<compile_context>
chip_gen: v5e
topology: v5e:2x2
jax: 0.10.0
libtpu: 0.0.40
codegen_flags: <defaults>
</compile_context>

<pallas_src>
import jax
import jax.numpy as jnp
from jax.experimental import pallas as pl
from jax.experimental.pallas import tpu as pltpu


# ------------------------------ host-side prep ------------------------------

def _round8(c):
    return max(8, ((c + 7) // 8) * 8)


def _taps_3x3(w):
    """(Cout, Cin, 3, 3) -> (9, Cout, Cin), tap index t = di*3 + dj."""
    cout, cin = w.shape[0], w.shape[1]
    return jnp.transpose(w, (2, 3, 0, 1)).reshape(9, cout, cin)


def _taps_polyphase(w):
    """Stride-2 3x3 conv (Cin=1) -> stride-1 2x2 conv over 4 polyphase channels.

    Returns (4, Cout, 4): tap t = a*2 + b, phase channel ch = 2*p + q, value
    w[co, 0, 2a+p, 2b+q] (zero where the original tap index exceeds 2).
    """
    cout = w.shape[0]
    w_e = jnp.zeros((2, 2, cout, 4), w.dtype)
    for a in range(2):
        for b in range(2):
            for p in range(2):
                for q in range(2):
                    di, dj = 2 * a + p, 2 * b + q
                    if di < 3 and dj < 3:
                        w_e = w_e.at[a, b, :, 2 * p + q].set(w[:, 0, di, dj])
    return w_e.reshape(4, cout, 4)


def _polyphase_input(x_nchw, hc, wc):
    """(B,1,H,W) -> (B, 4, hc*wc); channel 2p+q holds x[2r+p, 2c+q]."""
    planes = []
    for p in range(2):
        for q in range(2):
            ph = x_nchw[:, 0, p::2, q::2]
            ph = jnp.pad(ph, ((0, 0), (0, hc - ph.shape[1]), (0, wc - ph.shape[2])))
            planes.append(ph)
    ph4 = jnp.stack(planes, axis=1)                                  # (B,4,hc,wc)
    return ph4.reshape(ph4.shape[0], 4, hc * wc).astype(jnp.float32)


def _stack_layer(layer, cin_p, cout_p, *, polyphase=False):
    """Fold eval-mode BN scale into the conv weights and pack them as one
    tap-stacked matrix (cout_p, T*cin_p); also return the (cout_p, 1) shift."""
    w = layer["w"]
    wt = _taps_polyphase(w) if polyphase else _taps_3x3(w)           # (T, co, ci)
    T, cout, cin = wt.shape
    scale = layer["gamma"] / jnp.sqrt(layer["rv"] + layer["eps"])
    shift = (layer["b"] - layer["rm"]) * scale + layer["beta"]
    wt = wt * scale[None, :, None]                                   # fold BN scale
    wt = jnp.pad(wt, ((0, 0), (0, cout_p - cout), (0, cin_p - cin)))
    wk = jnp.transpose(wt, (1, 0, 2)).reshape(cout_p, T * cin_p)     # k = t*cin_p+ci
    sh = jnp.pad(shift, (0, cout_p - cout)).reshape(cout_p, 1)
    return wk.astype(jnp.float32), sh.astype(jnp.float32)


# ------------------------------ fused forward -------------------------------

def branch_forward(x_nchw, params, *, images_per_step=1):
    """Forward pass of Branch(bw) on NCHW input; returns (B, 4*bw)."""
    f32 = jnp.float32
    B, cin0, H, W = x_nchw.shape
    assert cin0 == 1, "Branch expects a single input channel"
    bw = params[0]["w"].shape[0]
    c3 = 4 * bw
    cp1, cp2, cp3 = _round8(bw), _round8(2 * bw), _round8(4 * bw)

    # ----- spatial bookkeeping: valid sizes + fixed per-block canvases -----
    h1, w1o = (H - 3) // 2 + 1, (W - 3) // 2 + 1     # conv1 (stride 2) output
    hc1, wc1 = h1 + 1, w1o + 1                       # block1 canvas (polyphase)
    v3h, v3w = h1 - 4, w1o - 4                       # after conv2, conv3
    hp1, wp1 = v3h // 2, v3w // 2                    # after pool1 = block2 canvas
    v5h, v5w = hp1 - 4, wp1 - 4                      # after conv4, conv5
    hp2, wp2 = v5h // 2, v5w // 2                    # after pool2 = block3 canvas
    v6h, v6w = hp2 - 2, wp2 - 2                      # block3 output
    assert (v6h, v6w) == (10, 10), (
        "input spatial size must give a 10x10 block3 output (e.g. 121x121) so "
        "that avg_pool2d(10) produces a single value per channel")

    F1, F2, F3 = hc1 * wc1, hp1 * wp1, hp2 * wp2
    n1 = F1 - (wc1 + 1)             # 2x2 taps on the block1 canvas
    n23 = F1 - (2 * wc1 + 2)        # 3x3 taps on the block1 canvas
    n45 = F2 - (2 * wp1 + 2)        # 3x3 taps on the block2 canvas
    n6 = F3 - (2 * wp2 + 2)         # 3x3 taps on the block3 canvas

    taps2 = [(a, b) for a in range(2) for b in range(2)]
    taps3 = [(di, dj) for di in range(3) for dj in range(3)]

    # per-layer packing: input-canvas rows, output rows, tap count
    cps_in = [cp1, cp1, cp1, cp1, cp2, cp2]
    cps_out = [cp1, cp1, cp1, cp2, cp2, cp3]
    tap_cnt = [4, 9, 9, 9, 9, 9]
    Ks = [t * ci for t, ci in zip(tap_cnt, cps_in)]
    Kmax = max(Ks)
    r_offs = [0]
    for co in cps_out:
        r_offs.append(r_offs[-1] + co)
    Wrows = r_offs[-1]

    w_blocks, s_blocks = [], []
    for li in range(6):
        wk, sh = _stack_layer(params[li], cps_in[li], cps_out[li],
                              polyphase=(li == 0))
        w_blocks.append(jnp.pad(wk, ((0, 0), (0, Kmax - wk.shape[1]))))
        s_blocks.append(sh)
    w_all = jnp.concatenate(w_blocks, axis=0)        # (Wrows, Kmax)
    sh_all = jnp.concatenate(s_blocks, axis=0)       # (Wrows, 1)

    # ----- batch tiling (TB images per grid step) -----
    TB = max(1, int(images_per_step))
    Bp = ((B + TB - 1) // TB) * TB
    G = Bp // TB
    phases = _polyphase_input(x_nchw.astype(f32), hc1, wc1)          # (B, 4, F1)
    if Bp != B:
        phases = jnp.pad(phases, ((0, Bp - B), (0, 0), (0, 0)))

    def kernel(ph_ref, w_ref, sh_ref, out_ref,
               act1, act2, act3, pool1, act4, act5, pool2, stk):

        def make_sel(w_out):
            rr = jax.lax.broadcasted_iota(jnp.int32, (2 * w_out - 1, w_out), 0)
            cc = jax.lax.broadcasted_iota(jnp.int32, (2 * w_out - 1, w_out), 1)
            return (rr == 2 * cc).astype(f32)       # even-column selector

        sel1, sel2 = make_sel(wp1), make_sel(wp2)

        def conv(src, taps, stride, n, li):
            """Tap-stacked VALID conv + folded-BN shift + ReLU -> (cout_p, n)."""
            cinp = cps_in[li]
            for t, (di, dj) in enumerate(taps):
                off = di * stride + dj
                stk[t * cinp:(t + 1) * cinp, :n] = src[:, off:off + n]
            K = len(taps) * cinp
            r0, r1 = r_offs[li], r_offs[li + 1]
            acc = jnp.dot(w_ref[r0:r1, :K], stk[:K, :n],
                          preferred_element_type=f32)
            return jnp.maximum(acc + sh_ref[r0:r1, :], 0.0)

        def store_canvas(dst, val, n):
            dst[:, :n] = val
            dst[:, n:] = jnp.zeros((dst.shape[0], dst.shape[1] - n), f32)

        def maxpool(src, cm_buf, dst, w_in, w_out, h_out, sel):
            """2x2/stride-2 max pool; row & column maxes hoisted to slab ops."""
            m = 2 * (h_out - 1) * w_in + 2 * w_out - 1
            rm = jnp.maximum(src[:, 0:m + 1], src[:, w_in:w_in + m + 1])
            cm_buf[:, :m] = jnp.maximum(rm[:, 0:m], rm[:, 1:m + 1])
            for i in range(h_out):
                seg = cm_buf[:, 2 * i * w_in:2 * i * w_in + 2 * w_out - 1]
                dst[:, i * w_out:(i + 1) * w_out] = jnp.dot(
                    seg, sel, preferred_element_type=f32)

        cols = []
        for t in range(TB):
            # stage the 4 polyphase planes (zero-padded to cp1 channels) in VMEM
            act3[0:4, :] = ph_ref[t]
            act3[4:cp1, :] = jnp.zeros((cp1 - 4, F1), f32)

            # ---- block 1: conv(stride 2, polyphase) -> conv -> conv -> pool ----
            store_canvas(act1, conv(act3, taps2, wc1, n1, 0), n1)
            store_canvas(act2, conv(act1, taps3, wc1, n23, 1), n23)
            store_canvas(act3, conv(act2, taps3, wc1, n23, 2), n23)
            maxpool(act3, act2, pool1, wc1, wp1, hp1, sel1)

            # ---- block 2: conv -> conv -> pool ----
            store_canvas(act4, conv(pool1, taps3, wp1, n45, 3), n45)
            store_canvas(act5, conv(act4, taps3, wp1, n45, 4), n45)
            maxpool(act5, act4, pool2, wp1, wp2, hp2, sel2)

            # ---- block 3: conv, then avg_pool2d(10) over the valid 10x10 ----
            y = conv(pool2, taps3, wp2, n6, 5)                       # (cp3, n6)
            acc = y[:, 0:v6w]
            for i in range(1, v6h):
                acc = acc + y[:, i * wp2:i * wp2 + v6w]
            cols.append(jnp.sum(acc, axis=-1, keepdims=True) * (1.0 / (v6h * v6w)))

        out_ref[...] = jnp.concatenate(cols, axis=-1)[None, :, :]    # (1, cp3, TB)

    out = pl.pallas_call(
        kernel,
        out_shape=jax.ShapeDtypeStruct((G, cp3, TB), f32),
        grid=(G,),
        in_specs=[
            pl.BlockSpec((TB, 4, F1), lambda g: (g, 0, 0)),
            pl.BlockSpec((Wrows, Kmax), lambda g: (0, 0)),
            pl.BlockSpec((Wrows, 1), lambda g: (0, 0)),
        ],
        out_specs=pl.BlockSpec((1, cp3, TB), lambda g: (g, 0, 0)),
        scratch_shapes=[
            pltpu.VMEM((cp1, F1), f32), pltpu.VMEM((cp1, F1), f32),
            pltpu.VMEM((cp1, F1), f32), pltpu.VMEM((cp1, F2), f32),
            pltpu.VMEM((cp2, F2), f32), pltpu.VMEM((cp2, F2), f32),
            pltpu.VMEM((cp2, F3), f32), pltpu.VMEM((Kmax, n1), f32),
        ],
        compiler_params=pltpu.CompilerParams(
            dimension_semantics=("parallel",)),
    )(phases, w_all, sh_all)

    out = jnp.transpose(out, (0, 2, 1)).reshape(Bp, cp3)
    return out[:B, :c3]


# ------------------------------ params & reference --------------------------

def init_branch_params(key, bw):
    defs = [(1, bw, 2), (bw, bw, 1), (bw, bw, 1),
            (bw, 2 * bw, 1), (2 * bw, 2 * bw, 1), (2 * bw, 4 * bw, 1)]
    params = []
    for cin, cout, stride in defs:
        key, kw, kb, kg, kbe = jax.random.split(key, 5)
        params.append(dict(
            w=jax.random.normal(kw, (cout, cin, 3, 3), jnp.float32)
              * (2.0 / (cin * 9)) ** 0.5,
            b=0.01 * jax.random.normal(kb, (cout,), jnp.float32),
            gamma=1.0 + 0.1 * jax.random.normal(kg, (cout,), jnp.float32),
            beta=0.1 * jax.random.normal(kbe, (cout,), jnp.float32),
            rm=jnp.zeros((cout,), jnp.float32),
            rv=jnp.ones((cout,), jnp.float32),
            eps=1e-3,
            stride=stride,
        ))
    return params


def _conv_bn_relu_ref(x, layer):
    y = jax.lax.conv_general_dilated(
        x, jnp.transpose(layer["w"], (2, 3, 1, 0)),
        window_strides=(layer["stride"], layer["stride"]), padding="VALID",
        dimension_numbers=("NHWC", "HWIO", "NHWC"),
        precision=jax.lax.Precision.HIGHEST)
    y = y + layer["b"]
    y = (y - layer["rm"]) / jnp.sqrt(layer["rv"] + layer["eps"])
    y = y * layer["gamma"] + layer["beta"]
    return jnp.maximum(y, 0.0)


def _maxpool2_ref(x):
    B, H, W, C = x.shape
    x = x[:, :H // 2 * 2, :W // 2 * 2, :]
    return x.reshape(B, H // 2, 2, W // 2, 2, C).max(axis=(2, 4))


def branch_forward_ref(x_nchw, params):
    x = jnp.transpose(x_nchw, (0, 2, 3, 1))
    for p in params[:3]:
        x = _conv_bn_relu_ref(x, p)
    x = _maxpool2_ref(x)
    for p in params[3:5]:
        x = _conv_bn_relu_ref(x, p)
    x = _maxpool2_ref(x)
    x = _conv_bn_relu_ref(x, params[5])
    return jnp.mean(x, axis=(1, 2))


if __name__ == "__main__":
    bw = 4                                            # small branch width
    key = jax.random.PRNGKey(0)
    kx, kp = jax.random.split(key)
    # 121 is the smallest spatial size the module supports: block3's output is
    # exactly 10x10, so avg_pool2d(10) yields a single value per channel.
    x = jax.random.normal(kx, (2, 1, 121, 121), jnp.float32)
    params = init_branch_params(kp, bw)

    fwd = jax.jit(lambda xx: branch_forward(xx, params))
    out = jax.block_until_ready(fwd(x))
    assert out.shape == (2, 4 * bw), out.shape

    ref = branch_forward_ref(x, params)
    err = float(jnp.max(jnp.abs(out - ref)))
    assert err < 5e-2, f"max abs error vs reference: {err}"
    print("KERNEL_OK")
</pallas_src>

<mosaic_0001>
module attributes {stable_mosaic.version = 11 : i64} {
  func.func @kernel(%arg0: i32, %arg1: memref<1x4x3721xf32, #tpu.memory_space<vmem>>, %arg2: memref<56x72xf32, #tpu.memory_space<vmem>>, %arg3: memref<56x1xf32, #tpu.memory_space<vmem>>, %arg4: memref<1x16x1xf32, #tpu.memory_space<vmem>>, %arg5: memref<8x3721xf32, #tpu.memory_space<vmem>>, %arg6: memref<8x3721xf32, #tpu.memory_space<vmem>>, %arg7: memref<8x3721xf32, #tpu.memory_space<vmem>>, %arg8: memref<8x784xf32, #tpu.memory_space<vmem>>, %arg9: memref<8x784xf32, #tpu.memory_space<vmem>>, %arg10: memref<8x784xf32, #tpu.memory_space<vmem>>, %arg11: memref<8x144xf32, #tpu.memory_space<vmem>>, %arg12: memref<72x3659xf32, #tpu.memory_space<vmem>>) attributes {dimension_semantics = [#tpu.dimension_semantics<parallel>], iteration_bounds = array<i64: 2>, scalar_prefetch = 0 : i64, scratch_operands = 8 : i64, tpu.core_type = #tpu.core_type<tc>, window_params = [{transform_indices = @transform_0, window_bounds = array<i64: 1, 4, 3721>}, {pipeline_mode = #tpu.pipeline_mode<synchronous>, transform_indices = @transform_1, window_bounds = array<i64: 56, 72>}, {pipeline_mode = #tpu.pipeline_mode<synchronous>, transform_indices = @transform_2, window_bounds = array<i64: 56, 1>}, {transform_indices = @transform_3, window_bounds = array<i64: 1, 16, 1>}]} {
    %0 = tpu.iota {dimensions = array<i32: 0>} : vector<55x28xi32>
    %1 = tpu.iota {dimensions = array<i32: 1>} : vector<55x28xi32>
    %c2_i32 = arith.constant 2 : i32
    %2 = vector.broadcast %c2_i32 : i32 to vector<55x28xi32>
    %3 = arith.muli %2, %1 : vector<55x28xi32>
    %4 = arith.cmpi eq, %0, %3 : vector<55x28xi32>
    %5 = arith.extui %4 : vector<55x28xi1> to vector<55x28xi32>
    %6 = arith.sitofp %5 : vector<55x28xi32> to vector<55x28xf32>
    %7 = tpu.iota {dimensions = array<i32: 0>} : vector<23x12xi32>
    %8 = tpu.iota {dimensions = array<i32: 1>} : vector<23x12xi32>
    %c2_i32_0 = arith.constant 2 : i32
    %9 = vector.broadcast %c2_i32_0 : i32 to vector<23x12xi32>
    %10 = arith.muli %9, %8 : vector<23x12xi32>
    %11 = arith.cmpi eq, %7, %10 : vector<23x12xi32>
    %12 = arith.extui %11 : vector<23x12xi1> to vector<23x12xi32>
    %13 = arith.sitofp %12 : vector<23x12xi32> to vector<23x12xf32>
    %c0 = arith.constant 0 : index
    %c0_1 = arith.constant 0 : index
    %c0_2 = arith.constant 0 : index
    %14 = vector.load %arg1[%c0, %c0_1, %c0_2] : memref<1x4x3721xf32, #tpu.memory_space<vmem>>, vector<1x4x3721xf32>
    %15 = vector.shape_cast %14 : vector<1x4x3721xf32> to vector<4x3721xf32>
    %c0_3 = arith.constant 0 : index
    %c0_4 = arith.constant 0 : index
    %16 = vector.load %arg7[%c0_3, %c0_4] : memref<8x3721xf32, #tpu.memory_space<vmem>>, vector<4x3721xf32>
    tpu.vector_store %arg7[%c0_3, %c0_4], %15 {strides = array<i32>} : memref<8x3721xf32, #tpu.memory_space<vmem>>, vector<4x3721xf32>,
    %cst = arith.constant 0.000000e+00 : f32
    %17 = vector.broadcast %cst : f32 to vector<4x3721xf32>
    %c4 = arith.constant 4 : index
    %c0_5 = arith.constant 0 : index
    %18 = vector.load %arg7[%c4, %c0_5] : memref<8x3721xf32, #tpu.memory_space<vmem>>, vector<4x3721xf32>
    tpu.vector_store %arg7[%c4, %c0_5], %17 {strides = array<i32>} : memref<8x3721xf32, #tpu.memory_space<vmem>>, vector<4x3721xf32>,
    %c0_6 = arith.constant 0 : index
    %c0_7 = arith.constant 0 : index
    %19 = vector.load %arg7[%c0_6, %c0_7] : memref<8x3721xf32, #tpu.memory_space<vmem>>, vector<8x3659xf32>
    %c0_8 = arith.constant 0 : index
    %c0_9 = arith.constant 0 : index
    %20 = vector.load %arg12[%c0_8, %c0_9] : memref<72x3659xf32, #tpu.memory_space<vmem>>, vector<8x3659xf32>
    tpu.vector_store %arg12[%c0_8, %c0_9], %19 {strides = array<i32>} : memref<72x3659xf32, #tpu.memory_space<vmem>>, vector<8x3659xf32>,
    %c0_10 = arith.constant 0 : index
    %c1 = arith.constant 1 : index
    %21 = vector.load %arg7[%c0_10, %c1] : memref<8x3721xf32, #tpu.memory_space<vmem>>, vector<8x3659xf32>
    %c8 = arith.constant 8 : index
    %c0_11 = arith.constant 0 : index
    %22 = vector.load %arg12[%c8, %c0_11] : memref<72x3659xf32, #tpu.memory_space<vmem>>, vector<8x3659xf32>
    tpu.vector_store %arg12[%c8, %c0_11], %21 {strides = array<i32>} : memref<72x3659xf32, #tpu.memory_space<vmem>>, vector<8x3659xf32>,
    %c0_12 = arith.constant 0 : index
    %c61 = arith.constant 61 : index
    %23 = vector.load %arg7[%c0_12, %c61] : memref<8x3721xf32, #tpu.memory_space<vmem>>, vector<8x3659xf32>
    %c16 = arith.constant 16 : index
    %c0_13 = arith.constant 0 : index
    %24 = vector.load %arg12[%c16, %c0_13] : memref<72x3659xf32, #tpu.memory_space<vmem>>, vector<8x3659xf32>
    tpu.vector_store %arg12[%c16, %c0_13], %23 {strides = array<i32>} : memref<72x3659xf32, #tpu.memory_space<vmem>>, vector<8x3659xf32>,
    %c0_14 = arith.constant 0 : index
    %c62 = arith.constant 62 : index
    %25 = vector.load %arg7[%c0_14, %c62] : memref<8x3721xf32, #tpu.memory_space<vmem>>, vector<8x3659xf32>
    %c24 = arith.constant 24 : index
    %c0_15 = arith.constant 0 : index
    %26 = vector.load %arg12[%c24, %c0_15] : memref<72x3659xf32, #tpu.memory_space<vmem>>, vector<8x3659xf32>
    tpu.vector_store %arg12[%c24, %c0_15], %25 {strides = array<i32>} : memref<72x3659xf32, #tpu.memory_space<vmem>>, vector<8x3659xf32>,
    %c0_16 = arith.constant 0 : index
    %c0_17 = arith.constant 0 : index
    %27 = vector.load %arg2[%c0_16, %c0_17] : memref<56x72xf32, #tpu.memory_space<vmem>>, vector<8x32xf32>
    %c0_18 = arith.constant 0 : index
    %c0_19 = arith.constant 0 : index
    %28 = vector.load %arg12[%c0_18, %c0_19] : memref<72x3659xf32, #tpu.memory_space<vmem>>, vector<32x3659xf32>
    %cst_20 = arith.constant dense<0.000000e+00> : vector<8x3659xf32>
    %29 = tpu.matmul %27, %28, %cst_20 {dimension_numbers = #tpu.dot_dimension_numbers<[1], [0], [0], [1], [0, 0, 1, 1], [], []>} : vector<8x32xf32>, vector<32x3659xf32>, vector<8x3659xf32> -> vector<8x3659xf32>
    %c0_21 = arith.constant 0 : index
    %c0_22 = arith.constant 0 : index
    %30 = vector.load %arg3[%c0_21, %c0_22] : memref<56x1xf32, #tpu.memory_space<vmem>>, vector<8x1xf32>
    %31 = vector.broadcast %30 : vector<8x1xf32> to vector<8x3659xf32>
    %32 = arith.addf %29, %31 : vector<8x3659xf32>
    %cst_23 = arith.constant 0.000000e+00 : f32
    %33 = vector.broadcast %cst_23 : f32 to vector<8x3659xf32>
    %34 = arith.maximumf %32, %33 : vector<8x3659xf32>
    %c0_24 = arith.constant 0 : index
    %c0_25 = arith.constant 0 : index
    %35 = vector.load %arg5[%c0_24, %c0_25] : memref<8x3721xf32, #tpu.memory_space<vmem>>, vector<8x3659xf32>
    tpu.vector_store %arg5[%c0_24, %c0_25], %34 {strides = array<i32>} : memref<8x3721xf32, #tpu.memory_space<vmem>>, vector<8x3659xf32>,
    %cst_26 = arith.constant 0.000000e+00 : f32
    %36 = vector.broadcast %cst_26 : f32 to vector<8x62xf32>
    %c0_27 = arith.constant 0 : index
    %c3659 = arith.constant 3659 : index
    %37 = vector.load %arg5[%c0_27, %c3659] : memref<8x3721xf32, #tpu.memory_space<vmem>>, vector<8x62xf32>
    tpu.vector_store %arg5[%c0_27, %c3659], %36 {strides = array<i32>} : memref<8x3721xf32, #tpu.memory_space<vmem>>, vector<8x62xf32>,
    %c0_28 = arith.constant 0 : index
    %c0_29 = arith.constant 0 : index
    %38 = vector.load %arg5[%c0_28, %c0_29] : memref<8x3721xf32, #tpu.memory_space<vmem>>, vector<8x3597xf32>
    %c0_30 = arith.constant 0 : index
    %c0_31 = arith.constant 0 : index
    %39 = vector.load %arg12[%c0_30, %c0_31] : memref<72x3659xf32, #tpu.memory_space<vmem>>, vector<8x3597xf32>
    tpu.vector_store %arg12[%c0_30, %c0_31], %38 {strides = array<i32>} : memref<72x3659xf32, #tpu.memory_space<vmem>>, vector<8x3597xf32>,
    %c0_32 = arith.constant 0 : index
    %c1_33 = arith.constant 1 : index
    %40 = vector.load %arg5[%c0_32, %c1_33] : memref<8x3721xf32, #tpu.memory_space<vmem>>, vector<8x3597xf32>
    %c8_34 = arith.constant 8 : index
    %c0_35 = arith.constant 0 : index
    %41 = vector.load %arg12[%c8_34, %c0_35] : memref<72x3659xf32, #tpu.memory_space<vmem>>, vector<8x3597xf32>
    tpu.vector_store %arg12[%c8_34, %c0_35], %40 {strides = array<i32>} : memref<72x3659xf32, #tpu.memory_space<vmem>>, vector<8x3597xf32>,
    %c0_36 = arith.constant 0 : index
    %c2 = arith.constant 2 : index
    %42 = vector.load %arg5[%c0_36, %c2] : memref<8x3721xf32, #tpu.memory_space<vmem>>, vector<8x3597xf32>
    %c16_37 = arith.constant 16 : index
    %c0_38 = arith.constant 0 : index
    %43 = vector.load %arg12[%c16_37, %c0_38] : memref<72x3659xf32, #tpu.memory_space<vmem>>, vector<8x3597xf32>
    tpu.vector_store %arg12[%c16_37, %c0_38], %42 {strides = array<i32>} : memref<72x3659xf32, #tpu.memory_space<vmem>>, vector<8x3597xf32>,
    %c0_39 = arith.constant 0 : index
    %c61_40 = arith.constant 61 : index
    %44 = vector.load %arg5[%c0_39, %c61_40] : memref<8x3721xf32, #tpu.memory_space<vmem>>, vector<8x3597xf32>
    %c24_41 = arith.constant 24 : index
    %c0_42 = arith.constant 0 : index
    %45 = vector.load %arg12[%c24_41, %c0_42] : memref<72x3659xf32, #tpu.memory_space<vmem>>, vector<8x3597xf32>
    tpu.vector_store %arg12[%c24_41, %c0_42], %44 {strides = array<i32>} : memref<72x3659xf32, #tpu.memory_space<vmem>>, vector<8x3597xf32>,
    %c0_43 = arith.constant 0 : index
    %c62_44 = arith.constant 62 : index
    %46 = vector.load %arg5[%c0_43, %c62_44] : memref<8x3721xf32, #tpu.memory_space<vmem>>, vector<8x3597xf32>
    %c32 = arith.constant 32 : index
    %c0_45 = arith.constant 0 : index
    %47 = vector.load %arg12[%c32, %c0_45] : memref<72x3659xf32, #tpu.memory_space<vmem>>, vector<8x3597xf32>
    tpu.vector_store %arg12[%c32, %c0_45], %46 {strides = array<i32>} : memref<72x3659xf32, #tpu.memory_space<vmem>>, vector<8x3597xf32>,
    %c0_46 = arith.constant 0 : index
    %c63 = arith.constant 63 : index
    %48 = vector.load %arg5[%c0_46, %c63] : memref<8x3721xf32, #tpu.memory_space<vmem>>, vector<8x3597xf32>
    %c40 = arith.constant 40 : index
    %c0_47 = arith.constant 0 : index
    %49 = vector.load %arg12[%c40, %c0_47] : memref<72x3659xf32, #tpu.memory_space<vmem>>, vector<8x3597xf32>
    tpu.vector_store %arg12[%c40, %c0_47], %48 {strides = array<i32>} : memref<72x3659xf32, #tpu.memory_space<vmem>>, vector<8x3597xf32>,
    %c0_48 = arith.constant 0 : index
    %c122 = arith.constant 122 : index
    %50 = vector.load %arg5[%c0_48, %c122] : memref<8x3721xf32, #tpu.memory_space<vmem>>, vector<8x3597xf32>
    %c48 = arith.constant 48 : index
    %c0_49 = arith.constant 0 : index
    %51 = vector.load %arg12[%c48, %c0_49] : memref<72x3659xf32, #tpu.memory_space<vmem>>, vector<8x3597xf32>
    tpu.vector_store %arg12[%c48, %c0_49], %50 {strides = array<i32>} : memref<72x3659xf32, #tpu.memory_space<vmem>>, vector<8x3597xf32>,
    %c0_50 = arith.constant 0 : index
    %c123 = arith.constant 123 : index
    %52 = vector.load %arg5[%c0_50, %c123] : memref<8x3721xf32, #tpu.memory_space<vmem>>, vector<8x3597xf32>
    %c56 = arith.constant 56 : index
    %c0_51 = arith.constant 0 : index
    %53 = vector.load %arg12[%c56, %c0_51] : memref<72x3659xf32, #tpu.memory_space<vmem>>, vector<8x3597xf32>
    tpu.vector_store %arg12[%c56, %c0_51], %52 {strides = array<i32>} : memref<72x3659xf32, #tpu.memory_space<vmem>>, vector<8x3597xf32>,
    %c0_52 = arith.constant 0 : index
    %c124 = arith.constant 124 : index
    %54 = vector.load %arg5[%c0_52, %c124] : memref<8x3721xf32, #tpu.memory_space<vmem>>, vector<8x3597xf32>
    %c64 = arith.constant 64 : index
    %c0_53 = arith.constant 0 : index
    %55 = vector.load %arg12[%c64, %c0_53] : memref<72x3659xf32, #tpu.memory_space<vmem>>, vector<8x3597xf32>
    tpu.vector_store %arg12[%c64, %c0_53], %54 {strides = array<i32>} : memref<72x3659xf32, #tpu.memory_space<vmem>>, vector<8x3597xf32>,
    %c8_54 = arith.constant 8 : index
    %c0_55 = arith.constant 0 : index
    %56 = vector.load %arg2[%c8_54, %c0_55] : memref<56x72xf32, #tpu.memory_space<vmem>>, vector<8x72xf32>
    %c0_56 = arith.constant 0 : index
    %c0_57 = arith.constant 0 : index
    %57 = vector.load %arg12[%c0_56, %c0_57] : memref<72x3659xf32, #tpu.memory_space<vmem>>, vector<72x3597xf32>
    %cst_58 = arith.constant dense<0.000000e+00> : vector<8x3597xf32>
    %58 = tpu.matmul %56, %57, %cst_58 {dimension_numbers = #tpu.dot_dimension_numbers<[1], [0], [0], [1], [0, 0, 1, 1], [], []>} : vector<8x72xf32>, vector<72x3597xf32>, vector<8x3597xf32> -> vector<8x3597xf32>
    %c8_59 = arith.constant 8 : index
    %c0_60 = arith.constant 0 : index
    %59 = vector.load %arg3[%c8_59, %c0_60] : memref<56x1xf32, #tpu.memory_space<vmem>>, vector<8x1xf32>
    %60 = vector.broadcast %59 : vector<8x1xf32> to vector<8x3597xf32>
    %61 = arith.addf %58, %60 : vector<8x3597xf32>
    %cst_61 = arith.constant 0.000000e+00 : f32
    %62 = vector.broadcast %cst_61 : f32 to vector<8x3597xf32>
    %63 = arith.maximumf %61, %62 : vector<8x3597xf32>
    %c0_62 = arith.constant 0 : index
    %c0_63 = arith.constant 0 : index
    %64 = vector.load %arg6[%c0_62, %c0_63] : memref<8x3721xf32, #tpu.memory_space<vmem>>, vector<8x3597xf32>
    tpu.vector_store %arg6[%c0_62, %c0_63], %63 {strides = array<i32>} : memref<8x3721xf32, #tpu.memory_space<vmem>>, vector<8x3597xf32>,
    %cst_64 = arith.constant 0.000000e+00 : f32
    %65 = vector.broadcast %cst_64 : f32 to vector<8x124xf32>
    %c0_65 = arith.constant 0 : index
    %c3597 = arith.constant 3597 : index
    %66 = vector.load %arg6[%c0_65, %c3597] : memref<8x3721xf32, #tpu.memory_space<vmem>>, vector<8x124xf32>
    tpu.vector_store %arg6[%c0_65, %c3597], %65 {strides = array<i32>} : memref<8x3721xf32, #tpu.memory_space<vmem>>, vector<8x124xf32>,
    %c0_66 = arith.constant 0 : index
    %c0_67 = arith.constant 0 : index
    %67 = vector.load %arg6[%c0_66, %c0_67] : memref<8x3721xf32, #tpu.memory_space<vmem>>, vector<8x3597xf32>
    %c0_68 = arith.constant 0 : index
    %c0_69 = arith.constant 0 : index
    %68 = vector.load %arg12[%c0_68, %c0_69] : memref<72x3659xf32, #tpu.memory_space<vmem>>, vector<8x3597xf32>
    tpu.vector_store %arg12[%c0_68, %c0_69], %67 {strides = array<i32>} : memref<72x3659xf32, #tpu.memory_space<vmem>>, vector<8x3597xf32>,
    %c0_70 = arith.constant 0 : index
    %c1_71 = arith.constant 1 : index
    %69 = vector.load %arg6[%c0_70, %c1_71] : memref<8x3721xf32, #tpu.memory_space<vmem>>, vector<8x3597xf32>
    %c8_72 = arith.constant 8 : index
    %c0_73 = arith.constant 0 : index
    %70 = vector.load %arg12[%c8_72, %c0_73] : memref<72x3659xf32, #tpu.memory_space<vmem>>, vector<8x3597xf32>
    tpu.vector_store %arg12[%c8_72, %c0_73], %69 {strides = array<i32>} : memref<72x3659xf32, #tpu.memory_space<vmem>>, vector<8x3597xf32>,
    %c0_74 = arith.constant 0 : index
    %c2_75 = arith.constant 2 : index
    %71 = vector.load %arg6[%c0_74, %c2_75] : memref<8x3721xf32, #tpu.memory_space<vmem>>, vector<8x3597xf32>
    %c16_76 = arith.constant 16 : index
    %c0_77 = arith.constant 0 : index
    %72 = vector.load %arg12[%c16_76, %c0_77] : memref<72x3659xf32, #tpu.memory_space<vmem>>, vector<8x3597xf32>
    tpu.vector_store %arg12[%c16_76, %c0_77], %71 {strides = array<i32>} : memref<72x3659xf32, #tpu.memory_space<vmem>>, vector<8x3597xf32>,
    %c0_78 = arith.constant 0 : index
    %c61_79 = arith.constant 61 : index
    %73 = vector.load %arg6[%c0_78, %c61_79] : memref<8x3721xf32, #tpu.memory_space<vmem>>, vector<8x3597xf32>
    %c24_80 = arith.constant 24 : index
    %c0_81 = arith.constant 0 : index
    %74 = vector.load %arg12[%c24_80, %c0_81] : memref<72x3659xf32, #tpu.memory_space<vmem>>, vector<8x3597xf32>
    tpu.vector_store %arg12[%c24_80, %c0_81], %73 {strides = array<i32>} : memref<72x3659xf32, #tpu.memory_space<vmem>>, vector<8x3597xf32>,
    %c0_82 = arith.constant 0 : index
    %c62_83 = arith.constant 62 : index
    %75 = vector.load %arg6[%c0_82, %c62_83] : memref<8x3721xf32, #tpu.memory_space<vmem>>, vector<8x3597xf32>
    %c32_84 = arith.constant 32 : index
    %c0_85 = arith.constant 0 : index
    %76 = vector.load %arg12[%c32_84, %c0_85] : memref<72x3659xf32, #tpu.memory_space<vmem>>, vector<8x3597xf32>
    tpu.vector_store %arg12[%c32_84, %c0_85], %75 {strides = array<i32>} : memref<72x3659xf32, #tpu.memory_space<vmem>>, vector<8x3597xf32>,
    %c0_86 = arith.constant 0 : index
    %c63_87 = arith.constant 63 : index
    %77 = vector.load %arg6[%c0_86, %c63_87] : memref<8x3721xf32, #tpu.memory_space<vmem>>, vector<8x3597xf32>
    %c40_88 = arith.constant 40 : index
    %c0_89 = arith.constant 0 : index
    %78 = vector.load %arg12[%c40_88, %c0_89] : memref<72x3659xf32, #tpu.memory_space<vmem>>, vector<8x3597xf32>
    tpu.vector_store %arg12[%c40_88, %c0_89], %77 {strides = array<i32>} : memref<72x3659xf32, #tpu.memory_space<vmem>>, vector<8x3597xf32>,
    %c0_90 = arith.constant 0 : index
    %c122_91 = arith.constant 122 : index
    %79 = vector.load %arg6[%c0_90, %c122_91] : memref<8x3721xf32, #tpu.memory_space<vmem>>, vector<8x3597xf32>
    %c48_92 = arith.constant 48 : index
    %c0_93 = arith.constant 0 : index
    %80 = vector.load %arg12[%c48_92, %c0_93] : memref<72x3659xf32, #tpu.memory_space<vmem>>, vector<8x3597xf32>
    tpu.vector_store %arg12[%c48_92, %c0_93], %79 {strides = array<i32>} : memref<72x3659xf32, #tpu.memory_space<vmem>>, vector<8x3597xf32>,
    %c0_94 = arith.constant 0 : index
    %c123_95 = arith.constant 123 : index
    %81 = vector.load %arg6[%c0_94, %c123_95] : memref<8x3721xf32, #tpu.memory_space<vmem>>, vector<8x3597xf32>
    %c56_96 = arith.constant 56 : index
    %c0_97 = arith.constant 0 : index
    %82 = vector.load %arg12[%c56_96, %c0_97] : memref<72x3659xf32, #tpu.memory_space<vmem>>, vector<8x3597xf32>
    tpu.vector_store %arg12[%c56_96, %c0_97], %81 {strides = array<i32>} : memref<72x3659xf32, #tpu.memory_space<vmem>>, vector<8x3597xf32>,
    %c0_98 = arith.constant 0 : index
    %c124_99 = arith.constant 124 : index
    %83 = vector.load %arg6[%c0_98, %c124_99] : memref<8x3721xf32, #tpu.memory_space<vmem>>, vector<8x3597xf32>
    %c64_100 = arith.constant 64 : index
    %c0_101 = arith.constant 0 : index
    %84 = vector.load %arg12[%c64_100, %c0_101] : memref<72x3659xf32, #tpu.memory_space<vmem>>, vector<8x3597xf32>
    tpu.vector_store %arg12[%c64_100, %c0_101], %83 {strides = array<i32>} : memref<72x3659xf32, #tpu.memory_space<vmem>>, vector<8x3597xf32>,
    %c16_102 = arith.constant 16 : index
    %c0_103 = arith.constant 0 : index
    %85 = vector.load %arg2[%c16_102, %c0_103] : memref<56x72xf32, #tpu.memory_space<vmem>>, vector<8x72xf32>
    %c0_104 = arith.constant 0 : index
    %c0_105 = arith.constant 0 : index
    %86 = vector.load %arg12[%c0_104, %c0_105] : memref<72x3659xf32, #tpu.memory_space<vmem>>, vector<72x3597xf32>
    %cst_106 = arith.constant dense<0.000000e+00> : vector<8x3597xf32>
    %87 = tpu.matmul %85, %86, %cst_106 {dimension_numbers = #tpu.dot_dimension_numbers<[1], [0], [0], [1], [0, 0, 1, 1], [], []>} : vector<8x72xf32>, vector<72x3597xf32>, vector<8x3597xf32> -> vector<8x3597xf32>
    %c16_107 = arith.constant 16 : index
    %c0_108 = arith.constant 0 : index
    %88 = vector.load %arg3[%c16_107, %c0_108] : memref<56x1xf32, #tpu.memory_space<vmem>>, vector<8x1xf32>
    %89 = vector.broadcast %88 : vector<8x1xf32> to vector<8x3597xf32>
    %90 = arith.addf %87, %89 : vector<8x3597xf32>
    %cst_109 = arith.constant 0.000000e+00 : f32
    %91 = vector.broadcast %cst_109 : f32 to vector<8x3597xf32>
    %92 = arith.maximumf %90, %91 : vector<8x3597xf32>
    %c0_110 = arith.constant 0 : index
    %c0_111 = arith.constant 0 : index
    %93 = vector.load %arg7[%c0_110, %c0_111] : memref<8x3721xf32, #tpu.memory_space<vmem>>, vector<8x3597xf32>
    tpu.vector_store %arg7[%c0_110, %c0_111], %92 {strides = array<i32>} : memref<8x3721xf32, #tpu.memory_space<vmem>>, vector<8x3597xf32>,
    %cst_112 = arith.constant 0.000000e+00 : f32
    %94 = vector.broadcast %cst_112 : f32 to vector<8x124xf32>
    %c0_113 = arith.constant 0 : index
    %c3597_114 = arith.constant 3597 : index
    %95 = vector.load %arg7[%c0_113, %c3597_114] : memref<8x3721xf32, #tpu.memory_space<vmem>>, vector<8x124xf32>
    tpu.vector_store %arg7[%c0_113, %c3597_114], %94 {strides = array<i32>} : memref<8x3721xf32, #tpu.memory_space<vmem>>, vector<8x124xf32>,
    %c0_115 = arith.constant 0 : index
    %c0_116 = arith.constant 0 : index
    %96 = vector.load %arg7[%c0_115, %c0_116] : memref<8x3721xf32, #tpu.memory_space<vmem>>, vector<8x3350xf32>
    %c0_117 = arith.constant 0 : index
    %c61_118 = arith.constant 61 : index
    %97 = vector.load %arg7[%c0_117, %c61_118] : memref<8x3721xf32, #tpu.memory_space<vmem>>, vector<8x3350xf32>
    %98 = arith.maximumf %96, %97 : vector<8x3350xf32>
    %99 = vector.extract_strided_slice %98 {offsets = [0, 0], sizes = [8, 3349], strides = [1, 1]} : vector<8x3350xf32> to vector<8x3349xf32>
    %100 = vector.extract_strided_slice %98 {offsets = [0, 1], sizes = [8, 3349], strides = [1, 1]} : vector<8x3350xf32> to vector<8x3349xf32>
    %101 = arith.maximumf %99, %100 : vector<8x3349xf32>
    %c0_119 = arith.constant 0 : index
    %c0_120 = arith.constant 0 : index
    %102 = vector.load %arg6[%c0_119, %c0_120] : memref<8x3721xf32, #tpu.memory_space<vmem>>, vector<8x3349xf32>
    tpu.vector_store %arg6[%c0_119, %c0_120], %101 {strides = array<i32>} : memref<8x3721xf32, #tpu.memory_space<vmem>>, vector<8x3349xf32>,
    %c0_121 = arith.constant 0 : index
    %c0_122 = arith.constant 0 : index
    %103 = vector.load %arg6[%c0_121, %c0_122] : memref<8x3721xf32, #tpu.memory_space<vmem>>, vector<8x55xf32>
    %cst_123 = arith.constant dense<0.000000e+00> : vector<8x28xf32>
    %104 = tpu.matmul %103, %6, %cst_123 {dimension_numbers = #tpu.dot_dimension_numbers<[1], [0], [0], [1], [0, 0, 1, 1], [], []>} : vector<8x55xf32>, vector<55x28xf32>, vector<8x28xf32> -> vector<8x28xf32>
    %c0_124 = arith.constant 0 : index
    %c0_125 = arith.constant 0 : index
    %105 = vector.load %arg8[%c0_124, %c0_125] : memref<8x784xf32, #tpu.memory_space<vmem>>, vector<8x28xf32>
    tpu.vector_store %arg8[%c0_124, %c0_125], %104 {strides = array<i32>} : memref<8x784xf32, #tpu.memory_space<vmem>>, vector<8x28xf32>,
    %c0_126 = arith.constant 0 : index
    %c122_127 = arith.constant 122 : index
    %106 = vector.load %arg6[%c0_126, %c122_127] : memref<8x3721xf32, #tpu.memory_space<vmem>>, vector<8x55xf32>
    %cst_128 = arith.constant dense<0.000000e+00> : vector<8x28xf32>
    %107 = tpu.matmul %106, %6, %cst_128 {dimension_numbers = #tpu.dot_dimension_numbers<[1], [0], [0], [1], [0, 0, 1, 1], [], []>} : vector<8x55xf32>, vector<55x28xf32>, vector<8x28xf32> -> vector<8x28xf32>
    %c0_129 = arith.constant 0 : index
    %c28 = arith.constant 28 : index
    %108 = vector.load %arg8[%c0_129, %c28] : memref<8x784xf32, #tpu.memory_space<vmem>>, vector<8x28xf32>
    tpu.vector_store %arg8[%c0_129, %c28], %107 {strides = array<i32>} : memref<8x784xf32, #tpu.memory_space<vmem>>, vector<8x28xf32>,
    %c0_130 = arith.constant 0 : index
    %c244 = arith.constant 244 : index
    %109 = vector.load %arg6[%c0_130, %c244] : memref<8x3721xf32, #tpu.memory_space<vmem>>, vector<8x55xf32>
    %cst_131 = arith.constant dense<0.000000e+00> : vector<8x28xf32>
    %110 = tpu.matmul %109, %6, %cst_131 {dimension_numbers = #tpu.dot_dimension_numbers<[1], [0], [0], [1], [0, 0, 1, 1], [], []>} : vector<8x55xf32>, vector<55x28xf32>, vector<8x28xf32> -> vector<8x28xf32>
    %c0_132 = arith.constant 0 : index
    %c56_133 = arith.constant 56 : index
    %111 = vector.load %arg8[%c0_132, %c56_133] : memref<8x784xf32, #tpu.memory_space<vmem>>, vector<8x28xf32>
    tpu.vector_store %arg8[%c0_132, %c56_133], %110 {strides = array<i32>} : memref<8x784xf32, #tpu.memory_space<vmem>>, vector<8x28xf32>,
    %c0_134 = arith.constant 0 : index
    %c366 = arith.constant 366 : index
    %112 = vector.load %arg6[%c0_134, %c366] : memref<8x3721xf32, #tpu.memory_space<vmem>>, vector<8x55xf32>
    %cst_135 = arith.constant dense<0.000000e+00> : vector<8x28xf32>
    %113 = tpu.matmul %112, %6, %cst_135 {dimension_numbers = #tpu.dot_dimension_numbers<[1], [0], [0], [1], [0, 0, 1, 1], [], []>} : vector<8x55xf32>, vector<55x28xf32>, vector<8x28xf32> -> vector<8x28xf32>
    %c0_136 = arith.constant 0 : index
    %c84 = arith.constant 84 : index
    %114 = vector.load %arg8[%c0_136, %c84] : memref<8x784xf32, #tpu.memory_space<vmem>>, vector<8x28xf32>
    tpu.vector_store %arg8[%c0_136, %c84], %113 {strides = array<i32>} : memref<8x784xf32, #tpu.memory_space<vmem>>, vector<8x28xf32>,
    %c0_137 = arith.constant 0 : index
    %c488 = arith.constant 488 : index
    %115 = vector.load %arg6[%c0_137, %c488] : memref<8x3721xf32, #tpu.memory_space<vmem>>, vector<8x55xf32>
    %cst_138 = arith.constant dense<0.000000e+00> : vector<8x28xf32>
    %116 = tpu.matmul %115, %6, %cst_138 {dimension_numbers = #tpu.dot_dimension_numbers<[1], [0], [0], [1], [0, 0, 1, 1], [], []>} : vector<8x55xf32>, vector<55x28xf32>, vector<8x28xf32> -> vector<8x28xf32>
    %c0_139 = arith.constant 0 : index
    %c112 = arith.constant 112 : index
    %117 = vector.load %arg8[%c0_139, %c112] : memref<8x784xf32, #tpu.memory_space<vmem>>, vector<8x28xf32>
    tpu.vector_store %arg8[%c0_139, %c112], %116 {strides = array<i32>} : memref<8x784xf32, #tpu.memory_space<vmem>>, vector<8x28xf32>,
    %c0_140 = arith.constant 0 : index
    %c610 = arith.constant 610 : index
    %118 = vector.load %arg6[%c0_140, %c610] : memref<8x3721xf32, #tpu.memory_space<vmem>>, vector<8x55xf32>
    %cst_141 = arith.constant dense<0.000000e+00> : vector<8x28xf32>
    %119 = tpu.matmul %118, %6, %cst_141 {dimension_numbers = #tpu.dot_dimension_numbers<[1], [0], [0], [1], [0, 0, 1, 1], [], []>} : vector<8x55xf32>, vector<55x28xf32>, vector<8x28xf32> -> vector<8x28xf32>
    %c0_142 = arith.constant 0 : index
    %c140 = arith.constant 140 : index
    %120 = vector.load %arg8[%c0_142, %c140] : memref<8x784xf32, #tpu.memory_space<vmem>>, vector<8x28xf32>
    tpu.vector_store %arg8[%c0_142, %c140], %119 {strides = array<i32>} : memref<8x784xf32, #tpu.memory_space<vmem>>, vector<8x28xf32>,
    %c0_143 = arith.constant 0 : index
    %c732 = arith.constant 732 : index
    %121 = vector.load %arg6[%c0_143, %c732] : memref<8x3721xf32, #tpu.memory_space<vmem>>, vector<8x55xf32>
    %cst_144 = arith.constant dense<0.000000e+00> : vector<8x28xf32>
    %122 = tpu.matmul %121, %6, %cst_144 {dimension_numbers = #tpu.dot_dimension_numbers<[1], [0], [0], [1], [0, 0, 1, 1], [], []>} : vector<8x55xf32>, vector<55x28xf32>, vector<8x28xf32> -> vector<8x28xf32>
    %c0_145 = arith.constant 0 : index
    %c168 = arith.constant 168 : index
    %123 = vector.load %arg8[%c0_145, %c168] : memref<8x784xf32, #tpu.memory_space<vmem>>, vector<8x28xf32>
    tpu.vector_store %arg8[%c0_145, %c168], %122 {strides = array<i32>} : memref<8x784xf32, #tpu.memory_space<vmem>>, vector<8x28xf32>,
    %c0_146 = arith.constant 0 : index
    %c854 = arith.constant 854 : index
    %124 = vector.load %arg6[%c0_146, %c854] : memref<8x3721xf32, #tpu.memory_space<vmem>>, vector<8x55xf32>
    %cst_147 = arith.constant dense<0.000000e+00> : vector<8x28xf32>
    %125 = tpu.matmul %124, %6, %cst_147 {dimension_numbers = #tpu.dot_dimension_numbers<[1], [0], [0], [1], [0, 0, 1, 1], [], []>} : vector<8x55xf32>, vector<55x28xf32>, vector<8x28xf32> -> vector<8x28xf32>
    %c0_148 = arith.constant 0 : index
    %c196 = arith.constant 196 : index
    %126 = vector.load %arg8[%c0_148, %c196] : memref<8x784xf32, #tpu.memory_space<vmem>>, vector<8x28xf32>
    tpu.vector_store %arg8[%c0_148, %c196], %125 {strides = array<i32>} : memref<8x784xf32, #tpu.memory_space<vmem>>, vector<8x28xf32>,
    %c0_149 = arith.constant 0 : index
    %c976 = arith.constant 976 : index
    %127 = vector.load %arg6[%c0_149, %c976] : memref<8x3721xf32, #tpu.memory_space<vmem>>, vector<8x55xf32>
    %cst_150 = arith.constant dense<0.000000e+00> : vector<8x28xf32>
    %128 = tpu.matmul %127, %6, %cst_150 {dimension_numbers = #tpu.dot_dimension_numbers<[1], [0], [0], [1], [0, 0, 1, 1], [], []>} : vector<8x55xf32>, vector<55x28xf32>, vector<8x28xf32> -> vector<8x28xf32>
    %c0_151 = arith.constant 0 : index
    %c224 = arith.constant 224 : index
    %129 = vector.load %arg8[%c0_151, %c224] : memref<8x784xf32, #tpu.memory_space<vmem>>, vector<8x28xf32>
    tpu.vector_store %arg8[%c0_151, %c224], %128 {strides = array<i32>} : memref<8x784xf32, #tpu.memory_space<vmem>>, vector<8x28xf32>,
    %c0_152 = arith.constant 0 : index
    %c1098 = arith.constant 1098 : index
    %130 = vector.load %arg6[%c0_152, %c1098] : memref<8x3721xf32, #tpu.memory_space<vmem>>, vector<8x55xf32>
    %cst_153 = arith.constant dense<0.000000e+00> : vector<8x28xf32>
    %131 = tpu.matmul %130, %6, %cst_153 {dimension_numbers = #tpu.dot_dimension_numbers<[1], [0], [0], [1], [0, 0, 1, 1], [], []>} : vector<8x55xf32>, vector<55x28xf32>, vector<8x28xf32> -> vector<8x28xf32>
    %c0_154 = arith.constant 0 : index
    %c252 = arith.constant 252 : index
    %132 = vector.load %arg8[%c0_154, %c252] : memref<8x784xf32, #tpu.memory_space<vmem>>, vector<8x28xf32>
    tpu.vector_store %arg8[%c0_154, %c252], %131 {strides = array<i32>} : memref<8x784xf32, #tpu.memory_space<vmem>>, vector<8x28xf32>,
    %c0_155 = arith.constant 0 : index
    %c1220 = arith.constant 1220 : index
    %133 = vector.load %arg6[%c0_155, %c1220] : memref<8x3721xf32, #tpu.memory_space<vmem>>, vector<8x55xf32>
    %cst_156 = arith.constant dense<0.000000e+00> : vector<8x28xf32>
    %134 = tpu.matmul %133, %6, %cst_156 {dimension_numbers = #tpu.dot_dimension_numbers<[1], [0], [0], [1], [0, 0, 1, 1], [], []>} : vector<8x55xf32>, vector<55x28xf32>, vector<8x28xf32> -> vector<8x28xf32>
    %c0_157 = arith.constant 0 : index
    %c280 = arith.constant 280 : index
    %135 = vector.load %arg8[%c0_157, %c280] : memref<8x784xf32, #tpu.memory_space<vmem>>, vector<8x28xf32>
    tpu.vector_store %arg8[%c0_157, %c280], %134 {strides = array<i32>} : memref<8x784xf32, #tpu.memory_space<vmem>>, vector<8x28xf32>,
    %c0_158 = arith.constant 0 : index
    %c1342 = arith.constant 1342 : index
    %136 = vector.load %arg6[%c0_158, %c1342] : memref<8x3721xf32, #tpu.memory_space<vmem>>, vector<8x55xf32>
    %cst_159 = arith.constant dense<0.000000e+00> : vector<8x28xf32>
    %137 = tpu.matmul %136, %6, %cst_159 {dimension_numbers = #tpu.dot_dimension_numbers<[1], [0], [0], [1], [0, 0, 1, 1], [], []>} : vector<8x55xf32>, vector<55x28xf32>, vector<8x28xf32> -> vector<8x28xf32>
    %c0_160 = arith.constant 0 : index
    %c308 = arith.constant 308 : index
    %138 = vector.load %arg8[%c0_160, %c308] : memref<8x784xf32, #tpu.memory_space<vmem>>, vector<8x28xf32>
    tpu.vector_store %arg8[%c0_160, %c308], %137 {strides = array<i32>} : memref<8x784xf32, #tpu.memory_space<vmem>>, vector<8x28xf32>,
    %c0_161 = arith.constant 0 : index
    %c1464 = arith.constant 1464 : index
    %139 = vector.load %arg6[%c0_161, %c1464] : memref<8x3721xf32, #tpu.memory_space<vmem>>, vector<8x55xf32>
    %cst_162 = arith.constant dense<0.000000e+00> : vector<8x28xf32>
    %140 = tpu.matmul %139, %6, %cst_162 {dimension_numbers = #tpu.dot_dimension_numbers<[1], [0], [0], [1], [0, 0, 1, 1], [], []>} : vector<8x55xf32>, vector<55x28xf32>, vector<8x28xf32> -> vector<8x28xf32>
    %c0_163 = arith.constant 0 : index
    %c336 = arith.constant 336 : index
    %141 = vector.load %arg8[%c0_163, %c336] : memref<8x784xf32, #tpu.memory_space<vmem>>, vector<8x28xf32>
    tpu.vector_store %arg8[%c0_163, %c336], %140 {strides = array<i32>} : memref<8x784xf32, #tpu.memory_space<vmem>>, vector<8x28xf32>,
    %c0_164 = arith.constant 0 : index
    %c1586 = arith.constant 1586 : index
    %142 = vector.load %arg6[%c0_164, %c1586] : memref<8x3721xf32, #tpu.memory_space<vmem>>, vector<8x55xf32>
    %cst_165 = arith.constant dense<0.000000e+00> : vector<8x28xf32>
    %143 = tpu.matmul %142, %6, %cst_165 {dimension_numbers = #tpu.dot_dimension_numbers<[1], [0], [0], [1], [0, 0, 1, 1], [], []>} : vector<8x55xf32>, vector<55x28xf32>, vector<8x28xf32> -> vector<8x28xf32>
    %c0_166 = arith.constant 0 : index
    %c364 = arith.constant 364 : index
    %144 = vector.load %arg8[%c0_166, %c364] : memref<8x784xf32, #tpu.memory_space<vmem>>, vector<8x28xf32>
    tpu.vector_store %arg8[%c0_166, %c364], %143 {strides = array<i32>} : memref<8x784xf32, #tpu.memory_space<vmem>>, vector<8x28xf32>,
    %c0_167 = arith.constant 0 : index
    %c1708 = arith.constant 1708 : index
    %145 = vector.load %arg6[%c0_167, %c1708] : memref<8x3721xf32, #tpu.memory_space<vmem>>, vector<8x55xf32>
    %cst_168 = arith.constant dense<0.000000e+00> : vector<8x28xf32>
    %146 = tpu.matmul %145, %6, %cst_168 {dimension_numbers = #tpu.dot_dimension_numbers<[1], [0], [0], [1], [0, 0, 1, 1], [], []>} : vector<8x55xf32>, vector<55x28xf32>, vector<8x28xf32> -> vector<8x28xf32>
    %c0_169 = arith.constant 0 : index
    %c392 = arith.constant 392 : index
    %147 = vector.load %arg8[%c0_169, %c392] : memref<8x784xf32, #tpu.memory_space<vmem>>, vector<8x28xf32>
    tpu.vector_store %arg8[%c0_169, %c392], %146 {strides = array<i32>} : memref<8x784xf32, #tpu.memory_space<vmem>>, vector<8x28xf32>,
    %c0_170 = arith.constant 0 : index
    %c1830 = arith.constant 1830 : index
    %148 = vector.load %arg6[%c0_170, %c1830] : memref<8x3721xf32, #tpu.memory_space<vmem>>, vector<8x55xf32>
    %cst_171 = arith.constant dense<0.000000e+00> : vector<8x28xf32>
    %149 = tpu.matmul %148, %6, %cst_171 {dimension_numbers = #tpu.dot_dimension_numbers<[1], [0], [0], [1], [0, 0, 1, 1], [], []>} : vector<8x55xf32>, vector<55x28xf32>, vector<8x28xf32> -> vector<8x28xf32>
    %c0_172 = arith.constant 0 : index
    %c420 = arith.constant 420 : index
    %150 = vector.load %arg8[%c0_172, %c420] : memref<8x784xf32, #tpu.memory_space<vmem>>, vector<8x28xf32>
    tpu.vector_store %arg8[%c0_172, %c420], %149 {strides = array<i32>} : memref<8x784xf32, #tpu.memory_space<vmem>>, vector<8x28xf32>,
    %c0_173 = arith.constant 0 : index
    %c1952 = arith.constant 1952 : index
    %151 = vector.load %arg6[%c0_173, %c1952] : memref<8x3721xf32, #tpu.memory_space<vmem>>, vector<8x55xf32>
    %cst_174 = arith.constant dense<0.000000e+00> : vector<8x28xf32>
    %152 = tpu.matmul %151, %6, %cst_174 {dimension_numbers = #tpu.dot_dimension_numbers<[1], [0], [0], [1], [0, 0, 1, 1], [], []>} : vector<8x55xf32>, vector<55x28xf32>, vector<8x28xf32> -> vector<8x28xf32>
    %c0_175 = arith.constant 0 : index
    %c448 = arith.constant 448 : index
    %153 = vector.load %arg8[%c0_175, %c448] : memref<8x784xf32, #tpu.memory_space<vmem>>, vector<8x28xf32>
    tpu.vector_store %arg8[%c0_175, %c448], %152 {strides = array<i32>} : memref<8x784xf32, #tpu.memory_space<vmem>>, vector<8x28xf32>,
    %c0_176 = arith.constant 0 : index
    %c2074 = arith.constant 2074 : index
    %154 = vector.load %arg6[%c0_176, %c2074] : memref<8x3721xf32, #tpu.memory_space<vmem>>, vector<8x55xf32>
    %cst_177 = arith.constant dense<0.000000e+00> : vector<8x28xf32>
    %155 = tpu.matmul %154, %6, %cst_177 {dimension_numbers = #tpu.dot_dimension_numbers<[1], [0], [0], [1], [0, 0, 1, 1], [], []>} : vector<8x55xf32>, vector<55x28xf32>, vector<8x28xf32> -> vector<8x28xf32>
    %c0_178 = arith.constant 0 : index
    %c476 = arith.constant 476 : index
    %156 = vector.load %arg8[%c0_178, %c476] : memref<8x784xf32, #tpu.memory_space<vmem>>, vector<8x28xf32>
    tpu.vector_store %arg8[%c0_178, %c476], %155 {strides = array<i32>} : memref<8x784xf32, #tpu.memory_space<vmem>>, vector<8x28xf32>,
    %c0_179 = arith.constant 0 : index
    %c2196 = arith.constant 2196 : index
    %157 = vector.load %arg6[%c0_179, %c2196] : memref<8x3721xf32, #tpu.memory_space<vmem>>, vector<8x55xf32>
    %cst_180 = arith.constant dense<0.000000e+00> : vector<8x28xf32>
    %158 = tpu.matmul %157, %6, %cst_180 {dimension_numbers = #tpu.dot_dimension_numbers<[1], [0], [0], [1], [0, 0, 1, 1], [], []>} : vector<8x55xf32>, vector<55x28xf32>, vector<8x28xf32> -> vector<8x28xf32>
    %c0_181 = arith.constant 0 : index
    %c504 = arith.constant 504 : index
    %159 = vector.load %arg8[%c0_181, %c504] : memref<8x784xf32, #tpu.memory_space<vmem>>, vector<8x28xf32>
    tpu.vector_store %arg8[%c0_181, %c504], %158 {strides = array<i32>} : memref<8x784xf32, #tpu.memory_space<vmem>>, vector<8x28xf32>,
    %c0_182 = arith.constant 0 : index
    %c2318 = arith.constant 2318 : index
    %160 = vector.load %arg6[%c0_182, %c2318] : memref<8x3721xf32, #tpu.memory_space<vmem>>, vector<8x55xf32>
    %cst_183 = arith.constant dense<0.000000e+00> : vector<8x28xf32>
    %161 = tpu.matmul %160, %6, %cst_183 {dimension_numbers = #tpu.dot_dimension_numbers<[1], [0], [0], [1], [0, 0, 1, 1], [], []>} : vector<8x55xf32>, vector<55x28xf32>, vector<8x28xf32> -> vector<8x28xf32>
    %c0_184 = arith.constant 0 : index
    %c532 = arith.constant 532 : index
    %162 = vector.load %arg8[%c0_184, %c532] : memref<8x784xf32, #tpu.memory_space<vmem>>, vector<8x28xf32>
    tpu.vector_store %arg8[%c0_184, %c532], %161 {strides = array<i32>} : memref<8x784xf32, #tpu.memory_space<vmem>>, vector<8x28xf32>,
    %c0_185 = arith.constant 0 : index
    %c2440 = arith.constant 2440 : index
    %163 = vector.load %arg6[%c0_185, %c2440] : memref<8x3721xf32, #tpu.memory_space<vmem>>, vector<8x55xf32>
    %cst_186 = arith.constant dense<0.000000e+00> : vector<8x28xf32>
    %164 = tpu.matmul %163, %6, %cst_186 {dimension_numbers = #tpu.dot_dimension_numbers<[1], [0], [0], [1], [0, 0, 1, 1], [], []>} : vector<8x55xf32>, vector<55x28xf32>, vector<8x28xf32> -> vector<8x28xf32>
    %c0_187 = arith.constant 0 : index
    %c560 = arith.constant 560 : index
    %165 = vector.load %arg8[%c0_187, %c560] : memref<8x784xf32, #tpu.memory_space<vmem>>, vector<8x28xf32>
    tpu.vector_store %arg8[%c0_187, %c560], %164 {strides = array<i32>} : memref<8x784xf32, #tpu.memory_space<vmem>>, vector<8x28xf32>,
    %c0_188 = arith.constant 0 : index
    %c2562 = arith.constant 2562 : index
    %166 = vector.load %arg6[%c0_188, %c2562] : memref<8x3721xf32, #tpu.memory_space<vmem>>, vector<8x55xf32>
    %cst_189 = arith.constant dense<0.000000e+00> : vector<8x28xf32>
    %167 = tpu.matmul %166, %6, %cst_189 {dimension_numbers = #tpu.dot_dimension_numbers<[1], [0], [0], [1], [0, 0, 1, 1], [], []>} : vector<8x55xf32>, vector<55x28xf32>, vector<8x28xf32> -> vector<8x28xf32>
    %c0_190 = arith.constant 0 : index
    %c588 = arith.constant 588 : index
    %168 = vector.load %arg8[%c0_190, %c588] : memref<8x784xf32, #tpu.memory_space<vmem>>, vector<8x28xf32>
    tpu.vector_store %arg8[%c0_190, %c588], %167 {strides = array<i32>} : memref<8x784xf32, #tpu.memory_space<vmem>>, vector<8x28xf32>,
    %c0_191 = arith.constant 0 : index
    %c2684 = arith.constant 2684 : index
    %169 = vector.load %arg6[%c0_191, %c2684] : memref<8x3721xf32, #tpu.memory_space<vmem>>, vector<8x55xf32>
    %cst_192 = arith.constant dense<0.000000e+00> : vector<8x28xf32>
    %170 = tpu.matmul %169, %6, %cst_192 {dimension_numbers = #tpu.dot_dimension_numbers<[1], [0], [0], [1], [0, 0, 1, 1], [], []>} : vector<8x55xf32>, vector<55x28xf32>, vector<8x28xf32> -> vector<8x28xf32>
    %c0_193 = arith.constant 0 : index
    %c616 = arith.constant 616 : index
    %171 = vector.load %arg8[%c0_193, %c616] : memref<8x784xf32, #tpu.memory_space<vmem>>, vector<8x28xf32>
    tpu.vector_store %arg8[%c0_193, %c616], %170 {strides = array<i32>} : memref<8x784xf32, #tpu.memory_space<vmem>>, vector<8x28xf32>,
    %c0_194 = arith.constant 0 : index
    %c2806 = arith.constant 2806 : index
    %172 = vector.load %arg6[%c0_194, %c2806] : memref<8x3721xf32, #tpu.memory_space<vmem>>, vector<8x55xf32>
    %cst_195 = arith.constant dense<0.000000e+00> : vector<8x28xf32>
    %173 = tpu.matmul %172, %6, %cst_195 {dimension_numbers = #tpu.dot_dimension_numbers<[1], [0], [0], [1], [0, 0, 1, 1], [], []>} : vector<8x55xf32>, vector<55x28xf32>, vector<8x28xf32> -> vector<8x28xf32>
    %c0_196 = arith.constant 0 : index
    %c644 = arith.constant 644 : index
    %174 = vector.load %arg8[%c0_196, %c644] : memref<8x784xf32, #tpu.memory_space<vmem>>, vector<8x28xf32>
    tpu.vector_store %arg8[%c0_196, %c644], %173 {strides = array<i32>} : memref<8x784xf32, #tpu.memory_space<vmem>>, vector<8x28xf32>,
    %c0_197 = arith.constant 0 : index
    %c2928 = arith.constant 2928 : index
    %175 = vector.load %arg6[%c0_197, %c2928] : memref<8x3721xf32, #tpu.memory_space<vmem>>, vector<8x55xf32>
    %cst_198 = arith.constant dense<0.000000e+00> : vector<8x28xf32>
    %176 = tpu.matmul %175, %6, %cst_198 {dimension_numbers = #tpu.dot_dimension_numbers<[1], [0], [0], [1], [0, 0, 1, 1], [], []>} : vector<8x55xf32>, vector<55x28xf32>, vector<8x28xf32> -> vector<8x28xf32>
    %c0_199 = arith.constant 0 : index
    %c672 = arith.constant 672 : index
    %177 = vector.load %arg8[%c0_199, %c672] : memref<8x784xf32, #tpu.memory_space<vmem>>, vector<8x28xf32>
    tpu.vector_store %arg8[%c0_199, %c672], %176 {strides = array<i32>} : memref<8x784xf32, #tpu.memory_space<vmem>>, vector<8x28xf32>,
    %c0_200 = arith.constant 0 : index
    %c3050 = arith.constant 3050 : index
    %178 = vector.load %arg6[%c0_200, %c3050] : memref<8x3721xf32, #tpu.memory_space<vmem>>, vector<8x55xf32>
    %cst_201 = arith.constant dense<0.000000e+00> : vector<8x28xf32>
    %179 = tpu.matmul %178, %6, %cst_201 {dimension_numbers = #tpu.dot_dimension_numbers<[1], [0], [0], [1], [0, 0, 1, 1], [], []>} : vector<8x55xf32>, vector<55x28xf32>, vector<8x28xf32> -> vector<8x28xf32>
    %c0_202 = arith.constant 0 : index
    %c700 = arith.constant 700 : index
    %180 = vector.load %arg8[%c0_202, %c700] : memref<8x784xf32, #tpu.memory_space<vmem>>, vector<8x28xf32>
    tpu.vector_store %arg8[%c0_202, %c700], %179 {strides = array<i32>} : memref<8x784xf32, #tpu.memory_space<vmem>>, vector<8x28xf32>,
    %c0_203 = arith.constant 0 : index
    %c3172 = arith.constant 3172 : index
    %181 = vector.load %arg6[%c0_203, %c3172] : memref<8x3721xf32, #tpu.memory_space<vmem>>, vector<8x55xf32>
    %cst_204 = arith.constant dense<0.000000e+00> : vector<8x28xf32>
    %182 = tpu.matmul %181, %6, %cst_204 {dimension_numbers = #tpu.dot_dimension_numbers<[1], [0], [0], [1], [0, 0, 1, 1], [], []>} : vector<8x55xf32>, vector<55x28xf32>, vector<8x28xf32> -> vector<8x28xf32>
    %c0_205 = arith.constant 0 : index
    %c728 = arith.constant 728 : index
    %183 = vector.load %arg8[%c0_205, %c728] : memref<8x784xf32, #tpu.memory_space<vmem>>, vector<8x28xf32>
    tpu.vector_store %arg8[%c0_205, %c728], %182 {strides = array<i32>} : memref<8x784xf32, #tpu.memory_space<vmem>>, vector<8x28xf32>,
    %c0_206 = arith.constant 0 : index
    %c3294 = arith.constant 3294 : index
    %184 = vector.load %arg6[%c0_206, %c3294] : memref<8x3721xf32, #tpu.memory_space<vmem>>, vector<8x55xf32>
    %cst_207 = arith.constant dense<0.000000e+00> : vector<8x28xf32>
    %185 = tpu.matmul %184, %6, %cst_207 {dimension_numbers = #tpu.dot_dimension_numbers<[1], [0], [0], [1], [0, 0, 1, 1], [], []>} : vector<8x55xf32>, vector<55x28xf32>, vector<8x28xf32> -> vector<8x28xf32>
    %c0_208 = arith.constant 0 : index
    %c756 = arith.constant 756 : index
    %186 = vector.load %arg8[%c0_208, %c756] : memref<8x784xf32, #tpu.memory_space<vmem>>, vector<8x28xf32>
    tpu.vector_store %arg8[%c0_208, %c756], %185 {strides = array<i32>} : memref<8x784xf32, #tpu.memory_space<vmem>>, vector<8x28xf32>,
    %c0_209 = arith.constant 0 : index
    %c0_210 = arith.constant 0 : index
    %187 = vector.load %arg8[%c0_209, %c0_210] : memref<8x784xf32, #tpu.memory_space<vmem>>, vector<8x726xf32>
    %c0_211 = arith.constant 0 : index
    %c0_212 = arith.constant 0 : index
    %188 = vector.load %arg12[%c0_211, %c0_212] : memref<72x3659xf32, #tpu.memory_space<vmem>>, vector<8x726xf32>
    tpu.vector_store %arg12[%c0_211, %c0_212], %187 {strides = array<i32>} : memref<72x3659xf32, #tpu.memory_space<vmem>>, vector<8x726xf32>,
    %c0_213 = arith.constant 0 : index
    %c1_214 = arith.constant 1 : index
    %189 = vector.load %arg8[%c0_213, %c1_214] : memref<8x784xf32, #tpu.memory_space<vmem>>, vector<8x726xf32>
    %c8_215 = arith.constant 8 : index
    %c0_216 = arith.constant 0 : index
    %190 = vector.load %arg12[%c8_215, %c0_216] : memref<72x3659xf32, #tpu.memory_space<vmem>>, vector<8x726xf32>
    tpu.vector_store %arg12[%c8_215, %c0_216], %189 {strides = array<i32>} : memref<72x3659xf32, #tpu.memory_space<vmem>>, vector<8x726xf32>,
    %c0_217 = arith.constant 0 : index
    %c2_218 = arith.constant 2 : index
    %191 = vector.load %arg8[%c0_217, %c2_218] : memref<8x784xf32, #tpu.memory_space<vmem>>, vector<8x726xf32>
    %c16_219 = arith.constant 16 : index
    %c0_220 = arith.constant 0 : index
    %192 = vector.load %arg12[%c16_219, %c0_220] : memref<72x3659xf32, #tpu.memory_space<vmem>>, vector<8x726xf32>
    tpu.vector_store %arg12[%c16_219, %c0_220], %191 {strides = array<i32>} : memref<72x3659xf32, #tpu.memory_space<vmem>>, vector<8x726xf32>,
    %c0_221 = arith.constant 0 : index
    %c28_222 = arith.constant 28 : index
    %193 = vector.load %arg8[%c0_221, %c28_222] : memref<8x784xf32, #tpu.memory_space<vmem>>, vector<8x726xf32>
    %c24_223 = arith.constant 24 : index
    %c0_224 = arith.constant 0 : index
    %194 = vector.load %arg12[%c24_223, %c0_224] : memref<72x3659xf32, #tpu.memory_space<vmem>>, vector<8x726xf32>
    tpu.vector_store %arg12[%c24_223, %c0_224], %193 {strides = array<i32>} : memref<72x3659xf32, #tpu.memory_space<vmem>>, vector<8x726xf32>,
    %c0_225 = arith.constant 0 : index
    %c29 = arith.constant 29 : index
    %195 = vector.load %arg8[%c0_225, %c29] : memref<8x784xf32, #tpu.memory_space<vmem>>, vector<8x726xf32>
    %c32_226 = arith.constant 32 : index
    %c0_227 = arith.constant 0 : index
    %196 = vector.load %arg12[%c32_226, %c0_227] : memref<72x3659xf32, #tpu.memory_space<vmem>>, vector<8x726xf32>
    tpu.vector_store %arg12[%c32_226, %c0_227], %195 {strides = array<i32>} : memref<72x3659xf32, #tpu.memory_space<vmem>>, vector<8x726xf32>,
    %c0_228 = arith.constant 0 : index
    %c30 = arith.constant 30 : index
    %197 = vector.load %arg8[%c0_228, %c30] : memref<8x784xf32, #tpu.memory_space<vmem>>, vector<8x726xf32>
    %c40_229 = arith.constant 40 : index
    %c0_230 = arith.constant 0 : index
    %198 = vector.load %arg12[%c40_229, %c0_230] : memref<72x3659xf32, #tpu.memory_space<vmem>>, vector<8x726xf32>
    tpu.vector_store %arg12[%c40_229, %c0_230], %197 {strides = array<i32>} : memref<72x3659xf32, #tpu.memory_space<vmem>>, vector<8x726xf32>,
    %c0_231 = arith.constant 0 : index
    %c56_232 = arith.constant 56 : index
    %199 = vector.load %arg8[%c0_231, %c56_232] : memref<8x784xf32, #tpu.memory_space<vmem>>, vector<8x726xf32>
    %c48_233 = arith.constant 48 : index
    %c0_234 = arith.constant 0 : index
    %200 = vector.load %arg12[%c48_233, %c0_234] : memref<72x3659xf32, #tpu.memory_space<vmem>>, vector<8x726xf32>
    tpu.vector_store %arg12[%c48_233, %c0_234], %199 {strides = array<i32>} : memref<72x3659xf32, #tpu.memory_space<vmem>>, vector<8x726xf32>,
    %c0_235 = arith.constant 0 : index
    %c57 = arith.constant 57 : index
    %201 = vector.load %arg8[%c0_235, %c57] : memref<8x784xf32, #tpu.memory_space<vmem>>, vector<8x726xf32>
    %c56_236 = arith.constant 56 : index
    %c0_237 = arith.constant 0 : index
    %202 = vector.load %arg12[%c56_236, %c0_237] : memref<72x3659xf32, #tpu.memory_space<vmem>>, vector<8x726xf32>
    tpu.vector_store %arg12[%c56_236, %c0_237], %201 {strides = array<i32>} : memref<72x3659xf32, #tpu.memory_space<vmem>>, vector<8x726xf32>,
    %c0_238 = arith.constant 0 : index
    %c58 = arith.constant 58 : index
    %203 = vector.load %arg8[%c0_238, %c58] : memref<8x784xf32, #tpu.memory_space<vmem>>, vector<8x726xf32>
    %c64_239 = arith.constant 64 : index
    %c0_240 = arith.constant 0 : index
    %204 = vector.load %arg12[%c64_239, %c0_240] : memref<72x3659xf32, #tpu.memory_space<vmem>>, vector<8x726xf32>
    tpu.vector_store %arg12[%c64_239, %c0_240], %203 {strides = array<i32>} : memref<72x3659xf32, #tpu.memory_space<vmem>>, vector<8x726xf32>,
    %c24_241 = arith.constant 24 : index
    %c0_242 = arith.constant 0 : index
    %205 = vector.load %arg2[%c24_241, %c0_242] : memref<56x72xf32, #tpu.memory_space<vmem>>, vector<8x72xf32>
    %c0_243 = arith.constant 0 : index
    %c0_244 = arith.constant 0 : index
    %206 = vector.load %arg12[%c0_243, %c0_244] : memref<72x3659xf32, #tpu.memory_space<vmem>>, vector<72x726xf32>
    %cst_245 = arith.constant dense<0.000000e+00> : vector<8x726xf32>
    %207 = tpu.matmul %205, %206, %cst_245 {dimension_numbers = #tpu.dot_dimension_numbers<[1], [0], [0], [1], [0, 0, 1, 1], [], []>} : vector<8x72xf32>, vector<72x726xf32>, vector<8x726xf32> -> vector<8x726xf32>
    %c24_246 = arith.constant 24 : index
    %c0_247 = arith.constant 0 : index
    %208 = vector.load %arg3[%c24_246, %c0_247] : memref<56x1xf32, #tpu.memory_space<vmem>>, vector<8x1xf32>
    %209 = vector.broadcast %208 : vector<8x1xf32> to vector<8x726xf32>
    %210 = arith.addf %207, %209 : vector<8x726xf32>
    %cst_248 = arith.constant 0.000000e+00 : f32
    %211 = vector.broadcast %cst_248 : f32 to vector<8x726xf32>
    %212 = arith.maximumf %210, %211 : vector<8x726xf32>
    %c0_249 = arith.constant 0 : index
    %c0_250 = arith.constant 0 : index
    %213 = vector.load %arg9[%c0_249, %c0_250] : memref<8x784xf32, #tpu.memory_space<vmem>>, vector<8x726xf32>
    tpu.vector_store %arg9[%c0_249, %c0_250], %212 {strides = array<i32>} : memref<8x784xf32, #tpu.memory_space<vmem>>, vector<8x726xf32>,
    %cst_251 = arith.constant 0.000000e+00 : f32
    %214 = vector.broadcast %cst_251 : f32 to vector<8x58xf32>
    %c0_252 = arith.constant 0 : index
    %c726 = arith.constant 726 : index
    %215 = vector.load %arg9[%c0_252, %c726] : memref<8x784xf32, #tpu.memory_space<vmem>>, vector<8x58xf32>
    tpu.vector_store %arg9[%c0_252, %c726], %214 {strides = array<i32>} : memref<8x784xf32, #tpu.memory_space<vmem>>, vector<8x58xf32>,
    %c0_253 = arith.constant 0 : index
    %c0_254 = arith.constant 0 : index
    %216 = vector.load %arg9[%c0_253, %c0_254] : memref<8x784xf32, #tpu.memory_space<vmem>>, vector<8x726xf32>
    %c0_255 = arith.constant 0 : index
    %c0_256 = arith.constant 0 : index
    %217 = vector.load %arg12[%c0_255, %c0_256] : memref<72x3659xf32, #tpu.memory_space<vmem>>, vector<8x726xf32>
    tpu.vector_store %arg12[%c0_255, %c0_256], %216 {strides = array<i32>} : memref<72x3659xf32, #tpu.memory_space<vmem>>, vector<8x726xf32>,
    %c0_257 = arith.constant 0 : index
    %c1_258 = arith.constant 1 : index
    %218 = vector.load %arg9[%c0_257, %c1_258] : memref<8x784xf32, #tpu.memory_space<vmem>>, vector<8x726xf32>
    %c8_259 = arith.constant 8 : index
    %c0_260 = arith.constant 0 : index
    %219 = vector.load %arg12[%c8_259, %c0_260] : memref<72x3659xf32, #tpu.memory_space<vmem>>, vector<8x726xf32>
    tpu.vector_store %arg12[%c8_259, %c0_260], %218 {strides = array<i32>} : memref<72x3659xf32, #tpu.memory_space<vmem>>, vector<8x726xf32>,
    %c0_261 = arith.constant 0 : index
    %c2_262 = arith.constant 2 : index
    %220 = vector.load %arg9[%c0_261, %c2_262] : memref<8x784xf32, #tpu.memory_space<vmem>>, vector<8x726xf32>
    %c16_263 = arith.constant 16 : index
    %c0_264 = arith.constant 0 : index
    %221 = vector.load %arg12[%c16_263, %c0_264] : memref<72x3659xf32, #tpu.memory_space<vmem>>, vector<8x726xf32>
    tpu.vector_store %arg12[%c16_263, %c0_264], %220 {strides = array<i32>} : memref<72x3659xf32, #tpu.memory_space<vmem>>, vector<8x726xf32>,
    %c0_265 = arith.constant 0 : index
    %c28_266 = arith.constant 28 : index
    %222 = vector.load %arg9[%c0_265, %c28_266] : memref<8x784xf32, #tpu.memory_space<vmem>>, vector<8x726xf32>
    %c24_267 = arith.constant 24 : index
    %c0_268 = arith.constant 0 : index
    %223 = vector.load %arg12[%c24_267, %c0_268] : memref<72x3659xf32, #tpu.memory_space<vmem>>, vector<8x726xf32>
    tpu.vector_store %arg12[%c24_267, %c0_268], %222 {strides = array<i32>} : memref<72x3659xf32, #tpu.memory_space<vmem>>, vector<8x726xf32>,
    %c0_269 = arith.constant 0 : index
    %c29_270 = arith.constant 29 : index
    %224 = vector.load %arg9[%c0_269, %c29_270] : memref<8x784xf32, #tpu.memory_space<vmem>>, vector<8x726xf32>
    %c32_271 = arith.constant 32 : index
    %c0_272 = arith.constant 0 : index
    %225 = vector.load %arg12[%c32_271, %c0_272] : memref<72x3659xf32, #tpu.memory_space<vmem>>, vector<8x726xf32>
    tpu.vector_store %arg12[%c32_271, %c0_272], %224 {strides = array<i32>} : memref<72x3659xf32, #tpu.memory_space<vmem>>, vector<8x726xf32>,
    %c0_273 = arith.constant 0 : index
    %c30_274 = arith.constant 30 : index
    %226 = vector.load %arg9[%c0_273, %c30_274] : memref<8x784xf32, #tpu.memory_space<vmem>>, vector<8x726xf32>
    %c40_275 = arith.constant 40 : index
    %c0_276 = arith.constant 0 : index
    %227 = vector.load %arg12[%c40_275, %c0_276] : memref<72x3659xf32, #tpu.memory_space<vmem>>, vector<8x726xf32>
    tpu.vector_store %arg12[%c40_275, %c0_276], %226 {strides = array<i32>} : memref<72x3659xf32, #tpu.memory_space<vmem>>, vector<8x726xf32>,
    %c0_277 = arith.constant 0 : index
    %c56_278 = arith.constant 56 : index
    %228 = vector.load %arg9[%c0_277, %c56_278] : memref<8x784xf32, #tpu.memory_space<vmem>>, vector<8x726xf32>
    %c48_279 = arith.constant 48 : index
    %c0_280 = arith.constant 0 : index
    %229 = vector.load %arg12[%c48_279, %c0_280] : memref<72x3659xf32, #tpu.memory_space<vmem>>, vector<8x726xf32>
    tpu.vector_store %arg12[%c48_279, %c0_280], %228 {strides = array<i32>} : memref<72x3659xf32, #tpu.memory_space<vmem>>, vector<8x726xf32>,
    %c0_281 = arith.constant 0 : index
    %c57_282 = arith.constant 57 : index
    %230 = vector.load %arg9[%c0_281, %c57_282] : memref<8x784xf32, #tpu.memory_space<vmem>>, vector<8x726xf32>
    %c56_283 = arith.constant 56 : index
    %c0_284 = arith.constant 0 : index
    %231 = vector.load %arg12[%c56_283, %c0_284] : memref<72x3659xf32, #tpu.memory_space<vmem>>, vector<8x726xf32>
    tpu.vector_store %arg12[%c56_283, %c0_284], %230 {strides = array<i32>} : memref<72x3659xf32, #tpu.memory_space<vmem>>, vector<8x726xf32>,
    %c0_285 = arith.constant 0 : index
    %c58_286 = arith.constant 58 : index
    %232 = vector.load %arg9[%c0_285, %c58_286] : memref<8x784xf32, #tpu.memory_space<vmem>>, vector<8x726xf32>
    %c64_287 = arith.constant 64 : index
    %c0_288 = arith.constant 0 : index
    %233 = vector.load %arg12[%c64_287, %c0_288] : memref<72x3659xf32, #tpu.memory_space<vmem>>, vector<8x726xf32>
    tpu.vector_store %arg12[%c64_287, %c0_288], %232 {strides = array<i32>} : memref<72x3659xf32, #tpu.memory_space<vmem>>, vector<8x726xf32>,
    %c32_289 = arith.constant 32 : index
    %c0_290 = arith.constant 0 : index
    %234 = vector.load %arg2[%c32_289, %c0_290] : memref<56x72xf32, #tpu.memory_space<vmem>>, vector<8x72xf32>
    %c0_291 = arith.constant 0 : index
    %c0_292 = arith.constant 0 : index
    %235 = vector.load %arg12[%c0_291, %c0_292] : memref<72x3659xf32, #tpu.memory_space<vmem>>, vector<72x726xf32>
    %cst_293 = arith.constant dense<0.000000e+00> : vector<8x726xf32>
    %236 = tpu.matmul %234, %235, %cst_293 {dimension_numbers = #tpu.dot_dimension_numbers<[1], [0], [0], [1], [0, 0, 1, 1], [], []>} : vector<8x72xf32>, vector<72x726xf32>, vector<8x726xf32> -> vector<8x726xf32>
    %c32_294 = arith.constant 32 : index
    %c0_295 = arith.constant 0 : index
    %237 = vector.load %arg3[%c32_294, %c0_295] : memref<56x1xf32, #tpu.memory_space<vmem>>, vector<8x1xf32>
    %238 = vector.broadcast %237 : vector<8x1xf32> to vector<8x726xf32>
    %239 = arith.addf %236, %238 : vector<8x726xf32>
    %cst_296 = arith.constant 0.000000e+00 : f32
    %240 = vector.broadcast %cst_296 : f32 to vector<8x726xf32>
    %241 = arith.maximumf %239, %240 : vector<8x726xf32>
    %c0_297 = arith.constant 0 : index
    %c0_298 = arith.constant 0 : index
    %242 = vector.load %arg10[%c0_297, %c0_298] : memref<8x784xf32, #tpu.memory_space<vmem>>, vector<8x726xf32>
    tpu.vector_store %arg10[%c0_297, %c0_298], %241 {strides = array<i32>} : memref<8x784xf32, #tpu.memory_space<vmem>>, vector<8x726xf32>,
    %cst_299 = arith.constant 0.000000e+00 : f32
    %243 = vector.broadcast %cst_299 : f32 to vector<8x58xf32>
    %c0_300 = arith.constant 0 : index
    %c726_301 = arith.constant 726 : index
    %244 = vector.load %arg10[%c0_300, %c726_301] : memref<8x784xf32, #tpu.memory_space<vmem>>, vector<8x58xf32>
    tpu.vector_store %arg10[%c0_300, %c726_301], %243 {strides = array<i32>} : memref<8x784xf32, #tpu.memory_space<vmem>>, vector<8x58xf32>,
    %c0_302 = arith.constant 0 : index
    %c0_303 = arith.constant 0 : index
    %245 = vector.load %arg10[%c0_302, %c0_303] : memref<8x784xf32, #tpu.memory_space<vmem>>, vector<8x640xf32>
    %c0_304 = arith.constant 0 : index
    %c28_305 = arith.constant 28 : index
    %246 = vector.load %arg10[%c0_304, %c28_305] : memref<8x784xf32, #tpu.memory_space<vmem>>, vector<8x640xf32>
    %247 = arith.maximumf %245, %246 : vector<8x640xf32>
    %248 = vector.extract_strided_slice %247 {offsets = [0, 0], sizes = [8, 639], strides = [1, 1]} : vector<8x640xf32> to vector<8x639xf32>
    %249 = vector.extract_strided_slice %247 {offsets = [0, 1], sizes = [8, 639], strides = [1, 1]} : vector<8x640xf32> to vector<8x639xf32>
    %250 = arith.maximumf %248, %249 : vector<8x639xf32>
    %c0_306 = arith.constant 0 : index
    %c0_307 = arith.constant 0 : index
    %251 = vector.load %arg9[%c0_306, %c0_307] : memref<8x784xf32, #tpu.memory_space<vmem>>, vector<8x639xf32>
    tpu.vector_store %arg9[%c0_306, %c0_307], %250 {strides = array<i32>} : memref<8x784xf32, #tpu.memory_space<vmem>>, vector<8x639xf32>,
    %c0_308 = arith.constant 0 : index
    %c0_309 = arith.constant 0 : index
    %252 = vector.load %arg9[%c0_308, %c0_309] : memref<8x784xf32, #tpu.memory_space<vmem>>, vector<8x23xf32>
    %cst_310 = arith.constant dense<0.000000e+00> : vector<8x12xf32>
    %253 = tpu.matmul %252, %13, %cst_310 {dimension_numbers = #tpu.dot_dimension_numbers<[1], [0], [0], [1], [0, 0, 1, 1], [], []>} : vector<8x23xf32>, vector<23x12xf32>, vector<8x12xf32> -> vector<8x12xf32>
    %c0_311 = arith.constant 0 : index
    %c0_312 = arith.constant 0 : index
    %254 = vector.load %arg11[%c0_311, %c0_312] : memref<8x144xf32, #tpu.memory_space<vmem>>, vector<8x12xf32>
    tpu.vector_store %arg11[%c0_311, %c0_312], %253 {strides = array<i32>} : memref<8x144xf32, #tpu.memory_space<vmem>>, vector<8x12xf32>,
    %c0_313 = arith.constant 0 : index
    %c56_314 = arith.constant 56 : index
    %255 = vector.load %arg9[%c0_313, %c56_314] : memref<8x784xf32, #tpu.memory_space<vmem>>, vector<8x23xf32>
    %cst_315 = arith.constant dense<0.000000e+00> : vector<8x12xf32>
    %256 = tpu.matmul %255, %13, %cst_315 {dimension_numbers = #tpu.dot_dimension_numbers<[1], [0], [0], [1], [0, 0, 1, 1], [], []>} : vector<8x23xf32>, vector<23x12xf32>, vector<8x12xf32> -> vector<8x12xf32>
    %c0_316 = arith.constant 0 : index
    %c12 = arith.constant 12 : index
    %257 = vector.load %arg11[%c0_316, %c12] : memref<8x144xf32, #tpu.memory_space<vmem>>, vector<8x12xf32>
    tpu.vector_store %arg11[%c0_316, %c12], %256 {strides = array<i32>} : memref<8x144xf32, #tpu.memory_space<vmem>>, vector<8x12xf32>,
    %c0_317 = arith.constant 0 : index
    %c112_318 = arith.constant 112 : index
    %258 = vector.load %arg9[%c0_317, %c112_318] : memref<8x784xf32, #tpu.memory_space<vmem>>, vector<8x23xf32>
    %cst_319 = arith.constant dense<0.000000e+00> : vector<8x12xf32>
    %259 = tpu.matmul %258, %13, %cst_319 {dimension_numbers = #tpu.dot_dimension_numbers<[1], [0], [0], [1], [0, 0, 1, 1], [], []>} : vector<8x23xf32>, vector<23x12xf32>, vector<8x12xf32> -> vector<8x12xf32>
    %c0_320 = arith.constant 0 : index
    %c24_321 = arith.constant 24 : index
    %260 = vector.load %arg11[%c0_320, %c24_321] : memref<8x144xf32, #tpu.memory_space<vmem>>, vector<8x12xf32>
    tpu.vector_store %arg11[%c0_320, %c24_321], %259 {strides = array<i32>} : memref<8x144xf32, #tpu.memory_space<vmem>>, vector<8x12xf32>,
    %c0_322 = arith.constant 0 : index
    %c168_323 = arith.constant 168 : index
    %261 = vector.load %arg9[%c0_322, %c168_323] : memref<8x784xf32, #tpu.memory_space<vmem>>, vector<8x23xf32>
    %cst_324 = arith.constant dense<0.000000e+00> : vector<8x12xf32>
    %262 = tpu.matmul %261, %13, %cst_324 {dimension_numbers = #tpu.dot_dimension_numbers<[1], [0], [0], [1], [0, 0, 1, 1], [], []>} : vector<8x23xf32>, vector<23x12xf32>, vector<8x12xf32> -> vector<8x12xf32>
    %c0_325 = arith.constant 0 : index
    %c36 = arith.constant 36 : index
    %263 = vector.load %arg11[%c0_325, %c36] : memref<8x144xf32, #tpu.memory_space<vmem>>, vector<8x12xf32>
    tpu.vector_store %arg11[%c0_325, %c36], %262 {strides = array<i32>} : memref<8x144xf32, #tpu.memory_space<vmem>>, vector<8x12xf32>,
    %c0_326 = arith.constant 0 : index
    %c224_327 = arith.constant 224 : index
    %264 = vector.load %arg9[%c0_326, %c224_327] : memref<8x784xf32, #tpu.memory_space<vmem>>, vector<8x23xf32>
    %cst_328 = arith.constant dense<0.000000e+00> : vector<8x12xf32>
    %265 = tpu.matmul %264, %13, %cst_328 {dimension_numbers = #tpu.dot_dimension_numbers<[1], [0], [0], [1], [0, 0, 1, 1], [], []>} : vector<8x23xf32>, vector<23x12xf32>, vector<8x12xf32> -> vector<8x12xf32>
    %c0_329 = arith.constant 0 : index
    %c48_330 = arith.constant 48 : index
    %266 = vector.load %arg11[%c0_329, %c48_330] : memref<8x144xf32, #tpu.memory_space<vmem>>, vector<8x12xf32>
    tpu.vector_store %arg11[%c0_329, %c48_330], %265 {strides = array<i32>} : memref<8x144xf32, #tpu.memory_space<vmem>>, vector<8x12xf32>,
    %c0_331 = arith.constant 0 : index
    %c280_332 = arith.constant 280 : index
    %267 = vector.load %arg9[%c0_331, %c280_332] : memref<8x784xf32, #tpu.memory_space<vmem>>, vector<8x23xf32>
    %cst_333 = arith.constant dense<0.000000e+00> : vector<8x12xf32>
    %268 = tpu.matmul %267, %13, %cst_333 {dimension_numbers = #tpu.dot_dimension_numbers<[1], [0], [0], [1], [0, 0, 1, 1], [], []>} : vector<8x23xf32>, vector<23x12xf32>, vector<8x12xf32> -> vector<8x12xf32>
    %c0_334 = arith.constant 0 : index
    %c60 = arith.constant 60 : index
    %269 = vector.load %arg11[%c0_334, %c60] : memref<8x144xf32, #tpu.memory_space<vmem>>, vector<8x12xf32>
    tpu.vector_store %arg11[%c0_334, %c60], %268 {strides = array<i32>} : memref<8x144xf32, #tpu.memory_space<vmem>>, vector<8x12xf32>,
    %c0_335 = arith.constant 0 : index
    %c336_336 = arith.constant 336 : index
    %270 = vector.load %arg9[%c0_335, %c336_336] : memref<8x784xf32, #tpu.memory_space<vmem>>, vector<8x23xf32>
    %cst_337 = arith.constant dense<0.000000e+00> : vector<8x12xf32>
    %271 = tpu.matmul %270, %13, %cst_337 {dimension_numbers = #tpu.dot_dimension_numbers<[1], [0], [0], [1], [0, 0, 1, 1], [], []>} : vector<8x23xf32>, vector<23x12xf32>, vector<8x12xf32> -> vector<8x12xf32>
    %c0_338 = arith.constant 0 : index
    %c72 = arith.constant 72 : index
    %272 = vector.load %arg11[%c0_338, %c72] : memref<8x144xf32, #tpu.memory_space<vmem>>, vector<8x12xf32>
    tpu.vector_store %arg11[%c0_338, %c72], %271 {strides = array<i32>} : memref<8x144xf32, #tpu.memory_space<vmem>>, vector<8x12xf32>,
    %c0_339 = arith.constant 0 : index
    %c392_340 = arith.constant 392 : index
    %273 = vector.load %arg9[%c0_339, %c392_340] : memref<8x784xf32, #tpu.memory_space<vmem>>, vector<8x23xf32>
    %cst_341 = arith.constant dense<0.000000e+00> : vector<8x12xf32>
    %274 = tpu.matmul %273, %13, %cst_341 {dimension_numbers = #tpu.dot_dimension_numbers<[1], [0], [0], [1], [0, 0, 1, 1], [], []>} : vector<8x23xf32>, vector<23x12xf32>, vector<8x12xf32> -> vector<8x12xf32>
    %c0_342 = arith.constant 0 : index
    %c84_343 = arith.constant 84 : index
    %275 = vector.load %arg11[%c0_342, %c84_343] : memref<8x144xf32, #tpu.memory_space<vmem>>, vector<8x12xf32>
    tpu.vector_store %arg11[%c0_342, %c84_343], %274 {strides = array<i32>} : memref<8x144xf32, #tpu.memory_space<vmem>>, vector<8x12xf32>,
    %c0_344 = arith.constant 0 : index
    %c448_345 = arith.constant 448 : index
    %276 = vector.load %arg9[%c0_344, %c448_345] : memref<8x784xf32, #tpu.memory_space<vmem>>, vector<8x23xf32>
    %cst_346 = arith.constant dense<0.000000e+00> : vector<8x12xf32>
    %277 = tpu.matmul %276, %13, %cst_346 {dimension_numbers = #tpu.dot_dimension_numbers<[1], [0], [0], [1], [0, 0, 1, 1], [], []>} : vector<8x23xf32>, vector<23x12xf32>, vector<8x12xf32> -> vector<8x12xf32>
    %c0_347 = arith.constant 0 : index
    %c96 = arith.constant 96 : index
    %278 = vector.load %arg11[%c0_347, %c96] : memref<8x144xf32, #tpu.memory_space<vmem>>, vector<8x12xf32>
    tpu.vector_store %arg11[%c0_347, %c96], %277 {strides = array<i32>} : memref<8x144xf32, #tpu.memory_space<vmem>>, vector<8x12xf32>,
    %c0_348 = arith.constant 0 : index
    %c504_349 = arith.constant 504 : index
    %279 = vector.load %arg9[%c0_348, %c504_349] : memref<8x784xf32, #tpu.memory_space<vmem>>, vector<8x23xf32>
    %cst_350 = arith.constant dense<0.000000e+00> : vector<8x12xf32>
    %280 = tpu.matmul %279, %13, %cst_350 {dimension_numbers = #tpu.dot_dimension_numbers<[1], [0], [0], [1], [0, 0, 1, 1], [], []>} : vector<8x23xf32>, vector<23x12xf32>, vector<8x12xf32> -> vector<8x12xf32>
    %c0_351 = arith.constant 0 : index
    %c108 = arith.constant 108 : index
    %281 = vector.load %arg11[%c0_351, %c108] : memref<8x144xf32, #tpu.memory_space<vmem>>, vector<8x12xf32>
    tpu.vector_store %arg11[%c0_351, %c108], %280 {strides = array<i32>} : memref<8x144xf32, #tpu.memory_space<vmem>>, vector<8x12xf32>,
    %c0_352 = arith.constant 0 : index
    %c560_353 = arith.constant 560 : index
    %282 = vector.load %arg9[%c0_352, %c560_353] : memref<8x784xf32, #tpu.memory_space<vmem>>, vector<8x23xf32>
    %cst_354 = arith.constant dense<0.000000e+00> : vector<8x12xf32>
    %283 = tpu.matmul %282, %13, %cst_354 {dimension_numbers = #tpu.dot_dimension_numbers<[1], [0], [0], [1], [0, 0, 1, 1], [], []>} : vector<8x23xf32>, vector<23x12xf32>, vector<8x12xf32> -> vector<8x12xf32>
    %c0_355 = arith.constant 0 : index
    %c120 = arith.constant 120 : index
    %284 = vector.load %arg11[%c0_355, %c120] : memref<8x144xf32, #tpu.memory_space<vmem>>, vector<8x12xf32>
    tpu.vector_store %arg11[%c0_355, %c120], %283 {strides = array<i32>} : memref<8x144xf32, #tpu.memory_space<vmem>>, vector<8x12xf32>,
    %c0_356 = arith.constant 0 : index
    %c616_357 = arith.constant 616 : index
    %285 = vector.load %arg9[%c0_356, %c616_357] : memref<8x784xf32, #tpu.memory_space<vmem>>, vector<8x23xf32>
    %cst_358 = arith.constant dense<0.000000e+00> : vector<8x12xf32>
    %286 = tpu.matmul %285, %13, %cst_358 {dimension_numbers = #tpu.dot_dimension_numbers<[1], [0], [0], [1], [0, 0, 1, 1], [], []>} : vector<8x23xf32>, vector<23x12xf32>, vector<8x12xf32> -> vector<8x12xf32>
    %c0_359 = arith.constant 0 : index
    %c132 = arith.constant 132 : index
    %287 = vector.load %arg11[%c0_359, %c132] : memref<8x144xf32, #tpu.memory_space<vmem>>, vector<8x12xf32>
    tpu.vector_store %arg11[%c0_359, %c132], %286 {strides = array<i32>} : memref<8x144xf32, #tpu.memory_space<vmem>>, vector<8x12xf32>,
    %c0_360 = arith.constant 0 : index
    %c0_361 = arith.constant 0 : index
    %288 = vector.load %arg11[%c0_360, %c0_361] : memref<8x144xf32, #tpu.memory_space<vmem>>, vector<8x118xf32>
    %c0_362 = arith.constant 0 : index
    %c0_363 = arith.constant 0 : index
    %289 = vector.load %arg12[%c0_362, %c0_363] : memref<72x3659xf32, #tpu.memory_space<vmem>>, vector<8x118xf32>
    tpu.vector_store %arg12[%c0_362, %c0_363], %288 {strides = array<i32>} : memref<72x3659xf32, #tpu.memory_space<vmem>>, vector<8x118xf32>,
    %c0_364 = arith.constant 0 : index
    %c1_365 = arith.constant 1 : index
    %290 = vector.load %arg11[%c0_364, %c1_365] : memref<8x144xf32, #tpu.memory_space<vmem>>, vector<8x118xf32>
    %c8_366 = arith.constant 8 : index
    %c0_367 = arith.constant 0 : index
    %291 = vector.load %arg12[%c8_366, %c0_367] : memref<72x3659xf32, #tpu.memory_space<vmem>>, vector<8x118xf32>
    tpu.vector_store %arg12[%c8_366, %c0_367], %290 {strides = array<i32>} : memref<72x3659xf32, #tpu.memory_space<vmem>>, vector<8x118xf32>,
    %c0_368 = arith.constant 0 : index
    %c2_369 = arith.constant 2 : index
    %292 = vector.load %arg11[%c0_368, %c2_369] : memref<8x144xf32, #tpu.memory_space<vmem>>, vector<8x118xf32>
    %c16_370 = arith.constant 16 : index
    %c0_371 = arith.constant 0 : index
    %293 = vector.load %arg12[%c16_370, %c0_371] : memref<72x3659xf32, #tpu.memory_space<vmem>>, vector<8x118xf32>
    tpu.vector_store %arg12[%c16_370, %c0_371], %292 {strides = array<i32>} : memref<72x3659xf32, #tpu.memory_space<vmem>>, vector<8x118xf32>,
    %c0_372 = arith.constant 0 : index
    %c12_373 = arith.constant 12 : index
    %294 = vector.load %arg11[%c0_372, %c12_373] : memref<8x144xf32, #tpu.memory_space<vmem>>, vector<8x118xf32>
    %c24_374 = arith.constant 24 : index
    %c0_375 = arith.constant 0 : index
    %295 = vector.load %arg12[%c24_374, %c0_375] : memref<72x3659xf32, #tpu.memory_space<vmem>>, vector<8x118xf32>
    tpu.vector_store %arg12[%c24_374, %c0_375], %294 {strides = array<i32>} : memref<72x3659xf32, #tpu.memory_space<vmem>>, vector<8x118xf32>,
    %c0_376 = arith.constant 0 : index
    %c13 = arith.constant 13 : index
    %296 = vector.load %arg11[%c0_376, %c13] : memref<8x144xf32, #tpu.memory_space<vmem>>, vector<8x118xf32>
    %c32_377 = arith.constant 32 : index
    %c0_378 = arith.constant 0 : index
    %297 = vector.load %arg12[%c32_377, %c0_378] : memref<72x3659xf32, #tpu.memory_space<vmem>>, vector<8x118xf32>
    tpu.vector_store %arg12[%c32_377, %c0_378], %296 {strides = array<i32>} : memref<72x3659xf32, #tpu.memory_space<vmem>>, vector<8x118xf32>,
    %c0_379 = arith.constant 0 : index
    %c14 = arith.constant 14 : index
    %298 = vector.load %arg11[%c0_379, %c14] : memref<8x144xf32, #tpu.memory_space<vmem>>, vector<8x118xf32>
    %c40_380 = arith.constant 40 : index
    %c0_381 = arith.constant 0 : index
    %299 = vector.load %arg12[%c40_380, %c0_381] : memref<72x3659xf32, #tpu.memory_space<vmem>>, vector<8x118xf32>
    tpu.vector_store %arg12[%c40_380, %c0_381], %298 {strides = array<i32>} : memref<72x3659xf32, #tpu.memory_space<vmem>>, vector<8x118xf32>,
    %c0_382 = arith.constant 0 : index
    %c24_383 = arith.constant 24 : index
    %300 = vector.load %arg11[%c0_382, %c24_383] : memref<8x144xf32, #tpu.memory_space<vmem>>, vector<8x118xf32>
    %c48_384 = arith.constant 48 : index
    %c0_385 = arith.constant 0 : index
    %301 = vector.load %arg12[%c48_384, %c0_385] : memref<72x3659xf32, #tpu.memory_space<vmem>>, vector<8x118xf32>
    tpu.vector_store %arg12[%c48_384, %c0_385], %300 {strides = array<i32>} : memref<72x3659xf32, #tpu.memory_space<vmem>>, vector<8x118xf32>,
    %c0_386 = arith.constant 0 : index
    %c25 = arith.constant 25 : index
    %302 = vector.load %arg11[%c0_386, %c25] : memref<8x144xf32, #tpu.memory_space<vmem>>, vector<8x118xf32>
    %c56_387 = arith.constant 56 : index
    %c0_388 = arith.constant 0 : index
    %303 = vector.load %arg12[%c56_387, %c0_388] : memref<72x3659xf32, #tpu.memory_space<vmem>>, vector<8x118xf32>
    tpu.vector_store %arg12[%c56_387, %c0_388], %302 {strides = array<i32>} : memref<72x3659xf32, #tpu.memory_space<vmem>>, vector<8x118xf32>,
    %c0_389 = arith.constant 0 : index
    %c26 = arith.constant 26 : index
    %304 = vector.load %arg11[%c0_389, %c26] : memref<8x144xf32, #tpu.memory_space<vmem>>, vector<8x118xf32>
    %c64_390 = arith.constant 64 : index
    %c0_391 = arith.constant 0 : index
    %305 = vector.load %arg12[%c64_390, %c0_391] : memref<72x3659xf32, #tpu.memory_space<vmem>>, vector<8x118xf32>
    tpu.vector_store %arg12[%c64_390, %c0_391], %304 {strides = array<i32>} : memref<72x3659xf32, #tpu.memory_space<vmem>>, vector<8x118xf32>,
    %c40_392 = arith.constant 40 : index
    %c0_393 = arith.constant 0 : index
    %306 = vector.load %arg2[%c40_392, %c0_393] : memref<56x72xf32, #tpu.memory_space<vmem>>, vector<16x72xf32>
    %c0_394 = arith.constant 0 : index
    %c0_395 = arith.constant 0 : index
    %307 = vector.load %arg12[%c0_394, %c0_395] : memref<72x3659xf32, #tpu.memory_space<vmem>>, vector<72x118xf32>
    %cst_396 = arith.constant dense<0.000000e+00> : vector<16x118xf32>
    %308 = tpu.matmul %306, %307, %cst_396 {dimension_numbers = #tpu.dot_dimension_numbers<[1], [0], [0], [1], [0, 0, 1, 1], [], []>} : vector<16x72xf32>, vector<72x118xf32>, vector<16x118xf32> -> vector<16x118xf32>
    %c40_397 = arith.constant 40 : index
    %c0_398 = arith.constant 0 : index
    %309 = vector.load %arg3[%c40_397, %c0_398] : memref<56x1xf32, #tpu.memory_space<vmem>>, vector<16x1xf32>
    %310 = vector.broadcast %309 : vector<16x1xf32> to vector<16x118xf32>
    %311 = arith.addf %308, %310 : vector<16x118xf32>
    %cst_399 = arith.constant 0.000000e+00 : f32
    %312 = vector.broadcast %cst_399 : f32 to vector<16x118xf32>
    %313 = arith.maximumf %311, %312 : vector<16x118xf32>
    %314 = vector.extract_strided_slice %313 {offsets = [0, 0], sizes = [16, 10], strides = [1, 1]} : vector<16x118xf32> to vector<16x10xf32>
    %315 = vector.extract_strided_slice %313 {offsets = [0, 12], sizes = [16, 10], strides = [1, 1]} : vector<16x118xf32> to vector<16x10xf32>
    %316 = arith.addf %314, %315 : vector<16x10xf32>
    %317 = vector.extract_strided_slice %313 {offsets = [0, 24], sizes = [16, 10], strides = [1, 1]} : vector<16x118xf32> to vector<16x10xf32>
    %318 = arith.addf %316, %317 : vector<16x10xf32>
    %319 = vector.extract_strided_slice %313 {offsets = [0, 36], sizes = [16, 10], strides = [1, 1]} : vector<16x118xf32> to vector<16x10xf32>
    %320 = arith.addf %318, %319 : vector<16x10xf32>
    %321 = vector.extract_strided_slice %313 {offsets = [0, 48], sizes = [16, 10], strides = [1, 1]} : vector<16x118xf32> to vector<16x10xf32>
    %322 = arith.addf %320, %321 : vector<16x10xf32>
    %323 = vector.extract_strided_slice %313 {offsets = [0, 60], sizes = [16, 10], strides = [1, 1]} : vector<16x118xf32> to vector<16x10xf32>
    %324 = arith.addf %322, %323 : vector<16x10xf32>
    %325 = vector.extract_strided_slice %313 {offsets = [0, 72], sizes = [16, 10], strides = [1, 1]} : vector<16x118xf32> to vector<16x10xf32>
    %326 = arith.addf %324, %325 : vector<16x10xf32>
    %327 = vector.extract_strided_slice %313 {offsets = [0, 84], sizes = [16, 10], strides = [1, 1]} : vector<16x118xf32> to vector<16x10xf32>
    %328 = arith.addf %326, %327 : vector<16x10xf32>
    %329 = vector.extract_strided_slice %313 {offsets = [0, 96], sizes = [16, 10], strides = [1, 1]} : vector<16x118xf32> to vector<16x10xf32>
    %330 = arith.addf %328, %329 : vector<16x10xf32>
    %331 = vector.extract_strided_slice %313 {offsets = [0, 108], sizes = [16, 10], strides = [1, 1]} : vector<16x118xf32> to vector<16x10xf32>
    %332 = arith.addf %330, %331 : vector<16x10xf32>
    %cst_400 = arith.constant dense<0.000000e+00> : vector<16xf32>
    %333 = vector.multi_reduction <add>, %332, %cst_400 [1] : vector<16x10xf32> to vector<16xf32>
    %334 = vector.shape_cast %333 : vector<16xf32> to vector<16x1xf32>
    %cst_401 = arith.constant 0.00999999977 : f32
    %335 = vector.broadcast %cst_401 : f32 to vector<16x1xf32>
    %336 = arith.mulf %334, %335 : vector<16x1xf32>
    %337 = vector.shape_cast %336 : vector<16x1xf32> to vector<1x16x1xf32>
    %c0_402 = arith.constant 0 : index
    %c0_403 = arith.constant 0 : index
    %c0_404 = arith.constant 0 : index
    %338 = vector.load %arg4[%c0_402, %c0_403, %c0_404] : memref<1x16x1xf32, #tpu.memory_space<vmem>>, vector<1x16x1xf32>
    tpu.vector_store %arg4[%c0_402, %c0_403, %c0_404], %337 {strides = array<i32>} : memref<1x16x1xf32, #tpu.memory_space<vmem>>, vector<1x16x1xf32>,
    return
  }
  func.func @transform_0(%arg0: i32) -> (i32, i32, i32) {
    %c0_i32 = arith.constant 0 : i32
    %c0_i32_0 = arith.constant 0 : i32
    %c0_i32_1 = arith.constant 0 : i32
    return %arg0, %c0_i32, %c0_i32_0 : i32, i32, i32
  }
  func.func @transform_1(%arg0: i32) -> (i32, i32) {
    %c0_i32 = arith.constant 0 : i32
    %c0_i32_0 = arith.constant 0 : i32
    %c0_i32_1 = arith.constant 0 : i32
    return %c0_i32, %c0_i32_0 : i32, i32
  }
  func.func @transform_2(%arg0: i32) -> (i32, i32) {
    %c0_i32 = arith.constant 0 : i32
    %c0_i32_0 = arith.constant 0 : i32
    %c0_i32_1 = arith.constant 0 : i32
    return %c0_i32, %c0_i32_0 : i32, i32
  }
  func.func @transform_3(%arg0: i32) -> (i32, i32, i32) {
    %c0_i32 = arith.constant 0 : i32
    %c0_i32_0 = arith.constant 0 : i32
    %c0_i32_1 = arith.constant 0 : i32
    return %arg0, %c0_i32, %c0_i32_0 : i32, i32, i32
  }
}

</mosaic_0001>

<llo_original>
// kernel: _lambda_.1
$region0: #{_lambda_.1}
  #allocation0 [shape = 'u32[]', space=smem, size = 0x4, offset = 0x4, fixed_abs, tag = 'smem constant byte address 0x4 - core index']
  #allocation1 [shape = 'u32[72,128]{1,0:T(1,128)}', space=vmem, size = 0x9000, scoped, tag = 'internal scratch']
  #allocation2 [shape = 'f32[8,3721]{1,0:T(8,128)}', space=vmem, size = 0x1e000, scoped, tag = 'scratch operand']
  #allocation3 [shape = 'f32[8,3721]{1,0:T(8,128)}', space=vmem, size = 0x1e000, scoped, tag = 'scratch operand']
  #allocation4 [shape = 'f32[8,3721]{1,0:T(8,128)}', space=vmem, size = 0x1e000, scoped, tag = 'scratch operand']
  #allocation5 [shape = 'f32[8,784]{1,0:T(8,128)}', space=vmem, size = 0x7000, scoped, tag = 'scratch operand']
  #allocation6 [shape = 'f32[8,784]{1,0:T(8,128)}', space=vmem, size = 0x7000, scoped, tag = 'scratch operand']
  #allocation7 [shape = 'f32[8,784]{1,0:T(8,128)}', space=vmem, size = 0x7000, scoped, tag = 'scratch operand']
  #allocation8 [shape = 'f32[8,144]{1,0:T(8,128)}', space=vmem, size = 0x2000, scoped, tag = 'scratch operand']
  #allocation9 [shape = 'f32[72,3659]{1,0:T(8,128)}', space=vmem, size = 0x105000, scoped, tag = 'scratch operand']
  %s0 = inlined_call_operand.vmem [shape: f32[2,4,3721], index: 0, kind: input, shape index: {}]
  %s1 = inlined_call_operand.vmem [shape: f32[56,72], index: 1, kind: input, shape index: {}]
  %s2 = inlined_call_operand.vmem [shape: f32[56,1], index: 2, kind: input, shape index: {}]
  %s3 = inlined_call_operand.vmem [shape: f32[2,16,1], index: 3, kind: output, shape index: {}]
  %s4 = sld [smem:[#allocation0]]
  $region45: #{_lambda_.1} parent=0
    _
  %s6 = ssub.s32 1, %s4
  %s7 = scalar_select 0, %s6, %s4
  loop: start=0, step=1, limit=4
  $region2: #{_lambda_.1} parent=0 // loop_pre_header
    _
  $region3: #{_lambda_.1} parent=0 // loop_header
    %s9 = sphi 0, %s13
    %p10 = scmp.ge.s32.totalorder %s9, 4
    %s19 = sphi 0, %s21
    %s22 = sphi 0, %s19
    %s23 = sphi 0, %s22
    %s39 = sphi 0, %s23
    %s43 = sphi 0, %s43
    %s45 = sphi 0, %s43
    %s46 = sphi 0, %s45
    %s60 = sphi 0, %s46
    %s64 = sphi 0, %s64
    %s66 = sphi 0, %s64
    %s67 = sphi 0, %s66
    %s81 = sphi 0, %s67
    %s87 = sphi 0, %s89
    %s90 = sphi 0, %s87
    %s91 = sphi 0, %s90
    %s107 = sphi 0, %s91
  $region4: #{_lambda_.1} parent=0 // loop_header_branch
    %12 = sbr.rel (%p10) target = $region8
  $region5: #{_lambda_.1} parent=0 // loop_body
    %s14 = ssub.s32 %s9, 1
    %s15 = ssub.s32 %s9, 2
    %s16 = sadd.s32 %s9, 1
    %s17 = ssub.s32 %s9, %s16
    %p18 = scmp.eq.s32.totalorder %s17, 0
    %s20 = sadd.s32 %s19, 1
    %s21 = scalar_select %p18, %s19, %s20
    %p24 = pneg %p18
    %p25 = scmp.eq.s32.totalorder %s9, 1
    %p26 = por %p24, %p25
    %p27 = scmp.ne.s32.totalorder %s19, %s22
    %p28 = scmp.eq.s32.totalorder %s9, 0
    %p29 = por %p27, %p28
    %p30 = scmp.ne.s32.totalorder %s19, %s22
    %p31 = scmp.eq.s32.totalorder %s14, 1
    %p32 = por %p30, %p31
    %p33 = scmp.ne.s32.totalorder %s22, %s23
    %p34 = scmp.eq.s32.totalorder %s14, 0
    %p35 = por %p33, %p34
    %p36 = scmp.ne.s32.totalorder %s22, %s23
    %p37 = scmp.eq.s32.totalorder %s15, 1
    %p38 = por %p36, %p37
    %p40 = scmp.ne.s32.totalorder %s23, %s39
    %p41 = scmp.eq.s32.totalorder %s15, 0
    %p42 = por %p40, %p41
    %s44 = sadd.s32 %s43, 1
    %p47 = scmp.eq.s32.totalorder %s9, 1
    %p48 = scmp.ne.s32.totalorder %s43, %s45
    %p49 = scmp.eq.s32.totalorder %s9, 0
    %p50 = por %p48, %p49
    %p51 = scmp.ne.s32.totalorder %s43, %s45
    %p52 = scmp.eq.s32.totalorder %s14, 1
    %p53 = por %p51, %p52
    %p54 = scmp.ne.s32.totalorder %s45, %s46
    %p55 = scmp.eq.s32.totalorder %s14, 0
    %p56 = por %p54, %p55
    %p57 = scmp.ne.s32.totalorder %s45, %s46
    %p58 = scmp.eq.s32.totalorder %s15, 1
    %p59 = por %p57, %p58
    %p61 = scmp.ne.s32.totalorder %s46, %s60
    %p62 = scmp.eq.s32.totalorder %s15, 0
    %p63 = por %p61, %p62
    %s65 = sadd.s32 %s64, 1
    %p68 = scmp.eq.s32.totalorder %s9, 1
    %p69 = scmp.ne.s32.totalorder %s64, %s66
    %p70 = scmp.eq.s32.totalorder %s9, 0
    %p71 = por %p69, %p70
    %p72 = scmp.ne.s32.totalorder %s64, %s66
    %p73 = scmp.eq.s32.totalorder %s14, 1
    %p74 = por %p72, %p73
    %p75 = scmp.ne.s32.totalorder %s66, %s67
    %p76 = scmp.eq.s32.totalorder %s14, 0
    %p77 = por %p75, %p76
    %p78 = scmp.ne.s32.totalorder %s66, %s67
    %p79 = scmp.eq.s32.totalorder %s15, 1
    %p80 = por %p78, %p79
    %p82 = scmp.ne.s32.totalorder %s67, %s81
    %p83 = scmp.eq.s32.totalorder %s15, 0
    %p84 = por %p82, %p83
    %s85 = ssub.s32 %s9, %s16
    %p86 = scmp.eq.s32.totalorder %s85, 0
    %s88 = sadd.s32 %s87, 1
    %s89 = scalar_select %p86, %s87, %s88
    %p92 = pneg %p86
    %p93 = scmp.eq.s32.totalorder %s9, 1
    %p94 = por %p92, %p93
    %p95 = scmp.ne.s32.totalorder %s87, %s90
    %p96 = scmp.eq.s32.totalorder %s9, 0
    %p97 = por %p95, %p96
    %p98 = scmp.ne.s32.totalorder %s87, %s90
    %p99 = scmp.eq.s32.totalorder %s14, 1
    %p100 = por %p98, %p99
    %p101 = scmp.ne.s32.totalorder %s90, %s91
    %p102 = scmp.eq.s32.totalorder %s14, 0
    %p103 = por %p101, %p102
    %p104 = scmp.ne.s32.totalorder %s90, %s91
    %p105 = scmp.eq.s32.totalorder %s15, 1
    %p106 = por %p104, %p105
    %p108 = scmp.ne.s32.totalorder %s91, %s107
    %p109 = scmp.eq.s32.totalorder %s15, 0
    %p110 = por %p108, %p109
    %p111 = scmp.le.s32.totalorder 1, %s9
    %p112 = scmp.lt.s32.totalorder %s9, 3
    %p113 = pnand %p111, %p112
    %p114 = pneg %p113
    // Predicated region
    $region9: #{_lambda_.1} parent=5 // pred_check
      _
    $region10: #{_lambda_.1} parent=5 // pred_check_branch
      %116 = sbr.rel (%p113) target = $region12
    $region11: #{_lambda_.1} parent=5 // pred_region
      %s117 = ssub.s32 %s9, 1
      // Predicated region
      $region13: #{_lambda_.1} parent=11 // pred_check
        %p118 = pneg %p56
      $region14: #{_lambda_.1} parent=11 // pred_check_branch
        %120 = sbr.rel (%p118) target = $region16
      $region15: #{_lambda_.1} parent=11 // pred_region
        _
      $region16: #{_lambda_.1} parent=11 // pred_fallthru
        _
      // Predicated region
      $region17: #{_lambda_.1} parent=11 // pred_check
        %p121 = pneg %p77
      $region18: #{_lambda_.1} parent=11 // pred_check_branch
        %123 = sbr.rel (%p121) target = $region20
      $region19: #{_lambda_.1} parent=11 // pred_region
        _
      $region20: #{_lambda_.1} parent=11 // pred_fallthru
        _
    $region12: #{_lambda_.1} parent=5 // pred_fallthru
      _
    %p124 = scmp.lt.s32.totalorder %s9, 2
    // Predicated region
    $region21: #{_lambda_.1} parent=5 // pred_check
      %p125 = pneg %p124
    $region22: #{_lambda_.1} parent=5 // pred_check_branch
      %127 = sbr.rel (%p125) target = $region24
    $region23: #{_lambda_.1} parent=5 // pred_region
      // Predicated region
      $region25: #{_lambda_.1} parent=23 // pred_check
        %p128 = pneg %p29
      $region26: #{_lambda_.1} parent=23 // pred_check_branch
        %130 = sbr.rel (%p128) target = $region28
      $region27: #{_lambda_.1} parent=23 // pred_region
        %p131 = scmp.lt.s32.totalorder %s9, 1
        %s132 = scalar_select %p131, %s9, 1
        %s133 = smul.addr %s132, 30
        %s134 = smul.addr %s133, 4
        %s135 = scalar_lea.vmem %s0, %s134
      $region28: #{_lambda_.1} parent=23 // pred_fallthru
        _
    $region24: #{_lambda_.1} parent=5 // pred_fallthru
      _
    %p136 = scmp.le.s32.totalorder 1, %s9
    %p137 = scmp.lt.s32.totalorder %s9, 3
    %p138 = pnand %p136, %p137
    %p139 = pneg %p138
    // Predicated region
    $region29: #{_lambda_.1} parent=5 // pred_check
      _
    $region30: #{_lambda_.1} parent=5 // pred_check_branch
      %141 = sbr.rel (%p138) target = $region32
    $region31: #{_lambda_.1} parent=5 // pred_region
      %s142 = ssub.s32 %s9, 1
      %p143 = scmp.lt.s32.totalorder %s14, 1
      %s144 = scalar_select %p143, %s14, 1
      %s145 = smul.addr %s144, 30
      %s146 = smul.addr %s145, 4
      %s147 = scalar_lea.vmem %s0, %s146
      %p148 = pneg %p35
      %p149 = pneg %p32
      %p150 = pneg %p56
      %p151 = pneg %p53
      %p152 = pneg %p77
      %p153 = pneg %p74
      %p154 = pneg %p103
      %p155 = pneg %p100
      %p156 = scmp.lt.s32.totalorder %s14, 1
      %s157 = scalar_select %p156, %s14, 1
      %s158 = smul.addr %s157, 2
      %s159 = smul.addr %s158, 8
      %s160 = scalar_lea.vmem %s3, %s159
      %p161 = scmp.lt.s32.totalorder %s14, 1
      %s162 = scalar_select %p161, %s14, 1
      %s163 = smul.addr %s162, 30
      %s164 = smul.addr %s163, 4
      %s165 = scalar_lea.vmem %s0, %s164
      %p166 = scmp.lt.s32.totalorder %s14, 1
      %s167 = scalar_select %p166, %s14, 1
      %s168 = smul.addr %s167, 2
      %s169 = smul.addr %s168, 8
      %s170 = scalar_lea.vmem %s3, %s169
      %v171 = vlaneseq
      %v172 = vshrl.u32 %v171, 7
      %v173 = vadd.s32 %v172, 8
      %v174 = vadd.s32 %v172, 16
      %v175 = vadd.s32 %v172, 24
      %v176 = vadd.s32 %v172, 32
      %v177 = vadd.s32 %v172, 40
      %v178 = vadd.s32 %v172, 48
      %v179 = vlaneseq
      %v180 = vand.u32 %v179, 127
      %v181 = vmul.u32 %v180, 2
      %vm182 = vcmp.eq.s32.totalorder %v172, %v181
      %vm183 = vcmp.eq.s32.totalorder %v173, %v181
      %vm184 = vcmp.eq.s32.totalorder %v174, %v181
      %vm185 = vcmp.eq.s32.totalorder %v175, %v181
      %vm186 = vcmp.eq.s32.totalorder %v176, %v181
      %vm187 = vcmp.eq.s32.totalorder %v177, %v181
      %vm188 = vcmp.eq.s32.totalorder %v178, %v181
      %v189 = vsel %vm182, 1, 0
      %v190 = vsel %vm183, 1, 0
      %v191 = vsel %vm184, 1, 0
      %v192 = vsel %vm185, 1, 0
      %v193 = vsel %vm186, 1, 0
      %v194 = vsel %vm187, 1, 0
      %v195 = vsel %vm188, 1, 0
      %v196 = vcvt.s32.f32 %v189
      %v197 = vcvt.s32.f32 %v190
      %v198 = vcvt.s32.f32 %v191
      %v199 = vcvt.s32.f32 %v192
      %v200 = vcvt.s32.f32 %v193
      %v201 = vcvt.s32.f32 %v194
      %v202 = vcvt.s32.f32 %v195
      %v203 = vld [vmem:[%s165] sm:$0xff]
      %v204 = vld [vmem:[%s165 + $0x8] sm:$0xff]
      %v205 = vld [vmem:[%s165 + $0x10] sm:$0xff]
      %v206 = vld [vmem:[%s165 + $0x18] sm:$0xff]
      %v207 = vld [vmem:[%s165 + $0x20] sm:$0xff]
      %v208 = vld [vmem:[%s165 + $0x28] sm:$0xff]
      %v209 = vld [vmem:[%s165 + $0x30] sm:$0xff]
      %v210 = vld [vmem:[%s165 + $0x38] sm:$0xff]
      %v211 = vld [vmem:[%s165 + $0x40] sm:$0xff]
      %v212 = vld [vmem:[%s165 + $0x48] sm:$0xff]
      %v213 = vld [vmem:[%s165 + $0x50] sm:$0xff]
      %v214 = vld [vmem:[%s165 + $0x58] sm:$0xff]
      %v215 = vld [vmem:[%s165 + $0x60] sm:$0xff]
      %v216 = vld [vmem:[%s165 + $0x68] sm:$0xff]
      %v217 = vld [vmem:[%s165 + $0x70] sm:$0xff]
      %233 = vst [vmem:[#allocation1] ss:$2 sm:$0xff] %v203
      %s234 = scalar_lea.vmem [#allocation1], 16
      %235 = vst [vmem:[%s234] ss:$2 sm:$0xff] %v204
      %s236 = scalar_lea.vmem [#allocation1], 32
      %237 = vst [vmem:[%s236] ss:$2 sm:$0xff] %v205
      %s238 = scalar_lea.vmem [#allocation1], 48
      %239 = vst [vmem:[%s238] ss:$2 sm:$0xff] %v206
      %v240 = vld.sshfl [vmem:[#allocation1] sm:$0xff pattern:$0x75316420]
      %v241 = vld.sshfl [vmem:[#allocation1 + $0x8] sm:$0xff pattern:$0x75316420]
      %v242 = vld.sshfl [vmem:[#allocation1 + $0x10] sm:$0xff pattern:$0x75316420]
      %v243 = vld.sshfl [vmem:[#allocation1 + $0x18] sm:$0xff pattern:$0x75316420]
      %v244 = vld.sshfl [vmem:[#allocation1 + $0x20] sm:$0xff pattern:$0x75316420]
      %v245 = vld.sshfl [vmem:[#allocation1 + $0x28] sm:$0xff pattern:$0x75316420]
      %v246 = vld.sshfl [vmem:[#allocation1 + $0x30] sm:$0xff pattern:$0x75316420]
      %v247 = vld.sshfl [vmem:[#allocation1 + $0x38] sm:$0xff pattern:$0x75316420]
      %248 = vst [vmem:[#allocation1] ss:$2 sm:$0xff] %v207
      %249 = vst [vmem:[%s234] ss:$2 sm:$0xff] %v208
      %250 = vst [vmem:[%s236] ss:$2 sm:$0xff] %v209
      %251 = vst [vmem:[%s238] ss:$2 sm:$0xff] %v210
      %v252 = vld.sshfl [vmem:[#allocation1] sm:$0xff pattern:$0x75316420]
      %v253 = vld.sshfl [vmem:[#allocation1 + $0x8] sm:$0xff pattern:$0x75316420]
      %v254 = vld.sshfl [vmem:[#allocation1 + $0x10] sm:$0xff pattern:$0x75316420]
      %v255 = vld.sshfl [vmem:[#allocation1 + $0x18] sm:$0xff pattern:$0x75316420]
      %v256 = vld.sshfl [vmem:[#allocation1 + $0x20] sm:$0xff pattern:$0x75316420]
      %v257 = vld.sshfl [vmem:[#allocation1 + $0x28] sm:$0xff pattern:$0x75316420]
      %v258 = vld.sshfl [vmem:[#allocation1 + $0x30] sm:$0xff pattern:$0x75316420]
      %v259 = vld.sshfl [vmem:[#allocation1 + $0x38] sm:$0xff pattern:$0x75316420]
      %260 = vst [vmem:[#allocation1] ss:$2 sm:$0xff] %v211
      %261 = vst [vmem:[%s234] ss:$2 sm:$0xff] %v212
      %262 = vst [vmem:[%s236] ss:$2 sm:$0xff] %v213
      %263 = vst [vmem:[%s238] ss:$2 sm:$0xff] %v214
      %v264 = vld.sshfl [vmem:[#allocation1] sm:$0xff pattern:$0x75316420]
      %v265 = vld.sshfl [vmem:[#allocation1 + $0x8] sm:$0xff pattern:$0x75316420]
      %v266 = vld.sshfl [vmem:[#allocation1 + $0x10] sm:$0xff pattern:$0x75316420]
      %v267 = vld.sshfl [vmem:[#allocation1 + $0x18] sm:$0xff pattern:$0x75316420]
      %v268 = vld.sshfl [vmem:[#allocation1 + $0x20] sm:$0xff pattern:$0x75316420]
      %v269 = vld.sshfl [vmem:[#allocation1 + $0x28] sm:$0xff pattern:$0x75316420]
      %v270 = vld.sshfl [vmem:[#allocation1 + $0x30] sm:$0xff pattern:$0x75316420]
      %v271 = vld.sshfl [vmem:[#allocation1 + $0x38] sm:$0xff pattern:$0x75316420]
      %272 = vst [vmem:[#allocation1] ss:$2 sm:$0xff] %v215
      %273 = vst [vmem:[%s234] ss:$2 sm:$0xff] %v216
      %274 = vst [vmem:[%s236] ss:$2 sm:$0xff] %v217
      %v275 = vld.sshfl [vmem:[#allocation1] sm:$0xff pattern:$0x75316420]
      %v276 = vld.sshfl [vmem:[#allocation1 + $0x8] sm:$0xff pattern:$0x75316420]
      %v277 = vld.sshfl [vmem:[#allocation1 + $0x10] sm:$0xff pattern:$0x75316420]
      %v278 = vld.sshfl [vmem:[#allocation1 + $0x18] sm:$0xff pattern:$0x75316420]
      %v279 = vld.sshfl [vmem:[#allocation1 + $0x20] sm:$0xff pattern:$0x75316420]
      %v280 = vld.sshfl [vmem:[#allocation1 + $0x28] sm:$0xff pattern:$0x75316420]
      %311 = vst [vmem:[#allocation4] sm:$0xf] %v240
      %312 = vst [vmem:[#allocation4 + $0x8] sm:$0xf] %v241
      %313 = vst [vmem:[#allocation4 + $0x10] sm:$0xf] %v242
      %314 = vst [vmem:[#allocation4 + $0x18] sm:$0xf] %v243
      %315 = vst [vmem:[#allocation4 + $0x20] sm:$0xf] %v244
      %316 = vst [vmem:[#allocation4 + $0x28] sm:$0xf] %v245
      %317 = vst [vmem:[#allocation4 + $0x30] sm:$0xf] %v246
      %318 = vst [vmem:[#allocation4 + $0x38] sm:$0xf] %v247
      %319 = vst [vmem:[#allocation4 + $0x40] sm:$0xf] %v252
      %320 = vst [vmem:[#allocation4 + $0x48] sm:$0xf] %v253
      %321 = vst [vmem:[#allocation4 + $0x50] sm:$0xf] %v254
      %322 = vst [vmem:[#allocation4 + $0x58] sm:$0xf] %v255
      %323 = vst [vmem:[#allocation4 + $0x60] sm:$0xf] %v256
      %324 = vst [vmem:[#allocation4 + $0x68] sm:$0xf] %v257
      %325 = vst [vmem:[#allocation4 + $0x70] sm:$0xf] %v258
      %326 = vst [vmem:[#allocation4 + $0x78] sm:$0xf] %v259
      %327 = vst [vmem:[#allocation4 + $0x80] sm:$0xf] %v264
      %328 = vst [vmem:[#allocation4 + $0x88] sm:$0xf] %v265
      %329 = vst [vmem:[#allocation4 + $0x90] sm:$0xf] %v266
      %330 = vst [vmem:[#allocation4 + $0x98] sm:$0xf] %v267
      %331 = vst [vmem:[#allocation4 + $0xa0] sm:$0xf] %v268
      %332 = vst [vmem:[#allocation4 + $0xa8] sm:$0xf] %v269
      %333 = vst [vmem:[#allocation4 + $0xb0] sm:$0xf] %v270
      %334 = vst [vmem:[#allocation4 + $0xb8] sm:$0xf] %v271
      %335 = vst [vmem:[#allocation4 + $0xc0] sm:$0xf] %v275
      %336 = vst [vmem:[#allocation4 + $0xc8] sm:$0xf] %v276
      %337 = vst [vmem:[#allocation4 + $0xd0] sm:$0xf] %v277
      %338 = vst [vmem:[#allocation4 + $0xd8] sm:$0xf] %v278
      %339 = vst [vmem:[#allocation4 + $0xe0] sm:$0xf] %v279
      %vm340 = vcmask 68608
      %341 = vst.msk [vmem:[#allocation4 + $0xe8] sm:$0xf] %vm340, %v280
      %342 = vst [vmem:[#allocation4] sm:$0xf0] 0.0
      %343 = vst [vmem:[#allocation4 + $0x8] sm:$0xf0] 0.0
      %344 = vst [vmem:[#allocation4 + $0x10] sm:$0xf0] 0.0
      %345 = vst [vmem:[#allocation4 + $0x18] sm:$0xf0] 0.0
      %346 = vst [vmem:[#allocation4 + $0x20] sm:$0xf0] 0.0
      %347 = vst [vmem:[#allocation4 + $0x28] sm:$0xf0] 0.0
      %348 = vst [vmem:[#allocation4 + $0x30] sm:$0xf0] 0.0
      %349 = vst [vmem:[#allocation4 + $0x38] sm:$0xf0] 0.0
      %350 = vst [vmem:[#allocation4 + $0x40] sm:$0xf0] 0.0
      %351 = vst [vmem:[#allocation4 + $0x48] sm:$0xf0] 0.0
      %352 = vst [vmem:[#allocation4 + $0x50] sm:$0xf0] 0.0
      %353 = vst [vmem:[#allocation4 + $0x58] sm:$0xf0] 0.0
      %354 = vst [vmem:[#allocation4 + $0x60] sm:$0xf0] 0.0
      %355 = vst [vmem:[#allocation4 + $0x68] sm:$0xf0] 0.0
      %356 = vst [vmem:[#allocation4 + $0x70] sm:$0xf0] 0.0
      %357 = vst [vmem:[#allocation4 + $0x78] sm:$0xf0] 0.0
      %358 = vst [vmem:[#allocation4 + $0x80] sm:$0xf0] 0.0
      %359 = vst [vmem:[#allocation4 + $0x88] sm:$0xf0] 0.0
      %360 = vst [vmem:[#allocation4 + $0x90] sm:$0xf0] 0.0
      %361 = vst [vmem:[#allocation4 + $0x98] sm:$0xf0] 0.0
      %362 = vst [vmem:[#allocation4 + $0xa0] sm:$0xf0] 0.0
      %363 = vst [vmem:[#allocation4 + $0xa8] sm:$0xf0] 0.0
      %364 = vst [vmem:[#allocation4 + $0xb0] sm:$0xf0] 0.0
      %365 = vst [vmem:[#allocation4 + $0xb8] sm:$0xf0] 0.0
      %366 = vst [vmem:[#allocation4 + $0xc0] sm:$0xf0] 0.0
      %367 = vst [vmem:[#allocation4 + $0xc8] sm:$0xf0] 0.0
      %368 = vst [vmem:[#allocation4 + $0xd0] sm:$0xf0] 0.0
      %369 = vst [vmem:[#allocation4 + $0xd8] sm:$0xf0] 0.0
      %370 = vst [vmem:[#allocation4 + $0xe0] sm:$0xf0] 0.0
      %vm371 = vcmask 72708
      %372 = vst.msk [vmem:[#allocation4 + $0xe8] sm:$0xf0] %vm371, 0.0
      %v373 = vld [vmem:[#allocation4] sm:$0xff]
      %v374 = vld [vmem:[#allocation4 + $0x8] sm:$0xff]
      %v375 = vld [vmem:[#allocation4 + $0x10] sm:$0xff]
      %v376 = vld [vmem:[#allocation4 + $0x18] sm:$0xff]
      %v377 = vld [vmem:[#allocation4 + $0x20] sm:$0xff]
      %v378 = vld [vmem:[#allocation4 + $0x28] sm:$0xff]
      %v379 = vld [vmem:[#allocation4 + $0x30] sm:$0xff]
      %v380 = vld [vmem:[#allocation4 + $0x38] sm:$0xff]
      %v381 = vld [vmem:[#allocation4 + $0x40] sm:$0xff]
      %v382 = vld [vmem:[#allocation4 + $0x48] sm:$0xff]
      %v383 = vld [vmem:[#allocation4 + $0x50] sm:$0xff]
      %v384 = vld [vmem:[#allocation4 + $0x58] sm:$0xff]
      %v385 = vld [vmem:[#allocation4 + $0x60] sm:$0xff]
      %v386 = vld [vmem:[#allocation4 + $0x68] sm:$0xff]
      %v387 = vld [vmem:[#allocation4 + $0x70] sm:$0xff]
      %v388 = vld [vmem:[#allocation4 + $0x78] sm:$0xff]
      %v389 = vld [vmem:[#allocation4 + $0x80] sm:$0xff]
      %v390 = vld [vmem:[#allocation4 + $0x88] sm:$0xff]
      %v391 = vld [vmem:[#allocation4 + $0x90] sm:$0xff]
      %v392 = vld [vmem:[#allocation4 + $0x98] sm:$0xff]
      %v393 = vld [vmem:[#allocation4 + $0xa0] sm:$0xff]
      %v394 = vld [vmem:[#allocation4 + $0xa8] sm:$0xff]
      %v395 = vld [vmem:[#allocation4 + $0xb0] sm:$0xff]
      %v396 = vld [vmem:[#allocation4 + $0xb8] sm:$0xff]
      %v397 = vld [vmem:[#allocation4 + $0xc0] sm:$0xff]
      %v398 = vld [vmem:[#allocation4 + $0xc8] sm:$0xff]
      %v399 = vld [vmem:[#allocation4 + $0xd0] sm:$0xff]
      %v400 = vld [vmem:[#allocation4 + $0xd8] sm:$0xff]
      %v401 = vld [vmem:[#allocation4 + $0xe0] sm:$0xff]
      %402 = vst [vmem:[#allocation9] sm:$0xff] %v373
      %403 = vst [vmem:[#allocation9 + $0x8] sm:$0xff] %v374
      %404 = vst [vmem:[#allocation9 + $0x10] sm:$0xff] %v375
      %405 = vst [vmem:[#allocation9 + $0x18] sm:$0xff] %v376
      %406 = vst [vmem:[#allocation9 + $0x20] sm:$0xff] %v377
      %407 = vst [vmem:[#allocation9 + $0x28] sm:$0xff] %v378
      %408 = vst [vmem:[#allocation9 + $0x30] sm:$0xff] %v379
      %409 = vst [vmem:[#allocation9 + $0x38] sm:$0xff] %v380
      %410 = vst [vmem:[#allocation9 + $0x40] sm:$0xff] %v381
      %411 = vst [vmem:[#allocation9 + $0x48] sm:$0xff] %v382
      %412 = vst [vmem:[#allocation9 + $0x50] sm:$0xff] %v383
      %413 = vst [vmem:[#allocation9 + $0x58] sm:$0xff] %v384
      %414 = vst [vmem:[#allocation9 + $0x60] sm:$0xff] %v385
      %415 = vst [vmem:[#allocation9 + $0x68] sm:$0xff] %v386
      %416 = vst [vmem:[#allocation9 + $0x70] sm:$0xff] %v387
      %417 = vst [vmem:[#allocation9 + $0x78] sm:$0xff] %v388
      %418 = vst [vmem:[#allocation9 + $0x80] sm:$0xff] %v389
      %419 = vst [vmem:[#allocation9 + $0x88] sm:$0xff] %v390
      %420 = vst [vmem:[#allocation9 + $0x90] sm:$0xff] %v391
      %421 = vst [vmem:[#allocation9 + $0x98] sm:$0xff] %v392
      %422 = vst [vmem:[#allocation9 + $0xa0] sm:$0xff] %v393
      %423 = vst [vmem:[#allocation9 + $0xa8] sm:$0xff] %v394
      %424 = vst [vmem:[#allocation9 + $0xb0] sm:$0xff] %v395
      %425 = vst [vmem:[#allocation9 + $0xb8] sm:$0xff] %v396
      %426 = vst [vmem:[#allocation9 + $0xc0] sm:$0xff] %v397
      %427 = vst [vmem:[#allocation9 + $0xc8] sm:$0xff] %v398
      %428 = vst [vmem:[#allocation9 + $0xd0] sm:$0xff] %v399
      %429 = vst [vmem:[#allocation9 + $0xd8] sm:$0xff] %v400
      %vm430 = vcmask 613376
      %431 = vst.msk [vmem:[#allocation9 + $0xe0] sm:$0xff] %vm430, %v401
      %v432 = vld [vmem:[#allocation4] sm:$0xff]
      %v433 = vld [vmem:[#allocation4 + $0x8] sm:$0xff]
      %v434 = vld [vmem:[#allocation4 + $0x10] sm:$0xff]
      %v435 = vld [vmem:[#allocation4 + $0x18] sm:$0xff]
      %v436 = vld [vmem:[#allocation4 + $0x20] sm:$0xff]
      %v437 = vld [vmem:[#allocation4 + $0x28] sm:$0xff]
      %v438 = vld [vmem:[#allocation4 + $0x30] sm:$0xff]
      %v439 = vld [vmem:[#allocation4 + $0x38] sm:$0xff]
      %v440 = vld [vmem:[#allocation4 + $0x40] sm:$0xff]
      %v441 = vld [vmem:[#allocation4 + $0x48] sm:$0xff]
      %v442 = vld [vmem:[#allocation4 + $0x50] sm:$0xff]
      %v443 = vld [vmem:[#allocation4 + $0x58] sm:$0xff]
      %v444 = vld [vmem:[#allocation4 + $0x60] sm:$0xff]
      %v445 = vld [vmem:[#allocation4 + $0x68] sm:$0xff]
      %v446 = vld [vmem:[#allocation4 + $0x70] sm:$0xff]
      %v447 = vld [vmem:[#allocation4 + $0x78] sm:$0xff]
      %v448 = vld [vmem:[#allocation4 + $0x80] sm:$0xff]
      %v449 = vld [vmem:[#allocation4 + $0x88] sm:$0xff]
      %v450 = vld [vmem:[#allocation4 + $0x90] sm:$0xff]
      %v451 = vld [vmem:[#allocation4 + $0x98] sm:$0xff]
      %v452 = vld [vmem:[#allocation4 + $0xa0] sm:$0xff]
      %v453 = vld [vmem:[#allocation4 + $0xa8] sm:$0xff]
      %v454 = vld [vmem:[#allocation4 + $0xb0] sm:$0xff]
      %v455 = vld [vmem:[#allocation4 + $0xb8] sm:$0xff]
      %v456 = vld [vmem:[#allocation4 + $0xc0] sm:$0xff]
      %v457 = vld [vmem:[#allocation4 + $0xc8] sm:$0xff]
      %v458 = vld [vmem:[#allocation4 + $0xd0] sm:$0xff]
      %v459 = vld [vmem:[#allocation4 + $0xd8] sm:$0xff]
      %v460 = vld [vmem:[#allocation4 + $0xe0] sm:$0xff]
      %490 = vrot.lane.b32.xlu0 %v432, 127
      %v491 = vpop.permute.xlu0 %490
      %492 = vrot.lane.b32.xlu0 %v433, 127
      %v493 = vpop.permute.xlu0 %492
      %494 = vrot.lane.b32.xlu0 %v434, 127
      %v495 = vpop.permute.xlu0 %494
      %496 = vrot.lane.b32.xlu0 %v435, 127
      %v497 = vpop.permute.xlu0 %496
      %498 = vrot.lane.b32.xlu0 %v436, 127
      %v499 = vpop.permute.xlu0 %498
      %500 = vrot.lane.b32.xlu0 %v437, 127
      %v501 = vpop.permute.xlu0 %500
      %502 = vrot.lane.b32.xlu0 %v438, 127
      %v503 = vpop.permute.xlu0 %502
      %504 = vrot.lane.b32.xlu0 %v439, 127
      %v505 = vpop.permute.xlu0 %504
      %506 = vrot.lane.b32.xlu0 %v440, 127
      %v507 = vpop.permute.xlu0 %506
      %508 = vrot.lane.b32.xlu0 %v441, 127
      %v509 = vpop.permute.xlu0 %508
      %510 = vrot.lane.b32.xlu0 %v442, 127
      %v511 = vpop.permute.xlu0 %510
      %512 = vrot.lane.b32.xlu0 %v443, 127
      %v513 = vpop.permute.xlu0 %512
      %514 = vrot.lane.b32.xlu0 %v444, 127
      %v515 = vpop.permute.xlu0 %514
      %516 = vrot.lane.b32.xlu0 %v445, 127
      %v517 = vpop.permute.xlu0 %516
      %518 = vrot.lane.b32.xlu0 %v446, 127
      %v519 = vpop.permute.xlu0 %518
      %520 = vrot.lane.b32.xlu0 %v447, 127
      %v521 = vpop.permute.xlu0 %520
      %522 = vrot.lane.b32.xlu0 %v448, 127
      %v523 = vpop.permute.xlu0 %522
      %524 = vrot.lane.b32.xlu0 %v449, 127
      %v525 = vpop.permute.xlu0 %524
      %526 = vrot.lane.b32.xlu0 %v450, 127
      %v527 = vpop.permute.xlu0 %526
      %528 = vrot.lane.b32.xlu0 %v451, 127
      %v529 = vpop.permute.xlu0 %528
      %530 = vrot.lane.b32.xlu0 %v452, 127
      %v531 = vpop.permute.xlu0 %530
      %532 = vrot.lane.b32.xlu0 %v453, 127
      %v533 = vpop.permute.xlu0 %532
      %534 = vrot.lane.b32.xlu0 %v454, 127
      %v535 = vpop.permute.xlu0 %534
      %536 = vrot.lane.b32.xlu0 %v455, 127
      %v537 = vpop.permute.xlu0 %536
      %538 = vrot.lane.b32.xlu0 %v456, 127
      %v539 = vpop.permute.xlu0 %538
      %540 = vrot.lane.b32.xlu0 %v457, 127
      %v541 = vpop.permute.xlu0 %540
      %542 = vrot.lane.b32.xlu0 %v458, 127
      %v543 = vpop.permute.xlu0 %542
      %544 = vrot.lane.b32.xlu0 %v459, 127
      %v545 = vpop.permute.xlu0 %544
      %546 = vrot.lane.b32.xlu0 %v460, 127
      %v547 = vpop.permute.xlu0 %546
      %vm548 = vcmask 1039360
      %v549 = vsel %vm548, %v491, %v493
      %v550 = vsel %vm548, %v493, %v495
      %v551 = vsel %vm548, %v495, %v497
      %v552 = vsel %vm548, %v497, %v499
      %v553 = vsel %vm548, %v499, %v501
      %v554 = vsel %vm548, %v501, %v503
      %v555 = vsel %vm548, %v503, %v505
      %v556 = vsel %vm548, %v505, %v507
      %v557 = vsel %vm548, %v507, %v509
      %v558 = vsel %vm548, %v509, %v511
      %v559 = vsel %vm548, %v511, %v513
      %v560 = vsel %vm548, %v513, %v515
      %v561 = vsel %vm548, %v515, %v517
      %v562 = vsel %vm548, %v517, %v519
      %v563 = vsel %vm548, %v519, %v521
      %v564 = vsel %vm548, %v521, %v523
      %v565 = vsel %vm548, %v523, %v525
      %v566 = vsel %vm548, %v525, %v527
      %v567 = vsel %vm548, %v527, %v529
      %v568 = vsel %vm548, %v529, %v531
      %v569 = vsel %vm548, %v531, %v533
      %v570 = vsel %vm548, %v533, %v535
      %v571 = vsel %vm548, %v535, %v537
      %v572 = vsel %vm548, %v537, %v539
      %v573 = vsel %vm548, %v539, %v541
      %v574 = vsel %vm548, %v541, %v543
      %v575 = vsel %vm548, %v543, %v545
      %v576 = vsel %vm548, %v545, %v547
      %606 = vst [vmem:[#allocation9 + $0xe8] sm:$0xff] %v549
      %607 = vst [vmem:[#allocation9 + $0xf0] sm:$0xff] %v550
      %608 = vst [vmem:[#allocation9 + $0xf8] sm:$0xff] %v551
      %609 = vst [vmem:[#allocation9 + $0x100] sm:$0xff] %v552
      %610 = vst [vmem:[#allocation9 + $0x108] sm:$0xff] %v553
      %611 = vst [vmem:[#allocation9 + $0x110] sm:$0xff] %v554
      %612 = vst [vmem:[#allocation9 + $0x118] sm:$0xff] %v555
      %613 = vst [vmem:[#allocation9 + $0x120] sm:$0xff] %v556
      %614 = vst [vmem:[#allocation9 + $0x128] sm:$0xff] %v557
      %615 = vst [vmem:[#allocation9 + $0x130] sm:$0xff] %v558
      %616 = vst [vmem:[#allocation9 + $0x138] sm:$0xff] %v559
      %617 = vst [vmem:[#allocation9 + $0x140] sm:$0xff] %v560
      %618 = vst [vmem:[#allocation9 + $0x148] sm:$0xff] %v561
      %619 = vst [vmem:[#allocation9 + $0x150] sm:$0xff] %v562
      %620 = vst [vmem:[#allocation9 + $0x158] sm:$0xff] %v563
      %621 = vst [vmem:[#allocation9 + $0x160] sm:$0xff] %v564
      %622 = vst [vmem:[#allocation9 + $0x168] sm:$0xff] %v565
      %623 = vst [vmem:[#allocation9 + $0x170] sm:$0xff] %v566
      %624 = vst [vmem:[#allocation9 + $0x178] sm:$0xff] %v567
      %625 = vst [vmem:[#allocation9 + $0x180] sm:$0xff] %v568
      %626 = vst [vmem:[#allocation9 + $0x188] sm:$0xff] %v569
      %627 = vst [vmem:[#allocation9 + $0x190] sm:$0xff] %v570
      %628 = vst [vmem:[#allocation9 + $0x198] sm:$0xff] %v571
      %629 = vst [vmem:[#allocation9 + $0x1a0] sm:$0xff] %v572
      %630 = vst [vmem:[#allocation9 + $0x1a8] sm:$0xff] %v573
      %631 = vst [vmem:[#allocation9 + $0x1b0] sm:$0xff] %v574
      %632 = vst [vmem:[#allocation9 + $0x1b8] sm:$0xff] %v575
      %633 = vst [vmem:[#allocation9 + $0x1c0] sm:$0xff] %v576
      %634 = vst.msk [vmem:[#allocation9 + $0x1c8] sm:$0xff] %vm430, %v547
      %v635 = vld [vmem:[#allocation4] sm:$0xff]
      %v636 = vld [vmem:[#allocation4 + $0x8] sm:$0xff]
      %v637 = vld [vmem:[#allocation4 + $0x10] sm:$0xff]
      %v638 = vld [vmem:[#allocation4 + $0x18] sm:$0xff]
      %v639 = vld [vmem:[#allocation4 + $0x20] sm:$0xff]
      %v640 = vld [vmem:[#allocation4 + $0x28] sm:$0xff]
      %v641 = vld [vmem:[#allocation4 + $0x30] sm:$0xff]
      %v642 = vld [vmem:[#allocation4 + $0x38] sm:$0xff]
      %v643 = vld [vmem:[#allocation4 + $0x40] sm:$0xff]
      %v644 = vld [vmem:[#allocation4 + $0x48] sm:$0xff]
      %v645 = vld [vmem:[#allocation4 + $0x50] sm:$0xff]
      %v646 = vld [vmem:[#allocation4 + $0x58] sm:$0xff]
      %v647 = vld [vmem:[#allocation4 + $0x60] sm:$0xff]
      %v648 = vld [vmem:[#allocation4 + $0x68] sm:$0xff]
      %v649 = vld [vmem:[#allocation4 + $0x70] sm:$0xff]
      %v650 = vld [vmem:[#allocation4 + $0x78] sm:$0xff]
      %v651 = vld [vmem:[#allocation4 + $0x80] sm:$0xff]
      %v652 = vld [vmem:[#allocation4 + $0x88] sm:$0xff]
      %v653 = vld [vmem:[#allocation4 + $0x90] sm:$0xff]
      %v654 = vld [vmem:[#allocation4 + $0x98] sm:$0xff]
      %v655 = vld [vmem:[#allocation4 + $0xa0] sm:$0xff]
      %v656 = vld [vmem:[#allocation4 + $0xa8] sm:$0xff]
      %v657 = vld [vmem:[#allocation4 + $0xb0] sm:$0xff]
      %v658 = vld [vmem:[#allocation4 + $0xb8] sm:$0xff]
      %v659 = vld [vmem:[#allocation4 + $0xc0] sm:$0xff]
      %v660 = vld [vmem:[#allocation4 + $0xc8] sm:$0xff]
      %v661 = vld [vmem:[#allocation4 + $0xd0] sm:$0xff]
      %v662 = vld [vmem:[#allocation4 + $0xd8] sm:$0xff]
      %v663 = vld [vmem:[#allocation4 + $0xe0] sm:$0xff]
      %v664 = vld [vmem:[#allocation4 + $0xe8] sm:$0xff]
      %695 = vrot.lane.b32.xlu0 %v635, 67
      %v696 = vpop.permute.xlu0 %695
      %697 = vrot.lane.b32.xlu0 %v636, 67
      %v698 = vpop.permute.xlu0 %697
      %699 = vrot.lane.b32.xlu0 %v637, 67
      %v700 = vpop.permute.xlu0 %699
      %701 = vrot.lane.b32.xlu0 %v638, 67
      %v702 = vpop.permute.xlu0 %701
      %703 = vrot.lane.b32.xlu0 %v639, 67
      %v704 = vpop.permute.xlu0 %703
      %705 = vrot.lane.b32.xlu0 %v640, 67
      %v706 = vpop.permute.xlu0 %705
      %707 = vrot.lane.b32.xlu0 %v641, 67
      %v708 = vpop.permute.xlu0 %707
      %709 = vrot.lane.b32.xlu0 %v642, 67
      %v710 = vpop.permute.xlu0 %709
      %711 = vrot.lane.b32.xlu0 %v643, 67
      %v712 = vpop.permute.xlu0 %711
      %713 = vrot.lane.b32.xlu0 %v644, 67
      %v714 = vpop.permute.xlu0 %713
      %715 = vrot.lane.b32.xlu0 %v645, 67
      %v716 = vpop.permute.xlu0 %715
      %717 = vrot.lane.b32.xlu0 %v646, 67
      %v718 = vpop.permute.xlu0 %717
      %719 = vrot.lane.b32.xlu0 %v647, 67
      %v720 = vpop.permute.xlu0 %719
      %721 = vrot.lane.b32.xlu0 %v648, 67
      %v722 = vpop.permute.xlu0 %721
      %723 = vrot.lane.b32.xlu0 %v649, 67
      %v724 = vpop.permute.xlu0 %723
      %725 = vrot.lane.b32.xlu0 %v650, 67
      %v726 = vpop.permute.xlu0 %725
      %727 = vrot.lane.b32.xlu0 %v651, 67
      %v728 = vpop.permute.xlu0 %727
      %729 = vrot.lane.b32.xlu0 %v652, 67
      %v730 = vpop.permute.xlu0 %729
      %731 = vrot.lane.b32.xlu0 %v653, 67
      %v732 = vpop.permute.xlu0 %731
      %733 = vrot.lane.b32.xlu0 %v654, 67
      %v734 = vpop.permute.xlu0 %733
      %735 = vrot.lane.b32.xlu0 %v655, 67
      %v736 = vpop.permute.xlu0 %735
      %737 = vrot.lane.b32.xlu0 %v656, 67
      %v738 = vpop.permute.xlu0 %737
      %739 = vrot.lane.b32.xlu0 %v657, 67
      %v740 = vpop.permute.xlu0 %739
      %741 = vrot.lane.b32.xlu0 %v658, 67
      %v742 = vpop.permute.xlu0 %741
      %743 = vrot.lane.b32.xlu0 %v659, 67
      %v744 = vpop.permute.xlu0 %743
      %745 = vrot.lane.b32.xlu0 %v660, 67
      %v746 = vpop.permute.xlu0 %745
      %747 = vrot.lane.b32.xlu0 %v661, 67
      %v748 = vpop.permute.xlu0 %747
      %749 = vrot.lane.b32.xlu0 %v662, 67
      %v750 = vpop.permute.xlu0 %749
      %751 = vrot.lane.b32.xlu0 %v663, 67
      %v752 = vpop.permute.xlu0 %751
      %753 = vrot.lane.b32.xlu0 %v664, 67
      %v754 = vpop.permute.xlu0 %753
      %vm755 = vcmask 547840
      %v756 = vsel %vm755, %v696, %v698
      %v757 = vsel %vm755, %v698, %v700
      %v758 = vsel %vm755, %v700, %v702
      %v759 = vsel %vm755, %v702, %v704
      %v760 = vsel %vm755, %v704, %v706
      %v761 = vsel %vm755, %v706, %v708
      %v762 = vsel %vm755, %v708, %v710
      %v763 = vsel %vm755, %v710, %v712
      %v764 = vsel %vm755, %v712, %v714
      %v765 = vsel %vm755, %v714, %v716
      %v766 = vsel %vm755, %v716, %v718
      %v767 = vsel %vm755, %v718, %v720
      %v768 = vsel %vm755, %v720, %v722
      %v769 = vsel %vm755, %v722, %v724
      %v770 = vsel %vm755, %v724, %v726
      %v771 = vsel %vm755, %v726, %v728
      %v772 = vsel %vm755, %v728, %v730
      %v773 = vsel %vm755, %v730, %v732
      %v774 = vsel %vm755, %v732, %v734
      %v775 = vsel %vm755, %v734, %v736
      %v776 = vsel %vm755, %v736, %v738
      %v777 = vsel %vm755, %v738, %v740
      %v778 = vsel %vm755, %v740, %v742
      %v779 = vsel %vm755, %v742, %v744
      %v780 = vsel %vm755, %v744, %v746
      %v781 = vsel %vm755, %v746, %v748
      %v782 = vsel %vm755, %v748, %v750
      %v783 = vsel %vm755, %v750, %v752
      %v784 = vsel %vm755, %v752, %v754
      %814 = vst [vmem:[#allocation9 + $0x1d0] sm:$0xff] %v756
      %815 = vst [vmem:[#allocation9 + $0x1d8] sm:$0xff] %v757
      %816 = vst [vmem:[#allocation9 + $0x1e0] sm:$0xff] %v758
      %817 = vst [vmem:[#allocation9 + $0x1e8] sm:$0xff] %v759
      %818 = vst [vmem:[#allocation9 + $0x1f0] sm:$0xff] %v760
      %819 = vst [vmem:[#allocation9 + $0x1f8] sm:$0xff] %v761
      %820 = vst [vmem:[#allocation9 + $0x200] sm:$0xff] %v762
      %821 = vst [vmem:[#allocation9 + $0x208] sm:$0xff] %v763
      %822 = vst [vmem:[#allocation9 + $0x210] sm:$0xff] %v764
      %823 = vst [vmem:[#allocation9 + $0x218] sm:$0xff] %v765
      %824 = vst [vmem:[#allocation9 + $0x220] sm:$0xff] %v766
      %825 = vst [vmem:[#allocation9 + $0x228] sm:$0xff] %v767
      %826 = vst [vmem:[#allocation9 + $0x230] sm:$0xff] %v768
      %827 = vst [vmem:[#allocation9 + $0x238] sm:$0xff] %v769
      %828 = vst [vmem:[#allocation9 + $0x240] sm:$0xff] %v770
      %829 = vst [vmem:[#allocation9 + $0x248] sm:$0xff] %v771
      %830 = vst [vmem:[#allocation9 + $0x250] sm:$0xff] %v772
      %831 = vst [vmem:[#allocation9 + $0x258] sm:$0xff] %v773
      %832 = vst [vmem:[#allocation9 + $0x260] sm:$0xff] %v774
      %833 = vst [vmem:[#allocation9 + $0x268] sm:$0xff] %v775
      %834 = vst [vmem:[#allocation9 + $0x270] sm:$0xff] %v776
      %835 = vst [vmem:[#allocation9 + $0x278] sm:$0xff] %v777
      %836 = vst [vmem:[#allocation9 + $0x280] sm:$0xff] %v778
      %837 = vst [vmem:[#allocation9 + $0x288] sm:$0xff] %v779
      %838 = vst [vmem:[#allocation9 + $0x290] sm:$0xff] %v780
      %839 = vst [vmem:[#allocation9 + $0x298] sm:$0xff] %v781
      %840 = vst [vmem:[#allocation9 + $0x2a0] sm:$0xff] %v782
      %841 = vst [vmem:[#allocation9 + $0x2a8] sm:$0xff] %v783
      %842 = vst.msk [vmem:[#allocation9 + $0x2b0] sm:$0xff] %vm430, %v784
      %v843 = vld [vmem:[#allocation4] sm:$0xff]
      %v844 = vld [vmem:[#allocation4 + $0x8] sm:$0xff]
      %v845 = vld [vmem:[#allocation4 + $0x10] sm:$0xff]
      %v846 = vld [vmem:[#allocation4 + $0x18] sm:$0xff]
      %v847 = vld [vmem:[#allocation4 + $0x20] sm:$0xff]
      %v848 = vld [vmem:[#allocation4 + $0x28] sm:$0xff]
      %v849 = vld [vmem:[#allocation4 + $0x30] sm:$0xff]
      %v850 = vld [vmem:[#allocation4 + $0x38] sm:$0xff]
      %v851 = vld [vmem:[#allocation4 + $0x40] sm:$0xff]
      %v852 = vld [vmem:[#allocation4 + $0x48] sm:$0xff]
      %v853 = vld [vmem:[#allocation4 + $0x50] sm:$0xff]
      %v854 = vld [vmem:[#allocation4 + $0x58] sm:$0xff]
      %v855 = vld [vmem:[#allocation4 + $0x60] sm:$0xff]
      %v856 = vld [vmem:[#allocation4 + $0x68] sm:$0xff]
      %v857 = vld [vmem:[#allocation4 + $0x70] sm:$0xff]
      %v858 = vld [vmem:[#allocation4 + $0x78] sm:$0xff]
      %v859 = vld [vmem:[#allocation4 + $0x80] sm:$0xff]
      %v860 = vld [vmem:[#allocation4 + $0x88] sm:$0xff]
      %v861 = vld [vmem:[#allocation4 + $0x90] sm:$0xff]
      %v862 = vld [vmem:[#allocation4 + $0x98] sm:$0xff]
      %v863 = vld [vmem:[#allocation4 + $0xa0] sm:$0xff]
      %v864 = vld [vmem:[#allocation4 + $0xa8] sm:$0xff]
      %v865 = vld [vmem:[#allocation4 + $0xb0] sm:$0xff]
      %v866 = vld [vmem:[#allocation4 + $0xb8] sm:$0xff]
      %v867 = vld [vmem:[#allocation4 + $0xc0] sm:$0xff]
      %v868 = vld [vmem:[#allocation4 + $0xc8] sm:$0xff]
      %v869 = vld [vmem:[#allocation4 + $0xd0] sm:$0xff]
      %v870 = vld [vmem:[#allocation4 + $0xd8] sm:$0xff]
      %v871 = vld [vmem:[#allocation4 + $0xe0] sm:$0xff]
      %v872 = vld [vmem:[#allocation4 + $0xe8] sm:$0xff]
      %903 = vrot.lane.b32.xlu0 %v843, 66
      %v904 = vpop.permute.xlu0 %903
      %905 = vrot.lane.b32.xlu0 %v844, 66
      %v906 = vpop.permute.xlu0 %905
      %907 = vrot.lane.b32.xlu0 %v845, 66
      %v908 = vpop.permute.xlu0 %907
      %909 = vrot.lane.b32.xlu0 %v846, 66
      %v910 = vpop.permute.xlu0 %909
      %911 = vrot.lane.b32.xlu0 %v847, 66
      %v912 = vpop.permute.xlu0 %911
      %913 = vrot.lane.b32.xlu0 %v848, 66
      %v914 = vpop.permute.xlu0 %913
      %915 = vrot.lane.b32.xlu0 %v849, 66
      %v916 = vpop.permute.xlu0 %915
      %917 = vrot.lane.b32.xlu0 %v850, 66
      %v918 = vpop.permute.xlu0 %917
      %919 = vrot.lane.b32.xlu0 %v851, 66
      %v920 = vpop.permute.xlu0 %919
      %921 = vrot.lane.b32.xlu0 %v852, 66
      %v922 = vpop.permute.xlu0 %921
      %923 = vrot.lane.b32.xlu0 %v853, 66
      %v924 = vpop.permute.xlu0 %923
      %925 = vrot.lane.b32.xlu0 %v854, 66
      %v926 = vpop.permute.xlu0 %925
      %927 = vrot.lane.b32.xlu0 %v855, 66
      %v928 = vpop.permute.xlu0 %927
      %929 = vrot.lane.b32.xlu0 %v856, 66
      %v930 = vpop.permute.xlu0 %929
      %931 = vrot.lane.b32.xlu0 %v857, 66
      %v932 = vpop.permute.xlu0 %931
      %933 = vrot.lane.b32.xlu0 %v858, 66
      %v934 = vpop.permute.xlu0 %933
      %935 = vrot.lane.b32.xlu0 %v859, 66
      %v936 = vpop.permute.xlu0 %935
      %937 = vrot.lane.b32.xlu0 %v860, 66
      %v938 = vpop.permute.xlu0 %937
      %939 = vrot.lane.b32.xlu0 %v861, 66
      %v940 = vpop.permute.xlu0 %939
      %941 = vrot.lane.b32.xlu0 %v862, 66
      %v942 = vpop.permute.xlu0 %941
      %943 = vrot.lane.b32.xlu0 %v863, 66
      %v944 = vpop.permute.xlu0 %943
      %945 = vrot.lane.b32.xlu0 %v864, 66
      %v946 = vpop.permute.xlu0 %945
      %947 = vrot.lane.b32.xlu0 %v865, 66
      %v948 = vpop.permute.xlu0 %947
      %949 = vrot.lane.b32.xlu0 %v866, 66
      %v950 = vpop.permute.xlu0 %949
      %951 = vrot.lane.b32.xlu0 %v867, 66
      %v952 = vpop.permute.xlu0 %951
      %953 = vrot.lane.b32.xlu0 %v868, 66
      %v954 = vpop.permute.xlu0 %953
      %955 = vrot.lane.b32.xlu0 %v869, 66
      %v956 = vpop.permute.xlu0 %955
      %957 = vrot.lane.b32.xlu0 %v870, 66
      %v958 = vpop.permute.xlu0 %957
      %959 = vrot.lane.b32.xlu0 %v871, 66
      %v960 = vpop.permute.xlu0 %959
      %961 = vrot.lane.b32.xlu0 %v872, 66
      %v962 = vpop.permute.xlu0 %961
      %vm963 = vcmask 539648
      %v964 = vsel %vm963, %v904, %v906
      %v965 = vsel %vm963, %v906, %v908
      %v966 = vsel %vm963, %v908, %v910
      %v967 = vsel %vm963, %v910, %v912
      %v968 = vsel %vm963, %v912, %v914
      %v969 = vsel %vm963, %v914, %v916
      %v970 = vsel %vm963, %v916, %v918
      %v971 = vsel %vm963, %v918, %v920
      %v972 = vsel %vm963, %v920, %v922
      %v973 = vsel %vm963, %v922, %v924
      %v974 = vsel %vm963, %v924, %v926
      %v975 = vsel %vm963, %v926, %v928
      %v976 = vsel %vm963, %v928, %v930
      %v977 = vsel %vm963, %v930, %v932
      %v978 = vsel %vm963, %v932, %v934
      %v979 = vsel %vm963, %v934, %v936
      %v980 = vsel %vm963, %v936, %v938
      %v981 = vsel %vm963, %v938, %v940
      %v982 = vsel %vm963, %v940, %v942
      %v983 = vsel %vm963, %v942, %v944
      %v984 = vsel %vm963, %v944, %v946
      %v985 = vsel %vm963, %v946, %v948
      %v986 = vsel %vm963, %v948, %v950
      %v987 = vsel %vm963, %v950, %v952
      %v988 = vsel %vm963, %v952, %v954
      %v989 = vsel %vm963, %v954, %v956
      %v990 = vsel %vm963, %v956, %v958
      %v991 = vsel %vm963, %v958, %v960
      %v992 = vsel %vm963, %v960, %v962
      %1022 = vst [vmem:[#allocation9 + $0x2b8] sm:$0xff] %v964
      %1023 = vst [vmem:[#allocation9 + $0x2c0] sm:$0xff] %v965
      %1024 = vst [vmem:[#allocation9 + $0x2c8] sm:$0xff] %v966
      %1025 = vst [vmem:[#allocation9 + $0x2d0] sm:$0xff] %v967
      %1026 = vst [vmem:[#allocation9 + $0x2d8] sm:$0xff] %v968
      %1027 = vst [vmem:[#allocation9 + $0x2e0] sm:$0xff] %v969
      %1028 = vst [vmem:[#allocation9 + $0x2e8] sm:$0xff] %v970
      %1029 = vst [vmem:[#allocation9 + $0x2f0] sm:$0xff] %v971
      %1030 = vst [vmem:[#allocation9 + $0x2f8] sm:$0xff] %v972
      %1031 = vst [vmem:[#allocation9 + $0x300] sm:$0xff] %v973
      %1032 = vst [vmem:[#allocation9 + $0x308] sm:$0xff] %v974
      %1033 = vst [vmem:[#allocation9 + $0x310] sm:$0xff] %v975
      %1034 = vst [vmem:[#allocation9 + $0x318] sm:$0xff] %v976
      %1035 = vst [vmem:[#allocation9 + $0x320] sm:$0xff] %v977
      %1036 = vst [vmem:[#allocation9 + $0x328] sm:$0xff] %v978
      %1037 = vst [vmem:[#allocation9 + $0x330] sm:$0xff] %v979
      %1038 = vst [vmem:[#allocation9 + $0x338] sm:$0xff] %v980
      %1039 = vst [vmem:[#allocation9 + $0x340] sm:$0xff] %v981
      %1040 = vst [vmem:[#allocation9 + $0x348] sm:$0xff] %v982
      %1041 = vst [vmem:[#allocation9 + $0x350] sm:$0xff] %v983
      %1042 = vst [vmem:[#allocation9 + $0x358] sm:$0xff] %v984
      %1043 = vst [vmem:[#allocation9 + $0x360] sm:$0xff] %v985
      %1044 = vst [vmem:[#allocation9 + $0x368] sm:$0xff] %v986
      %1045 = vst [vmem:[#allocation9 + $0x370] sm:$0xff] %v987
      %1046 = vst [vmem:[#allocation9 + $0x378] sm:$0xff] %v988
      %1047 = vst [vmem:[#allocation9 + $0x380] sm:$0xff] %v989
      %1048 = vst [vmem:[#allocation9 + $0x388] sm:$0xff] %v990
      %1049 = vst [vmem:[#allocation9 + $0x390] sm:$0xff] %v991
      %1050 = vst.msk [vmem:[#allocation9 + $0x398] sm:$0xff] %vm430, %v992
      %v1051 = vld [vmem:[%s1] sm:$0xff]
      %v1052 = vld [vmem:[#allocation9] sm:$0xff]
      %v1053 = vld [vmem:[#allocation9 + $0x8] sm:$0xff]
      %v1054 = vld [vmem:[#allocation9 + $0x10] sm:$0xff]
      %v1055 = vld [vmem:[#allocation9 + $0x18] sm:$0xff]
      %v1056 = vld [vmem:[#allocation9 + $0x20] sm:$0xff]
      %v1057 = vld [vmem:[#allocation9 + $0x28] sm:$0xff]
      %v1058 = vld [vmem:[#allocation9 + $0x30] sm:$0xff]
      %v1059 = vld [vmem:[#allocation9 + $0x38] sm:$0xff]
      %v1060 = vld [vmem:[#allocation9 + $0x40] sm:$0xff]
      %v1061 = vld [vmem:[#allocation9 + $0x48] sm:$0xff]
      %v1062 = vld [vmem:[#allocation9 + $0x50] sm:$0xff]
      %v1063 = vld [vmem:[#allocation9 + $0x58] sm:$0xff]
      %v1064 = vld [vmem:[#allocation9 + $0x60] sm:$0xff]
      %v1065 = vld [vmem:[#allocation9 + $0x68] sm:$0xff]
      %v1066 = vld [vmem:[#allocation9 + $0x70] sm:$0xff]
      %v1067 = vld [vmem:[#allocation9 + $0x78] sm:$0xff]
      %v1068 = vld [vmem:[#allocation9 + $0x80] sm:$0xff]
      %v1069 = vld [vmem:[#allocation9 + $0x88] sm:$0xff]
      %v1070 = vld [vmem:[#allocation9 + $0x90] sm:$0xff]
      %v1071 = vld [vmem:[#allocation9 + $0x98] sm:$0xff]
      %v1072 = vld [vmem:[#allocation9 + $0xa0] sm:$0xff]
      %v1073 = vld [vmem:[#allocation9 + $0xa8] sm:$0xff]
      %v1074 = vld [vmem:[#allocation9 + $0xb0] sm:$0xff]
      %v1075 = vld [vmem:[#allocation9 + $0xb8] sm:$0xff]
      %v1076 = vld [vmem:[#allocation9 + $0xc0] sm:$0xff]
      %v1077 = vld [vmem:[#allocation9 + $0xc8] sm:$0xff]
      %v1078 = vld [vmem:[#allocation9 + $0xd0] sm:$0xff]
      %v1079 = vld [vmem:[#allocation9 + $0xd8] sm:$0xff]
      %v1080 = vld [vmem:[#allocation9 + $0xe0] sm:$0xff]
      %v1081 = vld [vmem:[#allocation9 + $0xe8] sm:$0xff]
      %v1082 = vld [vmem:[#allocation9 + $0xf0] sm:$0xff]
      %v1083 = vld [vmem:[#allocation9 + $0xf8] sm:$0xff]
      %v1084 = vld [vmem:[#allocation9 + $0x100] sm:$0xff]
      %v1085 = vld [vmem:[#allocation9 + $0x108] sm:$0xff]
      %v1086 = vld [vmem:[#allocation9 + $0x110] sm:$0xff]
      %v1087 = vld [vmem:[#allocation9 + $0x118] sm:$0xff]
      %v1088 = vld [vmem:[#allocation9 + $0x120] sm:$0xff]
      %v1089 = vld [vmem:[#allocation9 + $0x128] sm:$0xff]
      %v1090 = vld [vmem:[#allocation9 + $0x130] sm:$0xff]
      %v1091 = vld [vmem:[#allocation9 + $0x138] sm:$0xff]
      %v1092 = vld [vmem:[#allocation9 + $0x140] sm:$0xff]
      %v1093 = vld [vmem:[#allocation9 + $0x148] sm:$0xff]
      %v1094 = vld [vmem:[#allocation9 + $0x150] sm:$0xff]
      %v1095 = vld [vmem:[#allocation9 + $0x158] sm:$0xff]
      %v1096 = vld [vmem:[#allocation9 + $0x160] sm:$0xff]
      %v1097 = vld [vmem:[#allocation9 + $0x168] sm:$0xff]
      %v1098 = vld [vmem:[#allocation9 + $0x170] sm:$0xff]
      %v1099 = vld [vmem:[#allocation9 + $0x178] sm:$0xff]
      %v1100 = vld [vmem:[#allocation9 + $0x180] sm:$0xff]
      %v1101 = vld [vmem:[#allocation9 + $0x188] sm:$0xff]
      %v1102 = vld [vmem:[#allocation9 + $0x190] sm:$0xff]
      %v1103 = vld [vmem:[#allocation9 + $0x198] sm:$0xff]
      %v1104 = vld [vmem:[#allocation9 + $0x1a0] sm:$0xff]
      %v1105 = vld [vmem:[#allocation9 + $0x1a8] sm:$0xff]
      %v1106 = vld [vmem:[#allocation9 + $0x1b0] sm:$0xff]
      %v1107 = vld [vmem:[#allocation9 + $0x1b8] sm:$0xff]
      %v1108 = vld [vmem:[#allocation9 + $0x1c0] sm:$0xff]
      %v1109 = vld [vmem:[#allocation9 + $0x1c8] sm:$0xff]
      %v1110 = vld [vmem:[#allocation9 + $0x1d0] sm:$0xff]
      %v1111 = vld [vmem:[#allocation9 + $0x1d8] sm:$0xff]
      %v1112 = vld [vmem:[#allocation9 + $0x1e0] sm:$0xff]
      %v1113 = vld [vmem:[#allocation9 + $0x1e8] sm:$0xff]
      %v1114 = vld [vmem:[#allocation9 + $0x1f0] sm:$0xff]
      %v1115 = vld [vmem:[#allocation9 + $0x1f8] sm:$0xff]
      %v1116 = vld [vmem:[#allocation9 + $0x200] sm:$0xff]
      %v1117 = vld [vmem:[#allocation9 + $0x208] sm:$0xff]
      %v1118 = vld [vmem:[#allocation9 + $0x210] sm:$0xff]
      %v1119 = vld [vmem:[#allocation9 + $0x218] sm:$0xff]
      %v1120 = vld [vmem:[#allocation9 + $0x220] sm:$0xff]
      %v1121 = vld [vmem:[#allocation9 + $0x228] sm:$0xff]
      %v1122 = vld [vmem:[#allocation9 + $0x230] sm:$0xff]
      %v1123 = vld [vmem:[#allocation9 + $0x238] sm:$0xff]
      %v1124 = vld [vmem:[#allocation9 + $0x240] sm:$0xff]
      %v1125 = vld [vmem:[#allocation9 + $0x248] sm:$0xff]
      %v1126 = vld [vmem:[#allocation9 + $0x250] sm:$0xff]
      %v1127 = vld [vmem:[#allocation9 + $0x258] sm:$0xff]
      %v1128 = vld [vmem:[#allocation9 + $0x260] sm:$0xff]
      %v1129 = vld [vmem:[#allocation9 + $0x268] sm:$0xff]
      %v1130 = vld [vmem:[#allocation9 + $0x270] sm:$0xff]
      %v1131 = vld [vmem:[#allocation9 + $0x278] sm:$0xff]
      %v1132 = vld [vmem:[#allocation9 + $0x280] sm:$0xff]
      %v1133 = vld [vmem:[#allocation9 + $0x288] sm:$0xff]
      %v1134 = vld [vmem:[#allocation9 + $0x290] sm:$0xff]
      %v1135 = vld [vmem:[#allocation9 + $0x298] sm:$0xff]
      %v1136 = vld [vmem:[#allocation9 + $0x2a0] sm:$0xff]
      %v1137 = vld [vmem:[#allocation9 + $0x2a8] sm:$0xff]
      %v1138 = vld [vmem:[#allocation9 + $0x2b0] sm:$0xff]
      %v1139 = vld [vmem:[#allocation9 + $0x2b8] sm:$0xff]
      %v1140 = vld [vmem:[#allocation9 + $0x2c0] sm:$0xff]
      %v1141 = vld [vmem:[#allocation9 + $0x2c8] sm:$0xff]
      %v1142 = vld [vmem:[#allocation9 + $0x2d0] sm:$0xff]
      %v1143 = vld [vmem:[#allocation9 + $0x2d8] sm:$0xff]
      %v1144 = vld [vmem:[#allocation9 + $0x2e0] sm:$0xff]
      %v1145 = vld [vmem:[#allocation9 + $0x2e8] sm:$0xff]
      %v1146 = vld [vmem:[#allocation9 + $0x2f0] sm:$0xff]
      %v1147 = vld [vmem:[#allocation9 + $0x2f8] sm:$0xff]
      %v1148 = vld [vmem:[#allocation9 + $0x300] sm:$0xff]
      %v1149 = vld [vmem:[#allocation9 + $0x308] sm:$0xff]
      %v1150 = vld [vmem:[#allocation9 + $0x310] sm:$0xff]
      %v1151 = vld [vmem:[#allocation9 + $0x318] sm:$0xff]
      %v1152 = vld [vmem:[#allocation9 + $0x320] sm:$0xff]
      %v1153 = vld [vmem:[#allocation9 + $0x328] sm:$0xff]
      %v1154 = vld [vmem:[#allocation9 + $0x330] sm:$0xff]
      %v1155 = vld [vmem:[#allocation9 + $0x338] sm:$0xff]
      %v1156 = vld [vmem:[#allocation9 + $0x340] sm:$0xff]
      %v1157 = vld [vmem:[#allocation9 + $0x348] sm:$0xff]
      %v1158 = vld [vmem:[#allocation9 + $0x350] sm:$0xff]
      %v1159 = vld [vmem:[#allocation9 + $0x358] sm:$0xff]
      %v1160 = vld [vmem:[#allocation9 + $0x360] sm:$0xff]
      %v1161 = vld [vmem:[#allocation9 + $0x368] sm:$0xff]
      %v1162 = vld [vmem:[#allocation9 + $0x370] sm:$0xff]
      %v1163 = vld [vmem:[#allocation9 + $0x378] sm:$0xff]
      %v1164 = vld [vmem:[#allocation9 + $0x380] sm:$0xff]
      %v1165 = vld [vmem:[#allocation9 + $0x388] sm:$0xff]
      %v1166 = vld [vmem:[#allocation9 + $0x390] sm:$0xff]
      %v1167 = vld [vmem:[#allocation9 + $0x398] sm:$0xff]
      %v1168 = vld [vmem:[%s2] sm:$0xff]
      %1170 = vset.pattern.permute.xlu0 0
      %1171 = vperm.xlu0 %1170, %v1168
      %v1172 = vpop.permute.xlu0 %1171
      %vm1174 = vcmask 261120
      %v1176 = vsel %vm1174, %v1051, 0
      %1178 = vmatpush.msra.mxu0 0.0
      %1179 = vmatpush.msra.mxu0 0.0
      %1180 = vmatpush.msra.mxu0 0.0
      %1181 = vmatpush.msra.mxu0 0.0
      %1182 = vmatpush.msra.mxu0 0.0
      %1183 = vmatpush.msra.mxu0 0.0
      %1184 = vmatpush.msra.mxu0 0.0
      %1185 = vmatpush.msra.mxu0 0.0
      %1186 = vmatpush.msra.mxu0 0.0
      %1187 = vmatpush.msra.mxu0 0.0
      %1188 = vmatpush.msra.mxu0 0.0
      %1189 = vmatpush.msra.mxu0 0.0
      %1190 = vmatpush.msra.mxu0 %v1139
      %1191 = vmatpush.msra.mxu0 %v1110
      %1192 = vmatpush.msra.mxu0 %v1081
      %1193 = vmatpush.msra.mxu0 %v1052
      %1194 = vmatmul.f32.gmra.mxu0 %v1176
      %v1195 = vpop.f32.mrf.mxu0
      %v1196 = vadd.f32 %v1172, %v1195
      %1197 = vdwg.mxu0
      %1198 = vmatpush.msra.mxu0 0.0
      %1199 = vmatpush.msra.mxu0 0.0
      %1200 = vmatpush.msra.mxu0 0.0
      %1201 = vmatpush.msra.mxu0 0.0
      %1202 = vmatpush.msra.mxu0 0.0
      %1203 = vmatpush.msra.mxu0 0.0
      %1204 = vmatpush.msra.mxu0 0.0
      %1205 = vmatpush.msra.mxu0 0.0
      %1206 = vmatpush.msra.mxu0 0.0
      %1207 = vmatpush.msra.mxu0 0.0
      %1208 = vmatpush.msra.mxu0 0.0
      %1209 = vmatpush.msra.mxu0 0.0
      %1210 = vmatpush.msra.mxu0 %v1140
      %1211 = vmatpush.msra.mxu0 %v1111
      %1212 = vmatpush.msra.mxu0 %v1082
      %1213 = vmatpush.msra.mxu0 %v1053
      %1214 = vmatmul.f32.gmra.mxu0 %v1176
      %v1215 = vpop.f32.mrf.mxu0
      %v1216 = vadd.f32 %v1172, %v1215
      %1217 = vdwg.mxu0
      %1218 = vmatpush.msra.mxu0 0.0
      %1219 = vmatpush.msra.mxu0 0.0
      %1220 = vmatpush.msra.mxu0 0.0
      %1221 = vmatpush.msra.mxu0 0.0
      %1222 = vmatpush.msra.mxu0 0.0
      %1223 = vmatpush.msra.mxu0 0.0
      %1224 = vmatpush.msra.mxu0 0.0
      %1225 = vmatpush.msra.mxu0 0.0
      %1226 = vmatpush.msra.mxu0 0.0
      %1227 = vmatpush.msra.mxu0 0.0
      %1228 = vmatpush.msra.mxu0 0.0
      %1229 = vmatpush.msra.mxu0 0.0
      %1230 = vmatpush.msra.mxu0 %v1141
      %1231 = vmatpush.msra.mxu0 %v1112
      %1232 = vmatpush.msra.mxu0 %v1083
      %1233 = vmatpush.msra.mxu0 %v1054
      %1234 = vmatmul.f32.gmra.mxu0 %v1176
      %v1235 = vpop.f32.mrf.mxu0
      %v1236 = vadd.f32 %v1172, %v1235
      %1237 = vdwg.mxu0
      %1238 = vmatpush.msra.mxu0 0.0
      %1239 = vmatpush.msra.mxu0 0.0
      %1240 = vmatpush.msra.mxu0 0.0
      %1241 = vmatpush.msra.mxu0 0.0
      %1242 = vmatpush.msra.mxu0 0.0
      %1243 = vmatpush.msra.mxu0 0.0
      %1244 = vmatpush.msra.mxu0 0.0
      %1245 = vmatpush.msra.mxu0 0.0
      %1246 = vmatpush.msra.mxu0 0.0
      %1247 = vmatpush.msra.mxu0 0.0
      %1248 = vmatpush.msra.mxu0 0.0
      %1249 = vmatpush.msra.mxu0 0.0
      %1250 = vmatpush.msra.mxu0 %v1142
      %1251 = vmatpush.msra.mxu0 %v1113
      %1252 = vmatpush.msra.mxu0 %v1084
      %1253 = vmatpush.msra.mxu0 %v1055
      %1254 = vmatmul.f32.gmra.mxu0 %v1176
      %v1255 = vpop.f32.mrf.mxu0
      %v1256 = vadd.f32 %v1172, %v1255
      %1257 = vdwg.mxu0
      %1258 = vmatpush.msra.mxu0 0.0
      %1259 = vmatpush.msra.mxu0 0.0
      %1260 = vmatpush.msra.mxu0 0.0
      %1261 = vmatpush.msra.mxu0 0.0
      %1262 = vmatpush.msra.mxu0 0.0
      %1263 = vmatpush.msra.mxu0 0.0
      %1264 = vmatpush.msra.mxu0 0.0
      %1265 = vmatpush.msra.mxu0 0.0
      %1266 = vmatpush.msra.mxu0 0.0
      %1267 = vmatpush.msra.mxu0 0.0
      %1268 = vmatpush.msra.mxu0 0.0
      %1269 = vmatpush.msra.mxu0 0.0
      %1270 = vmatpush.msra.mxu0 %v1143
      %1271 = vmatpush.msra.mxu0 %v1114
      %1272 = vmatpush.msra.mxu0 %v1085
      %1273 = vmatpush.msra.mxu0 %v1056
      %1274 = vmatmul.f32.gmra.mxu0 %v1176
      %v1275 = vpop.f32.mrf.mxu0
      %v1276 = vadd.f32 %v1172, %v1275
      %1277 = vdwg.mxu0
      %1278 = vmatpush.msra.mxu0 0.0
      %1279 = vmatpush.msra.mxu0 0.0
      %1280 = vmatpush.msra.mxu0 0.0
      %1281 = vmatpush.msra.mxu0 0.0
      %1282 = vmatpush.msra.mxu0 0.0
      %1283 = vmatpush.msra.mxu0 0.0
      %1284 = vmatpush.msra.mxu0 0.0
      %1285 = vmatpush.msra.mxu0 0.0
      %1286 = vmatpush.msra.mxu0 0.0
      %1287 = vmatpush.msra.mxu0 0.0
      %1288 = vmatpush.msra.mxu0 0.0
      %1289 = vmatpush.msra.mxu0 0.0
      %1290 = vmatpush.msra.mxu0 %v1144
      %1291 = vmatpush.msra.mxu0 %v1115
      %1292 = vmatpush.msra.mxu0 %v1086
      %1293 = vmatpush.msra.mxu0 %v1057
      %1294 = vmatmul.f32.gmra.mxu0 %v1176
      %v1295 = vpop.f32.mrf.mxu0
      %v1296 = vadd.f32 %v1172, %v1295
      %1297 = vdwg.mxu0
      %1298 = vmatpush.msra.mxu0 0.0
      %1299 = vmatpush.msra.mxu0 0.0
      %1300 = vmatpush.msra.mxu0 0.0
      %1301 = vmatpush.msra.mxu0 0.0
      %1302 = vmatpush.msra.mxu0 0.0
      %1303 = vmatpush.msra.mxu0 0.0
      %1304 = vmatpush.msra.mxu0 0.0
      %1305 = vmatpush.msra.mxu0 0.0
      %1306 = vmatpush.msra.mxu0 0.0
      %1307 = vmatpush.msra.mxu0 0.0
      %1308 = vmatpush.msra.mxu0 0.0
      %1309 = vmatpush.msra.mxu0 0.0
      %1310 = vmatpush.msra.mxu0 %v1145
      %1311 = vmatpush.msra.mxu0 %v1116
      %1312 = vmatpush.msra.mxu0 %v1087
      %1313 = vmatpush.msra.mxu0 %v1058
      %1314 = vmatmul.f32.gmra.mxu0 %v1176
      %v1315 = vpop.f32.mrf.mxu0
      %v1316 = vadd.f32 %v1172, %v1315
      %1317 = vdwg.mxu0
      %1318 = vmatpush.msra.mxu0 0.0
      %1319 = vmatpush.msra.mxu0 0.0
      %1320 = vmatpush.msra.mxu0 0.0
      %1321 = vmatpush.msra.mxu0 0.0
      %1322 = vmatpush.msra.mxu0 0.0
      %1323 = vmatpush.msra.mxu0 0.0
      %1324 = vmatpush.msra.mxu0 0.0
      %1325 = vmatpush.msra.mxu0 0.0
      %1326 = vmatpush.msra.mxu0 0.0
      %1327 = vmatpush.msra.mxu0 0.0
      %1328 = vmatpush.msra.mxu0 0.0
      %1329 = vmatpush.msra.mxu0 0.0
      %1330 = vmatpush.msra.mxu0 %v1146
      %1331 = vmatpush.msra.mxu0 %v1117
      %1332 = vmatpush.msra.mxu0 %v1088
      %1333 = vmatpush.msra.mxu0 %v1059
      %1334 = vmatmul.f32.gmra.mxu0 %v1176
      %v1335 = vpop.f32.mrf.mxu0
      %v1336 = vadd.f32 %v1172, %v1335
      %1337 = vdwg.mxu0
      %1338 = vmatpush.msra.mxu0 0.0
      %1339 = vmatpush.msra.mxu0 0.0
      %1340 = vmatpush.msra.mxu0 0.0
      %1341 = vmatpush.msra.mxu0 0.0
      %1342 = vmatpush.msra.mxu0 0.0
      %1343 = vmatpush.msra.mxu0 0.0
      %1344 = vmatpush.msra.mxu0 0.0
      %1345 = vmatpush.msra.mxu0 0.0
      %1346 = vmatpush.msra.mxu0 0.0
      %1347 = vmatpush.msra.mxu0 0.0
      %1348 = vmatpush.msra.mxu0 0.0
      %1349 = vmatpush.msra.mxu0 0.0
      %1350 = vmatpush.msra.mxu0 %v1147
      %1351 = vmatpush.msra.mxu0 %v1118
      %1352 = vmatpush.msra.mxu0 %v1089
      %1353 = vmatpush.msra.mxu0 %v1060
      %1354 = vmatmul.f32.gmra.mxu0 %v1176
      %v1355 = vpop.f32.mrf.mxu0
      %v1356 = vadd.f32 %v1172, %v1355
      %1357 = vdwg.mxu0
      %1358 = vmatpush.msra.mxu0 0.0
      %1359 = vmatpush.msra.mxu0 0.0
      %1360 = vmatpush.msra.mxu0 0.0
      %1361 = vmatpush.msra.mxu0 0.0
      %1362 = vmatpush.msra.mxu0 0.0
      %1363 = vmatpush.msra.mxu0 0.0
      %1364 = vmatpush.msra.mxu0 0.0
      %1365 = vmatpush.msra.mxu0 0.0
      %1366 = vmatpush.msra.mxu0 0.0
      %1367 = vmatpush.msra.mxu0 0.0
      %1368 = vmatpush.msra.mxu0 0.0
      %1369 = vmatpush.msra.mxu0 0.0
      %1370 = vmatpush.msra.mxu0 %v1148
      %1371 = vmatpush.msra.mxu0 %v1119
      %1372 = vmatpush.msra.mxu0 %v1090
      %1373 = vmatpush.msra.mxu0 %v1061
      %1374 = vmatmul.f32.gmra.mxu0 %v1176
      %v1375 = vpop.f32.mrf.mxu0
      %v1376 = vadd.f32 %v1172, %v1375
      %1377 = vdwg.mxu0
      %1378 = vmatpush.msra.mxu0 0.0
      %1379 = vmatpush.msra.mxu0 0.0
      %1380 = vmatpush.msra.mxu0 0.0
      %1381 = vmatpush.msra.mxu0 0.0
      %1382 = vmatpush.msra.mxu0 0.0
      %1383 = vmatpush.msra.mxu0 0.0
      %1384 = vmatpush.msra.mxu0 0.0
      %1385 = vmatpush.msra.mxu0 0.0
      %1386 = vmatpush.msra.mxu0 0.0
      %1387 = vmatpush.msra.mxu0 0.0
      %1388 = vmatpush.msra.mxu0 0.0
      %1389 = vmatpush.msra.mxu0 0.0
      %1390 = vmatpush.msra.mxu0 %v1149
      %1391 = vmatpush.msra.mxu0 %v1120
      %1392 = vmatpush.msra.mxu0 %v1091
      %1393 = vmatpush.msra.mxu0 %v1062
      %1394 = vmatmul.f32.gmra.mxu0 %v1176
      %v1395 = vpop.f32.mrf.mxu0
      %v1396 = vadd.f32 %v1172, %v1395
      %1397 = vdwg.mxu0
      %1398 = vmatpush.msra.mxu0 0.0
      %1399 = vmatpush.msra.mxu0 0.0
      %1400 = vmatpush.msra.mxu0 0.0
      %1401 = vmatpush.msra.mxu0 0.0
      %1402 = vmatpush.msra.mxu0 0.0
      %1403 = vmatpush.msra.mxu0 0.0
      %1404 = vmatpush.msra.mxu0 0.0
      %1405 = vmatpush.msra.mxu0 0.0
      %1406 = vmatpush.msra.mxu0 0.0
      %1407 = vmatpush.msra.mxu0 0.0
      %1408 = vmatpush.msra.mxu0 0.0
      %1409 = vmatpush.msra.mxu0 0.0
      %1410 = vmatpush.msra.mxu0 %v1150
      %1411 = vmatpush.msra.mxu0 %v1121
      %1412 = vmatpush.msra.mxu0 %v1092
      %1413 = vmatpush.msra.mxu0 %v1063
      %1414 = vmatmul.f32.gmra.mxu0 %v1176
      %v1415 = vpop.f32.mrf.mxu0
      %v1416 = vadd.f32 %v1172, %v1415
      %1417 = vdwg.mxu0
      %1418 = vmatpush.msra.mxu0 0.0
      %1419 = vmatpush.msra.mxu0 0.0
      %1420 = vmatpush.msra.mxu0 0.0
      %1421 = vmatpush.msra.mxu0 0.0
      %1422 = vmatpush.msra.mxu0 0.0
      %1423 = vmatpush.msra.mxu0 0.0
      %1424 = vmatpush.msra.mxu0 0.0
      %1425 = vmatpush.msra.mxu0 0.0
      %1426 = vmatpush.msra.mxu0 0.0
      %1427 = vmatpush.msra.mxu0 0.0
      %1428 = vmatpush.msra.mxu0 0.0
      %1429 = vmatpush.msra.mxu0 0.0
      %1430 = vmatpush.msra.mxu0 %v1151
      %1431 = vmatpush.msra.mxu0 %v1122
      %1432 = vmatpush.msra.mxu0 %v1093
      %1433 = vmatpush.msra.mxu0 %v1064
      %1434 = vmatmul.f32.gmra.mxu0 %v1176
      %v1435 = vpop.f32.mrf.mxu0
      %v1436 = vadd.f32 %v1172, %v1435
      %1437 = vdwg.mxu0
      %1438 = vmatpush.msra.mxu0 0.0
      %1439 = vmatpush.msra.mxu0 0.0
      %1440 = vmatpush.msra.mxu0 0.0
      %1441 = vmatpush.msra.mxu0 0.0
      %1442 = vmatpush.msra.mxu0 0.0
      %1443 = vmatpush.msra.mxu0 0.0
      %1444 = vmatpush.msra.mxu0 0.0
      %1445 = vmatpush.msra.mxu0 0.0
      %1446 = vmatpush.msra.mxu0 0.0
      %1447 = vmatpush.msra.mxu0 0.0
      %1448 = vmatpush.msra.mxu0 0.0
      %1449 = vmatpush.msra.mxu0 0.0
      %1450 = vmatpush.msra.mxu0 %v1152
      %1451 = vmatpush.msra.mxu0 %v1123
      %1452 = vmatpush.msra.mxu0 %v1094
      %1453 = vmatpush.msra.mxu0 %v1065
      %1454 = vmatmul.f32.gmra.mxu0 %v1176
      %v1455 = vpop.f32.mrf.mxu0
      %v1456 = vadd.f32 %v1172, %v1455
      %1457 = vdwg.mxu0
      %1458 = vmatpush.msra.mxu0 0.0
      %1459 = vmatpush.msra.mxu0 0.0
      %1460 = vmatpush.msra.mxu0 0.0
      %1461 = vmatpush.msra.mxu0 0.0
      %1462 = vmatpush.msra.mxu0 0.0
      %1463 = vmatpush.msra.mxu0 0.0
      %1464 = vmatpush.msra.mxu0 0.0
      %1465 = vmatpush.msra.mxu0 0.0
      %1466 = vmatpush.msra.mxu0 0.0
      %1467 = vmatpush.msra.mxu0 0.0
      %1468 = vmatpush.msra.mxu0 0.0
      %1469 = vmatpush.msra.mxu0 0.0
      %1470 = vmatpush.msra.mxu0 %v1153
      %1471 = vmatpush.msra.mxu0 %v1124
      %1472 = vmatpush.msra.mxu0 %v1095
      %1473 = vmatpush.msra.mxu0 %v1066
      %1474 = vmatmul.f32.gmra.mxu0 %v1176
      %v1475 = vpop.f32.mrf.mxu0
      %v1476 = vadd.f32 %v1172, %v1475
      %1477 = vdwg.mxu0
      %1478 = vmatpush.msra.mxu0 0.0
      %1479 = vmatpush.msra.mxu0 0.0
      %1480 = vmatpush.msra.mxu0 0.0
      %1481 = vmatpush.msra.mxu0 0.0
      %1482 = vmatpush.msra.mxu0 0.0
      %1483 = vmatpush.msra.mxu0 0.0
      %1484 = vmatpush.msra.mxu0 0.0
      %1485 = vmatpush.msra.mxu0 0.0
      %1486 = vmatpush.msra.mxu0 0.0
      %1487 = vmatpush.msra.mxu0 0.0
      %1488 = vmatpush.msra.mxu0 0.0
      %1489 = vmatpush.msra.mxu0 0.0
      %1490 = vmatpush.msra.mxu0 %v1154
      %1491 = vmatpush.msra.mxu0 %v1125
      %1492 = vmatpush.msra.mxu0 %v1096
      %1493 = vmatpush.msra.mxu0 %v1067
      %1494 = vmatmul.f32.gmra.mxu0 %v1176
      %v1495 = vpop.f32.mrf.mxu0
      %v1496 = vadd.f32 %v1172, %v1495
      %1497 = vdwg.mxu0
      %1498 = vmatpush.msra.mxu0 0.0
      %1499 = vmatpush.msra.mxu0 0.0
      %1500 = vmatpush.msra.mxu0 0.0
      %1501 = vmatpush.msra.mxu0 0.0
      %1502 = vmatpush.msra.mxu0 0.0
      %1503 = vmatpush.msra.mxu0 0.0
      %1504 = vmatpush.msra.mxu0 0.0
      %1505 = vmatpush.msra.mxu0 0.0
      %1506 = vmatpush.msra.mxu0 0.0
      %1507 = vmatpush.msra.mxu0 0.0
      %1508 = vmatpush.msra.mxu0 0.0
      %1509 = vmatpush.msra.mxu0 0.0
      %1510 = vmatpush.msra.mxu0 %v1155
      %1511 = vmatpush.msra.mxu0 %v1126
      %1512 = vmatpush.msra.mxu0 %v1097
      %1513 = vmatpush.msra.mxu0 %v1068
      %1514 = vmatmul.f32.gmra.mxu0 %v1176
      %v1515 = vpop.f32.mrf.mxu0
      %v1516 = vadd.f32 %v1172, %v1515
      %1517 = vdwg.mxu0
      %1518 = vmatpush.msra.mxu0 0.0
      %1519 = vmatpush.msra.mxu0 0.0
      %1520 = vmatpush.msra.mxu0 0.0
      %1521 = vmatpush.msra.mxu0 0.0
      %1522 = vmatpush.msra.mxu0 0.0
      %1523 = vmatpush.msra.mxu0 0.0
      %1524 = vmatpush.msra.mxu0 0.0
      %1525 = vmatpush.msra.mxu0 0.0
      %1526 = vmatpush.msra.mxu0 0.0
      %1527 = vmatpush.msra.mxu0 0.0
      %1528 = vmatpush.msra.mxu0 0.0
      %1529 = vmatpush.msra.mxu0 0.0
      %1530 = vmatpush.msra.mxu0 %v1156
      %1531 = vmatpush.msra.mxu0 %v1127
      %1532 = vmatpush.msra.mxu0 %v1098
      %1533 = vmatpush.msra.mxu0 %v1069
      %1534 = vmatmul.f32.gmra.mxu0 %v1176
      %v1535 = vpop.f32.mrf.mxu0
      %v1536 = vadd.f32 %v1172, %v1535
      %1537 = vdwg.mxu0
      %1538 = vmatpush.msra.mxu0 0.0
      %1539 = vmatpush.msra.mxu0 0.0
      %1540 = vmatpush.msra.mxu0 0.0
      %1541 = vmatpush.msra.mxu0 0.0
      %1542 = vmatpush.msra.mxu0 0.0
      %1543 = vmatpush.msra.mxu0 0.0
      %1544 = vmatpush.msra.mxu0 0.0
      %1545 = vmatpush.msra.mxu0 0.0
      %1546 = vmatpush.msra.mxu0 0.0
      %1547 = vmatpush.msra.mxu0 0.0
      %1548 = vmatpush.msra.mxu0 0.0
      %1549 = vmatpush.msra.mxu0 0.0
      %1550 = vmatpush.msra.mxu0 %v1157
      %1551 = vmatpush.msra.mxu0 %v1128
      %1552 = vmatpush.msra.mxu0 %v1099
      %1553 = vmatpush.msra.mxu0 %v1070
      %1554 = vmatmul.f32.gmra.mxu0 %v1176
      %v1555 = vpop.f32.mrf.mxu0
      %v1556 = vadd.f32 %v1172, %v1555
      %1557 = vdwg.mxu0
      %1558 = vmatpush.msra.mxu0 0.0
      %1559 = vmatpush.msra.mxu0 0.0
      %1560 = vmatpush.msra.mxu0 0.0
      %1561 = vmatpush.msra.mxu0 0.0
      %1562 = vmatpush.msra.mxu0 0.0
      %1563 = vmatpush.msra.mxu0 0.0
      %1564 = vmatpush.msra.mxu0 0.0
      %1565 = vmatpush.msra.mxu0 0.0
      %1566 = vmatpush.msra.mxu0 0.0
      %1567 = vmatpush.msra.mxu0 0.0
      %1568 = vmatpush.msra.mxu0 0.0
      %1569 = vmatpush.msra.mxu0 0.0
      %1570 = vmatpush.msra.mxu0 %v1158
      %1571 = vmatpush.msra.mxu0 %v1129
      %1572 = vmatpush.msra.mxu0 %v1100
      %1573 = vmatpush.msra.mxu0 %v1071
      %1574 = vmatmul.f32.gmra.mxu0 %v1176
      %v1575 = vpop.f32.mrf.mxu0
      %v1576 = vadd.f32 %v1172, %v1575
      %1577 = vdwg.mxu0
      %1578 = vmatpush.msra.mxu0 0.0
      %1579 = vmatpush.msra.mxu0 0.0
      %1580 = vmatpush.msra.mxu0 0.0
      %1581 = vmatpush.msra.mxu0 0.0
      %1582 = vmatpush.msra.mxu0 0.0
      %1583 = vmatpush.msra.mxu0 0.0
      %1584 = vmatpush.msra.mxu0 0.0
      %1585 = vmatpush.msra.mxu0 0.0
      %1586 = vmatpush.msra.mxu0 0.0
      %1587 = vmatpush.msra.mxu0 0.0
      %1588 = vmatpush.msra.mxu0 0.0
      %1589 = vmatpush.msra.mxu0 0.0
      %1590 = vmatpush.msra.mxu0 %v1159
      %1591 = vmatpush.msra.mxu0 %v1130
      %1592 = vmatpush.msra.mxu0 %v1101
      %1593 = vmatpush.msra.mxu0 %v1072
      %1594 = vmatmul.f32.gmra.mxu0 %v1176
      %v1595 = vpop.f32.mrf.mxu0
      %v1596 = vadd.f32 %v1172, %v1595
      %1597 = vdwg.mxu0
      %1598 = vmatpush.msra.mxu0 0.0
      %1599 = vmatpush.msra.mxu0 0.0
      %1600 = vmatpush.msra.mxu0 0.0
      %1601 = vmatpush.msra.mxu0 0.0
      %1602 = vmatpush.msra.mxu0 0.0
      %1603 = vmatpush.msra.mxu0 0.0
      %1604 = vmatpush.msra.mxu0 0.0
      %1605 = vmatpush.msra.mxu0 0.0
      %1606 = vmatpush.msra.mxu0 0.0
      %1607 = vmatpush.msra.mxu0 0.0
      %1608 = vmatpush.msra.mxu0 0.0
      %1609 = vmatpush.msra.mxu0 0.0
      %1610 = vmatpush.msra.mxu0 %v1160
      %1611 = vmatpush.msra.mxu0 %v1131
      %1612 = vmatpush.msra.mxu0 %v1102
      %1613 = vmatpush.msra.mxu0 %v1073
      %1614 = vmatmul.f32.gmra.mxu0 %v1176
      %v1615 = vpop.f32.mrf.mxu0
      %v1616 = vadd.f32 %v1172, %v1615
      %1617 = vdwg.mxu0
      %1618 = vmatpush.msra.mxu0 0.0
      %1619 = vmatpush.msra.mxu0 0.0
      %1620 = vmatpush.msra.mxu0 0.0
      %1621 = vmatpush.msra.mxu0 0.0
      %1622 = vmatpush.msra.mxu0 0.0
      %1623 = vmatpush.msra.mxu0 0.0
      %1624 = vmatpush.msra.mxu0 0.0
      %1625 = vmatpush.msra.mxu0 0.0
      %1626 = vmatpush.msra.mxu0 0.0
      %1627 = vmatpush.msra.mxu0 0.0
      %1628 = vmatpush.msra.mxu0 0.0
      %1629 = vmatpush.msra.mxu0 0.0
      %1630 = vmatpush.msra.mxu0 %v1161
      %1631 = vmatpush.msra.mxu0 %v1132
      %1632 = vmatpush.msra.mxu0 %v1103
      %1633 = vmatpush.msra.mxu0 %v1074
      %1634 = vmatmul.f32.gmra.mxu0 %v1176
      %v1635 = vpop.f32.mrf.mxu0
      %v1636 = vadd.f32 %v1172, %v1635
      %1637 = vdwg.mxu0
      %1638 = vmatpush.msra.mxu0 0.0
      %1639 = vmatpush.msra.mxu0 0.0
      %1640 = vmatpush.msra.mxu0 0.0
      %1641 = vmatpush.msra.mxu0 0.0
      %1642 = vmatpush.msra.mxu0 0.0
      %1643 = vmatpush.msra.mxu0 0.0
      %1644 = vmatpush.msra.mxu0 0.0
      %1645 = vmatpush.msra.mxu0 0.0
      %1646 = vmatpush.msra.mxu0 0.0
      %1647 = vmatpush.msra.mxu0 0.0
      %1648 = vmatpush.msra.mxu0 0.0
      %1649 = vmatpush.msra.mxu0 0.0
      %1650 = vmatpush.msra.mxu0 %v1162
      %1651 = vmatpush.msra.mxu0 %v1133
      %1652 = vmatpush.msra.mxu0 %v1104
      %1653 = vmatpush.msra.mxu0 %v1075
      %1654 = vmatmul.f32.gmra.mxu0 %v1176
      %v1655 = vpop.f32.mrf.mxu0
      %v1656 = vadd.f32 %v1172, %v1655
      %1657 = vdwg.mxu0
      %1658 = vmatpush.msra.mxu0 0.0
      %1659 = vmatpush.msra.mxu0 0.0
      %1660 = vmatpush.msra.mxu0 0.0
      %1661 = vmatpush.msra.mxu0 0.0
      %1662 = vmatpush.msra.mxu0 0.0
      %1663 = vmatpush.msra.mxu0 0.0
      %1664 = vmatpush.msra.mxu0 0.0
      %1665 = vmatpush.msra.mxu0 0.0
      %1666 = vmatpush.msra.mxu0 0.0
      %1667 = vmatpush.msra.mxu0 0.0
      %1668 = vmatpush.msra.mxu0 0.0
      %1669 = vmatpush.msra.mxu0 0.0
      %1670 = vmatpush.msra.mxu0 %v1163
      %1671 = vmatpush.msra.mxu0 %v1134
      %1672 = vmatpush.msra.mxu0 %v1105
      %1673 = vmatpush.msra.mxu0 %v1076
      %1674 = vmatmul.f32.gmra.mxu0 %v1176
      %v1675 = vpop.f32.mrf.mxu0
      %v1676 = vadd.f32 %v1172, %v1675
      %1677 = vdwg.mxu0
      %1678 = vmatpush.msra.mxu0 0.0
      %1679 = vmatpush.msra.mxu0 0.0
      %1680 = vmatpush.msra.mxu0 0.0
      %1681 = vmatpush.msra.mxu0 0.0
      %1682 = vmatpush.msra.mxu0 0.0
      %1683 = vmatpush.msra.mxu0 0.0
      %1684 = vmatpush.msra.mxu0 0.0
      %1685 = vmatpush.msra.mxu0 0.0
      %1686 = vmatpush.msra.mxu0 0.0
      %1687 = vmatpush.msra.mxu0 0.0
      %1688 = vmatpush.msra.mxu0 0.0
      %1689 = vmatpush.msra.mxu0 0.0
      %1690 = vmatpush.msra.mxu0 %v1164
      %1691 = vmatpush.msra.mxu0 %v1135
      %1692 = vmatpush.msra.mxu0 %v1106
      %1693 = vmatpush.msra.mxu0 %v1077
      %1694 = vmatmul.f32.gmra.mxu0 %v1176
      %v1695 = vpop.f32.mrf.mxu0
      %v1696 = vadd.f32 %v1172, %v1695
      %1697 = vdwg.mxu0
      %1698 = vmatpush.msra.mxu0 0.0
      %1699 = vmatpush.msra.mxu0 0.0
      %1700 = vmatpush.msra.mxu0 0.0
      %1701 = vmatpush.msra.mxu0 0.0
      %1702 = vmatpush.msra.mxu0 0.0
      %1703 = vmatpush.msra.mxu0 0.0
      %1704 = vmatpush.msra.mxu0 0.0
      %1705 = vmatpush.msra.mxu0 0.0
      %1706 = vmatpush.msra.mxu0 0.0
      %1707 = vmatpush.msra.mxu0 0.0
      %1708 = vmatpush.msra.mxu0 0.0
      %1709 = vmatpush.msra.mxu0 0.0
      %1710 = vmatpush.msra.mxu0 %v1165
      %1711 = vmatpush.msra.mxu0 %v1136
      %1712 = vmatpush.msra.mxu0 %v1107
      %1713 = vmatpush.msra.mxu0 %v1078
      %1714 = vmatmul.f32.gmra.mxu0 %v1176
      %v1715 = vpop.f32.mrf.mxu0
      %v1716 = vadd.f32 %v1172, %v1715
      %1717 = vdwg.mxu0
      %1718 = vmatpush.msra.mxu0 0.0
      %1719 = vmatpush.msra.mxu0 0.0
      %1720 = vmatpush.msra.mxu0 0.0
      %1721 = vmatpush.msra.mxu0 0.0
      %1722 = vmatpush.msra.mxu0 0.0
      %1723 = vmatpush.msra.mxu0 0.0
      %1724 = vmatpush.msra.mxu0 0.0
      %1725 = vmatpush.msra.mxu0 0.0
      %1726 = vmatpush.msra.mxu0 0.0
      %1727 = vmatpush.msra.mxu0 0.0
      %1728 = vmatpush.msra.mxu0 0.0
      %1729 = vmatpush.msra.mxu0 0.0
      %1730 = vmatpush.msra.mxu0 %v1166
      %1731 = vmatpush.msra.mxu0 %v1137
      %1732 = vmatpush.msra.mxu0 %v1108
      %1733 = vmatpush.msra.mxu0 %v1079
      %1734 = vmatmul.f32.gmra.mxu0 %v1176
      %v1735 = vpop.f32.mrf.mxu0
      %v1736 = vadd.f32 %v1172, %v1735
      %1737 = vdwg.mxu0
      %1738 = vmatpush.msra.mxu0 0.0
      %1739 = vmatpush.msra.mxu0 0.0
      %1740 = vmatpush.msra.mxu0 0.0
      %1741 = vmatpush.msra.mxu0 0.0
      %1742 = vmatpush.msra.mxu0 0.0
      %1743 = vmatpush.msra.mxu0 0.0
      %1744 = vmatpush.msra.mxu0 0.0
      %1745 = vmatpush.msra.mxu0 0.0
      %1746 = vmatpush.msra.mxu0 0.0
      %1747 = vmatpush.msra.mxu0 0.0
      %1748 = vmatpush.msra.mxu0 0.0
      %1749 = vmatpush.msra.mxu0 0.0
      %1750 = vmatpush.msra.mxu0 %v1167
      %1751 = vmatpush.msra.mxu0 %v1138
      %1752 = vmatpush.msra.mxu0 %v1109
      %1753 = vmatpush.msra.mxu0 %v1080
      %1754 = vmatmul.f32.gmra.mxu0 %v1176
      %v1755 = vpop.f32.mrf.mxu0
      %v1756 = vadd.f32 %v1172, %v1755
      %1757 = vdwg.mxu0
      %v1758 = vmax.f32 %v1196, 0.0
      %v1759 = vmax.f32 %v1216, 0.0
      %v1760 = vmax.f32 %v1236, 0.0
      %v1761 = vmax.f32 %v1256, 0.0
      %v1762 = vmax.f32 %v1276, 0.0
      %v1763 = vmax.f32 %v1296, 0.0
      %v1764 = vmax.f32 %v1316, 0.0
      %v1765 = vmax.f32 %v1336, 0.0
      %v1766 = vmax.f32 %v1356, 0.0
      %v1767 = vmax.f32 %v1376, 0.0
      %v1768 = vmax.f32 %v1396, 0.0
      %v1769 = vmax.f32 %v1416, 0.0
      %v1770 = vmax.f32 %v1436, 0.0
      %v1771 = vmax.f32 %v1456, 0.0
      %v1772 = vmax.f32 %v1476, 0.0
      %v1773 = vmax.f32 %v1496, 0.0
      %v1774 = vmax.f32 %v1516, 0.0
      %v1775 = vmax.f32 %v1536, 0.0
      %v1776 = vmax.f32 %v1556, 0.0
      %v1777 = vmax.f32 %v1576, 0.0
      %v1778 = vmax.f32 %v1596, 0.0
      %v1779 = vmax.f32 %v1616, 0.0
      %v1780 = vmax.f32 %v1636, 0.0
      %v1781 = vmax.f32 %v1656, 0.0
      %v1782 = vmax.f32 %v1676, 0.0
      %v1783 = vmax.f32 %v1696, 0.0
      %v1784 = vmax.f32 %v1716, 0.0
      %v1785 = vmax.f32 %v1736, 0.0
      %v1786 = vmax.f32 %v1756, 0.0
      %1787 = vst [vmem:[#allocation2] sm:$0xff] %v1758
      %1788 = vst [vmem:[#allocation2 + $0x8] sm:$0xff] %v1759
      %1789 = vst [vmem:[#allocation2 + $0x10] sm:$0xff] %v1760
      %1790 = vst [vmem:[#allocation2 + $0x18] sm:$0xff] %v1761
      %1791 = vst [vmem:[#allocation2 + $0x20] sm:$0xff] %v1762
      %1792 = vst [vmem:[#allocation2 + $0x28] sm:$0xff] %v1763
      %1793 = vst [vmem:[#allocation2 + $0x30] sm:$0xff] %v1764
      %1794 = vst [vmem:[#allocation2 + $0x38] sm:$0xff] %v1765
      %1795 = vst [vmem:[#allocation2 + $0x40] sm:$0xff] %v1766
      %1796 = vst [vmem:[#allocation2 + $0x48] sm:$0xff] %v1767
      %1797 = vst [vmem:[#allocation2 + $0x50] sm:$0xff] %v1768
      %1798 = vst [vmem:[#allocation2 + $0x58] sm:$0xff] %v1769
      %1799 = vst [vmem:[#allocation2 + $0x60] sm:$0xff] %v1770
      %1800 = vst [vmem:[#allocation2 + $0x68] sm:$0xff] %v1771
      %1801 = vst [vmem:[#allocation2 + $0x70] sm:$0xff] %v1772
      %1802 = vst [vmem:[#allocation2 + $0x78] sm:$0xff] %v1773
      %1803 = vst [vmem:[#allocation2 + $0x80] sm:$0xff] %v1774
      %1804 = vst [vmem:[#allocation2 + $0x88] sm:$0xff] %v1775
      %1805 = vst [vmem:[#allocation2 + $0x90] sm:$0xff] %v1776
      %1806 = vst [vmem:[#allocation2 + $0x98] sm:$0xff] %v1777
      %1807 = vst [vmem:[#allocation2 + $0xa0] sm:$0xff] %v1778
      %1808 = vst [vmem:[#allocation2 + $0xa8] sm:$0xff] %v1779
      %1809 = vst [vmem:[#allocation2 + $0xb0] sm:$0xff] %v1780
      %1810 = vst [vmem:[#allocation2 + $0xb8] sm:$0xff] %v1781
      %1811 = vst [vmem:[#allocation2 + $0xc0] sm:$0xff] %v1782
      %1812 = vst [vmem:[#allocation2 + $0xc8] sm:$0xff] %v1783
      %1813 = vst [vmem:[#allocation2 + $0xd0] sm:$0xff] %v1784
      %1814 = vst [vmem:[#allocation2 + $0xd8] sm:$0xff] %v1785
      %1815 = vst.msk [vmem:[#allocation2 + $0xe0] sm:$0xff] %vm430, %v1786
      %vm1816 = vcmask 1048152
      %1817 = vst.msk [vmem:[#allocation2 + $0xe0] sm:$0xff] %vm1816, 0.0
      %vm1818 = vcmask 72704
      %1819 = vst.msk [vmem:[#allocation2 + $0xe8] sm:$0xff] %vm1818, 0.0
      %v1820 = vld [vmem:[#allocation2] sm:$0xff]
      %v1821 = vld [vmem:[#allocation2 + $0x8] sm:$0xff]
      %v1822 = vld [vmem:[#allocation2 + $0x10] sm:$0xff]
      %v1823 = vld [vmem:[#allocation2 + $0x18] sm:$0xff]
      %v1824 = vld [vmem:[#allocation2 + $0x20] sm:$0xff]
      %v1825 = vld [vmem:[#allocation2 + $0x28] sm:$0xff]
      %v1826 = vld [vmem:[#allocation2 + $0x30] sm:$0xff]
      %v1827 = vld [vmem:[#allocation2 + $0x38] sm:$0xff]
      %v1828 = vld [vmem:[#allocation2 + $0x40] sm:$0xff]
      %v1829 = vld [vmem:[#allocation2 + $0x48] sm:$0xff]
      %v1830 = vld [vmem:[#allocation2 + $0x50] sm:$0xff]
      %v1831 = vld [vmem:[#allocation2 + $0x58] sm:$0xff]
      %v1832 = vld [vmem:[#allocation2 + $0x60] sm:$0xff]
      %v1833 = vld [vmem:[#allocation2 + $0x68] sm:$0xff]
      %v1834 = vld [vmem:[#allocation2 + $0x70] sm:$0xff]
      %v1835 = vld [vmem:[#allocation2 + $0x78] sm:$0xff]
      %v1836 = vld [vmem:[#allocation2 + $0x80] sm:$0xff]
      %v1837 = vld [vmem:[#allocation2 + $0x88] sm:$0xff]
      %v1838 = vld [vmem:[#allocation2 + $0x90] sm:$0xff]
      %v1839 = vld [vmem:[#allocation2 + $0x98] sm:$0xff]
      %v1840 = vld [vmem:[#allocation2 + $0xa0] sm:$0xff]
      %v1841 = vld [vmem:[#allocation2 + $0xa8] sm:$0xff]
      %v1842 = vld [vmem:[#allocation2 + $0xb0] sm:$0xff]
      %v1843 = vld [vmem:[#allocation2 + $0xb8] sm:$0xff]
      %v1844 = vld [vmem:[#allocation2 + $0xc0] sm:$0xff]
      %v1845 = vld [vmem:[#allocation2 + $0xc8] sm:$0xff]
      %v1846 = vld [vmem:[#allocation2 + $0xd0] sm:$0xff]
      %v1847 = vld [vmem:[#allocation2 + $0xd8] sm:$0xff]
      %v1848 = vld [vmem:[#allocation2 + $0xe0] sm:$0xff]
      %1849 = vst [vmem:[#allocation9] sm:$0xff] %v1820
      %1850 = vst [vmem:[#allocation9 + $0x8] sm:$0xff] %v1821
      %1851 = vst [vmem:[#allocation9 + $0x10] sm:$0xff] %v1822
      %1852 = vst [vmem:[#allocation9 + $0x18] sm:$0xff] %v1823
      %1853 = vst [vmem:[#allocation9 + $0x20] sm:$0xff] %v1824
      %1854 = vst [vmem:[#allocation9 + $0x28] sm:$0xff] %v1825
      %1855 = vst [vmem:[#allocation9 + $0x30] sm:$0xff] %v1826
      %1856 = vst [vmem:[#allocation9 + $0x38] sm:$0xff] %v1827
      %1857 = vst [vmem:[#allocation9 + $0x40] sm:$0xff] %v1828
      %1858 = vst [vmem:[#allocation9 + $0x48] sm:$0xff] %v1829
      %1859 = vst [vmem:[#allocation9 + $0x50] sm:$0xff] %v1830
      %1860 = vst [vmem:[#allocation9 + $0x58] sm:$0xff] %v1831
      %1861 = vst [vmem:[#allocation9 + $0x60] sm:$0xff] %v1832
      %1862 = vst [vmem:[#allocation9 + $0x68] sm:$0xff] %v1833
      %1863 = vst [vmem:[#allocation9 + $0x70] sm:$0xff] %v1834
      %1864 = vst [vmem:[#allocation9 + $0x78] sm:$0xff] %v1835
      %1865 = vst [vmem:[#allocation9 + $0x80] sm:$0xff] %v1836
      %1866 = vst [vmem:[#allocation9 + $0x88] sm:$0xff] %v1837
      %1867 = vst [vmem:[#allocation9 + $0x90] sm:$0xff] %v1838
      %1868 = vst [vmem:[#allocation9 + $0x98] sm:$0xff] %v1839
      %1869 = vst [vmem:[#allocation9 + $0xa0] sm:$0xff] %v1840
      %1870 = vst [vmem:[#allocation9 + $0xa8] sm:$0xff] %v1841
      %1871 = vst [vmem:[#allocation9 + $0xb0] sm:$0xff] %v1842
      %1872 = vst [vmem:[#allocation9 + $0xb8] sm:$0xff] %v1843
      %1873 = vst [vmem:[#allocation9 + $0xc0] sm:$0xff] %v1844
      %1874 = vst [vmem:[#allocation9 + $0xc8] sm:$0xff] %v1845
      %1875 = vst [vmem:[#allocation9 + $0xd0] sm:$0xff] %v1846
      %1876 = vst [vmem:[#allocation9 + $0xd8] sm:$0xff] %v1847
      %vm1877 = vcmask 105472
      %1878 = vst.msk [vmem:[#allocation9 + $0xe0] sm:$0xff] %vm1877, %v1848
      %v1879 = vld [vmem:[#allocation2] sm:$0xff]
      %v1880 = vld [vmem:[#allocation2 + $0x8] sm:$0xff]
      %v1881 = vld [vmem:[#allocation2 + $0x10] sm:$0xff]
      %v1882 = vld [vmem:[#allocation2 + $0x18] sm:$0xff]
      %v1883 = vld [vmem:[#allocation2 + $0x20] sm:$0xff]
      %v1884 = vld [vmem:[#allocation2 + $0x28] sm:$0xff]
      %v1885 = vld [vmem:[#allocation2 + $0x30] sm:$0xff]
      %v1886 = vld [vmem:[#allocation2 + $0x38] sm:$0xff]
      %v1887 = vld [vmem:[#allocation2 + $0x40] sm:$0xff]
      %v1888 = vld [vmem:[#allocation2 + $0x48] sm:$0xff]
      %v1889 = vld [vmem:[#allocation2 + $0x50] sm:$0xff]
      %v1890 = vld [vmem:[#allocation2 + $0x58] sm:$0xff]
      %v1891 = vld [vmem:[#allocation2 + $0x60] sm:$0xff]
      %v1892 = vld [vmem:[#allocation2 + $0x68] sm:$0xff]
      %v1893 = vld [vmem:[#allocation2 + $0x70] sm:$0xff]
      %v1894 = vld [vmem:[#allocation2 + $0x78] sm:$0xff]
      %v1895 = vld [vmem:[#allocation2 + $0x80] sm:$0xff]
      %v1896 = vld [vmem:[#allocation2 + $0x88] sm:$0xff]
      %v1897 = vld [vmem:[#allocation2 + $0x90] sm:$0xff]
      %v1898 = vld [vmem:[#allocation2 + $0x98] sm:$0xff]
      %v1899 = vld [vmem:[#allocation2 + $0xa0] sm:$0xff]
      %v1900 = vld [vmem:[#allocation2 + $0xa8] sm:$0xff]
      %v1901 = vld [vmem:[#allocation2 + $0xb0] sm:$0xff]
      %v1902 = vld [vmem:[#allocation2 + $0xb8] sm:$0xff]
      %v1903 = vld [vmem:[#allocation2 + $0xc0] sm:$0xff]
      %v1904 = vld [vmem:[#allocation2 + $0xc8] sm:$0xff]
      %v1905 = vld [vmem:[#allocation2 + $0xd0] sm:$0xff]
      %v1906 = vld [vmem:[#allocation2 + $0xd8] sm:$0xff]
      %v1907 = vld [vmem:[#allocation2 + $0xe0] sm:$0xff]
      %1937 = vrot.lane.b32.xlu0 %v1879, 127
      %v1938 = vpop.permute.xlu0 %1937
      %1939 = vrot.lane.b32.xlu0 %v1880, 127
      %v1940 = vpop.permute.xlu0 %1939
      %1941 = vrot.lane.b32.xlu0 %v1881, 127
      %v1942 = vpop.permute.xlu0 %1941
      %1943 = vrot.lane.b32.xlu0 %v1882, 127
      %v1944 = vpop.permute.xlu0 %1943
      %1945 = vrot.lane.b32.xlu0 %v1883, 127
      %v1946 = vpop.permute.xlu0 %1945
      %1947 = vrot.lane.b32.xlu0 %v1884, 127
      %v1948 = vpop.permute.xlu0 %1947
      %1949 = vrot.lane.b32.xlu0 %v1885, 127
      %v1950 = vpop.permute.xlu0 %1949
      %1951 = vrot.lane.b32.xlu0 %v1886, 127
      %v1952 = vpop.permute.xlu0 %1951
      %1953 = vrot.lane.b32.xlu0 %v1887, 127
      %v1954 = vpop.permute.xlu0 %1953
      %1955 = vrot.lane.b32.xlu0 %v1888, 127
      %v1956 = vpop.permute.xlu0 %1955
      %1957 = vrot.lane.b32.xlu0 %v1889, 127
      %v1958 = vpop.permute.xlu0 %1957
      %1959 = vrot.lane.b32.xlu0 %v1890, 127
      %v1960 = vpop.permute.xlu0 %1959
      %1961 = vrot.lane.b32.xlu0 %v1891, 127
      %v1962 = vpop.permute.xlu0 %1961
      %1963 = vrot.lane.b32.xlu0 %v1892, 127
      %v1964 = vpop.permute.xlu0 %1963
      %1965 = vrot.lane.b32.xlu0 %v1893, 127
      %v1966 = vpop.permute.xlu0 %1965
      %1967 = vrot.lane.b32.xlu0 %v1894, 127
      %v1968 = vpop.permute.xlu0 %1967
      %1969 = vrot.lane.b32.xlu0 %v1895, 127
      %v1970 = vpop.permute.xlu0 %1969
      %1971 = vrot.lane.b32.xlu0 %v1896, 127
      %v1972 = vpop.permute.xlu0 %1971
      %1973 = vrot.lane.b32.xlu0 %v1897, 127
      %v1974 = vpop.permute.xlu0 %1973
      %1975 = vrot.lane.b32.xlu0 %v1898, 127
      %v1976 = vpop.permute.xlu0 %1975
      %1977 = vrot.lane.b32.xlu0 %v1899, 127
      %v1978 = vpop.permute.xlu0 %1977
      %1979 = vrot.lane.b32.xlu0 %v1900, 127
      %v1980 = vpop.permute.xlu0 %1979
      %1981 = vrot.lane.b32.xlu0 %v1901, 127
      %v1982 = vpop.permute.xlu0 %1981
      %1983 = vrot.lane.b32.xlu0 %v1902, 127
      %v1984 = vpop.permute.xlu0 %1983
      %1985 = vrot.lane.b32.xlu0 %v1903, 127
      %v1986 = vpop.permute.xlu0 %1985
      %1987 = vrot.lane.b32.xlu0 %v1904, 127
      %v1988 = vpop.permute.xlu0 %1987
      %1989 = vrot.lane.b32.xlu0 %v1905, 127
      %v1990 = vpop.permute.xlu0 %1989
      %1991 = vrot.lane.b32.xlu0 %v1906, 127
      %v1992 = vpop.permute.xlu0 %1991
      %1993 = vrot.lane.b32.xlu0 %v1907, 127
      %v1994 = vpop.permute.xlu0 %1993
      %v1995 = vsel %vm548, %v1938, %v1940
      %v1996 = vsel %vm548, %v1940, %v1942
      %v1997 = vsel %vm548, %v1942, %v1944
      %v1998 = vsel %vm548, %v1944, %v1946
      %v1999 = vsel %vm548, %v1946, %v1948
      %v2000 = vsel %vm548, %v1948, %v1950
      %v2001 = vsel %vm548, %v1950, %v1952
      %v2002 = vsel %vm548, %v1952, %v1954
      %v2003 = vsel %vm548, %v1954, %v1956
      %v2004 = vsel %vm548, %v1956, %v1958
      %v2005 = vsel %vm548, %v1958, %v1960
      %v2006 = vsel %vm548, %v1960, %v1962
      %v2007 = vsel %vm548, %v1962, %v1964
      %v2008 = vsel %vm548, %v1964, %v1966
      %v2009 = vsel %vm548, %v1966, %v1968
      %v2010 = vsel %vm548, %v1968, %v1970
      %v2011 = vsel %vm548, %v1970, %v1972
      %v2012 = vsel %vm548, %v1972, %v1974
      %v2013 = vsel %vm548, %v1974, %v1976
      %v2014 = vsel %vm548, %v1976, %v1978
      %v2015 = vsel %vm548, %v1978, %v1980
      %v2016 = vsel %vm548, %v1980, %v1982
      %v2017 = vsel %vm548, %v1982, %v1984
      %v2018 = vsel %vm548, %v1984, %v1986
      %v2019 = vsel %vm548, %v1986, %v1988
      %v2020 = vsel %vm548, %v1988, %v1990
      %v2021 = vsel %vm548, %v1990, %v1992
      %v2022 = vsel %vm548, %v1992, %v1994
      %2052 = vst [vmem:[#allocation9 + $0xe8] sm:$0xff] %v1995
      %2053 = vst [vmem:[#allocation9 + $0xf0] sm:$0xff] %v1996
      %2054 = vst [vmem:[#allocation9 + $0xf8] sm:$0xff] %v1997
      %2055 = vst [vmem:[#allocation9 + $0x100] sm:$0xff] %v1998
      %2056 = vst [vmem:[#allocation9 + $0x108] sm:$0xff] %v1999
      %2057 = vst [vmem:[#allocation9 + $0x110] sm:$0xff] %v2000
      %2058 = vst [vmem:[#allocation9 + $0x118] sm:$0xff] %v2001
      %2059 = vst [vmem:[#allocation9 + $0x120] sm:$0xff] %v2002
      %2060 = vst [vmem:[#allocation9 + $0x128] sm:$0xff] %v2003
      %2061 = vst [vmem:[#allocation9 + $0x130] sm:$0xff] %v2004
      %2062 = vst [vmem:[#allocation9 + $0x138] sm:$0xff] %v2005
      %2063 = vst [vmem:[#allocation9 + $0x140] sm:$0xff] %v2006
      %2064 = vst [vmem:[#allocation9 + $0x148] sm:$0xff] %v2007
      %2065 = vst [vmem:[#allocation9 + $0x150] sm:$0xff] %v2008
      %2066 = vst [vmem:[#allocation9 + $0x158] sm:$0xff] %v2009
      %2067 = vst [vmem:[#allocation9 + $0x160] sm:$0xff] %v2010
      %2068 = vst [vmem:[#allocation9 + $0x168] sm:$0xff] %v2011
      %2069 = vst [vmem:[#allocation9 + $0x170] sm:$0xff] %v2012
      %2070 = vst [vmem:[#allocation9 + $0x178] sm:$0xff] %v2013
      %2071 = vst [vmem:[#allocation9 + $0x180] sm:$0xff] %v2014
      %2072 = vst [vmem:[#allocation9 + $0x188] sm:$0xff] %v2015
      %2073 = vst [vmem:[#allocation9 + $0x190] sm:$0xff] %v2016
      %2074 = vst [vmem:[#allocation9 + $0x198] sm:$0xff] %v2017
      %2075 = vst [vmem:[#allocation9 + $0x1a0] sm:$0xff] %v2018
      %2076 = vst [vmem:[#allocation9 + $0x1a8] sm:$0xff] %v2019
      %2077 = vst [vmem:[#allocation9 + $0x1b0] sm:$0xff] %v2020
      %2078 = vst [vmem:[#allocation9 + $0x1b8] sm:$0xff] %v2021
      %2079 = vst [vmem:[#allocation9 + $0x1c0] sm:$0xff] %v2022
      %2080 = vst.msk [vmem:[#allocation9 + $0x1c8] sm:$0xff] %vm1877, %v1994
      %v2081 = vld [vmem:[#allocation2] sm:$0xff]
      %v2082 = vld [vmem:[#allocation2 + $0x8] sm:$0xff]
      %v2083 = vld [vmem:[#allocation2 + $0x10] sm:$0xff]
      %v2084 = vld [vmem:[#allocation2 + $0x18] sm:$0xff]
      %v2085 = vld [vmem:[#allocation2 + $0x20] sm:$0xff]
      %v2086 = vld [vmem:[#allocation2 + $0x28] sm:$0xff]
      %v2087 = vld [vmem:[#allocation2 + $0x30] sm:$0xff]
      %v2088 = vld [vmem:[#allocation2 + $0x38] sm:$0xff]
      %v2089 = vld [vmem:[#allocation2 + $0x40] sm:$0xff]
      %v2090 = vld [vmem:[#allocation2 + $0x48] sm:$0xff]
      %v2091 = vld [vmem:[#allocation2 + $0x50] sm:$0xff]
      %v2092 = vld [vmem:[#allocation2 + $0x58] sm:$0xff]
      %v2093 = vld [vmem:[#allocation2 + $0x60] sm:$0xff]
      %v2094 = vld [vmem:[#allocation2 + $0x68] sm:$0xff]
      %v2095 = vld [vmem:[#allocation2 + $0x70] sm:$0xff]
      %v2096 = vld [vmem:[#allocation2 + $0x78] sm:$0xff]
      %v2097 = vld [vmem:[#allocation2 + $0x80] sm:$0xff]
      %v2098 = vld [vmem:[#allocation2 + $0x88] sm:$0xff]
      %v2099 = vld [vmem:[#allocation2 + $0x90] sm:$0xff]
      %v2100 = vld [vmem:[#allocation2 + $0x98] sm:$0xff]
      %v2101 = vld [vmem:[#allocation2 + $0xa0] sm:$0xff]
      %v2102 = vld [vmem:[#allocation2 + $0xa8] sm:$0xff]
      %v2103 = vld [vmem:[#allocation2 + $0xb0] sm:$0xff]
      %v2104 = vld [vmem:[#allocation2 + $0xb8] sm:$0xff]
      %v2105 = vld [vmem:[#allocation2 + $0xc0] sm:$0xff]
      %v2106 = vld [vmem:[#allocation2 + $0xc8] sm:$0xff]
      %v2107 = vld [vmem:[#allocation2 + $0xd0] sm:$0xff]
      %v2108 = vld [vmem:[#allocation2 + $0xd8] sm:$0xff]
      %v2109 = vld [vmem:[#allocation2 + $0xe0] sm:$0xff]
      %2139 = vrot.lane.b32.xlu0 %v2081, 126
      %v2140 = vpop.permute.xlu0 %2139
      %2141 = vrot.lane.b32.xlu0 %v2082, 126
      %v2142 = vpop.permute.xlu0 %2141
      %2143 = vrot.lane.b32.xlu0 %v2083, 126
      %v2144 = vpop.permute.xlu0 %2143
      %2145 = vrot.lane.b32.xlu0 %v2084, 126
      %v2146 = vpop.permute.xlu0 %2145
      %2147 = vrot.lane.b32.xlu0 %v2085, 126
      %v2148 = vpop.permute.xlu0 %2147
      %2149 = vrot.lane.b32.xlu0 %v2086, 126
      %v2150 = vpop.permute.xlu0 %2149
      %2151 = vrot.lane.b32.xlu0 %v2087, 126
      %v2152 = vpop.permute.xlu0 %2151
      %2153 = vrot.lane.b32.xlu0 %v2088, 126
      %v2154 = vpop.permute.xlu0 %2153
      %2155 = vrot.lane.b32.xlu0 %v2089, 126
      %v2156 = vpop.permute.xlu0 %2155
      %2157 = vrot.lane.b32.xlu0 %v2090, 126
      %v2158 = vpop.permute.xlu0 %2157
      %2159 = vrot.lane.b32.xlu0 %v2091, 126
      %v2160 = vpop.permute.xlu0 %2159
      %2161 = vrot.lane.b32.xlu0 %v2092, 126
      %v2162 = vpop.permute.xlu0 %2161
      %2163 = vrot.lane.b32.xlu0 %v2093, 126
      %v2164 = vpop.permute.xlu0 %2163
      %2165 = vrot.lane.b32.xlu0 %v2094, 126
      %v2166 = vpop.permute.xlu0 %2165
      %2167 = vrot.lane.b32.xlu0 %v2095, 126
      %v2168 = vpop.permute.xlu0 %2167
      %2169 = vrot.lane.b32.xlu0 %v2096, 126
      %v2170 = vpop.permute.xlu0 %2169
      %2171 = vrot.lane.b32.xlu0 %v2097, 126
      %v2172 = vpop.permute.xlu0 %2171
      %2173 = vrot.lane.b32.xlu0 %v2098, 126
      %v2174 = vpop.permute.xlu0 %2173
      %2175 = vrot.lane.b32.xlu0 %v2099, 126
      %v2176 = vpop.permute.xlu0 %2175
      %2177 = vrot.lane.b32.xlu0 %v2100, 126
      %v2178 = vpop.permute.xlu0 %2177
      %2179 = vrot.lane.b32.xlu0 %v2101, 126
      %v2180 = vpop.permute.xlu0 %2179
      %2181 = vrot.lane.b32.xlu0 %v2102, 126
      %v2182 = vpop.permute.xlu0 %2181
      %2183 = vrot.lane.b32.xlu0 %v2103, 126
      %v2184 = vpop.permute.xlu0 %2183
      %2185 = vrot.lane.b32.xlu0 %v2104, 126
      %v2186 = vpop.permute.xlu0 %2185
      %2187 = vrot.lane.b32.xlu0 %v2105, 126
      %v2188 = vpop.permute.xlu0 %2187
      %2189 = vrot.lane.b32.xlu0 %v2106, 126
      %v2190 = vpop.permute.xlu0 %2189
      %2191 = vrot.lane.b32.xlu0 %v2107, 126
      %v2192 = vpop.permute.xlu0 %2191
      %2193 = vrot.lane.b32.xlu0 %v2108, 126
      %v2194 = vpop.permute.xlu0 %2193
      %2195 = vrot.lane.b32.xlu0 %v2109, 126
      %v2196 = vpop.permute.xlu0 %2195
      %vm2197 = vcmask 1031168
      %v2198 = vsel %vm2197, %v2140, %v2142
      %v2199 = vsel %vm2197, %v2142, %v2144
      %v2200 = vsel %vm2197, %v2144, %v2146
      %v2201 = vsel %vm2197, %v2146, %v2148
      %v2202 = vsel %vm2197, %v2148, %v2150
      %v2203 = vsel %vm2197, %v2150, %v2152
      %v2204 = vsel %vm2197, %v2152, %v2154
      %v2205 = vsel %vm2197, %v2154, %v2156
      %v2206 = vsel %vm2197, %v2156, %v2158
      %v2207 = vsel %vm2197, %v2158, %v2160
      %v2208 = vsel %vm2197, %v2160, %v2162
      %v2209 = vsel %vm2197, %v2162, %v2164
      %v2210 = vsel %vm2197, %v2164, %v2166
      %v2211 = vsel %vm2197, %v2166, %v2168
      %v2212 = vsel %vm2197, %v2168, %v2170
      %v2213 = vsel %vm2197, %v2170, %v2172
      %v2214 = vsel %vm2197, %v2172, %v2174
      %v2215 = vsel %vm2197, %v2174, %v2176
      %v2216 = vsel %vm2197, %v2176, %v2178
      %v2217 = vsel %vm2197, %v2178, %v2180
      %v2218 = vsel %vm2197, %v2180, %v2182
      %v2219 = vsel %vm2197, %v2182, %v2184
      %v2220 = vsel %vm2197, %v2184, %v2186
      %v2221 = vsel %vm2197, %v2186, %v2188
      %v2222 = vsel %vm2197, %v2188, %v2190
      %v2223 = vsel %vm2197, %v2190, %v2192
      %v2224 = vsel %vm2197, %v2192, %v2194
      %v2225 = vsel %vm2197, %v2194, %v2196
      %2255 = vst [vmem:[#allocation9 + $0x1d0] sm:$0xff] %v2198
      %2256 = vst [vmem:[#allocation9 + $0x1d8] sm:$0xff] %v2199
      %2257 = vst [vmem:[#allocation9 + $0x1e0] sm:$0xff] %v2200
      %2258 = vst [vmem:[#allocation9 + $0x1e8] sm:$0xff] %v2201
      %2259 = vst [vmem:[#allocation9 + $0x1f0] sm:$0xff] %v2202
      %2260 = vst [vmem:[#allocation9 + $0x1f8] sm:$0xff] %v2203
      %2261 = vst [vmem:[#allocation9 + $0x200] sm:$0xff] %v2204
      %2262 = vst [vmem:[#allocation9 + $0x208] sm:$0xff] %v2205
      %2263 = vst [vmem:[#allocation9 + $0x210] sm:$0xff] %v2206
      %2264 = vst [vmem:[#allocation9 + $0x218] sm:$0xff] %v2207
      %2265 = vst [vmem:[#allocation9 + $0x220] sm:$0xff] %v2208
      %2266 = vst [vmem:[#allocation9 + $0x228] sm:$0xff] %v2209
      %2267 = vst [vmem:[#allocation9 + $0x230] sm:$0xff] %v2210
      %2268 = vst [vmem:[#allocation9 + $0x238] sm:$0xff] %v2211
      %2269 = vst [vmem:[#allocation9 + $0x240] sm:$0xff] %v2212
      %2270 = vst [vmem:[#allocation9 + $0x248] sm:$0xff] %v2213
      %2271 = vst [vmem:[#allocation9 + $0x250] sm:$0xff] %v2214
      %2272 = vst [vmem:[#allocation9 + $0x258] sm:$0xff] %v2215
      %2273 = vst [vmem:[#allocation9 + $0x260] sm:$0xff] %v2216
      %2274 = vst [vmem:[#allocation9 + $0x268] sm:$0xff] %v2217
      %2275 = vst [vmem:[#allocation9 + $0x270] sm:$0xff] %v2218
      %2276 = vst [vmem:[#allocation9 + $0x278] sm:$0xff] %v2219
      %2277 = vst [vmem:[#allocation9 + $0x280] sm:$0xff] %v2220
      %2278 = vst [vmem:[#allocation9 + $0x288] sm:$0xff] %v2221
      %2279 = vst [vmem:[#allocation9 + $0x290] sm:$0xff] %v2222
      %2280 = vst [vmem:[#allocation9 + $0x298] sm:$0xff] %v2223
      %2281 = vst [vmem:[#allocation9 + $0x2a0] sm:$0xff] %v2224
      %2282 = vst [vmem:[#allocation9 + $0x2a8] sm:$0xff] %v2225
      %2283 = vst.msk [vmem:[#allocation9 + $0x2b0] sm:$0xff] %vm1877, %v2196
      %v2284 = vld [vmem:[#allocation2] sm:$0xff]
      %v2285 = vld [vmem:[#allocation2 + $0x8] sm:$0xff]
      %v2286 = vld [vmem:[#allocation2 + $0x10] sm:$0xff]
      %v2287 = vld [vmem:[#allocation2 + $0x18] sm:$0xff]
      %v2288 = vld [vmem:[#allocation2 + $0x20] sm:$0xff]
      %v2289 = vld [vmem:[#allocation2 + $0x28] sm:$0xff]
      %v2290 = vld [vmem:[#allocation2 + $0x30] sm:$0xff]
      %v2291 = vld [vmem:[#allocation2 + $0x38] sm:$0xff]
      %v2292 = vld [vmem:[#allocation2 + $0x40] sm:$0xff]
      %v2293 = vld [vmem:[#allocation2 + $0x48] sm:$0xff]
      %v2294 = vld [vmem:[#allocation2 + $0x50] sm:$0xff]
      %v2295 = vld [vmem:[#allocation2 + $0x58] sm:$0xff]
      %v2296 = vld [vmem:[#allocation2 + $0x60] sm:$0xff]
      %v2297 = vld [vmem:[#allocation2 + $0x68] sm:$0xff]
      %v2298 = vld [vmem:[#allocation2 + $0x70] sm:$0xff]
      %v2299 = vld [vmem:[#allocation2 + $0x78] sm:$0xff]
      %v2300 = vld [vmem:[#allocation2 + $0x80] sm:$0xff]
      %v2301 = vld [vmem:[#allocation2 + $0x88] sm:$0xff]
      %v2302 = vld [vmem:[#allocation2 + $0x90] sm:$0xff]
      %v2303 = vld [vmem:[#allocation2 + $0x98] sm:$0xff]
      %v2304 = vld [vmem:[#allocation2 + $0xa0] sm:$0xff]
      %v2305 = vld [vmem:[#allocation2 + $0xa8] sm:$0xff]
      %v2306 = vld [vmem:[#allocation2 + $0xb0] sm:$0xff]
      %v2307 = vld [vmem:[#allocation2 + $0xb8] sm:$0xff]
      %v2308 = vld [vmem:[#allocation2 + $0xc0] sm:$0xff]
      %v2309 = vld [vmem:[#allocation2 + $0xc8] sm:$0xff]
      %v2310 = vld [vmem:[#allocation2 + $0xd0] sm:$0xff]
      %v2311 = vld [vmem:[#allocation2 + $0xd8] sm:$0xff]
      %v2312 = vld [vmem:[#allocation2 + $0xe0] sm:$0xff]
      %2342 = vrot.lane.b32.xlu0 %v2284, 67
      %v2343 = vpop.permute.xlu0 %2342
      %2344 = vrot.lane.b32.xlu0 %v2285, 67
      %v2345 = vpop.permute.xlu0 %2344
      %2346 = vrot.lane.b32.xlu0 %v2286, 67
      %v2347 = vpop.permute.xlu0 %2346
      %2348 = vrot.lane.b32.xlu0 %v2287, 67
      %v2349 = vpop.permute.xlu0 %2348
      %2350 = vrot.lane.b32.xlu0 %v2288, 67
      %v2351 = vpop.permute.xlu0 %2350
      %2352 = vrot.lane.b32.xlu0 %v2289, 67
      %v2353 = vpop.permute.xlu0 %2352
      %2354 = vrot.lane.b32.xlu0 %v2290, 67
      %v2355 = vpop.permute.xlu0 %2354
      %2356 = vrot.lane.b32.xlu0 %v2291, 67
      %v2357 = vpop.permute.xlu0 %2356
      %2358 = vrot.lane.b32.xlu0 %v2292, 67
      %v2359 = vpop.permute.xlu0 %2358
      %2360 = vrot.lane.b32.xlu0 %v2293, 67
      %v2361 = vpop.permute.xlu0 %2360
      %2362 = vrot.lane.b32.xlu0 %v2294, 67
      %v2363 = vpop.permute.xlu0 %2362
      %2364 = vrot.lane.b32.xlu0 %v2295, 67
      %v2365 = vpop.permute.xlu0 %2364
      %2366 = vrot.lane.b32.xlu0 %v2296, 67
      %v2367 = vpop.permute.xlu0 %2366
      %2368 = vrot.lane.b32.xlu0 %v2297, 67
      %v2369 = vpop.permute.xlu0 %2368
      %2370 = vrot.lane.b32.xlu0 %v2298, 67
      %v2371 = vpop.permute.xlu0 %2370
      %2372 = vrot.lane.b32.xlu0 %v2299, 67
      %v2373 = vpop.permute.xlu0 %2372
      %2374 = vrot.lane.b32.xlu0 %v2300, 67
      %v2375 = vpop.permute.xlu0 %2374
      %2376 = vrot.lane.b32.xlu0 %v2301, 67
      %v2377 = vpop.permute.xlu0 %2376
      %2378 = vrot.lane.b32.xlu0 %v2302, 67
      %v2379 = vpop.permute.xlu0 %2378
      %2380 = vrot.lane.b32.xlu0 %v2303, 67
      %v2381 = vpop.permute.xlu0 %2380
      %2382 = vrot.lane.b32.xlu0 %v2304, 67
      %v2383 = vpop.permute.xlu0 %2382
      %2384 = vrot.lane.b32.xlu0 %v2305, 67
      %v2385 = vpop.permute.xlu0 %2384
      %2386 = vrot.lane.b32.xlu0 %v2306, 67
      %v2387 = vpop.permute.xlu0 %2386
      %2388 = vrot.lane.b32.xlu0 %v2307, 67
      %v2389 = vpop.permute.xlu0 %2388
      %2390 = vrot.lane.b32.xlu0 %v2308, 67
      %v2391 = vpop.permute.xlu0 %2390
      %2392 = vrot.lane.b32.xlu0 %v2309, 67
      %v2393 = vpop.permute.xlu0 %2392
      %2394 = vrot.lane.b32.xlu0 %v2310, 67
      %v2395 = vpop.permute.xlu0 %2394
      %2396 = vrot.lane.b32.xlu0 %v2311, 67
      %v2397 = vpop.permute.xlu0 %2396
      %2398 = vrot.lane.b32.xlu0 %v2312, 67
      %v2399 = vpop.permute.xlu0 %2398
      %v2400 = vsel %vm755, %v2343, %v2345
      %v2401 = vsel %vm755, %v2345, %v2347
      %v2402 = vsel %vm755, %v2347, %v2349
      %v2403 = vsel %vm755, %v2349, %v2351
      %v2404 = vsel %vm755, %v2351, %v2353
      %v2405 = vsel %vm755, %v2353, %v2355
      %v2406 = vsel %vm755, %v2355, %v2357
      %v2407 = vsel %vm755, %v2357, %v2359
      %v2408 = vsel %vm755, %v2359, %v2361
      %v2409 = vsel %vm755, %v2361, %v2363
      %v2410 = vsel %vm755, %v2363, %v2365
      %v2411 = vsel %vm755, %v2365, %v2367
      %v2412 = vsel %vm755, %v2367, %v2369
      %v2413 = vsel %vm755, %v2369, %v2371
      %v2414 = vsel %vm755, %v2371, %v2373
      %v2415 = vsel %vm755, %v2373, %v2375
      %v2416 = vsel %vm755, %v2375, %v2377
      %v2417 = vsel %vm755, %v2377, %v2379
      %v2418 = vsel %vm755, %v2379, %v2381
      %v2419 = vsel %vm755, %v2381, %v2383
      %v2420 = vsel %vm755, %v2383, %v2385
      %v2421 = vsel %vm755, %v2385, %v2387
      %v2422 = vsel %vm755, %v2387, %v2389
      %v2423 = vsel %vm755, %v2389, %v2391
      %v2424 = vsel %vm755, %v2391, %v2393
      %v2425 = vsel %vm755, %v2393, %v2395
      %v2426 = vsel %vm755, %v2395, %v2397
      %v2427 = vsel %vm755, %v2397, %v2399
      %2457 = vst [vmem:[#allocation9 + $0x2b8] sm:$0xff] %v2400
      %2458 = vst [vmem:[#allocation9 + $0x2c0] sm:$0xff] %v2401
      %2459 = vst [vmem:[#allocation9 + $0x2c8] sm:$0xff] %v2402
      %2460 = vst [vmem:[#allocation9 + $0x2d0] sm:$0xff] %v2403
      %2461 = vst [vmem:[#allocation9 + $0x2d8] sm:$0xff] %v2404
      %2462 = vst [vmem:[#allocation9 + $0x2e0] sm:$0xff] %v2405
      %2463 = vst [vmem:[#allocation9 + $0x2e8] sm:$0xff] %v2406
      %2464 = vst [vmem:[#allocation9 + $0x2f0] sm:$0xff] %v2407
      %2465 = vst [vmem:[#allocation9 + $0x2f8] sm:$0xff] %v2408
      %2466 = vst [vmem:[#allocation9 + $0x300] sm:$0xff] %v2409
      %2467 = vst [vmem:[#allocation9 + $0x308] sm:$0xff] %v2410
      %2468 = vst [vmem:[#allocation9 + $0x310] sm:$0xff] %v2411
      %2469 = vst [vmem:[#allocation9 + $0x318] sm:$0xff] %v2412
      %2470 = vst [vmem:[#allocation9 + $0x320] sm:$0xff] %v2413
      %2471 = vst [vmem:[#allocation9 + $0x328] sm:$0xff] %v2414
      %2472 = vst [vmem:[#allocation9 + $0x330] sm:$0xff] %v2415
      %2473 = vst [vmem:[#allocation9 + $0x338] sm:$0xff] %v2416
      %2474 = vst [vmem:[#allocation9 + $0x340] sm:$0xff] %v2417
      %2475 = vst [vmem:[#allocation9 + $0x348] sm:$0xff] %v2418
      %2476 = vst [vmem:[#allocation9 + $0x350] sm:$0xff] %v2419
      %2477 = vst [vmem:[#allocation9 + $0x358] sm:$0xff] %v2420
      %2478 = vst [vmem:[#allocation9 + $0x360] sm:$0xff] %v2421
      %2479 = vst [vmem:[#allocation9 + $0x368] sm:$0xff] %v2422
      %2480 = vst [vmem:[#allocation9 + $0x370] sm:$0xff] %v2423
      %2481 = vst [vmem:[#allocation9 + $0x378] sm:$0xff] %v2424
      %2482 = vst [vmem:[#allocation9 + $0x380] sm:$0xff] %v2425
      %2483 = vst [vmem:[#allocation9 + $0x388] sm:$0xff] %v2426
      %2484 = vst [vmem:[#allocation9 + $0x390] sm:$0xff] %v2427
      %2485 = vst.msk [vmem:[#allocation9 + $0x398] sm:$0xff] %vm1877, %v2399
      %v2486 = vld [vmem:[#allocation2] sm:$0xff]
      %v2487 = vld [vmem:[#allocation2 + $0x8] sm:$0xff]
      %v2488 = vld [vmem:[#allocation2 + $0x10] sm:$0xff]
      %v2489 = vld [vmem:[#allocation2 + $0x18] sm:$0xff]
      %v2490 = vld [vmem:[#allocation2 + $0x20] sm:$0xff]
      %v2491 = vld [vmem:[#allocation2 + $0x28] sm:$0xff]
      %v2492 = vld [vmem:[#allocation2 + $0x30] sm:$0xff]
      %v2493 = vld [vmem:[#allocation2 + $0x38] sm:$0xff]
      %v2494 = vld [vmem:[#allocation2 + $0x40] sm:$0xff]
      %v2495 = vld [vmem:[#allocation2 + $0x48] sm:$0xff]
      %v2496 = vld [vmem:[#allocation2 + $0x50] sm:$0xff]
      %v2497 = vld [vmem:[#allocation2 + $0x58] sm:$0xff]
      %v2498 = vld [vmem:[#allocation2 + $0x60] sm:$0xff]
      %v2499 = vld [vmem:[#allocation2 + $0x68] sm:$0xff]
      %v2500 = vld [vmem:[#allocation2 + $0x70] sm:$0xff]
      %v2501 = vld [vmem:[#allocation2 + $0x78] sm:$0xff]
      %v2502 = vld [vmem:[#allocation2 + $0x80] sm:$0xff]
      %v2503 = vld [vmem:[#allocation2 + $0x88] sm:$0xff]
      %v2504 = vld [vmem:[#allocation2 + $0x90] sm:$0xff]
      %v2505 = vld [vmem:[#allocation2 + $0x98] sm:$0xff]
      %v2506 = vld [vmem:[#allocation2 + $0xa0] sm:$0xff]
      %v2507 = vld [vmem:[#allocation2 + $0xa8] sm:$0xff]
      %v2508 = vld [vmem:[#allocation2 + $0xb0] sm:$0xff]
      %v2509 = vld [vmem:[#allocation2 + $0xb8] sm:$0xff]
      %v2510 = vld [vmem:[#allocation2 + $0xc0] sm:$0xff]
      %v2511 = vld [vmem:[#allocation2 + $0xc8] sm:$0xff]
      %v2512 = vld [vmem:[#allocation2 + $0xd0] sm:$0xff]
      %v2513 = vld [vmem:[#allocation2 + $0xd8] sm:$0xff]
      %v2514 = vld [vmem:[#allocation2 + $0xe0] sm:$0xff]
      %2544 = vrot.lane.b32.xlu0 %v2486, 66
      %v2545 = vpop.permute.xlu0 %2544
      %2546 = vrot.lane.b32.xlu0 %v2487, 66
      %v2547 = vpop.permute.xlu0 %2546
      %2548 = vrot.lane.b32.xlu0 %v2488, 66
      %v2549 = vpop.permute.xlu0 %2548
      %2550 = vrot.lane.b32.xlu0 %v2489, 66
      %v2551 = vpop.permute.xlu0 %2550
      %2552 = vrot.lane.b32.xlu0 %v2490, 66
      %v2553 = vpop.permute.xlu0 %2552
      %2554 = vrot.lane.b32.xlu0 %v2491, 66
      %v2555 = vpop.permute.xlu0 %2554
      %2556 = vrot.lane.b32.xlu0 %v2492, 66
      %v2557 = vpop.permute.xlu0 %2556
      %2558 = vrot.lane.b32.xlu0 %v2493, 66
      %v2559 = vpop.permute.xlu0 %2558
      %2560 = vrot.lane.b32.xlu0 %v2494, 66
      %v2561 = vpop.permute.xlu0 %2560
      %2562 = vrot.lane.b32.xlu0 %v2495, 66
      %v2563 = vpop.permute.xlu0 %2562
      %2564 = vrot.lane.b32.xlu0 %v2496, 66
      %v2565 = vpop.permute.xlu0 %2564
      %2566 = vrot.lane.b32.xlu0 %v2497, 66
      %v2567 = vpop.permute.xlu0 %2566
      %2568 = vrot.lane.b32.xlu0 %v2498, 66
      %v2569 = vpop.permute.xlu0 %2568
      %2570 = vrot.lane.b32.xlu0 %v2499, 66
      %v2571 = vpop.permute.xlu0 %2570
      %2572 = vrot.lane.b32.xlu0 %v2500, 66
      %v2573 = vpop.permute.xlu0 %2572
      %2574 = vrot.lane.b32.xlu0 %v2501, 66
      %v2575 = vpop.permute.xlu0 %2574
      %2576 = vrot.lane.b32.xlu0 %v2502, 66
      %v2577 = vpop.permute.xlu0 %2576
      %2578 = vrot.lane.b32.xlu0 %v2503, 66
      %v2579 = vpop.permute.xlu0 %2578
      %2580 = vrot.lane.b32.xlu0 %v2504, 66
      %v2581 = vpop.permute.xlu0 %2580
      %2582 = vrot.lane.b32.xlu0 %v2505, 66
      %v2583 = vpop.permute.xlu0 %2582
      %2584 = vrot.lane.b32.xlu0 %v2506, 66
      %v2585 = vpop.permute.xlu0 %2584
      %2586 = vrot.lane.b32.xlu0 %v2507, 66
      %v2587 = vpop.permute.xlu0 %2586
      %2588 = vrot.lane.b32.xlu0 %v2508, 66
      %v2589 = vpop.permute.xlu0 %2588
      %2590 = vrot.lane.b32.xlu0 %v2509, 66
      %v2591 = vpop.permute.xlu0 %2590
      %2592 = vrot.lane.b32.xlu0 %v2510, 66
      %v2593 = vpop.permute.xlu0 %2592
      %2594 = vrot.lane.b32.xlu0 %v2511, 66
      %v2595 = vpop.permute.xlu0 %2594
      %2596 = vrot.lane.b32.xlu0 %v2512, 66
      %v2597 = vpop.permute.xlu0 %2596
      %2598 = vrot.lane.b32.xlu0 %v2513, 66
      %v2599 = vpop.permute.xlu0 %2598
      %2600 = vrot.lane.b32.xlu0 %v2514, 66
      %v2601 = vpop.permute.xlu0 %2600
      %v2602 = vsel %vm963, %v2545, %v2547
      %v2603 = vsel %vm963, %v2547, %v2549
      %v2604 = vsel %vm963, %v2549, %v2551
      %v2605 = vsel %vm963, %v2551, %v2553
      %v2606 = vsel %vm963, %v2553, %v2555
      %v2607 = vsel %vm963, %v2555, %v2557
      %v2608 = vsel %vm963, %v2557, %v2559
      %v2609 = vsel %vm963, %v2559, %v2561
      %v2610 = vsel %vm963, %v2561, %v2563
      %v2611 = vsel %vm963, %v2563, %v2565
      %v2612 = vsel %vm963, %v2565, %v2567
      %v2613 = vsel %vm963, %v2567, %v2569
      %v2614 = vsel %vm963, %v2569, %v2571
      %v2615 = vsel %vm963, %v2571, %v2573
      %v2616 = vsel %vm963, %v2573, %v2575
      %v2617 = vsel %vm963, %v2575, %v2577
      %v2618 = vsel %vm963, %v2577, %v2579
      %v2619 = vsel %vm963, %v2579, %v2581
      %v2620 = vsel %vm963, %v2581, %v2583
      %v2621 = vsel %vm963, %v2583, %v2585
      %v2622 = vsel %vm963, %v2585, %v2587
      %v2623 = vsel %vm963, %v2587, %v2589
      %v2624 = vsel %vm963, %v2589, %v2591
      %v2625 = vsel %vm963, %v2591, %v2593
      %v2626 = vsel %vm963, %v2593, %v2595
      %v2627 = vsel %vm963, %v2595, %v2597
      %v2628 = vsel %vm963, %v2597, %v2599
      %v2629 = vsel %vm963, %v2599, %v2601
      %2659 = vst [vmem:[#allocation9 + $0x3a0] sm:$0xff] %v2602
      %2660 = vst [vmem:[#allocation9 + $0x3a8] sm:$0xff] %v2603
      %2661 = vst [vmem:[#allocation9 + $0x3b0] sm:$0xff] %v2604
      %2662 = vst [vmem:[#allocation9 + $0x3b8] sm:$0xff] %v2605
      %2663 = vst [vmem:[#allocation9 + $0x3c0] sm:$0xff] %v2606
      %2664 = vst [vmem:[#allocation9 + $0x3c8] sm:$0xff] %v2607
      %2665 = vst [vmem:[#allocation9 + $0x3d0] sm:$0xff] %v2608
      %2666 = vst [vmem:[#allocation9 + $0x3d8] sm:$0xff] %v2609
      %2667 = vst [vmem:[#allocation9 + $0x3e0] sm:$0xff] %v2610
      %2668 = vst [vmem:[#allocation9 + $0x3e8] sm:$0xff] %v2611
      %2669 = vst [vmem:[#allocation9 + $0x3f0] sm:$0xff] %v2612
      %2670 = vst [vmem:[#allocation9 + $0x3f8] sm:$0xff] %v2613
      %2671 = vst [vmem:[#allocation9 + $0x400] sm:$0xff] %v2614
      %2672 = vst [vmem:[#allocation9 + $0x408] sm:$0xff] %v2615
      %2673 = vst [vmem:[#allocation9 + $0x410] sm:$0xff] %v2616
      %2674 = vst [vmem:[#allocation9 + $0x418] sm:$0xff] %v2617
      %2675 = vst [vmem:[#allocation9 + $0x420] sm:$0xff] %v2618
      %2676 = vst [vmem:[#allocation9 + $0x428] sm:$0xff] %v2619
      %2677 = vst [vmem:[#allocation9 + $0x430] sm:$0xff] %v2620
      %2678 = vst [vmem:[#allocation9 + $0x438] sm:$0xff] %v2621
      %2679 = vst [vmem:[#allocation9 + $0x440] sm:$0xff] %v2622
      %2680 = vst [vmem:[#allocation9 + $0x448] sm:$0xff] %v2623
      %2681 = vst [vmem:[#allocation9 + $0x450] sm:$0xff] %v2624
      %2682 = vst [vmem:[#allocation9 + $0x458] sm:$0xff] %v2625
      %2683 = vst [vmem:[#allocation9 + $0x460] sm:$0xff] %v2626
      %2684 = vst [vmem:[#allocation9 + $0x468] sm:$0xff] %v2627
      %2685 = vst [vmem:[#allocation9 + $0x470] sm:$0xff] %v2628
      %2686 = vst [vmem:[#allocation9 + $0x478] sm:$0xff] %v2629
      %2687 = vst.msk [vmem:[#allocation9 + $0x480] sm:$0xff] %vm1877, %v2601
      %v2688 = vld [vmem:[#allocation2] sm:$0xff]
      %v2689 = vld [vmem:[#allocation2 + $0x8] sm:$0xff]
      %v2690 = vld [vmem:[#allocation2 + $0x10] sm:$0xff]
      %v2691 = vld [vmem:[#allocation2 + $0x18] sm:$0xff]
      %v2692 = vld [vmem:[#allocation2 + $0x20] sm:$0xff]
      %v2693 = vld [vmem:[#allocation2 + $0x28] sm:$0xff]
      %v2694 = vld [vmem:[#allocation2 + $0x30] sm:$0xff]
      %v2695 = vld [vmem:[#allocation2 + $0x38] sm:$0xff]
      %v2696 = vld [vmem:[#allocation2 + $0x40] sm:$0xff]
      %v2697 = vld [vmem:[#allocation2 + $0x48] sm:$0xff]
      %v2698 = vld [vmem:[#allocation2 + $0x50] sm:$0xff]
      %v2699 = vld [vmem:[#allocation2 + $0x58] sm:$0xff]
      %v2700 = vld [vmem:[#allocation2 + $0x60] sm:$0xff]
      %v2701 = vld [vmem:[#allocation2 + $0x68] sm:$0xff]
      %v2702 = vld [vmem:[#allocation2 + $0x70] sm:$0xff]
      %v2703 = vld [vmem:[#allocation2 + $0x78] sm:$0xff]
      %v2704 = vld [vmem:[#allocation2 + $0x80] sm:$0xff]
      %v2705 = vld [vmem:[#allocation2 + $0x88] sm:$0xff]
      %v2706 = vld [vmem:[#allocation2 + $0x90] sm:$0xff]
      %v2707 = vld [vmem:[#allocation2 + $0x98] sm:$0xff]
      %v2708 = vld [vmem:[#allocation2 + $0xa0] sm:$0xff]
      %v2709 = vld [vmem:[#allocation2 + $0xa8] sm:$0xff]
      %v2710 = vld [vmem:[#allocation2 + $0xb0] sm:$0xff]
      %v2711 = vld [vmem:[#allocation2 + $0xb8] sm:$0xff]
      %v2712 = vld [vmem:[#allocation2 + $0xc0] sm:$0xff]
      %v2713 = vld [vmem:[#allocation2 + $0xc8] sm:$0xff]
      %v2714 = vld [vmem:[#allocation2 + $0xd0] sm:$0xff]
      %v2715 = vld [vmem:[#allocation2 + $0xd8] sm:$0xff]
      %v2716 = vld [vmem:[#allocation2 + $0xe0] sm:$0xff]
      %2746 = vrot.lane.b32.xlu0 %v2688, 65
      %v2747 = vpop.permute.xlu0 %2746
      %2748 = vrot.lane.b32.xlu0 %v2689, 65
      %v2749 = vpop.permute.xlu0 %2748
      %2750 = vrot.lane.b32.xlu0 %v2690, 65
      %v2751 = vpop.permute.xlu0 %2750
      %2752 = vrot.lane.b32.xlu0 %v2691, 65
      %v2753 = vpop.permute.xlu0 %2752
      %2754 = vrot.lane.b32.xlu0 %v2692, 65
      %v2755 = vpop.permute.xlu0 %2754
      %2756 = vrot.lane.b32.xlu0 %v2693, 65
      %v2757 = vpop.permute.xlu0 %2756
      %2758 = vrot.lane.b32.xlu0 %v2694, 65
      %v2759 = vpop.permute.xlu0 %2758
      %2760 = vrot.lane.b32.xlu0 %v2695, 65
      %v2761 = vpop.permute.xlu0 %2760
      %2762 = vrot.lane.b32.xlu0 %v2696, 65
      %v2763 = vpop.permute.xlu0 %2762
      %2764 = vrot.lane.b32.xlu0 %v2697, 65
      %v2765 = vpop.permute.xlu0 %2764
      %2766 = vrot.lane.b32.xlu0 %v2698, 65
      %v2767 = vpop.permute.xlu0 %2766
      %2768 = vrot.lane.b32.xlu0 %v2699, 65
      %v2769 = vpop.permute.xlu0 %2768
      %2770 = vrot.lane.b32.xlu0 %v2700, 65
      %v2771 = vpop.permute.xlu0 %2770
      %2772 = vrot.lane.b32.xlu0 %v2701, 65
      %v2773 = vpop.permute.xlu0 %2772
      %2774 = vrot.lane.b32.xlu0 %v2702, 65
      %v2775 = vpop.permute.xlu0 %2774
      %2776 = vrot.lane.b32.xlu0 %v2703, 65
      %v2777 = vpop.permute.xlu0 %2776
      %2778 = vrot.lane.b32.xlu0 %v2704, 65
      %v2779 = vpop.permute.xlu0 %2778
      %2780 = vrot.lane.b32.xlu0 %v2705, 65
      %v2781 = vpop.permute.xlu0 %2780
      %2782 = vrot.lane.b32.xlu0 %v2706, 65
      %v2783 = vpop.permute.xlu0 %2782
      %2784 = vrot.lane.b32.xlu0 %v2707, 65
      %v2785 = vpop.permute.xlu0 %2784
      %2786 = vrot.lane.b32.xlu0 %v2708, 65
      %v2787 = vpop.permute.xlu0 %2786
      %2788 = vrot.lane.b32.xlu0 %v2709, 65
      %v2789 = vpop.permute.xlu0 %2788
      %2790 = vrot.lane.b32.xlu0 %v2710, 65
      %v2791 = vpop.permute.xlu0 %2790
      %2792 = vrot.lane.b32.xlu0 %v2711, 65
      %v2793 = vpop.permute.xlu0 %2792
      %2794 = vrot.lane.b32.xlu0 %v2712, 65
      %v2795 = vpop.permute.xlu0 %2794
      %2796 = vrot.lane.b32.xlu0 %v2713, 65
      %v2797 = vpop.permute.xlu0 %2796
      %2798 = vrot.lane.b32.xlu0 %v2714, 65
      %v2799 = vpop.permute.xlu0 %2798
      %2800 = vrot.lane.b32.xlu0 %v2715, 65
      %v2801 = vpop.permute.xlu0 %2800
      %2802 = vrot.lane.b32.xlu0 %v2716, 65
      %v2803 = vpop.permute.xlu0 %2802
      %vm2804 = vcmask 531456
      %v2805 = vsel %vm2804, %v2747, %v2749
      %v2806 = vsel %vm2804, %v2749, %v2751
      %v2807 = vsel %vm2804, %v2751, %v2753
      %v2808 = vsel %vm2804, %v2753, %v2755
      %v2809 = vsel %vm2804, %v2755, %v2757
      %v2810 = vsel %vm2804, %v2757, %v2759
      %v2811 = vsel %vm2804, %v2759, %v2761
      %v2812 = vsel %vm2804, %v2761, %v2763
      %v2813 = vsel %vm2804, %v2763, %v2765
      %v2814 = vsel %vm2804, %v2765, %v2767
      %v2815 = vsel %vm2804, %v2767, %v2769
      %v2816 = vsel %vm2804, %v2769, %v2771
      %v2817 = vsel %vm2804, %v2771, %v2773
      %v2818 = vsel %vm2804, %v2773, %v2775
      %v2819 = vsel %vm2804, %v2775, %v2777
      %v2820 = vsel %vm2804, %v2777, %v2779
      %v2821 = vsel %vm2804, %v2779, %v2781
      %v2822 = vsel %vm2804, %v2781, %v2783
      %v2823 = vsel %vm2804, %v2783, %v2785
      %v2824 = vsel %vm2804, %v2785, %v2787
      %v2825 = vsel %vm2804, %v2787, %v2789
      %v2826 = vsel %vm2804, %v2789, %v2791
      %v2827 = vsel %vm2804, %v2791, %v2793
      %v2828 = vsel %vm2804, %v2793, %v2795
      %v2829 = vsel %vm2804, %v2795, %v2797
      %v2830 = vsel %vm2804, %v2797, %v2799
      %v2831 = vsel %vm2804, %v2799, %v2801
      %v2832 = vsel %vm2804, %v2801, %v2803
      %2862 = vst [vmem:[#allocation9 + $0x488] sm:$0xff] %v2805
      %2863 = vst [vmem:[#allocation9 + $0x490] sm:$0xff] %v2806
      %2864 = vst [vmem:[#allocation9 + $0x498] sm:$0xff] %v2807
      %2865 = vst [vmem:[#allocation9 + $0x4a0] sm:$0xff] %v2808
      %2866 = vst [vmem:[#allocation9 + $0x4a8] sm:$0xff] %v2809
      %2867 = vst [vmem:[#allocation9 + $0x4b0] sm:$0xff] %v2810
      %2868 = vst [vmem:[#allocation9 + $0x4b8] sm:$0xff] %v2811
      %2869 = vst [vmem:[#allocation9 + $0x4c0] sm:$0xff] %v2812
      %2870 = vst [vmem:[#allocation9 + $0x4c8] sm:$0xff] %v2813
      %2871 = vst [vmem:[#allocation9 + $0x4d0] sm:$0xff] %v2814
      %2872 = vst [vmem:[#allocation9 + $0x4d8] sm:$0xff] %v2815
      %2873 = vst [vmem:[#allocation9 + $0x4e0] sm:$0xff] %v2816
      %2874 = vst [vmem:[#allocation9 + $0x4e8] sm:$0xff] %v2817
      %2875 = vst [vmem:[#allocation9 + $0x4f0] sm:$0xff] %v2818
      %2876 = vst [vmem:[#allocation9 + $0x4f8] sm:$0xff] %v2819
      %2877 = vst [vmem:[#allocation9 + $0x500] sm:$0xff] %v2820
      %2878 = vst [vmem:[#allocation9 + $0x508] sm:$0xff] %v2821
      %2879 = vst [vmem:[#allocation9 + $0x510] sm:$0xff] %v2822
      %2880 = vst [vmem:[#allocation9 + $0x518] sm:$0xff] %v2823
      %2881 = vst [vmem:[#allocation9 + $0x520] sm:$0xff] %v2824
      %2882 = vst [vmem:[#allocation9 + $0x528] sm:$0xff] %v2825
      %2883 = vst [vmem:[#allocation9 + $0x530] sm:$0xff] %v2826
      %2884 = vst [vmem:[#allocation9 + $0x538] sm:$0xff] %v2827
      %2885 = vst [vmem:[#allocation9 + $0x540] sm:$0xff] %v2828
      %2886 = vst [vmem:[#allocation9 + $0x548] sm:$0xff] %v2829
      %2887 = vst [vmem:[#allocation9 + $0x550] sm:$0xff] %v2830
      %2888 = vst [vmem:[#allocation9 + $0x558] sm:$0xff] %v2831
      %2889 = vst [vmem:[#allocation9 + $0x560] sm:$0xff] %v2832
      %2890 = vst.msk [vmem:[#allocation9 + $0x568] sm:$0xff] %vm1877, %v2803
      %v2891 = vld [vmem:[#allocation2] sm:$0xff]
      %v2892 = vld [vmem:[#allocation2 + $0x8] sm:$0xff]
      %v2893 = vld [vmem:[#allocation2 + $0x10] sm:$0xff]
      %v2894 = vld [vmem:[#allocation2 + $0x18] sm:$0xff]
      %v2895 = vld [vmem:[#allocation2 + $0x20] sm:$0xff]
      %v2896 = vld [vmem:[#allocation2 + $0x28] sm:$0xff]
      %v2897 = vld [vmem:[#allocation2 + $0x30] sm:$0xff]
      %v2898 = vld [vmem:[#allocation2 + $0x38] sm:$0xff]
      %v2899 = vld [vmem:[#allocation2 + $0x40] sm:$0xff]
      %v2900 = vld [vmem:[#allocation2 + $0x48] sm:$0xff]
      %v2901 = vld [vmem:[#allocation2 + $0x50] sm:$0xff]
      %v2902 = vld [vmem:[#allocation2 + $0x58] sm:$0xff]
      %v2903 = vld [vmem:[#allocation2 + $0x60] sm:$0xff]
      %v2904 = vld [vmem:[#allocation2 + $0x68] sm:$0xff]
      %v2905 = vld [vmem:[#allocation2 + $0x70] sm:$0xff]
      %v2906 = vld [vmem:[#allocation2 + $0x78] sm:$0xff]
      %v2907 = vld [vmem:[#allocation2 + $0x80] sm:$0xff]
      %v2908 = vld [vmem:[#allocation2 + $0x88] sm:$0xff]
      %v2909 = vld [vmem:[#allocation2 + $0x90] sm:$0xff]
      %v2910 = vld [vmem:[#allocation2 + $0x98] sm:$0xff]
      %v2911 = vld [vmem:[#allocation2 + $0xa0] sm:$0xff]
      %v2912 = vld [vmem:[#allocation2 + $0xa8] sm:$0xff]
      %v2913 = vld [vmem:[#allocation2 + $0xb0] sm:$0xff]
      %v2914 = vld [vmem:[#allocation2 + $0xb8] sm:$0xff]
      %v2915 = vld [vmem:[#allocation2 + $0xc0] sm:$0xff]
      %v2916 = vld [vmem:[#allocation2 + $0xc8] sm:$0xff]
      %v2917 = vld [vmem:[#allocation2 + $0xd0] sm:$0xff]
      %v2918 = vld [vmem:[#allocation2 + $0xd8] sm:$0xff]
      %v2919 = vld [vmem:[#allocation2 + $0xe0] sm:$0xff]
      %v2920 = vld [vmem:[#allocation2 + $0xe8] sm:$0xff]
      %2951 = vrot.lane.b32.xlu0 %v2891, 6
      %v2952 = vpop.permute.xlu0 %2951
      %2953 = vrot.lane.b32.xlu0 %v2892, 6
      %v2954 = vpop.permute.xlu0 %2953
      %2955 = vrot.lane.b32.xlu0 %v2893, 6
      %v2956 = vpop.permute.xlu0 %2955
      %2957 = vrot.lane.b32.xlu0 %v2894, 6
      %v2958 = vpop.permute.xlu0 %2957
      %2959 = vrot.lane.b32.xlu0 %v2895, 6
      %v2960 = vpop.permute.xlu0 %2959
      %2961 = vrot.lane.b32.xlu0 %v2896, 6
      %v2962 = vpop.permute.xlu0 %2961
      %2963 = vrot.lane.b32.xlu0 %v2897, 6
      %v2964 = vpop.permute.xlu0 %2963
      %2965 = vrot.lane.b32.xlu0 %v2898, 6
      %v2966 = vpop.permute.xlu0 %2965
      %2967 = vrot.lane.b32.xlu0 %v2899, 6
      %v2968 = vpop.permute.xlu0 %2967
      %2969 = vrot.lane.b32.xlu0 %v2900, 6
      %v2970 = vpop.permute.xlu0 %2969
      %2971 = vrot.lane.b32.xlu0 %v2901, 6
      %v2972 = vpop.permute.xlu0 %2971
      %2973 = vrot.lane.b32.xlu0 %v2902, 6
      %v2974 = vpop.permute.xlu0 %2973
      %2975 = vrot.lane.b32.xlu0 %v2903, 6
      %v2976 = vpop.permute.xlu0 %2975
      %2977 = vrot.lane.b32.xlu0 %v2904, 6
      %v2978 = vpop.permute.xlu0 %2977
      %2979 = vrot.lane.b32.xlu0 %v2905, 6
      %v2980 = vpop.permute.xlu0 %2979
      %2981 = vrot.lane.b32.xlu0 %v2906, 6
      %v2982 = vpop.permute.xlu0 %2981
      %2983 = vrot.lane.b32.xlu0 %v2907, 6
      %v2984 = vpop.permute.xlu0 %2983
      %2985 = vrot.lane.b32.xlu0 %v2908, 6
      %v2986 = vpop.permute.xlu0 %2985
      %2987 = vrot.lane.b32.xlu0 %v2909, 6
      %v2988 = vpop.permute.xlu0 %2987
      %2989 = vrot.lane.b32.xlu0 %v2910, 6
      %v2990 = vpop.permute.xlu0 %2989
      %2991 = vrot.lane.b32.xlu0 %v2911, 6
      %v2992 = vpop.permute.xlu0 %2991
      %2993 = vrot.lane.b32.xlu0 %v2912, 6
      %v2994 = vpop.permute.xlu0 %2993
      %2995 = vrot.lane.b32.xlu0 %v2913, 6
      %v2996 = vpop.permute.xlu0 %2995
      %2997 = vrot.lane.b32.xlu0 %v2914, 6
      %v2998 = vpop.permute.xlu0 %2997
      %2999 = vrot.lane.b32.xlu0 %v2915, 6
      %v3000 = vpop.permute.xlu0 %2999
      %3001 = vrot.lane.b32.xlu0 %v2916, 6
      %v3002 = vpop.permute.xlu0 %3001
      %3003 = vrot.lane.b32.xlu0 %v2917, 6
      %v3004 = vpop.permute.xlu0 %3003
      %3005 = vrot.lane.b32.xlu0 %v2918, 6
      %v3006 = vpop.permute.xlu0 %3005
      %3007 = vrot.lane.b32.xlu0 %v2919, 6
      %v3008 = vpop.permute.xlu0 %3007
      %3009 = vrot.lane.b32.xlu0 %v2920, 6
      %v3010 = vpop.permute.xlu0 %3009
      %vm3011 = vcmask 48128
      %v3012 = vsel %vm3011, %v2952, %v2954
      %v3013 = vsel %vm3011, %v2954, %v2956
      %v3014 = vsel %vm3011, %v2956, %v2958
      %v3015 = vsel %vm3011, %v2958, %v2960
      %v3016 = vsel %vm3011, %v2960, %v2962
      %v3017 = vsel %vm3011, %v2962, %v2964
      %v3018 = vsel %vm3011, %v2964, %v2966
      %v3019 = vsel %vm3011, %v2966, %v2968
      %v3020 = vsel %vm3011, %v2968, %v2970
      %v3021 = vsel %vm3011, %v2970, %v2972
      %v3022 = vsel %vm3011, %v2972, %v2974
      %v3023 = vsel %vm3011, %v2974, %v2976
      %v3024 = vsel %vm3011, %v2976, %v2978
      %v3025 = vsel %vm3011, %v2978, %v2980
      %v3026 = vsel %vm3011, %v2980, %v2982
      %v3027 = vsel %vm3011, %v2982, %v2984
      %v3028 = vsel %vm3011, %v2984, %v2986
      %v3029 = vsel %vm3011, %v2986, %v2988
      %v3030 = vsel %vm3011, %v2988, %v2990
      %v3031 = vsel %vm3011, %v2990, %v2992
      %v3032 = vsel %vm3011, %v2992, %v2994
      %v3033 = vsel %vm3011, %v2994, %v2996
      %v3034 = vsel %vm3011, %v2996, %v2998
      %v3035 = vsel %vm3011, %v2998, %v3000
      %v3036 = vsel %vm3011, %v3000, %v3002
      %v3037 = vsel %vm3011, %v3002, %v3004
      %v3038 = vsel %vm3011, %v3004, %v3006
      %v3039 = vsel %vm3011, %v3006, %v3008
      %v3040 = vsel %vm3011, %v3008, %v3010
      %3070 = vst [vmem:[#allocation9 + $0x570] sm:$0xff] %v3012
      %3071 = vst [vmem:[#allocation9 + $0x578] sm:$0xff] %v3013
      %3072 = vst [vmem:[#allocation9 + $0x580] sm:$0xff] %v3014
      %3073 = vst [vmem:[#allocation9 + $0x588] sm:$0xff] %v3015
      %3074 = vst [vmem:[#allocation9 + $0x590] sm:$0xff] %v3016
      %3075 = vst [vmem:[#allocation9 + $0x598] sm:$0xff] %v3017
      %3076 = vst [vmem:[#allocation9 + $0x5a0] sm:$0xff] %v3018
      %3077 = vst [vmem:[#allocation9 + $0x5a8] sm:$0xff] %v3019
      %3078 = vst [vmem:[#allocation9 + $0x5b0] sm:$0xff] %v3020
      %3079 = vst [vmem:[#allocation9 + $0x5b8] sm:$0xff] %v3021
      %3080 = vst [vmem:[#allocation9 + $0x5c0] sm:$0xff] %v3022
      %3081 = vst [vmem:[#allocation9 + $0x5c8] sm:$0xff] %v3023
      %3082 = vst [vmem:[#allocation9 + $0x5d0] sm:$0xff] %v3024
      %3083 = vst [vmem:[#allocation9 + $0x5d8] sm:$0xff] %v3025
      %3084 = vst [vmem:[#allocation9 + $0x5e0] sm:$0xff] %v3026
      %3085 = vst [vmem:[#allocation9 + $0x5e8] sm:$0xff] %v3027
      %3086 = vst [vmem:[#allocation9 + $0x5f0] sm:$0xff] %v3028
      %3087 = vst [vmem:[#allocation9 + $0x5f8] sm:$0xff] %v3029
      %3088 = vst [vmem:[#allocation9 + $0x600] sm:$0xff] %v3030
      %3089 = vst [vmem:[#allocation9 + $0x608] sm:$0xff] %v3031
      %3090 = vst [vmem:[#allocation9 + $0x610] sm:$0xff] %v3032
      %3091 = vst [vmem:[#allocation9 + $0x618] sm:$0xff] %v3033
      %3092 = vst [vmem:[#allocation9 + $0x620] sm:$0xff] %v3034
      %3093 = vst [vmem:[#allocation9 + $0x628] sm:$0xff] %v3035
      %3094 = vst [vmem:[#allocation9 + $0x630] sm:$0xff] %v3036
      %3095 = vst [vmem:[#allocation9 + $0x638] sm:$0xff] %v3037
      %3096 = vst [vmem:[#allocation9 + $0x640] sm:$0xff] %v3038
      %3097 = vst [vmem:[#allocation9 + $0x648] sm:$0xff] %v3039
      %3098 = vst.msk [vmem:[#allocation9 + $0x650] sm:$0xff] %vm1877, %v3040
      %v3099 = vld [vmem:[#allocation2] sm:$0xff]
      %v3100 = vld [vmem:[#allocation2 + $0x8] sm:$0xff]
      %v3101 = vld [vmem:[#allocation2 + $0x10] sm:$0xff]
      %v3102 = vld [vmem:[#allocation2 + $0x18] sm:$0xff]
      %v3103 = vld [vmem:[#allocation2 + $0x20] sm:$0xff]
      %v3104 = vld [vmem:[#allocation2 + $0x28] sm:$0xff]
      %v3105 = vld [vmem:[#allocation2 + $0x30] sm:$0xff]
      %v3106 = vld [vmem:[#allocation2 + $0x38] sm:$0xff]
      %v3107 = vld [vmem:[#allocation2 + $0x40] sm:$0xff]
      %v3108 = vld [vmem:[#allocation2 + $0x48] sm:$0xff]
      %v3109 = vld [vmem:[#allocation2 + $0x50] sm:$0xff]
      %v3110 = vld [vmem:[#allocation2 + $0x58] sm:$0xff]
      %v3111 = vld [vmem:[#allocation2 + $0x60] sm:$0xff]
      %v3112 = vld [vmem:[#allocation2 + $0x68] sm:$0xff]
      %v3113 = vld [vmem:[#allocation2 + $0x70] sm:$0xff]
      %v3114 = vld [vmem:[#allocation2 + $0x78] sm:$0xff]
      %v3115 = vld [vmem:[#allocation2 + $0x80] sm:$0xff]
      %v3116 = vld [vmem:[#allocation2 + $0x88] sm:$0xff]
      %v3117 = vld [vmem:[#allocation2 + $0x90] sm:$0xff]
      %v3118 = vld [vmem:[#allocation2 + $0x98] sm:$0xff]
      %v3119 = vld [vmem:[#allocation2 + $0xa0] sm:$0xff]
      %v3120 = vld [vmem:[#allocation2 + $0xa8] sm:$0xff]
      %v3121 = vld [vmem:[#allocation2 + $0xb0] sm:$0xff]
      %v3122 = vld [vmem:[#allocation2 + $0xb8] sm:$0xff]
      %v3123 = vld [vmem:[#allocation2 + $0xc0] sm:$0xff]
      %v3124 = vld [vmem:[#allocation2 + $0xc8] sm:$0xff]
      %v3125 = vld [vmem:[#allocation2 + $0xd0] sm:$0xff]
      %v3126 = vld [vmem:[#allocation2 + $0xd8] sm:$0xff]
      %v3127 = vld [vmem:[#allocation2 + $0xe0] sm:$0xff]
      %v3128 = vld [vmem:[#allocation2 + $0xe8] sm:$0xff]
      %3159 = vrot.lane.b32.xlu0 %v3099, 5
      %v3160 = vpop.permute.xlu0 %3159
      %3161 = vrot.lane.b32.xlu0 %v3100, 5
      %v3162 = vpop.permute.xlu0 %3161
      %3163 = vrot.lane.b32.xlu0 %v3101, 5
      %v3164 = vpop.permute.xlu0 %3163
      %3165 = vrot.lane.b32.xlu0 %v3102, 5
      %v3166 = vpop.permute.xlu0 %3165
      %3167 = vrot.lane.b32.xlu0 %v3103, 5
      %v3168 = vpop.permute.xlu0 %3167
      %3169 = vrot.lane.b32.xlu0 %v3104, 5
      %v3170 = vpop.permute.xlu0 %3169
      %3171 = vrot.lane.b32.xlu0 %v3105, 5
      %v3172 = vpop.permute.xlu0 %3171
      %3173 = vrot.lane.b32.xlu0 %v3106, 5
      %v3174 = vpop.permute.xlu0 %3173
      %3175 = vrot.lane.b32.xlu0 %v3107, 5
      %v3176 = vpop.permute.xlu0 %3175
      %3177 = vrot.lane.b32.xlu0 %v3108, 5
      %v3178 = vpop.permute.xlu0 %3177
      %3179 = vrot.lane.b32.xlu0 %v3109, 5
      %v3180 = vpop.permute.xlu0 %3179
      %3181 = vrot.lane.b32.xlu0 %v3110, 5
      %v3182 = vpop.permute.xlu0 %3181
      %3183 = vrot.lane.b32.xlu0 %v3111, 5
      %v3184 = vpop.permute.xlu0 %3183
      %3185 = vrot.lane.b32.xlu0 %v3112, 5
      %v3186 = vpop.permute.xlu0 %3185
      %3187 = vrot.lane.b32.xlu0 %v3113, 5
      %v3188 = vpop.permute.xlu0 %3187
      %3189 = vrot.lane.b32.xlu0 %v3114, 5
      %v3190 = vpop.permute.xlu0 %3189
      %3191 = vrot.lane.b32.xlu0 %v3115, 5
      %v3192 = vpop.permute.xlu0 %3191
      %3193 = vrot.lane.b32.xlu0 %v3116, 5
      %v3194 = vpop.permute.xlu0 %3193
      %3195 = vrot.lane.b32.xlu0 %v3117, 5
      %v3196 = vpop.permute.xlu0 %3195
      %3197 = vrot.lane.b32.xlu0 %v3118, 5
      %v3198 = vpop.permute.xlu0 %3197
      %3199 = vrot.lane.b32.xlu0 %v3119, 5
      %v3200 = vpop.permute.xlu0 %3199
      %3201 = vrot.lane.b32.xlu0 %v3120, 5
      %v3202 = vpop.permute.xlu0 %3201
      %3203 = vrot.lane.b32.xlu0 %v3121, 5
      %v3204 = vpop.permute.xlu0 %3203
      %3205 = vrot.lane.b32.xlu0 %v3122, 5
      %v3206 = vpop.permute.xlu0 %3205
      %3207 = vrot.lane.b32.xlu0 %v3123, 5
      %v3208 = vpop.permute.xlu0 %3207
      %3209 = vrot.lane.b32.xlu0 %v3124, 5
      %v3210 = vpop.permute.xlu0 %3209
      %3211 = vrot.lane.b32.xlu0 %v3125, 5
      %v3212 = vpop.permute.xlu0 %3211
      %3213 = vrot.lane.b32.xlu0 %v3126, 5
      %v3214 = vpop.permute.xlu0 %3213
      %3215 = vrot.lane.b32.xlu0 %v3127, 5
      %v3216 = vpop.permute.xlu0 %3215
      %3217 = vrot.lane.b32.xlu0 %v3128, 5
      %v3218 = vpop.permute.xlu0 %3217
      %vm3219 = vcmask 39936
      %v3220 = vsel %vm3219, %v3160, %v3162
      %v3221 = vsel %vm3219, %v3162, %v3164
      %v3222 = vsel %vm3219, %v3164, %v3166
      %v3223 = vsel %vm3219, %v3166, %v3168
      %v3224 = vsel %vm3219, %v3168, %v3170
      %v3225 = vsel %vm3219, %v3170, %v3172
      %v3226 = vsel %vm3219, %v3172, %v3174
      %v3227 = vsel %vm3219, %v3174, %v3176
      %v3228 = vsel %vm3219, %v3176, %v3178
      %v3229 = vsel %vm3219, %v3178, %v3180
      %v3230 = vsel %vm3219, %v3180, %v3182
      %v3231 = vsel %vm3219, %v3182, %v3184
      %v3232 = vsel %vm3219, %v3184, %v3186
      %v3233 = vsel %vm3219, %v3186, %v3188
      %v3234 = vsel %vm3219, %v3188, %v3190
      %v3235 = vsel %vm3219, %v3190, %v3192
      %v3236 = vsel %vm3219, %v3192, %v3194
      %v3237 = vsel %vm3219, %v3194, %v3196
      %v3238 = vsel %vm3219, %v3196, %v3198
      %v3239 = vsel %vm3219, %v3198, %v3200
      %v3240 = vsel %vm3219, %v3200, %v3202
      %v3241 = vsel %vm3219, %v3202, %v3204
      %v3242 = vsel %vm3219, %v3204, %v3206
      %v3243 = vsel %vm3219, %v3206, %v3208
      %v3244 = vsel %vm3219, %v3208, %v3210
      %v3245 = vsel %vm3219, %v3210, %v3212
      %v3246 = vsel %vm3219, %v3212, %v3214
      %v3247 = vsel %vm3219, %v3214, %v3216
      %v3248 = vsel %vm3219, %v3216, %v3218
      %3278 = vst [vmem:[#allocation9 + $0x658] sm:$0xff] %v3220
      %3279 = vst [vmem:[#allocation9 + $0x660] sm:$0xff] %v3221
      %3280 = vst [vmem:[#allocation9 + $0x668] sm:$0xff] %v3222
      %3281 = vst [vmem:[#allocation9 + $0x670] sm:$0xff] %v3223
      %3282 = vst [vmem:[#allocation9 + $0x678] sm:$0xff] %v3224
      %3283 = vst [vmem:[#allocation9 + $0x680] sm:$0xff] %v3225
      %3284 = vst [vmem:[#allocation9 + $0x688] sm:$0xff] %v3226
      %3285 = vst [vmem:[#allocation9 + $0x690] sm:$0xff] %v3227
      %3286 = vst [vmem:[#allocation9 + $0x698] sm:$0xff] %v3228
      %3287 = vst [vmem:[#allocation9 + $0x6a0] sm:$0xff] %v3229
      %3288 = vst [vmem:[#allocation9 + $0x6a8] sm:$0xff] %v3230
      %3289 = vst [vmem:[#allocation9 + $0x6b0] sm:$0xff] %v3231
      %3290 = vst [vmem:[#allocation9 + $0x6b8] sm:$0xff] %v3232
      %3291 = vst [vmem:[#allocation9 + $0x6c0] sm:$0xff] %v3233
      %3292 = vst [vmem:[#allocation9 + $0x6c8] sm:$0xff] %v3234
      %3293 = vst [vmem:[#allocation9 + $0x6d0] sm:$0xff] %v3235
      %3294 = vst [vmem:[#allocation9 + $0x6d8] sm:$0xff] %v3236
      %3295 = vst [vmem:[#allocation9 + $0x6e0] sm:$0xff] %v3237
      %3296 = vst [vmem:[#allocation9 + $0x6e8] sm:$0xff] %v3238
      %3297 = vst [vmem:[#allocation9 + $0x6f0] sm:$0xff] %v3239
      %3298 = vst [vmem:[#allocation9 + $0x6f8] sm:$0xff] %v3240
      %3299 = vst [vmem:[#allocation9 + $0x700] sm:$0xff] %v3241
      %3300 = vst [vmem:[#allocation9 + $0x708] sm:$0xff] %v3242
      %3301 = vst [vmem:[#allocation9 + $0x710] sm:$0xff] %v3243
      %3302 = vst [vmem:[#allocation9 + $0x718] sm:$0xff] %v3244
      %3303 = vst [vmem:[#allocation9 + $0x720] sm:$0xff] %v3245
      %3304 = vst [vmem:[#allocation9 + $0x728] sm:$0xff] %v3246
      %3305 = vst [vmem:[#allocation9 + $0x730] sm:$0xff] %v3247
      %3306 = vst.msk [vmem:[#allocation9 + $0x738] sm:$0xff] %vm1877, %v3248
      %v3307 = vld [vmem:[#allocation2] sm:$0xff]
      %v3308 = vld [vmem:[#allocation2 + $0x8] sm:$0xff]
      %v3309 = vld [vmem:[#allocation2 + $0x10] sm:$0xff]
      %v3310 = vld [vmem:[#allocation2 + $0x18] sm:$0xff]
      %v3311 = vld [vmem:[#allocation2 + $0x20] sm:$0xff]
      %v3312 = vld [vmem:[#allocation2 + $0x28] sm:$0xff]
      %v3313 = vld [vmem:[#allocation2 + $0x30] sm:$0xff]
      %v3314 = vld [vmem:[#allocation2 + $0x38] sm:$0xff]
      %v3315 = vld [vmem:[#allocation2 + $0x40] sm:$0xff]
      %v3316 = vld [vmem:[#allocation2 + $0x48] sm:$0xff]
      %v3317 = vld [vmem:[#allocation2 + $0x50] sm:$0xff]
      %v3318 = vld [vmem:[#allocation2 + $0x58] sm:$0xff]
      %v3319 = vld [vmem:[#allocation2 + $0x60] sm:$0xff]
      %v3320 = vld [vmem:[#allocation2 + $0x68] sm:$0xff]
      %v3321 = vld [vmem:[#allocation2 + $0x70] sm:$0xff]
      %v3322 = vld [vmem:[#allocation2 + $0x78] sm:$0xff]
      %v3323 = vld [vmem:[#allocation2 + $0x80] sm:$0xff]
      %v3324 = vld [vmem:[#allocation2 + $0x88] sm:$0xff]
      %v3325 = vld [vmem:[#allocation2 + $0x90] sm:$0xff]
      %v3326 = vld [vmem:[#allocation2 + $0x98] sm:$0xff]
      %v3327 = vld [vmem:[#allocation2 + $0xa0] sm:$0xff]
      %v3328 = vld [vmem:[#allocation2 + $0xa8] sm:$0xff]
      %v3329 = vld [vmem:[#allocation2 + $0xb0] sm:$0xff]
      %v3330 = vld [vmem:[#allocation2 + $0xb8] sm:$0xff]
      %v3331 = vld [vmem:[#allocation2 + $0xc0] sm:$0xff]
      %v3332 = vld [vmem:[#allocation2 + $0xc8] sm:$0xff]
      %v3333 = vld [vmem:[#allocation2 + $0xd0] sm:$0xff]
      %v3334 = vld [vmem:[#allocation2 + $0xd8] sm:$0xff]
      %v3335 = vld [vmem:[#allocation2 + $0xe0] sm:$0xff]
      %v3336 = vld [vmem:[#allocation2 + $0xe8] sm:$0xff]
      %3367 = vrot.lane.b32.xlu0 %v3307, 4
      %v3368 = vpop.permute.xlu0 %3367
      %3369 = vrot.lane.b32.xlu0 %v3308, 4
      %v3370 = vpop.permute.xlu0 %3369
      %3371 = vrot.lane.b32.xlu0 %v3309, 4
      %v3372 = vpop.permute.xlu0 %3371
      %3373 = vrot.lane.b32.xlu0 %v3310, 4
      %v3374 = vpop.permute.xlu0 %3373
      %3375 = vrot.lane.b32.xlu0 %v3311, 4
      %v3376 = vpop.permute.xlu0 %3375
      %3377 = vrot.lane.b32.xlu0 %v3312, 4
      %v3378 = vpop.permute.xlu0 %3377
      %3379 = vrot.lane.b32.xlu0 %v3313, 4
      %v3380 = vpop.permute.xlu0 %3379
      %3381 = vrot.lane.b32.xlu0 %v3314, 4
      %v3382 = vpop.permute.xlu0 %3381
      %3383 = vrot.lane.b32.xlu0 %v3315, 4
      %v3384 = vpop.permute.xlu0 %3383
      %3385 = vrot.lane.b32.xlu0 %v3316, 4
      %v3386 = vpop.permute.xlu0 %3385
      %3387 = vrot.lane.b32.xlu0 %v3317, 4
      %v3388 = vpop.permute.xlu0 %3387
      %3389 = vrot.lane.b32.xlu0 %v3318, 4
      %v3390 = vpop.permute.xlu0 %3389
      %3391 = vrot.lane.b32.xlu0 %v3319, 4
      %v3392 = vpop.permute.xlu0 %3391
      %3393 = vrot.lane.b32.xlu0 %v3320, 4
      %v3394 = vpop.permute.xlu0 %3393
      %3395 = vrot.lane.b32.xlu0 %v3321, 4
      %v3396 = vpop.permute.xlu0 %3395
      %3397 = vrot.lane.b32.xlu0 %v3322, 4
      %v3398 = vpop.permute.xlu0 %3397
      %3399 = vrot.lane.b32.xlu0 %v3323, 4
      %v3400 = vpop.permute.xlu0 %3399
      %3401 = vrot.lane.b32.xlu0 %v3324, 4
      %v3402 = vpop.permute.xlu0 %3401
      %3403 = vrot.lane.b32.xlu0 %v3325, 4
      %v3404 = vpop.permute.xlu0 %3403
      %3405 = vrot.lane.b32.xlu0 %v3326, 4
      %v3406 = vpop.permute.xlu0 %3405
      %3407 = vrot.lane.b32.xlu0 %v3327, 4
      %v3408 = vpop.permute.xlu0 %3407
      %3409 = vrot.lane.b32.xlu0 %v3328, 4
      %v3410 = vpop.permute.xlu0 %3409
      %3411 = vrot.lane.b32.xlu0 %v3329, 4
      %v3412 = vpop.permute.xlu0 %3411
      %3413 = vrot.lane.b32.xlu0 %v3330, 4
      %v3414 = vpop.permute.xlu0 %3413
      %3415 = vrot.lane.b32.xlu0 %v3331, 4
      %v3416 = vpop.permute.xlu0 %3415
      %3417 = vrot.lane.b32.xlu0 %v3332, 4
      %v3418 = vpop.permute.xlu0 %3417
      %3419 = vrot.lane.b32.xlu0 %v3333, 4
      %v3420 = vpop.permute.xlu0 %3419
      %3421 = vrot.lane.b32.xlu0 %v3334, 4
      %v3422 = vpop.permute.xlu0 %3421
      %3423 = vrot.lane.b32.xlu0 %v3335, 4
      %v3424 = vpop.permute.xlu0 %3423
      %3425 = vrot.lane.b32.xlu0 %v3336, 4
      %v3426 = vpop.permute.xlu0 %3425
      %vm3427 = vcmask 31744
      %v3428 = vsel %vm3427, %v3368, %v3370
      %v3429 = vsel %vm3427, %v3370, %v3372
      %v3430 = vsel %vm3427, %v3372, %v3374
      %v3431 = vsel %vm3427, %v3374, %v3376
      %v3432 = vsel %vm3427, %v3376, %v3378
      %v3433 = vsel %vm3427, %v3378, %v3380
      %v3434 = vsel %vm3427, %v3380, %v3382
      %v3435 = vsel %vm3427, %v3382, %v3384
      %v3436 = vsel %vm3427, %v3384, %v3386
      %v3437 = vsel %vm3427, %v3386, %v3388
      %v3438 = vsel %vm3427, %v3388, %v3390
      %v3439 = vsel %vm3427, %v3390, %v3392
      %v3440 = vsel %vm3427, %v3392, %v3394
      %v3441 = vsel %vm3427, %v3394, %v3396
      %v3442 = vsel %vm3427, %v3396, %v3398
      %v3443 = vsel %vm3427, %v3398, %v3400
      %v3444 = vsel %vm3427, %v3400, %v3402
      %v3445 = vsel %vm3427, %v3402, %v3404
      %v3446 = vsel %vm3427, %v3404, %v3406
      %v3447 = vsel %vm3427, %v3406, %v3408
      %v3448 = vsel %vm3427, %v3408, %v3410
      %v3449 = vsel %vm3427, %v3410, %v3412
      %v3450 = vsel %vm3427, %v3412, %v3414
      %v3451 = vsel %vm3427, %v3414, %v3416
      %v3452 = vsel %vm3427, %v3416, %v3418
      %v3453 = vsel %vm3427, %v3418, %v3420
      %v3454 = vsel %vm3427, %v3420, %v3422
      %v3455 = vsel %vm3427, %v3422, %v3424
      %v3456 = vsel %vm3427, %v3424, %v3426
      %3486 = vst [vmem:[#allocation9 + $0x740] sm:$0xff] %v3428
      %3487 = vst [vmem:[#allocation9 + $0x748] sm:$0xff] %v3429
      %3488 = vst [vmem:[#allocation9 + $0x750] sm:$0xff] %v3430
      %3489 = vst [vmem:[#allocation9 + $0x758] sm:$0xff] %v3431
      %3490 = vst [vmem:[#allocation9 + $0x760] sm:$0xff] %v3432
      %3491 = vst [vmem:[#allocation9 + $0x768] sm:$0xff] %v3433
      %3492 = vst [vmem:[#allocation9 + $0x770] sm:$0xff] %v3434
      %3493 = vst [vmem:[#allocation9 + $0x778] sm:$0xff] %v3435
      %3494 = vst [vmem:[#allocation9 + $0x780] sm:$0xff] %v3436
      %3495 = vst [vmem:[#allocation9 + $0x788] sm:$0xff] %v3437
      %3496 = vst [vmem:[#allocation9 + $0x790] sm:$0xff] %v3438
      %3497 = vst [vmem:[#allocation9 + $0x798] sm:$0xff] %v3439
      %3498 = vst [vmem:[#allocation9 + $0x7a0] sm:$0xff] %v3440
      %3499 = vst [vmem:[#allocation9 + $0x7a8] sm:$0xff] %v3441
      %3500 = vst [vmem:[#allocation9 + $0x7b0] sm:$0xff] %v3442
      %3501 = vst [vmem:[#allocation9 + $0x7b8] sm:$0xff] %v3443
      %3502 = vst [vmem:[#allocation9 + $0x7c0] sm:$0xff] %v3444
      %3503 = vst [vmem:[#allocation9 + $0x7c8] sm:$0xff] %v3445
      %3504 = vst [vmem:[#allocation9 + $0x7d0] sm:$0xff] %v3446
      %3505 = vst [vmem:[#allocation9 + $0x7d8] sm:$0xff] %v3447
      %3506 = vst [vmem:[#allocation9 + $0x7e0] sm:$0xff] %v3448
      %3507 = vst [vmem:[#allocation9 + $0x7e8] sm:$0xff] %v3449
      %3508 = vst [vmem:[#allocation9 + $0x7f0] sm:$0xff] %v3450
      %3509 = vst [vmem:[#allocation9 + $0x7f8] sm:$0xff] %v3451
      %3510 = vst [vmem:[#allocation9 + $0x800] sm:$0xff] %v3452
      %3511 = vst [vmem:[#allocation9 + $0x808] sm:$0xff] %v3453
      %3512 = vst [vmem:[#allocation9 + $0x810] sm:$0xff] %v3454
      %3513 = vst [vmem:[#allocation9 + $0x818] sm:$0xff] %v3455
      %3514 = vst.msk [vmem:[#allocation9 + $0x820] sm:$0xff] %vm1877, %v3456
      %v3515 = vld [vmem:[%s1 + $0x8] sm:$0xff]
      %v3516 = vld [vmem:[#allocation9] sm:$0xff]
      %v3517 = vld [vmem:[#allocation9 + $0x8] sm:$0xff]
      %v3518 = vld [vmem:[#allocation9 + $0x10] sm:$0xff]
      %v3519 = vld [vmem:[#allocation9 + $0x18] sm:$0xff]
      %v3520 = vld [vmem:[#allocation9 + $0x20] sm:$0xff]
      %v3521 = vld [vmem:[#allocation9 + $0x28] sm:$0xff]
      %v3522 = vld [vmem:[#allocation9 + $0x30] sm:$0xff]
      %v3523 = vld [vmem:[#allocation9 + $0x38] sm:$0xff]
      %v3524 = vld [vmem:[#allocation9 + $0x40] sm:$0xff]
      %v3525 = vld [vmem:[#allocation9 + $0x48] sm:$0xff]
      %v3526 = vld [vmem:[#allocation9 + $0x50] sm:$0xff]
      %v3527 = vld [vmem:[#allocation9 + $0x58] sm:$0xff]
      %v3528 = vld [vmem:[#allocation9 + $0x60] sm:$0xff]
      %v3529 = vld [vmem:[#allocation9 + $0x68] sm:$0xff]
      %v3530 = vld [vmem:[#allocation9 + $0x70] sm:$0xff]
      %v3531 = vld [vmem:[#allocation9 + $0x78] sm:$0xff]
      %v3532 = vld [vmem:[#allocation9 + $0x80] sm:$0xff]
      %v3533 = vld [vmem:[#allocation9 + $0x88] sm:$0xff]
      %v3534 = vld [vmem:[#allocation9 + $0x90] sm:$0xff]
      %v3535 = vld [vmem:[#allocation9 + $0x98] sm:$0xff]
      %v3536 = vld [vmem:[#allocation9 + $0xa0] sm:$0xff]
      %v3537 = vld [vmem:[#allocation9 + $0xa8] sm:$0xff]
      %v3538 = vld [vmem:[#allocation9 + $0xb0] sm:$0xff]
      %v3539 = vld [vmem:[#allocation9 + $0xb8] sm:$0xff]
      %v3540 = vld [vmem:[#allocation9 + $0xc0] sm:$0xff]
      %v3541 = vld [vmem:[#allocation9 + $0xc8] sm:$0xff]
      %v3542 = vld [vmem:[#allocation9 + $0xd0] sm:$0xff]
      %v3543 = vld [vmem:[#allocation9 + $0xd8] sm:$0xff]
      %v3544 = vld [vmem:[#allocation9 + $0xe0] sm:$0xff]
      %v3545 = vld [vmem:[#allocation9 + $0xe8] sm:$0xff]
      %v3546 = vld [vmem:[#allocation9 + $0xf0] sm:$0xff]
      %v3547 = vld [vmem:[#allocation9 + $0xf8] sm:$0xff]
      %v3548 = vld [vmem:[#allocation9 + $0x100] sm:$0xff]
      %v3549 = vld [vmem:[#allocation9 + $0x108] sm:$0xff]
      %v3550 = vld [vmem:[#allocation9 + $0x110] sm:$0xff]
      %v3551 = vld [vmem:[#allocation9 + $0x118] sm:$0xff]
      %v3552 = vld [vmem:[#allocation9 + $0x120] sm:$0xff]
      %v3553 = vld [vmem:[#allocation9 + $0x128] sm:$0xff]
      %v3554 = vld [vmem:[#allocation9 + $0x130] sm:$0xff]
      %v3555 = vld [vmem:[#allocation9 + $0x138] sm:$0xff]
      %v3556 = vld [vmem:[#allocation9 + $0x140] sm:$0xff]
      %v3557 = vld [vmem:[#allocation9 + $0x148] sm:$0xff]
      %v3558 = vld [vmem:[#allocation9 + $0x150] sm:$0xff]
      %v3559 = vld [vmem:[#allocation9 + $0x158] sm:$0xff]
      %v3560 = vld [vmem:[#allocation9 + $0x160] sm:$0xff]
      %v3561 = vld [vmem:[#allocation9 + $0x168] sm:$0xff]
      %v3562 = vld [vmem:[#allocation9 + $0x170] sm:$0xff]
      %v3563 = vld [vmem:[#allocation9 + $0x178] sm:$0xff]
      %v3564 = vld [vmem:[#allocation9 + $0x180] sm:$0xff]
      %v3565 = vld [vmem:[#allocation9 + $0x188] sm:$0xff]
      %v3566 = vld [vmem:[#allocation9 + $0x190] sm:$0xff]
      %v3567 = vld [vmem:[#allocation9 + $0x198] sm:$0xff]
      %v3568 = vld [vmem:[#allocation9 + $0x1a0] sm:$0xff]
      %v3569 = vld [vmem:[#allocation9 + $0x1a8] sm:$0xff]
      %v3570 = vld [vmem:[#allocation9 + $0x1b0] sm:$0xff]
      %v3571 = vld [vmem:[#allocation9 + $0x1b8] sm:$0xff]
      %v3572 = vld [vmem:[#allocation9 + $0x1c0] sm:$0xff]
      %v3573 = vld [vmem:[#allocation9 + $0x1c8] sm:$0xff]
      %v3574 = vld [vmem:[#allocation9 + $0x1d0] sm:$0xff]
      %v3575 = vld [vmem:[#allocation9 + $0x1d8] sm:$0xff]
      %v3576 = vld [vmem:[#allocation9 + $0x1e0] sm:$0xff]
      %v3577 = vld [vmem:[#allocation9 + $0x1e8] sm:$0xff]
      %v3578 = vld [vmem:[#allocation9 + $0x1f0] sm:$0xff]
      %v3579 = vld [vmem:[#allocation9 + $0x1f8] sm:$0xff]
      %v3580 = vld [vmem:[#allocation9 + $0x200] sm:$0xff]
      %v3581 = vld [vmem:[#allocation9 + $0x208] sm:$0xff]
      %v3582 = vld [vmem:[#allocation9 + $0x210] sm:$0xff]
      %v3583 = vld [vmem:[#allocation9 + $0x218] sm:$0xff]
      %v3584 = vld [vmem:[#allocation9 + $0x220] sm:$0xff]
      %v3585 = vld [vmem:[#allocation9 + $0x228] sm:$0xff]
      %v3586 = vld [vmem:[#allocation9 + $0x230] sm:$0xff]
      %v3587 = vld [vmem:[#allocation9 + $0x238] sm:$0xff]
      %v3588 = vld [vmem:[#allocation9 + $0x240] sm:$0xff]
      %v3589 = vld [vmem:[#allocation9 + $0x248] sm:$0xff]
      %v3590 = vld [vmem:[#allocation9 + $0x250] sm:$0xff]
      %v3591 = vld [vmem:[#allocation9 + $0x258] sm:$0xff]
      %v3592 = vld [vmem:[#allocation9 + $0x260] sm:$0xff]
      %v3593 = vld [vmem:[#allocation9 + $0x268] sm:$0xff]
      %v3594 = vld [vmem:[#allocation9 + $0x270] sm:$0xff]
      %v3595 = vld [vmem:[#allocation9 + $0x278] sm:$0xff]
      %v3596 = vld [vmem:[#allocation9 + $0x280] sm:$0xff]
      %v3597 = vld [vmem:[#allocation9 + $0x288] sm:$0xff]
      %v3598 = vld [vmem:[#allocation9 + $0x290] sm:$0xff]
      %v3599 = vld [vmem:[#allocation9 + $0x298] sm:$0xff]
      %v3600 = vld [vmem:[#allocation9 + $0x2a0] sm:$0xff]
      %v3601 = vld [vmem:[#allocation9 + $0x2a8] sm:$0xff]
      %v3602 = vld [vmem:[#allocation9 + $0x2b0] sm:$0xff]
      %v3603 = vld [vmem:[#allocation9 + $0x2b8] sm:$0xff]
      %v3604 = vld [vmem:[#allocation9 + $0x2c0] sm:$0xff]
      %v3605 = vld [vmem:[#allocation9 + $0x2c8] sm:$0xff]
      %v3606 = vld [vmem:[#allocation9 + $0x2d0] sm:$0xff]
      %v3607 = vld [vmem:[#allocation9 + $0x2d8] sm:$0xff]
      %v3608 = vld [vmem:[#allocation9 + $0x2e0] sm:$0xff]
      %v3609 = vld [vmem:[#allocation9 + $0x2e8] sm:$0xff]
      %v3610 = vld [vmem:[#allocation9 + $0x2f0] sm:$0xff]
      %v3611 = vld [vmem:[#allocation9 + $0x2f8] sm:$0xff]
      %v3612 = vld [vmem:[#allocation9 + $0x300] sm:$0xff]
      %v3613 = vld [vmem:[#allocation9 + $0x308] sm:$0xff]
      %v3614 = vld [vmem:[#allocation9 + $0x310] sm:$0xff]
      %v3615 = vld [vmem:[#allocation9 + $0x318] sm:$0xff]
      %v3616 = vld [vmem:[#allocation9 + $0x320] sm:$0xff]
      %v3617 = vld [vmem:[#allocation9 + $0x328] sm:$0xff]
      %v3618 = vld [vmem:[#allocation9 + $0x330] sm:$0xff]
      %v3619 = vld [vmem:[#allocation9 + $0x338] sm:$0xff]
      %v3620 = vld [vmem:[#allocation9 + $0x340] sm:$0xff]
      %v3621 = vld [vmem:[#allocation9 + $0x348] sm:$0xff]
      %v3622 = vld [vmem:[#allocation9 + $0x350] sm:$0xff]
      %v3623 = vld [vmem:[#allocation9 + $0x358] sm:$0xff]
      %v3624 = vld [vmem:[#allocation9 + $0x360] sm:$0xff]
      %v3625 = vld [vmem:[#allocation9 + $0x368] sm:$0xff]
      %v3626 = vld [vmem:[#allocation9 + $0x370] sm:$0xff]
      %v3627 = vld [vmem:[#allocation9 + $0x378] sm:$0xff]
      %v3628 = vld [vmem:[#allocation9 + $0x380] sm:$0xff]
      %v3629 = vld [vmem:[#allocation9 + $0x388] sm:$0xff]
      %v3630 = vld [vmem:[#allocation9 + $0x390] sm:$0xff]
      %v3631 = vld [vmem:[#allocation9 + $0x398] sm:$0xff]
      %v3632 = vld [vmem:[#allocation9 + $0x3a0] sm:$0xff]
      %v3633 = vld [vmem:[#allocation9 + $0x3a8] sm:$0xff]
      %v3634 = vld [vmem:[#allocation9 + $0x3b0] sm:$0xff]
      %v3635 = vld [vmem:[#allocation9 + $0x3b8] sm:$0xff]
      %v3636 = vld [vmem:[#allocation9 + $0x3c0] sm:$0xff]
      %v3637 = vld [vmem:[#allocation9 + $0x3c8] sm:$0xff]
      %v3638 = vld [vmem:[#allocation9 + $0x3d0] sm:$0xff]
      %v3639 = vld [vmem:[#allocation9 + $0x3d8] sm:$0xff]
      %v3640 = vld [vmem:[#allocation9 + $0x3e0] sm:$0xff]
      %v3641 = vld [vmem:[#allocation9 + $0x3e8] sm:$0xff]
      %v3642 = vld [vmem:[#allocation9 + $0x3f0] sm:$0xff]
      %v3643 = vld [vmem:[#allocation9 + $0x3f8] sm:$0xff]
      %v3644 = vld [vmem:[#allocation9 + $0x400] sm:$0xff]
      %v3645 = vld [vmem:[#allocation9 + $0x408] sm:$0xff]
      %v3646 = vld [vmem:[#allocation9 + $0x410] sm:$0xff]
      %v3647 = vld [vmem:[#allocation9 + $0x418] sm:$0xff]
      %v3648 = vld [vmem:[#allocation9 + $0x420] sm:$0xff]
      %v3649 = vld [vmem:[#allocation9 + $0x428] sm:$0xff]
      %v3650 = vld [vmem:[#allocation9 + $0x430] sm:$0xff]
      %v3651 = vld [vmem:[#allocation9 + $0x438] sm:$0xff]
      %v3652 = vld [vmem:[#allocation9 + $0x440] sm:$0xff]
      %v3653 = vld [vmem:[#allocation9 + $0x448] sm:$0xff]
      %v3654 = vld [vmem:[#allocation9 + $0x450] sm:$0xff]
      %v3655 = vld [vmem:[#allocation9 + $0x458] sm:$0xff]
      %v3656 = vld [vmem:[#allocation9 + $0x460] sm:$0xff]
      %v3657 = vld [vmem:[#allocation9 + $0x468] sm:$0xff]
      %v3658 = vld [vmem:[#allocation9 + $0x470] sm:$0xff]
      %v3659 = vld [vmem:[#allocation9 + $0x478] sm:$0xff]
      %v3660 = vld [vmem:[#allocation9 + $0x480] sm:$0xff]
      %v3661 = vld [vmem:[#allocation9 + $0x488] sm:$0xff]
      %v3662 = vld [vmem:[#allocation9 + $0x490] sm:$0xff]
      %v3663 = vld [vmem:[#allocation9 + $0x498] sm:$0xff]
      %v3664 = vld [vmem:[#allocation9 + $0x4a0] sm:$0xff]
      %v3665 = vld [vmem:[#allocation9 + $0x4a8] sm:$0xff]
      %v3666 = vld [vmem:[#allocation9 + $0x4b0] sm:$0xff]
      %v3667 = vld [vmem:[#allocation9 + $0x4b8] sm:$0xff]
      %v3668 = vld [vmem:[#allocation9 + $0x4c0] sm:$0xff]
      %v3669 = vld [vmem:[#allocation9 + $0x4c8] sm:$0xff]
      %v3670 = vld [vmem:[#allocation9 + $0x4d0] sm:$0xff]
      %v3671 = vld [vmem:[#allocation9 + $0x4d8] sm:$0xff]
      %v3672 = vld [vmem:[#allocation9 + $0x4e0] sm:$0xff]
      %v3673 = vld [vmem:[#allocation9 + $0x4e8] sm:$0xff]
      %v3674 = vld [vmem:[#allocation9 + $0x4f0] sm:$0xff]
      %v3675 = vld [vmem:[#allocation9 + $0x4f8] sm:$0xff]
      %v3676 = vld [vmem:[#allocation9 + $0x500] sm:$0xff]
      %v3677 = vld [vmem:[#allocation9 + $0x508] sm:$0xff]
      %v3678 = vld [vmem:[#allocation9 + $0x510] sm:$0xff]
      %v3679 = vld [vmem:[#allocation9 + $0x518] sm:$0xff]
      %v3680 = vld [vmem:[#allocation9 + $0x520] sm:$0xff]
      %v3681 = vld [vmem:[#allocation9 + $0x528] sm:$0xff]
      %v3682 = vld [vmem:[#allocation9 + $0x530] sm:$0xff]
      %v3683 = vld [vmem:[#allocation9 + $0x538] sm:$0xff]
      %v3684 = vld [vmem:[#allocation9 + $0x540] sm:$0xff]
      %v3685 = vld [vmem:[#allocation9 + $0x548] sm:$0xff]
      %v3686 = vld [vmem:[#allocation9 + $0x550] sm:$0xff]
      %v3687 = vld [vmem:[#allocation9 + $0x558] sm:$0xff]
      %v3688 = vld [vmem:[#allocation9 + $0x560] sm:$0xff]
      %v3689 = vld [vmem:[#allocation9 + $0x568] sm:$0xff]
      %v3690 = vld [vmem:[#allocation9 + $0x570] sm:$0xff]
      %v3691 = vld [vmem:[#allocation9 + $0x578] sm:$0xff]
      %v3692 = vld [vmem:[#allocation9 + $0x580] sm:$0xff]
      %v3693 = vld [vmem:[#allocation9 + $0x588] sm:$0xff]
      %v3694 = vld [vmem:[#allocation9 + $0x590] sm:$0xff]
      %v3695 = vld [vmem:[#allocation9 + $0x598] sm:$0xff]
      %v3696 = vld [vmem:[#allocation9 + $0x5a0] sm:$0xff]
      %v3697 = vld [vmem:[#allocation9 + $0x5a8] sm:$0xff]
      %v3698 = vld [vmem:[#allocation9 + $0x5b0] sm:$0xff]
      %v3699 = vld [vmem:[#allocation9 + $0x5b8] sm:$0xff]
      %v3700 = vld [vmem:[#allocation9 + $0x5c0] sm:$0xff]
      %v3701 = vld [vmem:[#allocation9 + $0x5c8] sm:$0xff]
      %v3702 = vld [vmem:[#allocation9 + $0x5d0] sm:$0xff]
      %v3703 = vld [vmem:[#allocation9 + $0x5d8] sm:$0xff]
      %v3704 = vld [vmem:[#allocation9 + $0x5e0] sm:$0xff]
      %v3705 = vld [vmem:[#allocation9 + $0x5e8] sm:$0xff]
      %v3706 = vld [vmem:[#allocation9 + $0x5f0] sm:$0xff]
      %v3707 = vld [vmem:[#allocation9 + $0x5f8] sm:$0xff]
      %v3708 = vld [vmem:[#allocation9 + $0x600] sm:$0xff]
      %v3709 = vld [vmem:[#allocation9 + $0x608] sm:$0xff]
      %v3710 = vld [vmem:[#allocation9 + $0x610] sm:$0xff]
      %v3711 = vld [vmem:[#allocation9 + $0x618] sm:$0xff]
      %v3712 = vld [vmem:[#allocation9 + $0x620] sm:$0xff]
      %v3713 = vld [vmem:[#allocation9 + $0x628] sm:$0xff]
      %v3714 = vld [vmem:[#allocation9 + $0x630] sm:$0xff]
      %v3715 = vld [vmem:[#allocation9 + $0x638] sm:$0xff]
      %v3716 = vld [vmem:[#allocation9 + $0x640] sm:$0xff]
      %v3717 = vld [vmem:[#allocation9 + $0x648] sm:$0xff]
      %v3718 = vld [vmem:[#allocation9 + $0x650] sm:$0xff]
      %v3719 = vld [vmem:[#allocation9 + $0x658] sm:$0xff]
      %v3720 = vld [vmem:[#allocation9 + $0x660] sm:$0xff]
      %v3721 = vld [vmem:[#allocation9 + $0x668] sm:$0xff]
      %v3722 = vld [vmem:[#allocation9 + $0x670] sm:$0xff]
      %v3723 = vld [vmem:[#allocation9 + $0x678] sm:$0xff]
      %v3724 = vld [vmem:[#allocation9 + $0x680] sm:$0xff]
      %v3725 = vld [vmem:[#allocation9 + $0x688] sm:$0xff]
      %v3726 = vld [vmem:[#allocation9 + $0x690] sm:$0xff]
      %v3727 = vld [vmem:[#allocation9 + $0x698] sm:$0xff]
      %v3728 = vld [vmem:[#allocation9 + $0x6a0] sm:$0xff]
      %v3729 = vld [vmem:[#allocation9 + $0x6a8] sm:$0xff]
      %v3730 = vld [vmem:[#allocation9 + $0x6b0] sm:$0xff]
      %v3731 = vld [vmem:[#allocation9 + $0x6b8] sm:$0xff]
      %v3732 = vld [vmem:[#allocation9 + $0x6c0] sm:$0xff]
      %v3733 = vld [vmem:[#allocation9 + $0x6c8] sm:$0xff]
      %v3734 = vld [vmem:[#allocation9 + $0x6d0] sm:$0xff]
      %v3735 = vld [vmem:[#allocation9 + $0x6d8] sm:$0xff]
      %v3736 = vld [vmem:[#allocation9 + $0x6e0] sm:$0xff]
      %v3737 = vld [vmem:[#allocation9 + $0x6e8] sm:$0xff]
      %v3738 = vld [vmem:[#allocation9 + $0x6f0] sm:$0xff]
      %v3739 = vld [vmem:[#allocation9 + $0x6f8] sm:$0xff]
      %v3740 = vld [vmem:[#allocation9 + $0x700] sm:$0xff]
      %v3741 = vld [vmem:[#allocation9 + $0x708] sm:$0xff]
      %v3742 = vld [vmem:[#allocation9 + $0x710] sm:$0xff]
      %v3743 = vld [vmem:[#allocation9 + $0x718] sm:$0xff]
      %v3744 = vld [vmem:[#allocation9 + $0x720] sm:$0xff]
      %v3745 = vld [vmem:[#allocation9 + $0x728] sm:$0xff]
      %v3746 = vld [vmem:[#allocation9 + $0x730] sm:$0xff]
      %v3747 = vld [vmem:[#allocation9 + $0x738] sm:$0xff]
      %v3748 = vld [vmem:[#allocation9 + $0x740] sm:$0xff]
      %v3749 = vld [vmem:[#allocation9 + $0x748] sm:$0xff]
      %v3750 = vld [vmem:[#allocation9 + $0x750] sm:$0xff]
      %v3751 = vld [vmem:[#allocation9 + $0x758] sm:$0xff]
      %v3752 = vld [vmem:[#allocation9 + $0x760] sm:$0xff]
      %v3753 = vld [vmem:[#allocation9 + $0x768] sm:$0xff]
      %v3754 = vld [vmem:[#allocation9 + $0x770] sm:$0xff]
      %v3755 = vld [vmem:[#allocation9 + $0x778] sm:$0xff]
      %v3756 = vld [vmem:[#allocation9 + $0x780] sm:$0xff]
      %v3757 = vld [vmem:[#allocation9 + $0x788] sm:$0xff]
      %v3758 = vld [vmem:[#allocation9 + $0x790] sm:$0xff]
      %v3759 = vld [vmem:[#allocation9 + $0x798] sm:$0xff]
      %v3760 = vld [vmem:[#allocation9 + $0x7a0] sm:$0xff]
      %v3761 = vld [vmem:[#allocation9 + $0x7a8] sm:$0xff]
      %v3762 = vld [vmem:[#allocation9 + $0x7b0] sm:$0xff]
      %v3763 = vld [vmem:[#allocation9 + $0x7b8] sm:$0xff]
      %v3764 = vld [vmem:[#allocation9 + $0x7c0] sm:$0xff]
      %v3765 = vld [vmem:[#allocation9 + $0x7c8] sm:$0xff]
      %v3766 = vld [vmem:[#allocation9 + $0x7d0] sm:$0xff]
      %v3767 = vld [vmem:[#allocation9 + $0x7d8] sm:$0xff]
      %v3768 = vld [vmem:[#allocation9 + $0x7e0] sm:$0xff]
      %v3769 = vld [vmem:[#allocation9 + $0x7e8] sm:$0xff]
      %v3770 = vld [vmem:[#allocation9 + $0x7f0] sm:$0xff]
      %v3771 = vld [vmem:[#allocation9 + $0x7f8] sm:$0xff]
      %v3772 = vld [vmem:[#allocation9 + $0x800] sm:$0xff]
      %v3773 = vld [vmem:[#allocation9 + $0x808] sm:$0xff]
      %v3774 = vld [vmem:[#allocation9 + $0x810] sm:$0xff]
      %v3775 = vld [vmem:[#allocation9 + $0x818] sm:$0xff]
      %v3776 = vld [vmem:[#allocation9 + $0x820] sm:$0xff]
      %v3777 = vld [vmem:[%s2 + $0x8] sm:$0xff]
      %3779 = vset.pattern.permute.xlu0 0
      %3780 = vperm.xlu0 %3779, %v3777
      %v3781 = vpop.permute.xlu0 %3780
      %vm3783 = vcmask 588800
      %v3785 = vsel %vm3783, %v3515, 0
      %3787 = vmatpush.msra.mxu0 0.0
      %3788 = vmatpush.msra.mxu0 0.0
      %3789 = vmatpush.msra.mxu0 0.0
      %3790 = vmatpush.msra.mxu0 0.0
      %3791 = vmatpush.msra.mxu0 0.0
      %3792 = vmatpush.msra.mxu0 0.0
      %3793 = vmatpush.msra.mxu0 0.0
      %3794 = vmatpush.msra.mxu0 %v3748
      %3795 = vmatpush.msra.mxu0 %v3719
      %3796 = vmatpush.msra.mxu0 %v3690
      %3797 = vmatpush.msra.mxu0 %v3661
      %3798 = vmatpush.msra.mxu0 %v3632
      %3799 = vmatpush.msra.mxu0 %v3603
      %3800 = vmatpush.msra.mxu0 %v3574
      %3801 = vmatpush.msra.mxu0 %v3545
      %3802 = vmatpush.msra.mxu0 %v3516
      %3803 = vmatmul.f32.gmra.mxu0 %v3785
      %v3804 = vpop.f32.mrf.mxu0
      %v3805 = vadd.f32 %v3781, %v3804
      %3806 = vdwg.mxu0
      %3807 = vmatpush.msra.mxu0 0.0
      %3808 = vmatpush.msra.mxu0 0.0
      %3809 = vmatpush.msra.mxu0 0.0
      %3810 = vmatpush.msra.mxu0 0.0
      %3811 = vmatpush.msra.mxu0 0.0
      %3812 = vmatpush.msra.mxu0 0.0
      %3813 = vmatpush.msra.mxu0 0.0
      %3814 = vmatpush.msra.mxu0 %v3749
      %3815 = vmatpush.msra.mxu0 %v3720
      %3816 = vmatpush.msra.mxu0 %v3691
      %3817 = vmatpush.msra.mxu0 %v3662
      %3818 = vmatpush.msra.mxu0 %v3633
      %3819 = vmatpush.msra.mxu0 %v3604
      %3820 = vmatpush.msra.mxu0 %v3575
      %3821 = vmatpush.msra.mxu0 %v3546
      %3822 = vmatpush.msra.mxu0 %v3517
      %3823 = vmatmul.f32.gmra.mxu0 %v3785
      %v3824 = vpop.f32.mrf.mxu0
      %v3825 = vadd.f32 %v3781, %v3824
      %3826 = vdwg.mxu0
      %3827 = vmatpush.msra.mxu0 0.0
      %3828 = vmatpush.msra.mxu0 0.0
      %3829 = vmatpush.msra.mxu0 0.0
      %3830 = vmatpush.msra.mxu0 0.0
      %3831 = vmatpush.msra.mxu0 0.0
      %3832 = vmatpush.msra.mxu0 0.0
      %3833 = vmatpush.msra.mxu0 0.0
      %3834 = vmatpush.msra.mxu0 %v3750
      %3835 = vmatpush.msra.mxu0 %v3721
      %3836 = vmatpush.msra.mxu0 %v3692
      %3837 = vmatpush.msra.mxu0 %v3663
      %3838 = vmatpush.msra.mxu0 %v3634
      %3839 = vmatpush.msra.mxu0 %v3605
      %3840 = vmatpush.msra.mxu0 %v3576
      %3841 = vmatpush.msra.mxu0 %v3547
      %3842 = vmatpush.msra.mxu0 %v3518
      %3843 = vmatmul.f32.gmra.mxu0 %v3785
      %v3844 = vpop.f32.mrf.mxu0
      %v3845 = vadd.f32 %v3781, %v3844
      %3846 = vdwg.mxu0
      %3847 = vmatpush.msra.mxu0 0.0
      %3848 = vmatpush.msra.mxu0 0.0
      %3849 = vmatpush.msra.mxu0 0.0
      %3850 = vmatpush.msra.mxu0 0.0
      %3851 = vmatpush.msra.mxu0 0.0
      %3852 = vmatpush.msra.mxu0 0.0
      %3853 = vmatpush.msra.mxu0 0.0
      %3854 = vmatpush.msra.mxu0 %v3751
      %3855 = vmatpush.msra.mxu0 %v3722
      %3856 = vmatpush.msra.mxu0 %v3693
      %3857 = vmatpush.msra.mxu0 %v3664
      %3858 = vmatpush.msra.mxu0 %v3635
      %3859 = vmatpush.msra.mxu0 %v3606
      %3860 = vmatpush.msra.mxu0 %v3577
      %3861 = vmatpush.msra.mxu0 %v3548
      %3862 = vmatpush.msra.mxu0 %v3519
      %3863 = vmatmul.f32.gmra.mxu0 %v3785
      %v3864 = vpop.f32.mrf.mxu0
      %v3865 = vadd.f32 %v3781, %v3864
      %3866 = vdwg.mxu0
      %3867 = vmatpush.msra.mxu0 0.0
      %3868 = vmatpush.msra.mxu0 0.0
      %3869 = vmatpush.msra.mxu0 0.0
      %3870 = vmatpush.msra.mxu0 0.0
      %3871 = vmatpush.msra.mxu0 0.0
      %3872 = vmatpush.msra.mxu0 0.0
      %3873 = vmatpush.msra.mxu0 0.0
      %3874 = vmatpush.msra.mxu0 %v3752
      %3875 = vmatpush.msra.mxu0 %v3723
      %3876 = vmatpush.msra.mxu0 %v3694
      %3877 = vmatpush.msra.mxu0 %v3665
      %3878 = vmatpush.msra.mxu0 %v3636
      %3879 = vmatpush.msra.mxu0 %v3607
      %3880 = vmatpush.msra.mxu0 %v3578
      %3881 = vmatpush.msra.mxu0 %v3549
      %3882 = vmatpush.msra.mxu0 %v3520
      %3883 = vmatmul.f32.gmra.mxu0 %v3785
      %v3884 = vpop.f32.mrf.mxu0
      %v3885 = vadd.f32 %v3781, %v3884
      %3886 = vdwg.mxu0
      %3887 = vmatpush.msra.mxu0 0.0
      %3888 = vmatpush.msra.mxu0 0.0
      %3889 = vmatpush.msra.mxu0 0.0
      %3890 = vmatpush.msra.mxu0 0.0
      %3891 = vmatpush.msra.mxu0 0.0
      %3892 = vmatpush.msra.mxu0 0.0
      %3893 = vmatpush.msra.mxu0 0.0
      %3894 = vmatpush.msra.mxu0 %v3753
      %3895 = vmatpush.msra.mxu0 %v3724
      %3896 = vmatpush.msra.mxu0 %v3695
      %3897 = vmatpush.msra.mxu0 %v3666
      %3898 = vmatpush.msra.mxu0 %v3637
      %3899 = vmatpush.msra.mxu0 %v3608
      %3900 = vmatpush.msra.mxu0 %v3579
      %3901 = vmatpush.msra.mxu0 %v3550
      %3902 = vmatpush.msra.mxu0 %v3521
      %3903 = vmatmul.f32.gmra.mxu0 %v3785
      %v3904 = vpop.f32.mrf.mxu0
      %v3905 = vadd.f32 %v3781, %v3904
      %3906 = vdwg.mxu0
      %3907 = vmatpush.msra.mxu0 0.0
      %3908 = vmatpush.msra.mxu0 0.0
      %3909 = vmatpush.msra.mxu0 0.0
      %3910 = vmatpush.msra.mxu0 0.0
      %3911 = vmatpush.msra.mxu0 0.0
      %3912 = vmatpush.msra.mxu0 0.0
      %3913 = vmatpush.msra.mxu0 0.0
      %3914 = vmatpush.msra.mxu0 %v3754
      %3915 = vmatpush.msra.mxu0 %v3725
      %3916 = vmatpush.msra.mxu0 %v3696
      %3917 = vmatpush.msra.mxu0 %v3667
      %3918 = vmatpush.msra.mxu0 %v3638
      %3919 = vmatpush.msra.mxu0 %v3609
      %3920 = vmatpush.msra.mxu0 %v3580
      %3921 = vmatpush.msra.mxu0 %v3551
      %3922 = vmatpush.msra.mxu0 %v3522
      %3923 = vmatmul.f32.gmra.mxu0 %v3785
      %v3924 = vpop.f32.mrf.mxu0
      %v3925 = vadd.f32 %v3781, %v3924
      %3926 = vdwg.mxu0
      %3927 = vmatpush.msra.mxu0 0.0
      %3928 = vmatpush.msra.mxu0 0.0
      %3929 = vmatpush.msra.mxu0 0.0
      %3930 = vmatpush.msra.mxu0 0.0
      %3931 = vmatpush.msra.mxu0 0.0
      %3932 = vmatpush.msra.mxu0 0.0
      %3933 = vmatpush.msra.mxu0 0.0
      %3934 = vmatpush.msra.mxu0 %v3755
      %3935 = vmatpush.msra.mxu0 %v3726
      %3936 = vmatpush.msra.mxu0 %v3697
      %3937 = vmatpush.msra.mxu0 %v3668
      %3938 = vmatpush.msra.mxu0 %v3639
      %3939 = vmatpush.msra.mxu0 %v3610
      %3940 = vmatpush.msra.mxu0 %v3581
      %3941 = vmatpush.msra.mxu0 %v3552
      %3942 = vmatpush.msra.mxu0 %v3523
      %3943 = vmatmul.f32.gmra.mxu0 %v3785
      %v3944 = vpop.f32.mrf.mxu0
      %v3945 = vadd.f32 %v3781, %v3944
      %3946 = vdwg.mxu0
      %3947 = vmatpush.msra.mxu0 0.0
      %3948 = vmatpush.msra.mxu0 0.0
      %3949 = vmatpush.msra.mxu0 0.0
      %3950 = vmatpush.msra.mxu0 0.0
      %3951 = vmatpush.msra.mxu0 0.0
      %3952 = vmatpush.msra.mxu0 0.0
      %3953 = vmatpush.msra.mxu0 0.0
      %3954 = vmatpush.msra.mxu0 %v3756
      %3955 = vmatpush.msra.mxu0 %v3727
      %3956 = vmatpush.msra.mxu0 %v3698
      %3957 = vmatpush.msra.mxu0 %v3669
      %3958 = vmatpush.msra.mxu0 %v3640
      %3959 = vmatpush.msra.mxu0 %v3611
      %3960 = vmatpush.msra.mxu0 %v3582
      %3961 = vmatpush.msra.mxu0 %v3553
      %3962 = vmatpush.msra.mxu0 %v3524
      %3963 = vmatmul.f32.gmra.mxu0 %v3785
      %v3964 = vpop.f32.mrf.mxu0
      %v3965 = vadd.f32 %v3781, %v3964
      %3966 = vdwg.mxu0
      %3967 = vmatpush.msra.mxu0 0.0
      %3968 = vmatpush.msra.mxu0 0.0
      %3969 = vmatpush.msra.mxu0 0.0
      %3970 = vmatpush.msra.mxu0 0.0
      %3971 = vmatpush.msra.mxu0 0.0
      %3972 = vmatpush.msra.mxu0 0.0
      %3973 = vmatpush.msra.mxu0 0.0
      %3974 = vmatpush.msra.mxu0 %v3757
      %3975 = vmatpush.msra.mxu0 %v3728
      %3976 = vmatpush.msra.mxu0 %v3699
      %3977 = vmatpush.msra.mxu0 %v3670
      %3978 = vmatpush.msra.mxu0 %v3641
      %3979 = vmatpush.msra.mxu0 %v3612
      %3980 = vmatpush.msra.mxu0 %v3583
      %3981 = vmatpush.msra.mxu0 %v3554
      %3982 = vmatpush.msra.mxu0 %v3525
      %3983 = vmatmul.f32.gmra.mxu0 %v3785
      %v3984 = vpop.f32.mrf.mxu0
      %v3985 = vadd.f32 %v3781, %v3984
      %3986 = vdwg.mxu0
      %3987 = vmatpush.msra.mxu0 0.0
      %3988 = vmatpush.msra.mxu0 0.0
      %3989 = vmatpush.msra.mxu0 0.0
      %3990 = vmatpush.msra.mxu0 0.0
      %3991 = vmatpush.msra.mxu0 0.0
      %3992 = vmatpush.msra.mxu0 0.0
      %3993 = vmatpush.msra.mxu0 0.0
      %3994 = vmatpush.msra.mxu0 %v3758
      %3995 = vmatpush.msra.mxu0 %v3729
      %3996 = vmatpush.msra.mxu0 %v3700
      %3997 = vmatpush.msra.mxu0 %v3671
      %3998 = vmatpush.msra.mxu0 %v3642
      %3999 = vmatpush.msra.mxu0 %v3613
      %4000 = vmatpush.msra.mxu0 %v3584
      %4001 = vmatpush.msra.mxu0 %v3555
      %4002 = vmatpush.msra.mxu0 %v3526
      %4003 = vmatmul.f32.gmra.mxu0 %v3785
      %v4004 = vpop.f32.mrf.mxu0
      %v4005 = vadd.f32 %v3781, %v4004
      %4006 = vdwg.mxu0
      %4007 = vmatpush.msra.mxu0 0.0
      %4008 = vmatpush.msra.mxu0 0.0
      %4009 = vmatpush.msra.mxu0 0.0
      %4010 = vmatpush.msra.mxu0 0.0
      %4011 = vmatpush.msra.mxu0 0.0
      %4012 = vmatpush.msra.mxu0 0.0
      %4013 = vmatpush.msra.mxu0 0.0
      %4014 = vmatpush.msra.mxu0 %v3759
      %4015 = vmatpush.msra.mxu0 %v3730
      %4016 = vmatpush.msra.mxu0 %v3701
      %4017 = vmatpush.msra.mxu0 %v3672
      %4018 = vmatpush.msra.mxu0 %v3643
      %4019 = vmatpush.msra.mxu0 %v3614
      %4020 = vmatpush.msra.mxu0 %v3585
      %4021 = vmatpush.msra.mxu0 %v3556
      %4022 = vmatpush.msra.mxu0 %v3527
      %4023 = vmatmul.f32.gmra.mxu0 %v3785
      %v4024 = vpop.f32.mrf.mxu0
      %v4025 = vadd.f32 %v3781, %v4024
      %4026 = vdwg.mxu0
      %4027 = vmatpush.msra.mxu0 0.0
      %4028 = vmatpush.msra.mxu0 0.0
      %4029 = vmatpush.msra.mxu0 0.0
      %4030 = vmatpush.msra.mxu0 0.0
      %4031 = vmatpush.msra.mxu0 0.0
      %4032 = vmatpush.msra.mxu0 0.0
      %4033 = vmatpush.msra.mxu0 0.0
      %4034 = vmatpush.msra.mxu0 %v3760
      %4035 = vmatpush.msra.mxu0 %v3731
      %4036 = vmatpush.msra.mxu0 %v3702
      %4037 = vmatpush.msra.mxu0 %v3673
      %4038 = vmatpush.msra.mxu0 %v3644
      %4039 = vmatpush.msra.mxu0 %v3615
      %4040 = vmatpush.msra.mxu0 %v3586
      %4041 = vmatpush.msra.mxu0 %v3557
      %4042 = vmatpush.msra.mxu0 %v3528
      %4043 = vmatmul.f32.gmra.mxu0 %v3785
      %v4044 = vpop.f32.mrf.mxu0
      %v4045 = vadd.f32 %v3781, %v4044
      %4046 = vdwg.mxu0
      %4047 = vmatpush.msra.mxu0 0.0
      %4048 = vmatpush.msra.mxu0 0.0
      %4049 = vmatpush.msra.mxu0 0.0
      %4050 = vmatpush.msra.mxu0 0.0
      %4051 = vmatpush.msra.mxu0 0.0
      %4052 = vmatpush.msra.mxu0 0.0
      %4053 = vmatpush.msra.mxu0 0.0
      %4054 = vmatpush.msra.mxu0 %v3761
      %4055 = vmatpush.msra.mxu0 %v3732
      %4056 = vmatpush.msra.mxu0 %v3703
      %4057 = vmatpush.msra.mxu0 %v3674
      %4058 = vmatpush.msra.mxu0 %v3645
      %4059 = vmatpush.msra.mxu0 %v3616
      %4060 = vmatpush.msra.mxu0 %v3587
      %4061 = vmatpush.msra.mxu0 %v3558
      %4062 = vmatpush.msra.mxu0 %v3529
      %4063 = vmatmul.f32.gmra.mxu0 %v3785
      %v4064 = vpop.f32.mrf.mxu0
      %v4065 = vadd.f32 %v3781, %v4064
      %4066 = vdwg.mxu0
      %4067 = vmatpush.msra.mxu0 0.0
      %4068 = vmatpush.msra.mxu0 0.0
      %4069 = vmatpush.msra.mxu0 0.0
      %4070 = vmatpush.msra.mxu0 0.0
      %4071 = vmatpush.msra.mxu0 0.0
      %4072 = vmatpush.msra.mxu0 0.0
      %4073 = vmatpush.msra.mxu0 0.0
      %4074 = vmatpush.msra.mxu0 %v3762
      %4075 = vmatpush.msra.mxu0 %v3733
      %4076 = vmatpush.msra.mxu0 %v3704
      %4077 = vmatpush.msra.mxu0 %v3675
      %4078 = vmatpush.msra.mxu0 %v3646
      %4079 = vmatpush.msra.mxu0 %v3617
      %4080 = vmatpush.msra.mxu0 %v3588
      %4081 = vmatpush.msra.mxu0 %v3559
      %4082 = vmatpush.msra.mxu0 %v3530
      %4083 = vmatmul.f32.gmra.mxu0 %v3785
      %v4084 = vpop.f32.mrf.mxu0
      %v4085 = vadd.f32 %v3781, %v4084
      %4086 = vdwg.mxu0
      %4087 = vmatpush.msra.mxu0 0.0
      %4088 = vmatpush.msra.mxu0 0.0
      %4089 = vmatpush.msra.mxu0 0.0
      %4090 = vmatpush.msra.mxu0 0.0
      %4091 = vmatpush.msra.mxu0 0.0
      %4092 = vmatpush.msra.mxu0 0.0
      %4093 = vmatpush.msra.mxu0 0.0
      %4094 = vmatpush.msra.mxu0 %v3763
      %4095 = vmatpush.msra.mxu0 %v3734
      %4096 = vmatpush.msra.mxu0 %v3705
      %4097 = vmatpush.msra.mxu0 %v3676
      %4098 = vmatpush.msra.mxu0 %v3647
      %4099 = vmatpush.msra.mxu0 %v3618
      %4100 = vmatpush.msra.mxu0 %v3589
      %4101 = vmatpush.msra.mxu0 %v3560
      %4102 = vmatpush.msra.mxu0 %v3531
      %4103 = vmatmul.f32.gmra.mxu0 %v3785
      %v4104 = vpop.f32.mrf.mxu0
      %v4105 = vadd.f32 %v3781, %v4104
      %4106 = vdwg.mxu0
      %4107 = vmatpush.msra.mxu0 0.0
      %4108 = vmatpush.msra.mxu0 0.0
      %4109 = vmatpush.msra.mxu0 0.0
      %4110 = vmatpush.msra.mxu0 0.0
      %4111 = vmatpush.msra.mxu0 0.0
      %4112 = vmatpush.msra.mxu0 0.0
      %4113 = vmatpush.msra.mxu0 0.0
      %4114 = vmatpush.msra.mxu0 %v3764
      %4115 = vmatpush.msra.mxu0 %v3735
      %4116 = vmatpush.msra.mxu0 %v3706
      %4117 = vmatpush.msra.mxu0 %v3677
      %4118 = vmatpush.msra.mxu0 %v3648
      %4119 = vmatpush.msra.mxu0 %v3619
      %4120 = vmatpush.msra.mxu0 %v3590
      %4121 = vmatpush.msra.mxu0 %v3561
      %4122 = vmatpush.msra.mxu0 %v3532
      %4123 = vmatmul.f32.gmra.mxu0 %v3785
      %v4124 = vpop.f32.mrf.mxu0
      %v4125 = vadd.f32 %v3781, %v4124
      %4126 = vdwg.mxu0
      %4127 = vmatpush.msra.mxu0 0.0
      %4128 = vmatpush.msra.mxu0 0.0
      %4129 = vmatpush.msra.mxu0 0.0
      %4130 = vmatpush.msra.mxu0 0.0
      %4131 = vmatpush.msra.mxu0 0.0
      %4132 = vmatpush.msra.mxu0 0.0
      %4133 = vmatpush.msra.mxu0 0.0
      %4134 = vmatpush.msra.mxu0 %v3765
      %4135 = vmatpush.msra.mxu0 %v3736
      %4136 = vmatpush.msra.mxu0 %v3707
      %4137 = vmatpush.msra.mxu0 %v3678
      %4138 = vmatpush.msra.mxu0 %v3649
      %4139 = vmatpush.msra.mxu0 %v3620
      %4140 = vmatpush.msra.mxu0 %v3591
      %4141 = vmatpush.msra.mxu0 %v3562
      %4142 = vmatpush.msra.mxu0 %v3533
      %4143 = vmatmul.f32.gmra.mxu0 %v3785
      %v4144 = vpop.f32.mrf.mxu0
      %v4145 = vadd.f32 %v3781, %v4144
      %4146 = vdwg.mxu0
      %4147 = vmatpush.msra.mxu0 0.0
      %4148 = vmatpush.msra.mxu0 0.0
      %4149 = vmatpush.msra.mxu0 0.0
      %4150 = vmatpush.msra.mxu0 0.0
      %4151 = vmatpush.msra.mxu0 0.0
      %4152 = vmatpush.msra.mxu0 0.0
      %4153 = vmatpush.msra.mxu0 0.0
      %4154 = vmatpush.msra.mxu0 %v3766
      %4155 = vmatpush.msra.mxu0 %v3737
      %4156 = vmatpush.msra.mxu0 %v3708
      %4157 = vmatpush.msra.mxu0 %v3679
      %4158 = vmatpush.msra.mxu0 %v3650
      %4159 = vmatpush.msra.mxu0 %v3621
      %4160 = vmatpush.msra.mxu0 %v3592
      %4161 = vmatpush.msra.mxu0 %v3563
      %4162 = vmatpush.msra.mxu0 %v3534
      %4163 = vmatmul.f32.gmra.mxu0 %v3785
      %v4164 = vpop.f32.mrf.mxu0
      %v4165 = vadd.f32 %v3781, %v4164
      %4166 = vdwg.mxu0
      %4167 = vmatpush.msra.mxu0 0.0
      %4168 = vmatpush.msra.mxu0 0.0
      %4169 = vmatpush.msra.mxu0 0.0
      %4170 = vmatpush.msra.mxu0 0.0
      %4171 = vmatpush.msra.mxu0 0.0
      %4172 = vmatpush.msra.mxu0 0.0
      %4173 = vmatpush.msra.mxu0 0.0
      %4174 = vmatpush.msra.mxu0 %v3767
      %4175 = vmatpush.msra.mxu0 %v3738
      %4176 = vmatpush.msra.mxu0 %v3709
      %4177 = vmatpush.msra.mxu0 %v3680
      %4178 = vmatpush.msra.mxu0 %v3651
      %4179 = vmatpush.msra.mxu0 %v3622
      %4180 = vmatpush.msra.mxu0 %v3593
      %4181 = vmatpush.msra.mxu0 %v3564
      %4182 = vmatpush.msra.mxu0 %v3535
      %4183 = vmatmul.f32.gmra.mxu0 %v3785
      %v4184 = vpop.f32.mrf.mxu0
      %v4185 = vadd.f32 %v3781, %v4184
      %4186 = vdwg.mxu0
      %4187 = vmatpush.msra.mxu0 0.0
      %4188 = vmatpush.msra.mxu0 0.0
      %4189 = vmatpush.msra.mxu0 0.0
      %4190 = vmatpush.msra.mxu0 0.0
      %4191 = vmatpush.msra.mxu0 0.0
      %4192 = vmatpush.msra.mxu0 0.0
      %4193 = vmatpush.msra.mxu0 0.0
      %4194 = vmatpush.msra.mxu0 %v3768
      %4195 = vmatpush.msra.mxu0 %v3739
      %4196 = vmatpush.msra.mxu0 %v3710
      %4197 = vmatpush.msra.mxu0 %v3681
      %4198 = vmatpush.msra.mxu0 %v3652
      %4199 = vmatpush.msra.mxu0 %v3623
      %4200 = vmatpush.msra.mxu0 %v3594
      %4201 = vmatpush.msra.mxu0 %v3565
      %4202 = vmatpush.msra.mxu0 %v3536
      %4203 = vmatmul.f32.gmra.mxu0 %v3785
      %v4204 = vpop.f32.mrf.mxu0
      %v4205 = vadd.f32 %v3781, %v4204
      %4206 = vdwg.mxu0
      %4207 = vmatpush.msra.mxu0 0.0
      %4208 = vmatpush.msra.mxu0 0.0
      %4209 = vmatpush.msra.mxu0 0.0
      %4210 = vmatpush.msra.mxu0 0.0
      %4211 = vmatpush.msra.mxu0 0.0
      %4212 = vmatpush.msra.mxu0 0.0
      %4213 = vmatpush.msra.mxu0 0.0
      %4214 = vmatpush.msra.mxu0 %v3769
      %4215 = vmatpush.msra.mxu0 %v3740
      %4216 = vmatpush.msra.mxu0 %v3711
      %4217 = vmatpush.msra.mxu0 %v3682
      %4218 = vmatpush.msra.mxu0 %v3653
      %4219 = vmatpush.msra.mxu0 %v3624
      %4220 = vmatpush.msra.mxu0 %v3595
      %4221 = vmatpush.msra.mxu0 %v3566
      %4222 = vmatpush.msra.mxu0 %v3537
      %4223 = vmatmul.f32.gmra.mxu0 %v3785
      %v4224 = vpop.f32.mrf.mxu0
      %v4225 = vadd.f32 %v3781, %v4224
      %4226 = vdwg.mxu0
      %4227 = vmatpush.msra.mxu0 0.0
      %4228 = vmatpush.msra.mxu0 0.0
      %4229 = vmatpush.msra.mxu0 0.0
      %4230 = vmatpush.msra.mxu0 0.0
      %4231 = vmatpush.msra.mxu0 0.0
      %4232 = vmatpush.msra.mxu0 0.0
      %4233 = vmatpush.msra.mxu0 0.0
      %4234 = vmatpush.msra.mxu0 %v3770
      %4235 = vmatpush.msra.mxu0 %v3741
      %4236 = vmatpush.msra.mxu0 %v3712
      %4237 = vmatpush.msra.mxu0 %v3683
      %4238 = vmatpush.msra.mxu0 %v3654
      %4239 = vmatpush.msra.mxu0 %v3625
      %4240 = vmatpush.msra.mxu0 %v3596
      %4241 = vmatpush.msra.mxu0 %v3567
      %4242 = vmatpush.msra.mxu0 %v3538
      %4243 = vmatmul.f32.gmra.mxu0 %v3785
      %v4244 = vpop.f32.mrf.mxu0
      %v4245 = vadd.f32 %v3781, %v4244
      %4246 = vdwg.mxu0
      %4247 = vmatpush.msra.mxu0 0.0
      %4248 = vmatpush.msra.mxu0 0.0
      %4249 = vmatpush.msra.mxu0 0.0
      %4250 = vmatpush.msra.mxu0 0.0
      %4251 = vmatpush.msra.mxu0 0.0
      %4252 = vmatpush.msra.mxu0 0.0
      %4253 = vmatpush.msra.mxu0 0.0
      %4254 = vmatpush.msra.mxu0 %v3771
      %4255 = vmatpush.msra.mxu0 %v3742
      %4256 = vmatpush.msra.mxu0 %v3713
      %4257 = vmatpush.msra.mxu0 %v3684
      %4258 = vmatpush.msra.mxu0 %v3655
      %4259 = vmatpush.msra.mxu0 %v3626
      %4260 = vmatpush.msra.mxu0 %v3597
      %4261 = vmatpush.msra.mxu0 %v3568
      %4262 = vmatpush.msra.mxu0 %v3539
      %4263 = vmatmul.f32.gmra.mxu0 %v3785
      %v4264 = vpop.f32.mrf.mxu0
      %v4265 = vadd.f32 %v3781, %v4264
      %4266 = vdwg.mxu0
      %4267 = vmatpush.msra.mxu0 0.0
      %4268 = vmatpush.msra.mxu0 0.0
      %4269 = vmatpush.msra.mxu0 0.0
      %4270 = vmatpush.msra.mxu0 0.0
      %4271 = vmatpush.msra.mxu0 0.0
      %4272 = vmatpush.msra.mxu0 0.0
      %4273 = vmatpush.msra.mxu0 0.0
      %4274 = vmatpush.msra.mxu0 %v3772
      %4275 = vmatpush.msra.mxu0 %v3743
      %4276 = vmatpush.msra.mxu0 %v3714
      %4277 = vmatpush.msra.mxu0 %v3685
      %4278 = vmatpush.msra.mxu0 %v3656
      %4279 = vmatpush.msra.mxu0 %v3627
      %4280 = vmatpush.msra.mxu0 %v3598
      %4281 = vmatpush.msra.mxu0 %v3569
      %4282 = vmatpush.msra.mxu0 %v3540
      %4283 = vmatmul.f32.gmra.mxu0 %v3785
      %v4284 = vpop.f32.mrf.mxu0
      %v4285 = vadd.f32 %v3781, %v4284
      %4286 = vdwg.mxu0
      %4287 = vmatpush.msra.mxu0 0.0
      %4288 = vmatpush.msra.mxu0 0.0
      %4289 = vmatpush.msra.mxu0 0.0
      %4290 = vmatpush.msra.mxu0 0.0
      %4291 = vmatpush.msra.mxu0 0.0
      %4292 = vmatpush.msra.mxu0 0.0
      %4293 = vmatpush.msra.mxu0 0.0
      %4294 = vmatpush.msra.mxu0 %v3773
      %4295 = vmatpush.msra.mxu0 %v3744
      %4296 = vmatpush.msra.mxu0 %v3715
      %4297 = vmatpush.msra.mxu0 %v3686
      %4298 = vmatpush.msra.mxu0 %v3657
      %4299 = vmatpush.msra.mxu0 %v3628
      %4300 = vmatpush.msra.mxu0 %v3599
      %4301 = vmatpush.msra.mxu0 %v3570
      %4302 = vmatpush.msra.mxu0 %v3541
      %4303 = vmatmul.f32.gmra.mxu0 %v3785
      %v4304 = vpop.f32.mrf.mxu0
      %v4305 = vadd.f32 %v3781, %v4304
      %4306 = vdwg.mxu0
      %4307 = vmatpush.msra.mxu0 0.0
      %4308 = vmatpush.msra.mxu0 0.0
      %4309 = vmatpush.msra.mxu0 0.0
      %4310 = vmatpush.msra.mxu0 0.0
      %4311 = vmatpush.msra.mxu0 0.0
      %4312 = vmatpush.msra.mxu0 0.0
      %4313 = vmatpush.msra.mxu0 0.0
      %4314 = vmatpush.msra.mxu0 %v3774
      %4315 = vmatpush.msra.mxu0 %v3745
      %4316 = vmatpush.msra.mxu0 %v3716
      %4317 = vmatpush.msra.mxu0 %v3687
      %4318 = vmatpush.msra.mxu0 %v3658
      %4319 = vmatpush.msra.mxu0 %v3629
      %4320 = vmatpush.msra.mxu0 %v3600
      %4321 = vmatpush.msra.mxu0 %v3571
      %4322 = vmatpush.msra.mxu0 %v3542
      %4323 = vmatmul.f32.gmra.mxu0 %v3785
      %v4324 = vpop.f32.mrf.mxu0
      %v4325 = vadd.f32 %v3781, %v4324
      %4326 = vdwg.mxu0
      %4327 = vmatpush.msra.mxu0 0.0
      %4328 = vmatpush.msra.mxu0 0.0
      %4329 = vmatpush.msra.mxu0 0.0
      %4330 = vmatpush.msra.mxu0 0.0
      %4331 = vmatpush.msra.mxu0 0.0
      %4332 = vmatpush.msra.mxu0 0.0
      %4333 = vmatpush.msra.mxu0 0.0
      %4334 = vmatpush.msra.mxu0 %v3775
      %4335 = vmatpush.msra.mxu0 %v3746
      %4336 = vmatpush.msra.mxu0 %v3717
      %4337 = vmatpush.msra.mxu0 %v3688
      %4338 = vmatpush.msra.mxu0 %v3659
      %4339 = vmatpush.msra.mxu0 %v3630
      %4340 = vmatpush.msra.mxu0 %v3601
      %4341 = vmatpush.msra.mxu0 %v3572
      %4342 = vmatpush.msra.mxu0 %v3543
      %4343 = vmatmul.f32.gmra.mxu0 %v3785
      %v4344 = vpop.f32.mrf.mxu0
      %v4345 = vadd.f32 %v3781, %v4344
      %4346 = vdwg.mxu0
      %4347 = vmatpush.msra.mxu0 0.0
      %4348 = vmatpush.msra.mxu0 0.0
      %4349 = vmatpush.msra.mxu0 0.0
      %4350 = vmatpush.msra.mxu0 0.0
      %4351 = vmatpush.msra.mxu0 0.0
      %4352 = vmatpush.msra.mxu0 0.0
      %4353 = vmatpush.msra.mxu0 0.0
      %4354 = vmatpush.msra.mxu0 %v3776
      %4355 = vmatpush.msra.mxu0 %v3747
      %4356 = vmatpush.msra.mxu0 %v3718
      %4357 = vmatpush.msra.mxu0 %v3689
      %4358 = vmatpush.msra.mxu0 %v3660
      %4359 = vmatpush.msra.mxu0 %v3631
      %4360 = vmatpush.msra.mxu0 %v3602
      %4361 = vmatpush.msra.mxu0 %v3573
      %4362 = vmatpush.msra.mxu0 %v3544
      %4363 = vmatmul.f32.gmra.mxu0 %v3785
      %v4364 = vpop.f32.mrf.mxu0
      %v4365 = vadd.f32 %v3781, %v4364
      %4366 = vdwg.mxu0
      %v4367 = vmax.f32 %v3805, 0.0
      %v4368 = vmax.f32 %v3825, 0.0
      %v4369 = vmax.f32 %v3845, 0.0
      %v4370 = vmax.f32 %v3865, 0.0
      %v4371 = vmax.f32 %v3885, 0.0
      %v4372 = vmax.f32 %v3905, 0.0
      %v4373 = vmax.f32 %v3925, 0.0
      %v4374 = vmax.f32 %v3945, 0.0
      %v4375 = vmax.f32 %v3965, 0.0
      %v4376 = vmax.f32 %v3985, 0.0
      %v4377 = vmax.f32 %v4005, 0.0
      %v4378 = vmax.f32 %v4025, 0.0
      %v4379 = vmax.f32 %v4045, 0.0
      %v4380 = vmax.f32 %v4065, 0.0
      %v4381 = vmax.f32 %v4085, 0.0
      %v4382 = vmax.f32 %v4105, 0.0
      %v4383 = vmax.f32 %v4125, 0.0
      %v4384 = vmax.f32 %v4145, 0.0
      %v4385 = vmax.f32 %v4165, 0.0
      %v4386 = vmax.f32 %v4185, 0.0
      %v4387 = vmax.f32 %v4205, 0.0
      %v4388 = vmax.f32 %v4225, 0.0
      %v4389 = vmax.f32 %v4245, 0.0
      %v4390 = vmax.f32 %v4265, 0.0
      %v4391 = vmax.f32 %v4285, 0.0
      %v4392 = vmax.f32 %v4305, 0.0
      %v4393 = vmax.f32 %v4325, 0.0
      %v4394 = vmax.f32 %v4345, 0.0
      %v4395 = vmax.f32 %v4365, 0.0
      %4396 = vst [vmem:[#allocation3] sm:$0xff] %v4367
      %4397 = vst [vmem:[#allocation3 + $0x8] sm:$0xff] %v4368
      %4398 = vst [vmem:[#allocation3 + $0x10] sm:$0xff] %v4369
      %4399 = vst [vmem:[#allocation3 + $0x18] sm:$0xff] %v4370
      %4400 = vst [vmem:[#allocation3 + $0x20] sm:$0xff] %v4371
      %4401 = vst [vmem:[#allocation3 + $0x28] sm:$0xff] %v4372
      %4402 = vst [vmem:[#allocation3 + $0x30] sm:$0xff] %v4373
      %4403 = vst [vmem:[#allocation3 + $0x38] sm:$0xff] %v4374
      %4404 = vst [vmem:[#allocation3 + $0x40] sm:$0xff] %v4375
      %4405 = vst [vmem:[#allocation3 + $0x48] sm:$0xff] %v4376
      %4406 = vst [vmem:[#allocation3 + $0x50] sm:$0xff] %v4377
      %4407 = vst [vmem:[#allocation3 + $0x58] sm:$0xff] %v4378
      %4408 = vst [vmem:[#allocation3 + $0x60] sm:$0xff] %v4379
      %4409 = vst [vmem:[#allocation3 + $0x68] sm:$0xff] %v4380
      %4410 = vst [vmem:[#allocation3 + $0x70] sm:$0xff] %v4381
      %4411 = vst [vmem:[#allocation3 + $0x78] sm:$0xff] %v4382
      %4412 = vst [vmem:[#allocation3 + $0x80] sm:$0xff] %v4383
      %4413 = vst [vmem:[#allocation3 + $0x88] sm:$0xff] %v4384
      %4414 = vst [vmem:[#allocation3 + $0x90] sm:$0xff] %v4385
      %4415 = vst [vmem:[#allocation3 + $0x98] sm:$0xff] %v4386
      %4416 = vst [vmem:[#allocation3 + $0xa0] sm:$0xff] %v4387
      %4417 = vst [vmem:[#allocation3 + $0xa8] sm:$0xff] %v4388
      %4418 = vst [vmem:[#allocation3 + $0xb0] sm:$0xff] %v4389
      %4419 = vst [vmem:[#allocation3 + $0xb8] sm:$0xff] %v4390
      %4420 = vst [vmem:[#allocation3 + $0xc0] sm:$0xff] %v4391
      %4421 = vst [vmem:[#allocation3 + $0xc8] sm:$0xff] %v4392
      %4422 = vst [vmem:[#allocation3 + $0xd0] sm:$0xff] %v4393
      %4423 = vst [vmem:[#allocation3 + $0xd8] sm:$0xff] %v4394
      %4424 = vst.msk [vmem:[#allocation3 + $0xe0] sm:$0xff] %vm1877, %v4395
      %vm4425 = vcmask 1047656
      %4426 = vst.msk [vmem:[#allocation3 + $0xe0] sm:$0xff] %vm4425, 0.0
      %4427 = vst.msk [vmem:[#allocation3 + $0xe8] sm:$0xff] %vm1818, 0.0
      %v4428 = vld [vmem:[#allocation3] sm:$0xff]
      %v4429 = vld [vmem:[#allocation3 + $0x8] sm:$0xff]
      %v4430 = vld [vmem:[#allocation3 + $0x10] sm:$0xff]
      %v4431 = vld [vmem:[#allocation3 + $0x18] sm:$0xff]
      %v4432 = vld [vmem:[#allocation3 + $0x20] sm:$0xff]
      %v4433 = vld [vmem:[#allocation3 + $0x28] sm:$0xff]
      %v4434 = vld [vmem:[#allocation3 + $0x30] sm:$0xff]
      %v4435 = vld [vmem:[#allocation3 + $0x38] sm:$0xff]
      %v4436 = vld [vmem:[#allocation3 + $0x40] sm:$0xff]
      %v4437 = vld [vmem:[#allocation3 + $0x48] sm:$0xff]
      %v4438 = vld [vmem:[#allocation3 + $0x50] sm:$0xff]
      %v4439 = vld [vmem:[#allocation3 + $0x58] sm:$0xff]
      %v4440 = vld [vmem:[#allocation3 + $0x60] sm:$0xff]
      %v4441 = vld [vmem:[#allocation3 + $0x68] sm:$0xff]
      %v4442 = vld [vmem:[#allocation3 + $0x70] sm:$0xff]
      %v4443 = vld [vmem:[#allocation3 + $0x78] sm:$0xff]
      %v4444 = vld [vmem:[#allocation3 + $0x80] sm:$0xff]
      %v4445 = vld [vmem:[#allocation3 + $0x88] sm:$0xff]
      %v4446 = vld [vmem:[#allocation3 + $0x90] sm:$0xff]
      %v4447 = vld [vmem:[#allocation3 + $0x98] sm:$0xff]
      %v4448 = vld [vmem:[#allocation3 + $0xa0] sm:$0xff]
      %v4449 = vld [vmem:[#allocation3 + $0xa8] sm:$0xff]
      %v4450 = vld [vmem:[#allocation3 + $0xb0] sm:$0xff]
      %v4451 = vld [vmem:[#allocation3 + $0xb8] sm:$0xff]
      %v4452 = vld [vmem:[#allocation3 + $0xc0] sm:$0xff]
      %v4453 = vld [vmem:[#allocation3 + $0xc8] sm:$0xff]
      %v4454 = vld [vmem:[#allocation3 + $0xd0] sm:$0xff]
      %v4455 = vld [vmem:[#allocation3 + $0xd8] sm:$0xff]
      %v4456 = vld [vmem:[#allocation3 + $0xe0] sm:$0xff]
      %4457 = vst [vmem:[#allocation9] sm:$0xff] %v4428
      %4458 = vst [vmem:[#allocation9 + $0x8] sm:$0xff] %v4429
      %4459 = vst [vmem:[#allocation9 + $0x10] sm:$0xff] %v4430
      %4460 = vst [vmem:[#allocation9 + $0x18] sm:$0xff] %v4431
      %4461 = vst [vmem:[#allocation9 + $0x20] sm:$0xff] %v4432
      %4462 = vst [vmem:[#allocation9 + $0x28] sm:$0xff] %v4433
      %4463 = vst [vmem:[#allocation9 + $0x30] sm:$0xff] %v4434
      %4464 = vst [vmem:[#allocation9 + $0x38] sm:$0xff] %v4435
      %4465 = vst [vmem:[#allocation9 + $0x40] sm:$0xff] %v4436
      %4466 = vst [vmem:[#allocation9 + $0x48] sm:$0xff] %v4437
      %4467 = vst [vmem:[#allocation9 + $0x50] sm:$0xff] %v4438
      %4468 = vst [vmem:[#allocation9 + $0x58] sm:$0xff] %v4439
      %4469 = vst [vmem:[#allocation9 + $0x60] sm:$0xff] %v4440
      %4470 = vst [vmem:[#allocation9 + $0x68] sm:$0xff] %v4441
      %4471 = vst [vmem:[#allocation9 + $0x70] sm:$0xff] %v4442
      %4472 = vst [vmem:[#allocation9 + $0x78] sm:$0xff] %v4443
      %4473 = vst [vmem:[#allocation9 + $0x80] sm:$0xff] %v4444
      %4474 = vst [vmem:[#allocation9 + $0x88] sm:$0xff] %v4445
      %4475 = vst [vmem:[#allocation9 + $0x90] sm:$0xff] %v4446
      %4476 = vst [vmem:[#allocation9 + $0x98] sm:$0xff] %v4447
      %4477 = vst [vmem:[#allocation9 + $0xa0] sm:$0xff] %v4448
      %4478 = vst [vmem:[#allocation9 + $0xa8] sm:$0xff] %v4449
      %4479 = vst [vmem:[#allocation9 + $0xb0] sm:$0xff] %v4450
      %4480 = vst [vmem:[#allocation9 + $0xb8] sm:$0xff] %v4451
      %4481 = vst [vmem:[#allocation9 + $0xc0] sm:$0xff] %v4452
      %4482 = vst [vmem:[#allocation9 + $0xc8] sm:$0xff] %v4453
      %4483 = vst [vmem:[#allocation9 + $0xd0] sm:$0xff] %v4454
      %4484 = vst [vmem:[#allocation9 + $0xd8] sm:$0xff] %v4455
      %4485 = vst.msk [vmem:[#allocation9 + $0xe0] sm:$0xff] %vm1877, %v4456
      %v4486 = vld [vmem:[#allocation3] sm:$0xff]
      %v4487 = vld [vmem:[#allocation3 + $0x8] sm:$0xff]
      %v4488 = vld [vmem:[#allocation3 + $0x10] sm:$0xff]
      %v4489 = vld [vmem:[#allocation3 + $0x18] sm:$0xff]
      %v4490 = vld [vmem:[#allocation3 + $0x20] sm:$0xff]
      %v4491 = vld [vmem:[#allocation3 + $0x28] sm:$0xff]
      %v4492 = vld [vmem:[#allocation3 + $0x30] sm:$0xff]
      %v4493 = vld [vmem:[#allocation3 + $0x38] sm:$0xff]
      %v4494 = vld [vmem:[#allocation3 + $0x40] sm:$0xff]
      %v4495 = vld [vmem:[#allocation3 + $0x48] sm:$0xff]
      %v4496 = vld [vmem:[#allocation3 + $0x50] sm:$0xff]
      %v4497 = vld [vmem:[#allocation3 + $0x58] sm:$0xff]
      %v4498 = vld [vmem:[#allocation3 + $0x60] sm:$0xff]
      %v4499 = vld [vmem:[#allocation3 + $0x68] sm:$0xff]
      %v4500 = vld [vmem:[#allocation3 + $0x70] sm:$0xff]
      %v4501 = vld [vmem:[#allocation3 + $0x78] sm:$0xff]
      %v4502 = vld [vmem:[#allocation3 + $0x80] sm:$0xff]
      %v4503 = vld [vmem:[#allocation3 + $0x88] sm:$0xff]
      %v4504 = vld [vmem:[#allocation3 + $0x90] sm:$0xff]
      %v4505 = vld [vmem:[#allocation3 + $0x98] sm:$0xff]
      %v4506 = vld [vmem:[#allocation3 + $0xa0] sm:$0xff]
      %v4507 = vld [vmem:[#allocation3 + $0xa8] sm:$0xff]
      %v4508 = vld [vmem:[#allocation3 + $0xb0] sm:$0xff]
      %v4509 = vld [vmem:[#allocation3 + $0xb8] sm:$0xff]
      %v4510 = vld [vmem:[#allocation3 + $0xc0] sm:$0xff]
      %v4511 = vld [vmem:[#allocation3 + $0xc8] sm:$0xff]
      %v4512 = vld [vmem:[#allocation3 + $0xd0] sm:$0xff]
      %v4513 = vld [vmem:[#allocation3 + $0xd8] sm:$0xff]
      %v4514 = vld [vmem:[#allocation3 + $0xe0] sm:$0xff]
      %4544 = vrot.lane.b32.xlu0 %v4486, 127
      %v4545 = vpop.permute.xlu0 %4544
      %4546 = vrot.lane.b32.xlu0 %v4487, 127
      %v4547 = vpop.permute.xlu0 %4546
      %4548 = vrot.lane.b32.xlu0 %v4488, 127
      %v4549 = vpop.permute.xlu0 %4548
      %4550 = vrot.lane.b32.xlu0 %v4489, 127
      %v4551 = vpop.permute.xlu0 %4550
      %4552 = vrot.lane.b32.xlu0 %v4490, 127
      %v4553 = vpop.permute.xlu0 %4552
      %4554 = vrot.lane.b32.xlu0 %v4491, 127
      %v4555 = vpop.permute.xlu0 %4554
      %4556 = vrot.lane.b32.xlu0 %v4492, 127
      %v4557 = vpop.permute.xlu0 %4556
      %4558 = vrot.lane.b32.xlu0 %v4493, 127
      %v4559 = vpop.permute.xlu0 %4558
      %4560 = vrot.lane.b32.xlu0 %v4494, 127
      %v4561 = vpop.permute.xlu0 %4560
      %4562 = vrot.lane.b32.xlu0 %v4495, 127
      %v4563 = vpop.permute.xlu0 %4562
      %4564 = vrot.lane.b32.xlu0 %v4496, 127
      %v4565 = vpop.permute.xlu0 %4564
      %4566 = vrot.lane.b32.xlu0 %v4497, 127
      %v4567 = vpop.permute.xlu0 %4566
      %4568 = vrot.lane.b32.xlu0 %v4498, 127
      %v4569 = vpop.permute.xlu0 %4568
      %4570 = vrot.lane.b32.xlu0 %v4499, 127
      %v4571 = vpop.permute.xlu0 %4570
      %4572 = vrot.lane.b32.xlu0 %v4500, 127
      %v4573 = vpop.permute.xlu0 %4572
      %4574 = vrot.lane.b32.xlu0 %v4501, 127
      %v4575 = vpop.permute.xlu0 %4574
      %4576 = vrot.lane.b32.xlu0 %v4502, 127
      %v4577 = vpop.permute.xlu0 %4576
      %4578 = vrot.lane.b32.xlu0 %v4503, 127
      %v4579 = vpop.permute.xlu0 %4578
      %4580 = vrot.lane.b32.xlu0 %v4504, 127
      %v4581 = vpop.permute.xlu0 %4580
      %4582 = vrot.lane.b32.xlu0 %v4505, 127
      %v4583 = vpop.permute.xlu0 %4582
      %4584 = vrot.lane.b32.xlu0 %v4506, 127
      %v4585 = vpop.permute.xlu0 %4584
      %4586 = vrot.lane.b32.xlu0 %v4507, 127
      %v4587 = vpop.permute.xlu0 %4586
      %4588 = vrot.lane.b32.xlu0 %v4508, 127
      %v4589 = vpop.permute.xlu0 %4588
      %4590 = vrot.lane.b32.xlu0 %v4509, 127
      %v4591 = vpop.permute.xlu0 %4590
      %4592 = vrot.lane.b32.xlu0 %v4510, 127
      %v4593 = vpop.permute.xlu0 %4592
      %4594 = vrot.lane.b32.xlu0 %v4511, 127
      %v4595 = vpop.permute.xlu0 %4594
      %4596 = vrot.lane.b32.xlu0 %v4512, 127
      %v4597 = vpop.permute.xlu0 %4596
      %4598 = vrot.lane.b32.xlu0 %v4513, 127
      %v4599 = vpop.permute.xlu0 %4598
      %4600 = vrot.lane.b32.xlu0 %v4514, 127
      %v4601 = vpop.permute.xlu0 %4600
      %v4602 = vsel %vm548, %v4545, %v4547
      %v4603 = vsel %vm548, %v4547, %v4549
      %v4604 = vsel %vm548, %v4549, %v4551
      %v4605 = vsel %vm548, %v4551, %v4553
      %v4606 = vsel %vm548, %v4553, %v4555
      %v4607 = vsel %vm548, %v4555, %v4557
      %v4608 = vsel %vm548, %v4557, %v4559
      %v4609 = vsel %vm548, %v4559, %v4561
      %v4610 = vsel %vm548, %v4561, %v4563
      %v4611 = vsel %vm548, %v4563, %v4565
      %v4612 = vsel %vm548, %v4565, %v4567
      %v4613 = vsel %vm548, %v4567, %v4569
      %v4614 = vsel %vm548, %v4569, %v4571
      %v4615 = vsel %vm548, %v4571, %v4573
      %v4616 = vsel %vm548, %v4573, %v4575
      %v4617 = vsel %vm548, %v4575, %v4577
      %v4618 = vsel %vm548, %v4577, %v4579
      %v4619 = vsel %vm548, %v4579, %v4581
      %v4620 = vsel %vm548, %v4581, %v4583
      %v4621 = vsel %vm548, %v4583, %v4585
      %v4622 = vsel %vm548, %v4585, %v4587
      %v4623 = vsel %vm548, %v4587, %v4589
      %v4624 = vsel %vm548, %v4589, %v4591
      %v4625 = vsel %vm548, %v4591, %v4593
      %v4626 = vsel %vm548, %v4593, %v4595
      %v4627 = vsel %vm548, %v4595, %v4597
      %v4628 = vsel %vm548, %v4597, %v4599
      %v4629 = vsel %vm548, %v4599, %v4601
      %4659 = vst [vmem:[#allocation9 + $0xe8] sm:$0xff] %v4602
      %4660 = vst [vmem:[#allocation9 + $0xf0] sm:$0xff] %v4603
      %4661 = vst [vmem:[#allocation9 + $0xf8] sm:$0xff] %v4604
      %4662 = vst [vmem:[#allocation9 + $0x100] sm:$0xff] %v4605
      %4663 = vst [vmem:[#allocation9 + $0x108] sm:$0xff] %v4606
      %4664 = vst [vmem:[#allocation9 + $0x110] sm:$0xff] %v4607
      %4665 = vst [vmem:[#allocation9 + $0x118] sm:$0xff] %v4608
      %4666 = vst [vmem:[#allocation9 + $0x120] sm:$0xff] %v4609
      %4667 = vst [vmem:[#allocation9 + $0x128] sm:$0xff] %v4610
      %4668 = vst [vmem:[#allocation9 + $0x130] sm:$0xff] %v4611
      %4669 = vst [vmem:[#allocation9 + $0x138] sm:$0xff] %v4612
      %4670 = vst [vmem:[#allocation9 + $0x140] sm:$0xff] %v4613
      %4671 = vst [vmem:[#allocation9 + $0x148] sm:$0xff] %v4614
      %4672 = vst [vmem:[#allocation9 + $0x150] sm:$0xff] %v4615
      %4673 = vst [vmem:[#allocation9 + $0x158] sm:$0xff] %v4616
      %4674 = vst [vmem:[#allocation9 + $0x160] sm:$0xff] %v4617
      %4675 = vst [vmem:[#allocation9 + $0x168] sm:$0xff] %v4618
      %4676 = vst [vmem:[#allocation9 + $0x170] sm:$0xff] %v4619
      %4677 = vst [vmem:[#allocation9 + $0x178] sm:$0xff] %v4620
      %4678 = vst [vmem:[#allocation9 + $0x180] sm:$0xff] %v4621
      %4679 = vst [vmem:[#allocation9 + $0x188] sm:$0xff] %v4622
      %4680 = vst [vmem:[#allocation9 + $0x190] sm:$0xff] %v4623
      %4681 = vst [vmem:[#allocation9 + $0x198] sm:$0xff] %v4624
      %4682 = vst [vmem:[#allocation9 + $0x1a0] sm:$0xff] %v4625
      %4683 = vst [vmem:[#allocation9 + $0x1a8] sm:$0xff] %v4626
      %4684 = vst [vmem:[#allocation9 + $0x1b0] sm:$0xff] %v4627
      %4685 = vst [vmem:[#allocation9 + $0x1b8] sm:$0xff] %v4628
      %4686 = vst [vmem:[#allocation9 + $0x1c0] sm:$0xff] %v4629
      %4687 = vst.msk [vmem:[#allocation9 + $0x1c8] sm:$0xff] %vm1877, %v4601
      %v4688 = vld [vmem:[#allocation3] sm:$0xff]
      %v4689 = vld [vmem:[#allocation3 + $0x8] sm:$0xff]
      %v4690 = vld [vmem:[#allocation3 + $0x10] sm:$0xff]
      %v4691 = vld [vmem:[#allocation3 + $0x18] sm:$0xff]
      %v4692 = vld [vmem:[#allocation3 + $0x20] sm:$0xff]
      %v4693 = vld [vmem:[#allocation3 + $0x28] sm:$0xff]
      %v4694 = vld [vmem:[#allocation3 + $0x30] sm:$0xff]
      %v4695 = vld [vmem:[#allocation3 + $0x38] sm:$0xff]
      %v4696 = vld [vmem:[#allocation3 + $0x40] sm:$0xff]
      %v4697 = vld [vmem:[#allocation3 + $0x48] sm:$0xff]
      %v4698 = vld [vmem:[#allocation3 + $0x50] sm:$0xff]
      %v4699 = vld [vmem:[#allocation3 + $0x58] sm:$0xff]
      %v4700 = vld [vmem:[#allocation3 + $0x60] sm:$0xff]
      %v4701 = vld [vmem:[#allocation3 + $0x68] sm:$0xff]
      %v4702 = vld [vmem:[#allocation3 + $0x70] sm:$0xff]
      %v4703 = vld [vmem:[#allocation3 + $0x78] sm:$0xff]
      %v4704 = vld [vmem:[#allocation3 + $0x80] sm:$0xff]
      %v4705 = vld [vmem:[#allocation3 + $0x88] sm:$0xff]
      %v4706 = vld [vmem:[#allocation3 + $0x90] sm:$0xff]
      %v4707 = vld [vmem:[#allocation3 + $0x98] sm:$0xff]
      %v4708 = vld [vmem:[#allocation3 + $0xa0] sm:$0xff]
      %v4709 = vld [vmem:[#allocation3 + $0xa8] sm:$0xff]
      %v4710 = vld [vmem:[#allocation3 + $0xb0] sm:$0xff]
      %v4711 = vld [vmem:[#allocation3 + $0xb8] sm:$0xff]
      %v4712 = vld [vmem:[#allocation3 + $0xc0] sm:$0xff]
      %v4713 = vld [vmem:[#allocation3 + $0xc8] sm:$0xff]
      %v4714 = vld [vmem:[#allocation3 + $0xd0] sm:$0xff]
      %v4715 = vld [vmem:[#allocation3 + $0xd8] sm:$0xff]
      %v4716 = vld [vmem:[#allocation3 + $0xe0] sm:$0xff]
      %4746 = vrot.lane.b32.xlu0 %v4688, 126
      %v4747 = vpop.permute.xlu0 %4746
      %4748 = vrot.lane.b32.xlu0 %v4689, 126
      %v4749 = vpop.permute.xlu0 %4748
      %4750 = vrot.lane.b32.xlu0 %v4690, 126
      %v4751 = vpop.permute.xlu0 %4750
      %4752 = vrot.lane.b32.xlu0 %v4691, 126
      %v4753 = vpop.permute.xlu0 %4752
      %4754 = vrot.lane.b32.xlu0 %v4692, 126
      %v4755 = vpop.permute.xlu0 %4754
      %4756 = vrot.lane.b32.xlu0 %v4693, 126
      %v4757 = vpop.permute.xlu0 %4756
      %4758 = vrot.lane.b32.xlu0 %v4694, 126
      %v4759 = vpop.permute.xlu0 %4758
      %4760 = vrot.lane.b32.xlu0 %v4695, 126
      %v4761 = vpop.permute.xlu0 %4760
      %4762 = vrot.lane.b32.xlu0 %v4696, 126
      %v4763 = vpop.permute.xlu0 %4762
      %4764 = vrot.lane.b32.xlu0 %v4697, 126
      %v4765 = vpop.permute.xlu0 %4764
      %4766 = vrot.lane.b32.xlu0 %v4698, 126
      %v4767 = vpop.permute.xlu0 %4766
      %4768 = vrot.lane.b32.xlu0 %v4699, 126
      %v4769 = vpop.permute.xlu0 %4768
      %4770 = vrot.lane.b32.xlu0 %v4700, 126
      %v4771 = vpop.permute.xlu0 %4770
      %4772 = vrot.lane.b32.xlu0 %v4701, 126
      %v4773 = vpop.permute.xlu0 %4772
      %4774 = vrot.lane.b32.xlu0 %v4702, 126
      %v4775 = vpop.permute.xlu0 %4774
      %4776 = vrot.lane.b32.xlu0 %v4703, 126
      %v4777 = vpop.permute.xlu0 %4776
      %4778 = vrot.lane.b32.xlu0 %v4704, 126
      %v4779 = vpop.permute.xlu0 %4778
      %4780 = vrot.lane.b32.xlu0 %v4705, 126
      %v4781 = vpop.permute.xlu0 %4780
      %4782 = vrot.lane.b32.xlu0 %v4706, 126
      %v4783 = vpop.permute.xlu0 %4782
      %4784 = vrot.lane.b32.xlu0 %v4707, 126
      %v4785 = vpop.permute.xlu0 %4784
      %4786 = vrot.lane.b32.xlu0 %v4708, 126
      %v4787 = vpop.permute.xlu0 %4786
      %4788 = vrot.lane.b32.xlu0 %v4709, 126
      %v4789 = vpop.permute.xlu0 %4788
      %4790 = vrot.lane.b32.xlu0 %v4710, 126
      %v4791 = vpop.permute.xlu0 %4790
      %4792 = vrot.lane.b32.xlu0 %v4711, 126
      %v4793 = vpop.permute.xlu0 %4792
      %4794 = vrot.lane.b32.xlu0 %v4712, 126
      %v4795 = vpop.permute.xlu0 %4794
      %4796 = vrot.lane.b32.xlu0 %v4713, 126
      %v4797 = vpop.permute.xlu0 %4796
      %4798 = vrot.lane.b32.xlu0 %v4714, 126
      %v4799 = vpop.permute.xlu0 %4798
      %4800 = vrot.lane.b32.xlu0 %v4715, 126
      %v4801 = vpop.permute.xlu0 %4800
      %4802 = vrot.lane.b32.xlu0 %v4716, 126
      %v4803 = vpop.permute.xlu0 %4802
      %v4804 = vsel %vm2197, %v4747, %v4749
      %v4805 = vsel %vm2197, %v4749, %v4751
      %v4806 = vsel %vm2197, %v4751, %v4753
      %v4807 = vsel %vm2197, %v4753, %v4755
      %v4808 = vsel %vm2197, %v4755, %v4757
      %v4809 = vsel %vm2197, %v4757, %v4759
      %v4810 = vsel %vm2197, %v4759, %v4761
      %v4811 = vsel %vm2197, %v4761, %v4763
      %v4812 = vsel %vm2197, %v4763, %v4765
      %v4813 = vsel %vm2197, %v4765, %v4767
      %v4814 = vsel %vm2197, %v4767, %v4769
      %v4815 = vsel %vm2197, %v4769, %v4771
      %v4816 = vsel %vm2197, %v4771, %v4773
      %v4817 = vsel %vm2197, %v4773, %v4775
      %v4818 = vsel %vm2197, %v4775, %v4777
      %v4819 = vsel %vm2197, %v4777, %v4779
      %v4820 = vsel %vm2197, %v4779, %v4781
      %v4821 = vsel %vm2197, %v4781, %v4783
      %v4822 = vsel %vm2197, %v4783, %v4785
      %v4823 = vsel %vm2197, %v4785, %v4787
      %v4824 = vsel %vm2197, %v4787, %v4789
      %v4825 = vsel %vm2197, %v4789, %v4791
      %v4826 = vsel %vm2197, %v4791, %v4793
      %v4827 = vsel %vm2197, %v4793, %v4795
      %v4828 = vsel %vm2197, %v4795, %v4797
      %v4829 = vsel %vm2197, %v4797, %v4799
      %v4830 = vsel %vm2197, %v4799, %v4801
      %v4831 = vsel %vm2197, %v4801, %v4803
      %4861 = vst [vmem:[#allocation9 + $0x1d0] sm:$0xff] %v4804
      %4862 = vst [vmem:[#allocation9 + $0x1d8] sm:$0xff] %v4805
      %4863 = vst [vmem:[#allocation9 + $0x1e0] sm:$0xff] %v4806
      %4864 = vst [vmem:[#allocation9 + $0x1e8] sm:$0xff] %v4807
      %4865 = vst [vmem:[#allocation9 + $0x1f0] sm:$0xff] %v4808
      %4866 = vst [vmem:[#allocation9 + $0x1f8] sm:$0xff] %v4809
      %4867 = vst [vmem:[#allocation9 + $0x200] sm:$0xff] %v4810
      %4868 = vst [vmem:[#allocation9 + $0x208] sm:$0xff] %v4811
      %4869 = vst [vmem:[#allocation9 + $0x210] sm:$0xff] %v4812
      %4870 = vst [vmem:[#allocation9 + $0x218] sm:$0xff] %v4813
      %4871 = vst [vmem:[#allocation9 + $0x220] sm:$0xff] %v4814
      %4872 = vst [vmem:[#allocation9 + $0x228] sm:$0xff] %v4815
      %4873 = vst [vmem:[#allocation9 + $0x230] sm:$0xff] %v4816
      %4874 = vst [vmem:[#allocation9 + $0x238] sm:$0xff] %v4817
      %4875 = vst [vmem:[#allocation9 + $0x240] sm:$0xff] %v4818
      %4876 = vst [vmem:[#allocation9 + $0x248] sm:$0xff] %v4819
      %4877 = vst [vmem:[#allocation9 + $0x250] sm:$0xff] %v4820
      %4878 = vst [vmem:[#allocation9 + $0x258] sm:$0xff] %v4821
      %4879 = vst [vmem:[#allocation9 + $0x260] sm:$0xff] %v4822
      %4880 = vst [vmem:[#allocation9 + $0x268] sm:$0xff] %v4823
      %4881 = vst [vmem:[#allocation9 + $0x270] sm:$0xff] %v4824
      %4882 = vst [vmem:[#allocation9 + $0x278] sm:$0xff] %v4825
      %4883 = vst [vmem:[#allocation9 + $0x280] sm:$0xff] %v4826
      %4884 = vst [vmem:[#allocation9 + $0x288] sm:$0xff] %v4827
      %4885 = vst [vmem:[#allocation9 + $0x290] sm:$0xff] %v4828
      %4886 = vst [vmem:[#allocation9 + $0x298] sm:$0xff] %v4829
      %4887 = vst [vmem:[#allocation9 + $0x2a0] sm:$0xff] %v4830
      %4888 = vst [vmem:[#allocation9 + $0x2a8] sm:$0xff] %v4831
      %4889 = vst.msk [vmem:[#allocation9 + $0x2b0] sm:$0xff] %vm1877, %v4803
      %v4890 = vld [vmem:[#allocation3] sm:$0xff]
      %v4891 = vld [vmem:[#allocation3 + $0x8] sm:$0xff]
      %v4892 = vld [vmem:[#allocation3 + $0x10] sm:$0xff]
      %v4893 = vld [vmem:[#allocation3 + $0x18] sm:$0xff]
      %v4894 = vld [vmem:[#allocation3 + $0x20] sm:$0xff]
      %v4895 = vld [vmem:[#allocation3 + $0x28] sm:$0xff]
      %v4896 = vld [vmem:[#allocation3 + $0x30] sm:$0xff]
      %v4897 = vld [vmem:[#allocation3 + $0x38] sm:$0xff]
      %v4898 = vld [vmem:[#allocation3 + $0x40] sm:$0xff]
      %v4899 = vld [vmem:[#allocation3 + $0x48] sm:$0xff]
      %v4900 = vld [vmem:[#allocation3 + $0x50] sm:$0xff]
      %v4901 = vld [vmem:[#allocation3 + $0x58] sm:$0xff]
      %v4902 = vld [vmem:[#allocation3 + $0x60] sm:$0xff]
      %v4903 = vld [vmem:[#allocation3 + $0x68] sm:$0xff]
      %v4904 = vld [vmem:[#allocation3 + $0x70] sm:$0xff]
      %v4905 = vld [vmem:[#allocation3 + $0x78] sm:$0xff]
      %v4906 = vld [vmem:[#allocation3 + $0x80] sm:$0xff]
      %v4907 = vld [vmem:[#allocation3 + $0x88] sm:$0xff]
      %v4908 = vld [vmem:[#allocation3 + $0x90] sm:$0xff]
      %v4909 = vld [vmem:[#allocation3 + $0x98] sm:$0xff]
      %v4910 = vld [vmem:[#allocation3 + $0xa0] sm:$0xff]
      %v4911 = vld [vmem:[#allocation3 + $0xa8] sm:$0xff]
      %v4912 = vld [vmem:[#allocation3 + $0xb0] sm:$0xff]
      %v4913 = vld [vmem:[#allocation3 + $0xb8] sm:$0xff]
      %v4914 = vld [vmem:[#allocation3 + $0xc0] sm:$0xff]
      %v4915 = vld [vmem:[#allocation3 + $0xc8] sm:$0xff]
      %v4916 = vld [vmem:[#allocation3 + $0xd0] sm:$0xff]
      %v4917 = vld [vmem:[#allocation3 + $0xd8] sm:$0xff]
      %v4918 = vld [vmem:[#allocation3 + $0xe0] sm:$0xff]
      %4948 = vrot.lane.b32.xlu0 %v4890, 67
      %v4949 = vpop.permute.xlu0 %4948
      %4950 = vrot.lane.b32.xlu0 %v4891, 67
      %v4951 = vpop.permute.xlu0 %4950
      %4952 = vrot.lane.b32.xlu0 %v4892, 67
      %v4953 = vpop.permute.xlu0 %4952
      %4954 = vrot.lane.b32.xlu0 %v4893, 67
      %v4955 = vpop.permute.xlu0 %4954
      %4956 = vrot.lane.b32.xlu0 %v4894, 67
      %v4957 = vpop.permute.xlu0 %4956
      %4958 = vrot.lane.b32.xlu0 %v4895, 67
      %v4959 = vpop.permute.xlu0 %4958
      %4960 = vrot.lane.b32.xlu0 %v4896, 67
      %v4961 = vpop.permute.xlu0 %4960
      %4962 = vrot.lane.b32.xlu0 %v4897, 67
      %v4963 = vpop.permute.xlu0 %4962
      %4964 = vrot.lane.b32.xlu0 %v4898, 67
      %v4965 = vpop.permute.xlu0 %4964
      %4966 = vrot.lane.b32.xlu0 %v4899, 67
      %v4967 = vpop.permute.xlu0 %4966
      %4968 = vrot.lane.b32.xlu0 %v4900, 67
      %v4969 = vpop.permute.xlu0 %4968
      %4970 = vrot.lane.b32.xlu0 %v4901, 67
      %v4971 = vpop.permute.xlu0 %4970
      %4972 = vrot.lane.b32.xlu0 %v4902, 67
      %v4973 = vpop.permute.xlu0 %4972
      %4974 = vrot.lane.b32.xlu0 %v4903, 67
      %v4975 = vpop.permute.xlu0 %4974
      %4976 = vrot.lane.b32.xlu0 %v4904, 67
      %v4977 = vpop.permute.xlu0 %4976
      %4978 = vrot.lane.b32.xlu0 %v4905, 67
      %v4979 = vpop.permute.xlu0 %4978
      %4980 = vrot.lane.b32.xlu0 %v4906, 67
      %v4981 = vpop.permute.xlu0 %4980
      %4982 = vrot.lane.b32.xlu0 %v4907, 67
      %v4983 = vpop.permute.xlu0 %4982
      %4984 = vrot.lane.b32.xlu0 %v4908, 67
      %v4985 = vpop.permute.xlu0 %4984
      %4986 = vrot.lane.b32.xlu0 %v4909, 67
      %v4987 = vpop.permute.xlu0 %4986
      %4988 = vrot.lane.b32.xlu0 %v4910, 67
      %v4989 = vpop.permute.xlu0 %4988
      %4990 = vrot.lane.b32.xlu0 %v4911, 67
      %v4991 = vpop.permute.xlu0 %4990
      %4992 = vrot.lane.b32.xlu0 %v4912, 67
      %v4993 = vpop.permute.xlu0 %4992
      %4994 = vrot.lane.b32.xlu0 %v4913, 67
      %v4995 = vpop.permute.xlu0 %4994
      %4996 = vrot.lane.b32.xlu0 %v4914, 67
      %v4997 = vpop.permute.xlu0 %4996
      %4998 = vrot.lane.b32.xlu0 %v4915, 67
      %v4999 = vpop.permute.xlu0 %4998
      %5000 = vrot.lane.b32.xlu0 %v4916, 67
      %v5001 = vpop.permute.xlu0 %5000
      %5002 = vrot.lane.b32.xlu0 %v4917, 67
      %v5003 = vpop.permute.xlu0 %5002
      %5004 = vrot.lane.b32.xlu0 %v4918, 67
      %v5005 = vpop.permute.xlu0 %5004
      %v5006 = vsel %vm755, %v4949, %v4951
      %v5007 = vsel %vm755, %v4951, %v4953
      %v5008 = vsel %vm755, %v4953, %v4955
      %v5009 = vsel %vm755, %v4955, %v4957
      %v5010 = vsel %vm755, %v4957, %v4959
      %v5011 = vsel %vm755, %v4959, %v4961
      %v5012 = vsel %vm755, %v4961, %v4963
      %v5013 = vsel %vm755, %v4963, %v4965
      %v5014 = vsel %vm755, %v4965, %v4967
      %v5015 = vsel %vm755, %v4967, %v4969
      %v5016 = vsel %vm755, %v4969, %v4971
      %v5017 = vsel %vm755, %v4971, %v4973
      %v5018 = vsel %vm755, %v4973, %v4975
      %v5019 = vsel %vm755, %v4975, %v4977
      %v5020 = vsel %vm755, %v4977, %v4979
      %v5021 = vsel %vm755, %v4979, %v4981
      %v5022 = vsel %vm755, %v4981, %v4983
      %v5023 = vsel %vm755, %v4983, %v4985
      %v5024 = vsel %vm755, %v4985, %v4987
      %v5025 = vsel %vm755, %v4987, %v4989
      %v5026 = vsel %vm755, %v4989, %v4991
      %v5027 = vsel %vm755, %v4991, %v4993
      %v5028 = vsel %vm755, %v4993, %v4995
      %v5029 = vsel %vm755, %v4995, %v4997
      %v5030 = vsel %vm755, %v4997, %v4999
      %v5031 = vsel %vm755, %v4999, %v5001
      %v5032 = vsel %vm755, %v5001, %v5003
      %v5033 = vsel %vm755, %v5003, %v5005
      %5063 = vst [vmem:[#allocation9 + $0x2b8] sm:$0xff] %v5006
      %5064 = vst [vmem:[#allocation9 + $0x2c0] sm:$0xff] %v5007
      %5065 = vst [vmem:[#allocation9 + $0x2c8] sm:$0xff] %v5008
      %5066 = vst [vmem:[#allocation9 + $0x2d0] sm:$0xff] %v5009
      %5067 = vst [vmem:[#allocation9 + $0x2d8] sm:$0xff] %v5010
      %5068 = vst [vmem:[#allocation9 + $0x2e0] sm:$0xff] %v5011
      %5069 = vst [vmem:[#allocation9 + $0x2e8] sm:$0xff] %v5012
      %5070 = vst [vmem:[#allocation9 + $0x2f0] sm:$0xff] %v5013
      %5071 = vst [vmem:[#allocation9 + $0x2f8] sm:$0xff] %v5014
      %5072 = vst [vmem:[#allocation9 + $0x300] sm:$0xff] %v5015
      %5073 = vst [vmem:[#allocation9 + $0x308] sm:$0xff] %v5016
      %5074 = vst [vmem:[#allocation9 + $0x310] sm:$0xff] %v5017
      %5075 = vst [vmem:[#allocation9 + $0x318] sm:$0xff] %v5018
      %5076 = vst [vmem:[#allocation9 + $0x320] sm:$0xff] %v5019
      %5077 = vst [vmem:[#allocation9 + $0x328] sm:$0xff] %v5020
      %5078 = vst [vmem:[#allocation9 + $0x330] sm:$0xff] %v5021
      %5079 = vst [vmem:[#allocation9 + $0x338] sm:$0xff] %v5022
      %5080 = vst [vmem:[#allocation9 + $0x340] sm:$0xff] %v5023
      %5081 = vst [vmem:[#allocation9 + $0x348] sm:$0xff] %v5024
      %5082 = vst [vmem:[#allocation9 + $0x350] sm:$0xff] %v5025
      %5083 = vst [vmem:[#allocation9 + $0x358] sm:$0xff] %v5026
      %5084 = vst [vmem:[#allocation9 + $0x360] sm:$0xff] %v5027
      %5085 = vst [vmem:[#allocation9 + $0x368] sm:$0xff] %v5028
      %5086 = vst [vmem:[#allocation9 + $0x370] sm:$0xff] %v5029
      %5087 = vst [vmem:[#allocation9 + $0x378] sm:$0xff] %v5030
      %5088 = vst [vmem:[#allocation9 + $0x380] sm:$0xff] %v5031
      %5089 = vst [vmem:[#allocation9 + $0x388] sm:$0xff] %v5032
      %5090 = vst [vmem:[#allocation9 + $0x390] sm:$0xff] %v5033
      %5091 = vst.msk [vmem:[#allocation9 + $0x398] sm:$0xff] %vm1877, %v5005
      %v5092 = vld [vmem:[#allocation3] sm:$0xff]
      %v5093 = vld [vmem:[#allocation3 + $0x8] sm:$0xff]
      %v5094 = vld [vmem:[#allocation3 + $0x10] sm:$0xff]
      %v5095 = vld [vmem:[#allocation3 + $0x18] sm:$0xff]
      %v5096 = vld [vmem:[#allocation3 + $0x20] sm:$0xff]
      %v5097 = vld [vmem:[#allocation3 + $0x28] sm:$0xff]
      %v5098 = vld [vmem:[#allocation3 + $0x30] sm:$0xff]
      %v5099 = vld [vmem:[#allocation3 + $0x38] sm:$0xff]
      %v5100 = vld [vmem:[#allocation3 + $0x40] sm:$0xff]
      %v5101 = vld [vmem:[#allocation3 + $0x48] sm:$0xff]
      %v5102 = vld [vmem:[#allocation3 + $0x50] sm:$0xff]
      %v5103 = vld [vmem:[#allocation3 + $0x58] sm:$0xff]
      %v5104 = vld [vmem:[#allocation3 + $0x60] sm:$0xff]
      %v5105 = vld [vmem:[#allocation3 + $0x68] sm:$0xff]
      %v5106 = vld [vmem:[#allocation3 + $0x70] sm:$0xff]
      %v5107 = vld [vmem:[#allocation3 + $0x78] sm:$0xff]
      %v5108 = vld [vmem:[#allocation3 + $0x80] sm:$0xff]
      %v5109 = vld [vmem:[#allocation3 + $0x88] sm:$0xff]
      %v5110 = vld [vmem:[#allocation3 + $0x90] sm:$0xff]
      %v5111 = vld [vmem:[#allocation3 + $0x98] sm:$0xff]
      %v5112 = vld [vmem:[#allocation3 + $0xa0] sm:$0xff]
      %v5113 = vld [vmem:[#allocation3 + $0xa8] sm:$0xff]
      %v5114 = vld [vmem:[#allocation3 + $0xb0] sm:$0xff]
      %v5115 = vld [vmem:[#allocation3 + $0xb8] sm:$0xff]
      %v5116 = vld [vmem:[#allocation3 + $0xc0] sm:$0xff]
      %v5117 = vld [vmem:[#allocation3 + $0xc8] sm:$0xff]
      %v5118 = vld [vmem:[#allocation3 + $0xd0] sm:$0xff]
      %v5119 = vld [vmem:[#allocation3 + $0xd8] sm:$0xff]
      %v5120 = vld [vmem:[#allocation3 + $0xe0] sm:$0xff]
      %5150 = vrot.lane.b32.xlu0 %v5092, 66
      %v5151 = vpop.permute.xlu0 %5150
      %5152 = vrot.lane.b32.xlu0 %v5093, 66
      %v5153 = vpop.permute.xlu0 %5152
      %5154 = vrot.lane.b32.xlu0 %v5094, 66
      %v5155 = vpop.permute.xlu0 %5154
      %5156 = vrot.lane.b32.xlu0 %v5095, 66
      %v5157 = vpop.permute.xlu0 %5156
      %5158 = vrot.lane.b32.xlu0 %v5096, 66
      %v5159 = vpop.permute.xlu0 %5158
      %5160 = vrot.lane.b32.xlu0 %v5097, 66
      %v5161 = vpop.permute.xlu0 %5160
      %5162 = vrot.lane.b32.xlu0 %v5098, 66
      %v5163 = vpop.permute.xlu0 %5162
      %5164 = vrot.lane.b32.xlu0 %v5099, 66
      %v5165 = vpop.permute.xlu0 %5164
      %5166 = vrot.lane.b32.xlu0 %v5100, 66
      %v5167 = vpop.permute.xlu0 %5166
      %5168 = vrot.lane.b32.xlu0 %v5101, 66
      %v5169 = vpop.permute.xlu0 %5168
      %5170 = vrot.lane.b32.xlu0 %v5102, 66
      %v5171 = vpop.permute.xlu0 %5170
      %5172 = vrot.lane.b32.xlu0 %v5103, 66
      %v5173 = vpop.permute.xlu0 %5172
      %5174 = vrot.lane.b32.xlu0 %v5104, 66
      %v5175 = vpop.permute.xlu0 %5174
      %5176 = vrot.lane.b32.xlu0 %v5105, 66
      %v5177 = vpop.permute.xlu0 %5176
      %5178 = vrot.lane.b32.xlu0 %v5106, 66
      %v5179 = vpop.permute.xlu0 %5178
      %5180 = vrot.lane.b32.xlu0 %v5107, 66
      %v5181 = vpop.permute.xlu0 %5180
      %5182 = vrot.lane.b32.xlu0 %v5108, 66
      %v5183 = vpop.permute.xlu0 %5182
      %5184 = vrot.lane.b32.xlu0 %v5109, 66
      %v5185 = vpop.permute.xlu0 %5184
      %5186 = vrot.lane.b32.xlu0 %v5110, 66
      %v5187 = vpop.permute.xlu0 %5186
      %5188 = vrot.lane.b32.xlu0 %v5111, 66
      %v5189 = vpop.permute.xlu0 %5188
      %5190 = vrot.lane.b32.xlu0 %v5112, 66
      %v5191 = vpop.permute.xlu0 %5190
      %5192 = vrot.lane.b32.xlu0 %v5113, 66
      %v5193 = vpop.permute.xlu0 %5192
      %5194 = vrot.lane.b32.xlu0 %v5114, 66
      %v5195 = vpop.permute.xlu0 %5194
      %5196 = vrot.lane.b32.xlu0 %v5115, 66
      %v5197 = vpop.permute.xlu0 %5196
      %5198 = vrot.lane.b32.xlu0 %v5116, 66
      %v5199 = vpop.permute.xlu0 %5198
      %5200 = vrot.lane.b32.xlu0 %v5117, 66
      %v5201 = vpop.permute.xlu0 %5200
      %5202 = vrot.lane.b32.xlu0 %v5118, 66
      %v5203 = vpop.permute.xlu0 %5202
      %5204 = vrot.lane.b32.xlu0 %v5119, 66
      %v5205 = vpop.permute.xlu0 %5204
      %5206 = vrot.lane.b32.xlu0 %v5120, 66
      %v5207 = vpop.permute.xlu0 %5206
      %v5208 = vsel %vm963, %v5151, %v5153
      %v5209 = vsel %vm963, %v5153, %v5155
      %v5210 = vsel %vm963, %v5155, %v5157
      %v5211 = vsel %vm963, %v5157, %v5159
      %v5212 = vsel %vm963, %v5159, %v5161
      %v5213 = vsel %vm963, %v5161, %v5163
      %v5214 = vsel %vm963, %v5163, %v5165
      %v5215 = vsel %vm963, %v5165, %v5167
      %v5216 = vsel %vm963, %v5167, %v5169
      %v5217 = vsel %vm963, %v5169, %v5171
      %v5218 = vsel %vm963, %v5171, %v5173
      %v5219 = vsel %vm963, %v5173, %v5175
      %v5220 = vsel %vm963, %v5175, %v5177
      %v5221 = vsel %vm963, %v5177, %v5179
      %v5222 = vsel %vm963, %v5179, %v5181
      %v5223 = vsel %vm963, %v5181, %v5183
      %v5224 = vsel %vm963, %v5183, %v5185
      %v5225 = vsel %vm963, %v5185, %v5187
      %v5226 = vsel %vm963, %v5187, %v5189
      %v5227 = vsel %vm963, %v5189, %v5191
      %v5228 = vsel %vm963, %v5191, %v5193
      %v5229 = vsel %vm963, %v5193, %v5195
      %v5230 = vsel %vm963, %v5195, %v5197
      %v5231 = vsel %vm963, %v5197, %v5199
      %v5232 = vsel %vm963, %v5199, %v5201
      %v5233 = vsel %vm963, %v5201, %v5203
      %v5234 = vsel %vm963, %v5203, %v5205
      %v5235 = vsel %vm963, %v5205, %v5207
      %5265 = vst [vmem:[#allocation9 + $0x3a0] sm:$0xff] %v5208
      %5266 = vst [vmem:[#allocation9 + $0x3a8] sm:$0xff] %v5209
      %5267 = vst [vmem:[#allocation9 + $0x3b0] sm:$0xff] %v5210
      %5268 = vst [vmem:[#allocation9 + $0x3b8] sm:$0xff] %v5211
      %5269 = vst [vmem:[#allocation9 + $0x3c0] sm:$0xff] %v5212
      %5270 = vst [vmem:[#allocation9 + $0x3c8] sm:$0xff] %v5213
      %5271 = vst [vmem:[#allocation9 + $0x3d0] sm:$0xff] %v5214
      %5272 = vst [vmem:[#allocation9 + $0x3d8] sm:$0xff] %v5215
      %5273 = vst [vmem:[#allocation9 + $0x3e0] sm:$0xff] %v5216
      %5274 = vst [vmem:[#allocation9 + $0x3e8] sm:$0xff] %v5217
      %5275 = vst [vmem:[#allocation9 + $0x3f0] sm:$0xff] %v5218
      %5276 = vst [vmem:[#allocation9 + $0x3f8] sm:$0xff] %v5219
      %5277 = vst [vmem:[#allocation9 + $0x400] sm:$0xff] %v5220
      %5278 = vst [vmem:[#allocation9 + $0x408] sm:$0xff] %v5221
      %5279 = vst [vmem:[#allocation9 + $0x410] sm:$0xff] %v5222
      %5280 = vst [vmem:[#allocation9 + $0x418] sm:$0xff] %v5223
      %5281 = vst [vmem:[#allocation9 + $0x420] sm:$0xff] %v5224
      %5282 = vst [vmem:[#allocation9 + $0x428] sm:$0xff] %v5225
      %5283 = vst [vmem:[#allocation9 + $0x430] sm:$0xff] %v5226
      %5284 = vst [vmem:[#allocation9 + $0x438] sm:$0xff] %v5227
      %5285 = vst [vmem:[#allocation9 + $0x440] sm:$0xff] %v5228
      %5286 = vst [vmem:[#allocation9 + $0x448] sm:$0xff] %v5229
      %5287 = vst [vmem:[#allocation9 + $0x450] sm:$0xff] %v5230
      %5288 = vst [vmem:[#allocation9 + $0x458] sm:$0xff] %v5231
      %5289 = vst [vmem:[#allocation9 + $0x460] sm:$0xff] %v5232
      %5290 = vst [vmem:[#allocation9 + $0x468] sm:$0xff] %v5233
      %5291 = vst [vmem:[#allocation9 + $0x470] sm:$0xff] %v5234
      %5292 = vst [vmem:[#allocation9 + $0x478] sm:$0xff] %v5235
      %5293 = vst.msk [vmem:[#allocation9 + $0x480] sm:$0xff] %vm1877, %v5207
      %v5294 = vld [vmem:[#allocation3] sm:$0xff]
      %v5295 = vld [vmem:[#allocation3 + $0x8] sm:$0xff]
      %v5296 = vld [vmem:[#allocation3 + $0x10] sm:$0xff]
      %v5297 = vld [vmem:[#allocation3 + $0x18] sm:$0xff]
      %v5298 = vld [vmem:[#allocation3 + $0x20] sm:$0xff]
      %v5299 = vld [vmem:[#allocation3 + $0x28] sm:$0xff]
      %v5300 = vld [vmem:[#allocation3 + $0x30] sm:$0xff]
      %v5301 = vld [vmem:[#allocation3 + $0x38] sm:$0xff]
      %v5302 = vld [vmem:[#allocation3 + $0x40] sm:$0xff]
      %v5303 = vld [vmem:[#allocation3 + $0x48] sm:$0xff]
      %v5304 = vld [vmem:[#allocation3 + $0x50] sm:$0xff]
      %v5305 = vld [vmem:[#allocation3 + $0x58] sm:$0xff]
      %v5306 = vld [vmem:[#allocation3 + $0x60] sm:$0xff]
      %v5307 = vld [vmem:[#allocation3 + $0x68] sm:$0xff]
      %v5308 = vld [vmem:[#allocation3 + $0x70] sm:$0xff]
      %v5309 = vld [vmem:[#allocation3 + $0x78] sm:$0xff]
      %v5310 = vld [vmem:[#allocation3 + $0x80] sm:$0xff]
      %v5311 = vld [vmem:[#allocation3 + $0x88] sm:$0xff]
      %v5312 = vld [vmem:[#allocation3 + $0x90] sm:$0xff]
      %v5313 = vld [vmem:[#allocation3 + $0x98] sm:$0xff]
      %v5314 = vld [vmem:[#allocation3 + $0xa0] sm:$0xff]
      %v5315 = vld [vmem:[#allocation3 + $0xa8] sm:$0xff]
      %v5316 = vld [vmem:[#allocation3 + $0xb0] sm:$0xff]
      %v5317 = vld [vmem:[#allocation3 + $0xb8] sm:$0xff]
      %v5318 = vld [vmem:[#allocation3 + $0xc0] sm:$0xff]
      %v5319 = vld [vmem:[#allocation3 + $0xc8] sm:$0xff]
      %v5320 = vld [vmem:[#allocation3 + $0xd0] sm:$0xff]
      %v5321 = vld [vmem:[#allocation3 + $0xd8] sm:$0xff]
      %v5322 = vld [vmem:[#allocation3 + $0xe0] sm:$0xff]
      %5352 = vrot.lane.b32.xlu0 %v5294, 65
      %v5353 = vpop.permute.xlu0 %5352
      %5354 = vrot.lane.b32.xlu0 %v5295, 65
      %v5355 = vpop.permute.xlu0 %5354
      %5356 = vrot.lane.b32.xlu0 %v5296, 65
      %v5357 = vpop.permute.xlu0 %5356
      %5358 = vrot.lane.b32.xlu0 %v5297, 65
      %v5359 = vpop.permute.xlu0 %5358
      %5360 = vrot.lane.b32.xlu0 %v5298, 65
      %v5361 = vpop.permute.xlu0 %5360
      %5362 = vrot.lane.b32.xlu0 %v5299, 65
      %v5363 = vpop.permute.xlu0 %5362
      %5364 = vrot.lane.b32.xlu0 %v5300, 65
      %v5365 = vpop.permute.xlu0 %5364
      %5366 = vrot.lane.b32.xlu0 %v5301, 65
      %v5367 = vpop.permute.xlu0 %5366
      %5368 = vrot.lane.b32.xlu0 %v5302, 65
      %v5369 = vpop.permute.xlu0 %5368
      %5370 = vrot.lane.b32.xlu0 %v5303, 65
      %v5371 = vpop.permute.xlu0 %5370
      %5372 = vrot.lane.b32.xlu0 %v5304, 65
      %v5373 = vpop.permute.xlu0 %5372
      %5374 = vrot.lane.b32.xlu0 %v5305, 65
      %v5375 = vpop.permute.xlu0 %5374
      %5376 = vrot.lane.b32.xlu0 %v5306, 65
      %v5377 = vpop.permute.xlu0 %5376
      %5378 = vrot.lane.b32.xlu0 %v5307, 65
      %v5379 = vpop.permute.xlu0 %5378
      %5380 = vrot.lane.b32.xlu0 %v5308, 65
      %v5381 = vpop.permute.xlu0 %5380
      %5382 = vrot.lane.b32.xlu0 %v5309, 65
      %v5383 = vpop.permute.xlu0 %5382
      %5384 = vrot.lane.b32.xlu0 %v5310, 65
      %v5385 = vpop.permute.xlu0 %5384
      %5386 = vrot.lane.b32.xlu0 %v5311, 65
      %v5387 = vpop.permute.xlu0 %5386
      %5388 = vrot.lane.b32.xlu0 %v5312, 65
      %v5389 = vpop.permute.xlu0 %5388
      %5390 = vrot.lane.b32.xlu0 %v5313, 65
      %v5391 = vpop.permute.xlu0 %5390
      %5392 = vrot.lane.b32.xlu0 %v5314, 65
      %v5393 = vpop.permute.xlu0 %5392
      %5394 = vrot.lane.b32.xlu0 %v5315, 65
      %v5395 = vpop.permute.xlu0 %5394
      %5396 = vrot.lane.b32.xlu0 %v5316, 65
      %v5397 = vpop.permute.xlu0 %5396
      %5398 = vrot.lane.b32.xlu0 %v5317, 65
      %v5399 = vpop.permute.xlu0 %5398
      %5400 = vrot.lane.b32.xlu0 %v5318, 65
      %v5401 = vpop.permute.xlu0 %5400
      %5402 = vrot.lane.b32.xlu0 %v5319, 65
      %v5403 = vpop.permute.xlu0 %5402
      %5404 = vrot.lane.b32.xlu0 %v5320, 65
      %v5405 = vpop.permute.xlu0 %5404
      %5406 = vrot.lane.b32.xlu0 %v5321, 65
      %v5407 = vpop.permute.xlu0 %5406
      %5408 = vrot.lane.b32.xlu0 %v5322, 65
      %v5409 = vpop.permute.xlu0 %5408
      %v5410 = vsel %vm2804, %v5353, %v5355
      %v5411 = vsel %vm2804, %v5355, %v5357
      %v5412 = vsel %vm2804, %v5357, %v5359
      %v5413 = vsel %vm2804, %v5359, %v5361
      %v5414 = vsel %vm2804, %v5361, %v5363
      %v5415 = vsel %vm2804, %v5363, %v5365
      %v5416 = vsel %vm2804, %v5365, %v5367
      %v5417 = vsel %vm2804, %v5367, %v5369
      %v5418 = vsel %vm2804, %v5369, %v5371
      %v5419 = vsel %vm2804, %v5371, %v5373
      %v5420 = vsel %vm2804, %v5373, %v5375
      %v5421 = vsel %vm2804, %v5375, %v5377
      %v5422 = vsel %vm2804, %v5377, %v5379
      %v5423 = vsel %vm2804, %v5379, %v5381
      %v5424 = vsel %vm2804, %v5381, %v5383
      %v5425 = vsel %vm2804, %v5383, %v5385
      %v5426 = vsel %vm2804, %v5385, %v5387
      %v5427 = vsel %vm2804, %v5387, %v5389
      %v5428 = vsel %vm2804, %v5389, %v5391
      %v5429 = vsel %vm2804, %v5391, %v5393
      %v5430 = vsel %vm2804, %v5393, %v5395
      %v5431 = vsel %vm2804, %v5395, %v5397
      %v5432 = vsel %vm2804, %v5397, %v5399
      %v5433 = vsel %vm2804, %v5399, %v5401
      %v5434 = vsel %vm2804, %v5401, %v5403
      %v5435 = vsel %vm2804, %v5403, %v5405
      %v5436 = vsel %vm2804, %v5405, %v5407
      %v5437 = vsel %vm2804, %v5407, %v5409
      %5467 = vst [vmem:[#allocation9 + $0x488] sm:$0xff] %v5410
      %5468 = vst [vmem:[#allocation9 + $0x490] sm:$0xff] %v5411
      %5469 = vst [vmem:[#allocation9 + $0x498] sm:$0xff] %v5412
      %5470 = vst [vmem:[#allocation9 + $0x4a0] sm:$0xff] %v5413
      %5471 = vst [vmem:[#allocation9 + $0x4a8] sm:$0xff] %v5414
      %5472 = vst [vmem:[#allocation9 + $0x4b0] sm:$0xff] %v5415
      %5473 = vst [vmem:[#allocation9 + $0x4b8] sm:$0xff] %v5416
      %5474 = vst [vmem:[#allocation9 + $0x4c0] sm:$0xff] %v5417
      %5475 = vst [vmem:[#allocation9 + $0x4c8] sm:$0xff] %v5418
      %5476 = vst [vmem:[#allocation9 + $0x4d0] sm:$0xff] %v5419
      %5477 = vst [vmem:[#allocation9 + $0x4d8] sm:$0xff] %v5420
      %5478 = vst [vmem:[#allocation9 + $0x4e0] sm:$0xff] %v5421
      %5479 = vst [vmem:[#allocation9 + $0x4e8] sm:$0xff] %v5422
      %5480 = vst [vmem:[#allocation9 + $0x4f0] sm:$0xff] %v5423
      %5481 = vst [vmem:[#allocation9 + $0x4f8] sm:$0xff] %v5424
      %5482 = vst [vmem:[#allocation9 + $0x500] sm:$0xff] %v5425
      %5483 = vst [vmem:[#allocation9 + $0x508] sm:$0xff] %v5426
      %5484 = vst [vmem:[#allocation9 + $0x510] sm:$0xff] %v5427
      %5485 = vst [vmem:[#allocation9 + $0x518] sm:$0xff] %v5428
      %5486 = vst [vmem:[#allocation9 + $0x520] sm:$0xff] %v5429
      %5487 = vst [vmem:[#allocation9 + $0x528] sm:$0xff] %v5430
      %5488 = vst [vmem:[#allocation9 + $0x530] sm:$0xff] %v5431
      %5489 = vst [vmem:[#allocation9 + $0x538] sm:$0xff] %v5432
      %5490 = vst [vmem:[#allocation9 + $0x540] sm:$0xff] %v5433
      %5491 = vst [vmem:[#allocation9 + $0x548] sm:$0xff] %v5434
      %5492 = vst [vmem:[#allocation9 + $0x550] sm:$0xff] %v5435
      %5493 = vst [vmem:[#allocation9 + $0x558] sm:$0xff] %v5436
      %5494 = vst [vmem:[#allocation9 + $0x560] sm:$0xff] %v5437
      %5495 = vst.msk [vmem:[#allocation9 + $0x568] sm:$0xff] %vm1877, %v5409
      %v5496 = vld [vmem:[#allocation3] sm:$0xff]
      %v5497 = vld [vmem:[#allocation3 + $0x8] sm:$0xff]
      %v5498 = vld [vmem:[#allocation3 + $0x10] sm:$0xff]
      %v5499 = vld [vmem:[#allocation3 + $0x18] sm:$0xff]
      %v5500 = vld [vmem:[#allocation3 + $0x20] sm:$0xff]
      %v5501 = vld [vmem:[#allocation3 + $0x28] sm:$0xff]
      %v5502 = vld [vmem:[#allocation3 + $0x30] sm:$0xff]
      %v5503 = vld [vmem:[#allocation3 + $0x38] sm:$0xff]
      %v5504 = vld [vmem:[#allocation3 + $0x40] sm:$0xff]
      %v5505 = vld [vmem:[#allocation3 + $0x48] sm:$0xff]
      %v5506 = vld [vmem:[#allocation3 + $0x50] sm:$0xff]
      %v5507 = vld [vmem:[#allocation3 + $0x58] sm:$0xff]
      %v5508 = vld [vmem:[#allocation3 + $0x60] sm:$0xff]
      %v5509 = vld [vmem:[#allocation3 + $0x68] sm:$0xff]
      %v5510 = vld [vmem:[#allocation3 + $0x70] sm:$0xff]
      %v5511 = vld [vmem:[#allocation3 + $0x78] sm:$0xff]
      %v5512 = vld [vmem:[#allocation3 + $0x80] sm:$0xff]
      %v5513 = vld [vmem:[#allocation3 + $0x88] sm:$0xff]
      %v5514 = vld [vmem:[#allocation3 + $0x90] sm:$0xff]
      %v5515 = vld [vmem:[#allocation3 + $0x98] sm:$0xff]
      %v5516 = vld [vmem:[#allocation3 + $0xa0] sm:$0xff]
      %v5517 = vld [vmem:[#allocation3 + $0xa8] sm:$0xff]
      %v5518 = vld [vmem:[#allocation3 + $0xb0] sm:$0xff]
      %v5519 = vld [vmem:[#allocation3 + $0xb8] sm:$0xff]
      %v5520 = vld [vmem:[#allocation3 + $0xc0] sm:$0xff]
      %v5521 = vld [vmem:[#allocation3 + $0xc8] sm:$0xff]
      %v5522 = vld [vmem:[#allocation3 + $0xd0] sm:$0xff]
      %v5523 = vld [vmem:[#allocation3 + $0xd8] sm:$0xff]
      %v5524 = vld [vmem:[#allocation3 + $0xe0] sm:$0xff]
      %v5525 = vld [vmem:[#allocation3 + $0xe8] sm:$0xff]
      %5556 = vrot.lane.b32.xlu0 %v5496, 6
      %v5557 = vpop.permute.xlu0 %5556
      %5558 = vrot.lane.b32.xlu0 %v5497, 6
      %v5559 = vpop.permute.xlu0 %5558
      %5560 = vrot.lane.b32.xlu0 %v5498, 6
      %v5561 = vpop.permute.xlu0 %5560
      %5562 = vrot.lane.b32.xlu0 %v5499, 6
      %v5563 = vpop.permute.xlu0 %5562
      %5564 = vrot.lane.b32.xlu0 %v5500, 6
      %v5565 = vpop.permute.xlu0 %5564
      %5566 = vrot.lane.b32.xlu0 %v5501, 6
      %v5567 = vpop.permute.xlu0 %5566
      %5568 = vrot.lane.b32.xlu0 %v5502, 6
      %v5569 = vpop.permute.xlu0 %5568
      %5570 = vrot.lane.b32.xlu0 %v5503, 6
      %v5571 = vpop.permute.xlu0 %5570
      %5572 = vrot.lane.b32.xlu0 %v5504, 6
      %v5573 = vpop.permute.xlu0 %5572
      %5574 = vrot.lane.b32.xlu0 %v5505, 6
      %v5575 = vpop.permute.xlu0 %5574
      %5576 = vrot.lane.b32.xlu0 %v5506, 6
      %v5577 = vpop.permute.xlu0 %5576
      %5578 = vrot.lane.b32.xlu0 %v5507, 6
      %v5579 = vpop.permute.xlu0 %5578
      %5580 = vrot.lane.b32.xlu0 %v5508, 6
      %v5581 = vpop.permute.xlu0 %5580
      %5582 = vrot.lane.b32.xlu0 %v5509, 6
      %v5583 = vpop.permute.xlu0 %5582
      %5584 = vrot.lane.b32.xlu0 %v5510, 6
      %v5585 = vpop.permute.xlu0 %5584
      %5586 = vrot.lane.b32.xlu0 %v5511, 6
      %v5587 = vpop.permute.xlu0 %5586
      %5588 = vrot.lane.b32.xlu0 %v5512, 6
      %v5589 = vpop.permute.xlu0 %5588
      %5590 = vrot.lane.b32.xlu0 %v5513, 6
      %v5591 = vpop.permute.xlu0 %5590
      %5592 = vrot.lane.b32.xlu0 %v5514, 6
      %v5593 = vpop.permute.xlu0 %5592
      %5594 = vrot.lane.b32.xlu0 %v5515, 6
      %v5595 = vpop.permute.xlu0 %5594
      %5596 = vrot.lane.b32.xlu0 %v5516, 6
      %v5597 = vpop.permute.xlu0 %5596
      %5598 = vrot.lane.b32.xlu0 %v5517, 6
      %v5599 = vpop.permute.xlu0 %5598
      %5600 = vrot.lane.b32.xlu0 %v5518, 6
      %v5601 = vpop.permute.xlu0 %5600
      %5602 = vrot.lane.b32.xlu0 %v5519, 6
      %v5603 = vpop.permute.xlu0 %5602
      %5604 = vrot.lane.b32.xlu0 %v5520, 6
      %v5605 = vpop.permute.xlu0 %5604
      %5606 = vrot.lane.b32.xlu0 %v5521, 6
      %v5607 = vpop.permute.xlu0 %5606
      %5608 = vrot.lane.b32.xlu0 %v5522, 6
      %v5609 = vpop.permute.xlu0 %5608
      %5610 = vrot.lane.b32.xlu0 %v5523, 6
      %v5611 = vpop.permute.xlu0 %5610
      %5612 = vrot.lane.b32.xlu0 %v5524, 6
      %v5613 = vpop.permute.xlu0 %5612
      %5614 = vrot.lane.b32.xlu0 %v5525, 6
      %v5615 = vpop.permute.xlu0 %5614
      %v5616 = vsel %vm3011, %v5557, %v5559
      %v5617 = vsel %vm3011, %v5559, %v5561
      %v5618 = vsel %vm3011, %v5561, %v5563
      %v5619 = vsel %vm3011, %v5563, %v5565
      %v5620 = vsel %vm3011, %v5565, %v5567
      %v5621 = vsel %vm3011, %v5567, %v5569
      %v5622 = vsel %vm3011, %v5569, %v5571
      %v5623 = vsel %vm3011, %v5571, %v5573
      %v5624 = vsel %vm3011, %v5573, %v5575
      %v5625 = vsel %vm3011, %v5575, %v5577
      %v5626 = vsel %vm3011, %v5577, %v5579
      %v5627 = vsel %vm3011, %v5579, %v5581
      %v5628 = vsel %vm3011, %v5581, %v5583
      %v5629 = vsel %vm3011, %v5583, %v5585
      %v5630 = vsel %vm3011, %v5585, %v5587
      %v5631 = vsel %vm3011, %v5587, %v5589
      %v5632 = vsel %vm3011, %v5589, %v5591
      %v5633 = vsel %vm3011, %v5591, %v5593
      %v5634 = vsel %vm3011, %v5593, %v5595
      %v5635 = vsel %vm3011, %v5595, %v5597
      %v5636 = vsel %vm3011, %v5597, %v5599
      %v5637 = vsel %vm3011, %v5599, %v5601
      %v5638 = vsel %vm3011, %v5601, %v5603
      %v5639 = vsel %vm3011, %v5603, %v5605
      %v5640 = vsel %vm3011, %v5605, %v5607
      %v5641 = vsel %vm3011, %v5607, %v5609
      %v5642 = vsel %vm3011, %v5609, %v5611
      %v5643 = vsel %vm3011, %v5611, %v5613
      %v5644 = vsel %vm3011, %v5613, %v5615
      %5674 = vst [vmem:[#allocation9 + $0x570] sm:$0xff] %v5616
      %5675 = vst [vmem:[#allocation9 + $0x578] sm:$0xff] %v5617
      %5676 = vst [vmem:[#allocation9 + $0x580] sm:$0xff] %v5618
      %5677 = vst [vmem:[#allocation9 + $0x588] sm:$0xff] %v5619
      %5678 = vst [vmem:[#allocation9 + $0x590] sm:$0xff] %v5620
      %5679 = vst [vmem:[#allocation9 + $0x598] sm:$0xff] %v5621
      %5680 = vst [vmem:[#allocation9 + $0x5a0] sm:$0xff] %v5622
      %5681 = vst [vmem:[#allocation9 + $0x5a8] sm:$0xff] %v5623
      %5682 = vst [vmem:[#allocation9 + $0x5b0] sm:$0xff] %v5624
      %5683 = vst [vmem:[#allocation9 + $0x5b8] sm:$0xff] %v5625
      %5684 = vst [vmem:[#allocation9 + $0x5c0] sm:$0xff] %v5626
      %5685 = vst [vmem:[#allocation9 + $0x5c8] sm:$0xff] %v5627
      %5686 = vst [vmem:[#allocation9 + $0x5d0] sm:$0xff] %v5628
      %5687 = vst [vmem:[#allocation9 + $0x5d8] sm:$0xff] %v5629
      %5688 = vst [vmem:[#allocation9 + $0x5e0] sm:$0xff] %v5630
      %5689 = vst [vmem:[#allocation9 + $0x5e8] sm:$0xff] %v5631
      %5690 = vst [vmem:[#allocation9 + $0x5f0] sm:$0xff] %v5632
      %5691 = vst [vmem:[#allocation9 + $0x5f8] sm:$0xff] %v5633
      %5692 = vst [vmem:[#allocation9 + $0x600] sm:$0xff] %v5634
      %5693 = vst [vmem:[#allocation9 + $0x608] sm:$0xff] %v5635
      %5694 = vst [vmem:[#allocation9 + $0x610] sm:$0xff] %v5636
      %5695 = vst [vmem:[#allocation9 + $0x618] sm:$0xff] %v5637
      %5696 = vst [vmem:[#allocation9 + $0x620] sm:$0xff] %v5638
      %5697 = vst [vmem:[#allocation9 + $0x628] sm:$0xff] %v5639
      %5698 = vst [vmem:[#allocation9 + $0x630] sm:$0xff] %v5640
      %5699 = vst [vmem:[#allocation9 + $0x638] sm:$0xff] %v5641
      %5700 = vst [vmem:[#allocation9 + $0x640] sm:$0xff] %v5642
      %5701 = vst [vmem:[#allocation9 + $0x648] sm:$0xff] %v5643
      %5702 = vst.msk [vmem:[#allocation9 + $0x650] sm:$0xff] %vm1877, %v5644
      %v5703 = vld [vmem:[#allocation3] sm:$0xff]
      %v5704 = vld [vmem:[#allocation3 + $0x8] sm:$0xff]
      %v5705 = vld [vmem:[#allocation3 + $0x10] sm:$0xff]
      %v5706 = vld [vmem:[#allocation3 + $0x18] sm:$0xff]
      %v5707 = vld [vmem:[#allocation3 + $0x20] sm:$0xff]
      %v5708 = vld [vmem:[#allocation3 + $0x28] sm:$0xff]
      %v5709 = vld [vmem:[#allocation3 + $0x30] sm:$0xff]
      %v5710 = vld [vmem:[#allocation3 + $0x38] sm:$0xff]
      %v5711 = vld [vmem:[#allocation3 + $0x40] sm:$0xff]
      %v5712 = vld [vmem:[#allocation3 + $0x48] sm:$0xff]
      %v5713 = vld [vmem:[#allocation3 + $0x50] sm:$0xff]
      %v5714 = vld [vmem:[#allocation3 + $0x58] sm:$0xff]
      %v5715 = vld [vmem:[#allocation3 + $0x60] sm:$0xff]
      %v5716 = vld [vmem:[#allocation3 + $0x68] sm:$0xff]
      %v5717 = vld [vmem:[#allocation3 + $0x70] sm:$0xff]
      %v5718 = vld [vmem:[#allocation3 + $0x78] sm:$0xff]
      %v5719 = vld [vmem:[#allocation3 + $0x80] sm:$0xff]
      %v5720 = vld [vmem:[#allocation3 + $0x88] sm:$0xff]
      %v5721 = vld [vmem:[#allocation3 + $0x90] sm:$0xff]
      %v5722 = vld [vmem:[#allocation3 + $0x98] sm:$0xff]
      %v5723 = vld [vmem:[#allocation3 + $0xa0] sm:$0xff]
      %v5724 = vld [vmem:[#allocation3 + $0xa8] sm:$0xff]
      %v5725 = vld [vmem:[#allocation3 + $0xb0] sm:$0xff]
      %v5726 = vld [vmem:[#allocation3 + $0xb8] sm:$0xff]
      %v5727 = vld [vmem:[#allocation3 + $0xc0] sm:$0xff]
      %v5728 = vld [vmem:[#allocation3 + $0xc8] sm:$0xff]
      %v5729 = vld [vmem:[#allocation3 + $0xd0] sm:$0xff]
      %v5730 = vld [vmem:[#allocation3 + $0xd8] sm:$0xff]
      %v5731 = vld [vmem:[#allocation3 + $0xe0] sm:$0xff]
      %v5732 = vld [vmem:[#allocation3 + $0xe8] sm:$0xff]
      %5763 = vrot.lane.b32.xlu0 %v5703, 5
      %v5764 = vpop.permute.xlu0 %5763
      %5765 = vrot.lane.b32.xlu0 %v5704, 5
      %v5766 = vpop.permute.xlu0 %5765
      %5767 = vrot.lane.b32.xlu0 %v5705, 5
      %v5768 = vpop.permute.xlu0 %5767
      %5769 = vrot.lane.b32.xlu0 %v5706, 5
      %v5770 = vpop.permute.xlu0 %5769
      %5771 = vrot.lane.b32.xlu0 %v5707, 5
      %v5772 = vpop.permute.xlu0 %5771
      %5773 = vrot.lane.b32.xlu0 %v5708, 5
      %v5774 = vpop.permute.xlu0 %5773
      %5775 = vrot.lane.b32.xlu0 %v5709, 5
      %v5776 = vpop.permute.xlu0 %5775
      %5777 = vrot.lane.b32.xlu0 %v5710, 5
      %v5778 = vpop.permute.xlu0 %5777
      %5779 = vrot.lane.b32.xlu0 %v5711, 5
      %v5780 = vpop.permute.xlu0 %5779
      %5781 = vrot.lane.b32.xlu0 %v5712, 5
      %v5782 = vpop.permute.xlu0 %5781
      %5783 = vrot.lane.b32.xlu0 %v5713, 5
      %v5784 = vpop.permute.xlu0 %5783
      %5785 = vrot.lane.b32.xlu0 %v5714, 5
      %v5786 = vpop.permute.xlu0 %5785
      %5787 = vrot.lane.b32.xlu0 %v5715, 5
      %v5788 = vpop.permute.xlu0 %5787
      %5789 = vrot.lane.b32.xlu0 %v5716, 5
      %v5790 = vpop.permute.xlu0 %5789
      %5791 = vrot.lane.b32.xlu0 %v5717, 5
      %v5792 = vpop.permute.xlu0 %5791
      %5793 = vrot.lane.b32.xlu0 %v5718, 5
      %v5794 = vpop.permute.xlu0 %5793
      %5795 = vrot.lane.b32.xlu0 %v5719, 5
      %v5796 = vpop.permute.xlu0 %5795
      %5797 = vrot.lane.b32.xlu0 %v5720, 5
      %v5798 = vpop.permute.xlu0 %5797
      %5799 = vrot.lane.b32.xlu0 %v5721, 5
      %v5800 = vpop.permute.xlu0 %5799
      %5801 = vrot.lane.b32.xlu0 %v5722, 5
      %v5802 = vpop.permute.xlu0 %5801
      %5803 = vrot.lane.b32.xlu0 %v5723, 5
      %v5804 = vpop.permute.xlu0 %5803
      %5805 = vrot.lane.b32.xlu0 %v5724, 5
      %v5806 = vpop.permute.xlu0 %5805
      %5807 = vrot.lane.b32.xlu0 %v5725, 5
      %v5808 = vpop.permute.xlu0 %5807
      %5809 = vrot.lane.b32.xlu0 %v5726, 5
      %v5810 = vpop.permute.xlu0 %5809
      %5811 = vrot.lane.b32.xlu0 %v5727, 5
      %v5812 = vpop.permute.xlu0 %5811
      %5813 = vrot.lane.b32.xlu0 %v5728, 5
      %v5814 = vpop.permute.xlu0 %5813
      %5815 = vrot.lane.b32.xlu0 %v5729, 5
      %v5816 = vpop.permute.xlu0 %5815
      %5817 = vrot.lane.b32.xlu0 %v5730, 5
      %v5818 = vpop.permute.xlu0 %5817
      %5819 = vrot.lane.b32.xlu0 %v5731, 5
      %v5820 = vpop.permute.xlu0 %5819
      %5821 = vrot.lane.b32.xlu0 %v5732, 5
      %v5822 = vpop.permute.xlu0 %5821
      %v5823 = vsel %vm3219, %v5764, %v5766
      %v5824 = vsel %vm3219, %v5766, %v5768
      %v5825 = vsel %vm3219, %v5768, %v5770
      %v5826 = vsel %vm3219, %v5770, %v5772
      %v5827 = vsel %vm3219, %v5772, %v5774
      %v5828 = vsel %vm3219, %v5774, %v5776
      %v5829 = vsel %vm3219, %v5776, %v5778
      %v5830 = vsel %vm3219, %v5778, %v5780
      %v5831 = vsel %vm3219, %v5780, %v5782
      %v5832 = vsel %vm3219, %v5782, %v5784
      %v5833 = vsel %vm3219, %v5784, %v5786
      %v5834 = vsel %vm3219, %v5786, %v5788
      %v5835 = vsel %vm3219, %v5788, %v5790
      %v5836 = vsel %vm3219, %v5790, %v5792
      %v5837 = vsel %vm3219, %v5792, %v5794
      %v5838 = vsel %vm3219, %v5794, %v5796
      %v5839 = vsel %vm3219, %v5796, %v5798
      %v5840 = vsel %vm3219, %v5798, %v5800
      %v5841 = vsel %vm3219, %v5800, %v5802
      %v5842 = vsel %vm3219, %v5802, %v5804
      %v5843 = vsel %vm3219, %v5804, %v5806
      %v5844 = vsel %vm3219, %v5806, %v5808
      %v5845 = vsel %vm3219, %v5808, %v5810
      %v5846 = vsel %vm3219, %v5810, %v5812
      %v5847 = vsel %vm3219, %v5812, %v5814
      %v5848 = vsel %vm3219, %v5814, %v5816
      %v5849 = vsel %vm3219, %v5816, %v5818
      %v5850 = vsel %vm3219, %v5818, %v5820
      %v5851 = vsel %vm3219, %v5820, %v5822
      %5881 = vst [vmem:[#allocation9 + $0x658] sm:$0xff] %v5823
      %5882 = vst [vmem:[#allocation9 + $0x660] sm:$0xff] %v5824
      %5883 = vst [vmem:[#allocation9 + $0x668] sm:$0xff] %v5825
      %5884 = vst [vmem:[#allocation9 + $0x670] sm:$0xff] %v5826
      %5885 = vst [vmem:[#allocation9 + $0x678] sm:$0xff] %v5827
      %5886 = vst [vmem:[#allocation9 + $0x680] sm:$0xff] %v5828
      %5887 = vst [vmem:[#allocation9 + $0x688] sm:$0xff] %v5829
      %5888 = vst [vmem:[#allocation9 + $0x690] sm:$0xff] %v5830
      %5889 = vst [vmem:[#allocation9 + $0x698] sm:$0xff] %v5831
      %5890 = vst [vmem:[#allocation9 + $0x6a0] sm:$0xff] %v5832
      %5891 = vst [vmem:[#allocation9 + $0x6a8] sm:$0xff] %v5833
      %5892 = vst [vmem:[#allocation9 + $0x6b0] sm:$0xff] %v5834
      %5893 = vst [vmem:[#allocation9 + $0x6b8] sm:$0xff] %v5835
      %5894 = vst [vmem:[#allocation9 + $0x6c0] sm:$0xff] %v5836
      %5895 = vst [vmem:[#allocation9 + $0x6c8] sm:$0xff] %v5837
      %5896 = vst [vmem:[#allocation9 + $0x6d0] sm:$0xff] %v5838
      %5897 = vst [vmem:[#allocation9 + $0x6d8] sm:$0xff] %v5839
      %5898 = vst [vmem:[#allocation9 + $0x6e0] sm:$0xff] %v5840
      %5899 = vst [vmem:[#allocation9 + $0x6e8] sm:$0xff] %v5841
      %5900 = vst [vmem:[#allocation9 + $0x6f0] sm:$0xff] %v5842
      %5901 = vst [vmem:[#allocation9 + $0x6f8] sm:$0xff] %v5843
      %5902 = vst [vmem:[#allocation9 + $0x700] sm:$0xff] %v5844
      %5903 = vst [vmem:[#allocation9 + $0x708] sm:$0xff] %v5845
      %5904 = vst [vmem:[#allocation9 + $0x710] sm:$0xff] %v5846
      %5905 = vst [vmem:[#allocation9 + $0x718] sm:$0xff] %v5847
      %5906 = vst [vmem:[#allocation9 + $0x720] sm:$0xff] %v5848
      %5907 = vst [vmem:[#allocation9 + $0x728] sm:$0xff] %v5849
      %5908 = vst [vmem:[#allocation9 + $0x730] sm:$0xff] %v5850
      %5909 = vst.msk [vmem:[#allocation9 + $0x738] sm:$0xff] %vm1877, %v5851
      %v5910 = vld [vmem:[#allocation3] sm:$0xff]
      %v5911 = vld [vmem:[#allocation3 + $0x8] sm:$0xff]
      %v5912 = vld [vmem:[#allocation3 + $0x10] sm:$0xff]
      %v5913 = vld [vmem:[#allocation3 + $0x18] sm:$0xff]
      %v5914 = vld [vmem:[#allocation3 + $0x20] sm:$0xff]
      %v5915 = vld [vmem:[#allocation3 + $0x28] sm:$0xff]
      %v5916 = vld [vmem:[#allocation3 + $0x30] sm:$0xff]
      %v5917 = vld [vmem:[#allocation3 + $0x38] sm:$0xff]
      %v5918 = vld [vmem:[#allocation3 + $0x40] sm:$0xff]
      %v5919 = vld [vmem:[#allocation3 + $0x48] sm:$0xff]
      %v5920 = vld [vmem:[#allocation3 + $0x50] sm:$0xff]
      %v5921 = vld [vmem:[#allocation3 + $0x58] sm:$0xff]
      %v5922 = vld [vmem:[#allocation3 + $0x60] sm:$0xff]
      %v5923 = vld [vmem:[#allocation3 + $0x68] sm:$0xff]
      %v5924 = vld [vmem:[#allocation3 + $0x70] sm:$0xff]
      %v5925 = vld [vmem:[#allocation3 + $0x78] sm:$0xff]
      %v5926 = vld [vmem:[#allocation3 + $0x80] sm:$0xff]
      %v5927 = vld [vmem:[#allocation3 + $0x88] sm:$0xff]
      %v5928 = vld [vmem:[#allocation3 + $0x90] sm:$0xff]
      %v5929 = vld [vmem:[#allocation3 + $0x98] sm:$0xff]
      %v5930 = vld [vmem:[#allocation3 + $0xa0] sm:$0xff]
      %v5931 = vld [vmem:[#allocation3 + $0xa8] sm:$0xff]
      %v5932 = vld [vmem:[#allocation3 + $0xb0] sm:$0xff]
      %v5933 = vld [vmem:[#allocation3 + $0xb8] sm:$0xff]
      %v5934 = vld [vmem:[#allocation3 + $0xc0] sm:$0xff]
      %v5935 = vld [vmem:[#allocation3 + $0xc8] sm:$0xff]
      %v5936 = vld [vmem:[#allocation3 + $0xd0] sm:$0xff]
      %v5937 = vld [vmem:[#allocation3 + $0xd8] sm:$0xff]
      %v5938 = vld [vmem:[#allocation3 + $0xe0] sm:$0xff]
      %v5939 = vld [vmem:[#allocation3 + $0xe8] sm:$0xff]
      %5970 = vrot.lane.b32.xlu0 %v5910, 4
      %v5971 = vpop.permute.xlu0 %5970
      %5972 = vrot.lane.b32.xlu0 %v5911, 4
      %v5973 = vpop.permute.xlu0 %5972
      %5974 = vrot.lane.b32.xlu0 %v5912, 4
      %v5975 = vpop.permute.xlu0 %5974
      %5976 = vrot.lane.b32.xlu0 %v5913, 4
      %v5977 = vpop.permute.xlu0 %5976
      %5978 = vrot.lane.b32.xlu0 %v5914, 4
      %v5979 = vpop.permute.xlu0 %5978
      %5980 = vrot.lane.b32.xlu0 %v5915, 4
      %v5981 = vpop.permute.xlu0 %5980
      %5982 = vrot.lane.b32.xlu0 %v5916, 4
      %v5983 = vpop.permute.xlu0 %5982
      %5984 = vrot.lane.b32.xlu0 %v5917, 4
      %v5985 = vpop.permute.xlu0 %5984
      %5986 = vrot.lane.b32.xlu0 %v5918, 4
      %v5987 = vpop.permute.xlu0 %5986
      %5988 = vrot.lane.b32.xlu0 %v5919, 4
      %v5989 = vpop.permute.xlu0 %5988
      %5990 = vrot.lane.b32.xlu0 %v5920, 4
      %v5991 = vpop.permute.xlu0 %5990
      %5992 = vrot.lane.b32.xlu0 %v5921, 4
      %v5993 = vpop.permute.xlu0 %5992
      %5994 = vrot.lane.b32.xlu0 %v5922, 4
      %v5995 = vpop.permute.xlu0 %5994
      %5996 = vrot.lane.b32.xlu0 %v5923, 4
      %v5997 = vpop.permute.xlu0 %5996
      %5998 = vrot.lane.b32.xlu0 %v5924, 4
      %v5999 = vpop.permute.xlu0 %5998
      %6000 = vrot.lane.b32.xlu0 %v5925, 4
      %v6001 = vpop.permute.xlu0 %6000
      %6002 = vrot.lane.b32.xlu0 %v5926, 4
      %v6003 = vpop.permute.xlu0 %6002
      %6004 = vrot.lane.b32.xlu0 %v5927, 4
      %v6005 = vpop.permute.xlu0 %6004
      %6006 = vrot.lane.b32.xlu0 %v5928, 4
      %v6007 = vpop.permute.xlu0 %6006
      %6008 = vrot.lane.b32.xlu0 %v5929, 4
      %v6009 = vpop.permute.xlu0 %6008
      %6010 = vrot.lane.b32.xlu0 %v5930, 4
      %v6011 = vpop.permute.xlu0 %6010
      %6012 = vrot.lane.b32.xlu0 %v5931, 4
      %v6013 = vpop.permute.xlu0 %6012
      %6014 = vrot.lane.b32.xlu0 %v5932, 4
      %v6015 = vpop.permute.xlu0 %6014
      %6016 = vrot.lane.b32.xlu0 %v5933, 4
      %v6017 = vpop.permute.xlu0 %6016
      %6018 = vrot.lane.b32.xlu0 %v5934, 4
      %v6019 = vpop.permute.xlu0 %6018
      %6020 = vrot.lane.b32.xlu0 %v5935, 4
      %v6021 = vpop.permute.xlu0 %6020
      %6022 = vrot.lane.b32.xlu0 %v5936, 4
      %v6023 = vpop.permute.xlu0 %6022
      %6024 = vrot.lane.b32.xlu0 %v5937, 4
      %v6025 = vpop.permute.xlu0 %6024
      %6026 = vrot.lane.b32.xlu0 %v5938, 4
      %v6027 = vpop.permute.xlu0 %6026
      %6028 = vrot.lane.b32.xlu0 %v5939, 4
      %v6029 = vpop.permute.xlu0 %6028
      %v6030 = vsel %vm3427, %v5971, %v5973
      %v6031 = vsel %vm3427, %v5973, %v5975
      %v6032 = vsel %vm3427, %v5975, %v5977
      %v6033 = vsel %vm3427, %v5977, %v5979
      %v6034 = vsel %vm3427, %v5979, %v5981
      %v6035 = vsel %vm3427, %v5981, %v5983
      %v6036 = vsel %vm3427, %v5983, %v5985
      %v6037 = vsel %vm3427, %v5985, %v5987
      %v6038 = vsel %vm3427, %v5987, %v5989
      %v6039 = vsel %vm3427, %v5989, %v5991
      %v6040 = vsel %vm3427, %v5991, %v5993
      %v6041 = vsel %vm3427, %v5993, %v5995
      %v6042 = vsel %vm3427, %v5995, %v5997
      %v6043 = vsel %vm3427, %v5997, %v5999
      %v6044 = vsel %vm3427, %v5999, %v6001
      %v6045 = vsel %vm3427, %v6001, %v6003
      %v6046 = vsel %vm3427, %v6003, %v6005
      %v6047 = vsel %vm3427, %v6005, %v6007
      %v6048 = vsel %vm3427, %v6007, %v6009
      %v6049 = vsel %vm3427, %v6009, %v6011
      %v6050 = vsel %vm3427, %v6011, %v6013
      %v6051 = vsel %vm3427, %v6013, %v6015
      %v6052 = vsel %vm3427, %v6015, %v6017
      %v6053 = vsel %vm3427, %v6017, %v6019
      %v6054 = vsel %vm3427, %v6019, %v6021
      %v6055 = vsel %vm3427, %v6021, %v6023
      %v6056 = vsel %vm3427, %v6023, %v6025
      %v6057 = vsel %vm3427, %v6025, %v6027
      %v6058 = vsel %vm3427, %v6027, %v6029
      %6088 = vst [vmem:[#allocation9 + $0x740] sm:$0xff] %v6030
      %6089 = vst [vmem:[#allocation9 + $0x748] sm:$0xff] %v6031
      %6090 = vst [vmem:[#allocation9 + $0x750] sm:$0xff] %v6032
      %6091 = vst [vmem:[#allocation9 + $0x758] sm:$0xff] %v6033
      %6092 = vst [vmem:[#allocation9 + $0x760] sm:$0xff] %v6034
      %6093 = vst [vmem:[#allocation9 + $0x768] sm:$0xff] %v6035
      %6094 = vst [vmem:[#allocation9 + $0x770] sm:$0xff] %v6036
      %6095 = vst [vmem:[#allocation9 + $0x778] sm:$0xff] %v6037
      %6096 = vst [vmem:[#allocation9 + $0x780] sm:$0xff] %v6038
      %6097 = vst [vmem:[#allocation9 + $0x788] sm:$0xff] %v6039
      %6098 = vst [vmem:[#allocation9 + $0x790] sm:$0xff] %v6040
      %6099 = vst [vmem:[#allocation9 + $0x798] sm:$0xff] %v6041
      %6100 = vst [vmem:[#allocation9 + $0x7a0] sm:$0xff] %v6042
      %6101 = vst [vmem:[#allocation9 + $0x7a8] sm:$0xff] %v6043
      %6102 = vst [vmem:[#allocation9 + $0x7b0] sm:$0xff] %v6044
      %6103 = vst [vmem:[#allocation9 + $0x7b8] sm:$0xff] %v6045
      %6104 = vst [vmem:[#allocation9 + $0x7c0] sm:$0xff] %v6046
      %6105 = vst [vmem:[#allocation9 + $0x7c8] sm:$0xff] %v6047
      %6106 = vst [vmem:[#allocation9 + $0x7d0] sm:$0xff] %v6048
      %6107 = vst [vmem:[#allocation9 + $0x7d8] sm:$0xff] %v6049
      %6108 = vst [vmem:[#allocation9 + $0x7e0] sm:$0xff] %v6050
      %6109 = vst [vmem:[#allocation9 + $0x7e8] sm:$0xff] %v6051
      %6110 = vst [vmem:[#allocation9 + $0x7f0] sm:$0xff] %v6052
      %6111 = vst [vmem:[#allocation9 + $0x7f8] sm:$0xff] %v6053
      %6112 = vst [vmem:[#allocation9 + $0x800] sm:$0xff] %v6054
      %6113 = vst [vmem:[#allocation9 + $0x808] sm:$0xff] %v6055
      %6114 = vst [vmem:[#allocation9 + $0x810] sm:$0xff] %v6056
      %6115 = vst [vmem:[#allocation9 + $0x818] sm:$0xff] %v6057
      %6116 = vst.msk [vmem:[#allocation9 + $0x820] sm:$0xff] %vm1877, %v6058
      %v6117 = vld [vmem:[%s1 + $0x10] sm:$0xff]
      %v6118 = vld [vmem:[#allocation9] sm:$0xff]
      %v6119 = vld [vmem:[#allocation9 + $0x8] sm:$0xff]
      %v6120 = vld [vmem:[#allocation9 + $0x10] sm:$0xff]
      %v6121 = vld [vmem:[#allocation9 + $0x18] sm:$0xff]
      %v6122 = vld [vmem:[#allocation9 + $0x20] sm:$0xff]
      %v6123 = vld [vmem:[#allocation9 + $0x28] sm:$0xff]
      %v6124 = vld [vmem:[#allocation9 + $0x30] sm:$0xff]
      %v6125 = vld [vmem:[#allocation9 + $0x38] sm:$0xff]
      %v6126 = vld [vmem:[#allocation9 + $0x40] sm:$0xff]
      %v6127 = vld [vmem:[#allocation9 + $0x48] sm:$0xff]
      %v6128 = vld [vmem:[#allocation9 + $0x50] sm:$0xff]
      %v6129 = vld [vmem:[#allocation9 + $0x58] sm:$0xff]
      %v6130 = vld [vmem:[#allocation9 + $0x60] sm:$0xff]
      %v6131 = vld [vmem:[#allocation9 + $0x68] sm:$0xff]
      %v6132 = vld [vmem:[#allocation9 + $0x70] sm:$0xff]
      %v6133 = vld [vmem:[#allocation9 + $0x78] sm:$0xff]
      %v6134 = vld [vmem:[#allocation9 + $0x80] sm:$0xff]
      %v6135 = vld [vmem:[#allocation9 + $0x88] sm:$0xff]
      %v6136 = vld [vmem:[#allocation9 + $0x90] sm:$0xff]
      %v6137 = vld [vmem:[#allocation9 + $0x98] sm:$0xff]
      %v6138 = vld [vmem:[#allocation9 + $0xa0] sm:$0xff]
      %v6139 = vld [vmem:[#allocation9 + $0xa8] sm:$0xff]
      %v6140 = vld [vmem:[#allocation9 + $0xb0] sm:$0xff]
      %v6141 = vld [vmem:[#allocation9 + $0xb8] sm:$0xff]
      %v6142 = vld [vmem:[#allocation9 + $0xc0] sm:$0xff]
      %v6143 = vld [vmem:[#allocation9 + $0xc8] sm:$0xff]
      %v6144 = vld [vmem:[#allocation9 + $0xd0] sm:$0xff]
      %v6145 = vld [vmem:[#allocation9 + $0xd8] sm:$0xff]
      %v6146 = vld [vmem:[#allocation9 + $0xe0] sm:$0xff]
      %v6147 = vld [vmem:[#allocation9 + $0xe8] sm:$0xff]
      %v6148 = vld [vmem:[#allocation9 + $0xf0] sm:$0xff]
      %v6149 = vld [vmem:[#allocation9 + $0xf8] sm:$0xff]
      %v6150 = vld [vmem:[#allocation9 + $0x100] sm:$0xff]
      %v6151 = vld [vmem:[#allocation9 + $0x108] sm:$0xff]
      %v6152 = vld [vmem:[#allocation9 + $0x110] sm:$0xff]
      %v6153 = vld [vmem:[#allocation9 + $0x118] sm:$0xff]
      %v6154 = vld [vmem:[#allocation9 + $0x120] sm:$0xff]
      %v6155 = vld [vmem:[#allocation9 + $0x128] sm:$0xff]
      %v6156 = vld [vmem:[#allocation9 + $0x130] sm:$0xff]
      %v6157 = vld [vmem:[#allocation9 + $0x138] sm:$0xff]
      %v6158 = vld [vmem:[#allocation9 + $0x140] sm:$0xff]
      %v6159 = vld [vmem:[#allocation9 + $0x148] sm:$0xff]
      %v6160 = vld [vmem:[#allocation9 + $0x150] sm:$0xff]
      %v6161 = vld [vmem:[#allocation9 + $0x158] sm:$0xff]
      %v6162 = vld [vmem:[#allocation9 + $0x160] sm:$0xff]
      %v6163 = vld [vmem:[#allocation9 + $0x168] sm:$0xff]
      %v6164 = vld [vmem:[#allocation9 + $0x170] sm:$0xff]
      %v6165 = vld [vmem:[#allocation9 + $0x178] sm:$0xff]
      %v6166 = vld [vmem:[#allocation9 + $0x180] sm:$0xff]
      %v6167 = vld [vmem:[#allocation9 + $0x188] sm:$0xff]
      %v6168 = vld [vmem:[#allocation9 + $0x190] sm:$0xff]
      %v6169 = vld [vmem:[#allocation9 + $0x198] sm:$0xff]
      %v6170 = vld [vmem:[#allocation9 + $0x1a0] sm:$0xff]
      %v6171 = vld [vmem:[#allocation9 + $0x1a8] sm:$0xff]
      %v6172 = vld [vmem:[#allocation9 + $0x1b0] sm:$0xff]
      %v6173 = vld [vmem:[#allocation9 + $0x1b8] sm:$0xff]
      %v6174 = vld [vmem:[#allocation9 + $0x1c0] sm:$0xff]
      %v6175 = vld [vmem:[#allocation9 + $0x1c8] sm:$0xff]
      %v6176 = vld [vmem:[#allocation9 + $0x1d0] sm:$0xff]
      %v6177 = vld [vmem:[#allocation9 + $0x1d8] sm:$0xff]
      %v6178 = vld [vmem:[#allocation9 + $0x1e0] sm:$0xff]
      %v6179 = vld [vmem:[#allocation9 + $0x1e8] sm:$0xff]
      %v6180 = vld [vmem:[#allocation9 + $0x1f0] sm:$0xff]
      %v6181 = vld [vmem:[#allocation9 + $0x1f8] sm:$0xff]
      %v6182 = vld [vmem:[#allocation9 + $0x200] sm:$0xff]
      %v6183 = vld [vmem:[#allocation9 + $0x208] sm:$0xff]
      %v6184 = vld [vmem:[#allocation9 + $0x210] sm:$0xff]
      %v6185 = vld [vmem:[#allocation9 + $0x218] sm:$0xff]
      %v6186 = vld [vmem:[#allocation9 + $0x220] sm:$0xff]
      %v6187 = vld [vmem:[#allocation9 + $0x228] sm:$0xff]
      %v6188 = vld [vmem:[#allocation9 + $0x230] sm:$0xff]
      %v6189 = vld [vmem:[#allocation9 + $0x238] sm:$0xff]
      %v6190 = vld [vmem:[#allocation9 + $0x240] sm:$0xff]
      %v6191 = vld [vmem:[#allocation9 + $0x248] sm:$0xff]
      %v6192 = vld [vmem:[#allocation9 + $0x250] sm:$0xff]
      %v6193 = vld [vmem:[#allocation9 + $0x258] sm:$0xff]
      %v6194 = vld [vmem:[#allocation9 + $0x260] sm:$0xff]
      %v6195 = vld [vmem:[#allocation9 + $0x268] sm:$0xff]
      %v6196 = vld [vmem:[#allocation9 + $0x270] sm:$0xff]
      %v6197 = vld [vmem:[#allocation9 + $0x278] sm:$0xff]
      %v6198 = vld [vmem:[#allocation9 + $0x280] sm:$0xff]
      %v6199 = vld [vmem:[#allocation9 + $0x288] sm:$0xff]
      %v6200 = vld [vmem:[#allocation9 + $0x290] sm:$0xff]
      %v6201 = vld [vmem:[#allocation9 + $0x298] sm:$0xff]
      %v6202 = vld [vmem:[#allocation9 + $0x2a0] sm:$0xff]
      %v6203 = vld [vmem:[#allocation9 + $0x2a8] sm:$0xff]
      %v6204 = vld [vmem:[#allocation9 + $0x2b0] sm:$0xff]
      %v6205 = vld [vmem:[#allocation9 + $0x2b8] sm:$0xff]
      %v6206 = vld [vmem:[#allocation9 + $0x2c0] sm:$0xff]
      %v6207 = vld [vmem:[#allocation9 + $0x2c8] sm:$0xff]
      %v6208 = vld [vmem:[#allocation9 + $0x2d0] sm:$0xff]
      %v6209 = vld [vmem:[#allocation9 + $0x2d8] sm:$0xff]
      %v6210 = vld [vmem:[#allocation9 + $0x2e0] sm:$0xff]
      %v6211 = vld [vmem:[#allocation9 + $0x2e8] sm:$0xff]
      %v6212 = vld [vmem:[#allocation9 + $0x2f0] sm:$0xff]
      %v6213 = vld [vmem:[#allocation9 + $0x2f8] sm:$0xff]
      %v6214 = vld [vmem:[#allocation9 + $0x300] sm:$0xff]
      %v6215 = vld [vmem:[#allocation9 + $0x308] sm:$0xff]
      %v6216 = vld [vmem:[#allocation9 + $0x310] sm:$0xff]
      %v6217 = vld [vmem:[#allocation9 + $0x318] sm:$0xff]
      %v6218 = vld [vmem:[#allocation9 + $0x320] sm:$0xff]
      %v6219 = vld [vmem:[#allocation9 + $0x328] sm:$0xff]
      %v6220 = vld [vmem:[#allocation9 + $0x330] sm:$0xff]
      %v6221 = vld [vmem:[#allocation9 + $0x338] sm:$0xff]
      %v6222 = vld [vmem:[#allocation9 + $0x340] sm:$0xff]
      %v6223 = vld [vmem:[#allocation9 + $0x348] sm:$0xff]
      %v6224 = vld [vmem:[#allocation9 + $0x350] sm:$0xff]
      %v6225 = vld [vmem:[#allocation9 + $0x358] sm:$0xff]
      %v6226 = vld [vmem:[#allocation9 + $0x360] sm:$0xff]
      %v6227 = vld [vmem:[#allocation9 + $0x368] sm:$0xff]
      %v6228 = vld [vmem:[#allocation9 + $0x370] sm:$0xff]
      %v6229 = vld [vmem:[#allocation9 + $0x378] sm:$0xff]
      %v6230 = vld [vmem:[#allocation9 + $0x380] sm:$0xff]
      %v6231 = vld [vmem:[#allocation9 + $0x388] sm:$0xff]
      %v6232 = vld [vmem:[#allocation9 + $0x390] sm:$0xff]
      %v6233 = vld [vmem:[#allocation9 + $0x398] sm:$0xff]
      %v6234 = vld [vmem:[#allocation9 + $0x3a0] sm:$0xff]
      %v6235 = vld [vmem:[#allocation9 + $0x3a8] sm:$0xff]
      %v6236 = vld [vmem:[#allocation9 + $0x3b0] sm:$0xff]
      %v6237 = vld [vmem:[#allocation9 + $0x3b8] sm:$0xff]
      %v6238 = vld [vmem:[#allocation9 + $0x3c0] sm:$0xff]
      %v6239 = vld [vmem:[#allocation9 + $0x3c8] sm:$0xff]
      %v6240 = vld [vmem:[#allocation9 + $0x3d0] sm:$0xff]
      %v6241 = vld [vmem:[#allocation9 + $0x3d8] sm:$0xff]
      %v6242 = vld [vmem:[#allocation9 + $0x3e0] sm:$0xff]
      %v6243 = vld [vmem:[#allocation9 + $0x3e8] sm:$0xff]
      %v6244 = vld [vmem:[#allocation9 + $0x3f0] sm:$0xff]
      %v6245 = vld [vmem:[#allocation9 + $0x3f8] sm:$0xff]
      %v6246 = vld [vmem:[#allocation9 + $0x400] sm:$0xff]
      %v6247 = vld [vmem:[#allocation9 + $0x408] sm:$0xff]
      %v6248 = vld [vmem:[#allocation9 + $0x410] sm:$0xff]
      %v6249 = vld [vmem:[#allocation9 + $0x418] sm:$0xff]
      %v6250 = vld [vmem:[#allocation9 + $0x420] sm:$0xff]
      %v6251 = vld [vmem:[#allocation9 + $0x428] sm:$0xff]
      %v6252 = vld [vmem:[#allocation9 + $0x430] sm:$0xff]
      %v6253 = vld [vmem:[#allocation9 + $0x438] sm:$0xff]
      %v6254 = vld [vmem:[#allocation9 + $0x440] sm:$0xff]
      %v6255 = vld [vmem:[#allocation9 + $0x448] sm:$0xff]
      %v6256 = vld [vmem:[#allocation9 + $0x450] sm:$0xff]
      %v6257 = vld [vmem:[#allocation9 + $0x458] sm:$0xff]
      %v6258 = vld [vmem:[#allocation9 + $0x460] sm:$0xff]
      %v6259 = vld [vmem:[#allocation9 + $0x468] sm:$0xff]
      %v6260 = vld [vmem:[#allocation9 + $0x470] sm:$0xff]
      %v6261 = vld [vmem:[#allocation9 + $0x478] sm:$0xff]
      %v6262 = vld [vmem:[#allocation9 + $0x480] sm:$0xff]
      %v6263 = vld [vmem:[#allocation9 + $0x488] sm:$0xff]
      %v6264 = vld [vmem:[#allocation9 + $0x490] sm:$0xff]
      %v6265 = vld [vmem:[#allocation9 + $0x498] sm:$0xff]
      %v6266 = vld [vmem:[#allocation9 + $0x4a0] sm:$0xff]
      %v6267 = vld [vmem:[#allocation9 + $0x4a8] sm:$0xff]
      %v6268 = vld [vmem:[#allocation9 + $0x4b0] sm:$0xff]
      %v6269 = vld [vmem:[#allocation9 + $0x4b8] sm:$0xff]
      %v6270 = vld [vmem:[#allocation9 + $0x4c0] sm:$0xff]
      %v6271 = vld [vmem:[#allocation9 + $0x4c8] sm:$0xff]
      %v6272 = vld [vmem:[#allocation9 + $0x4d0] sm:$0xff]
      %v6273 = vld [vmem:[#allocation9 + $0x4d8] sm:$0xff]
      %v6274 = vld [vmem:[#allocation9 + $0x4e0] sm:$0xff]
      %v6275 = vld [vmem:[#allocation9 + $0x4e8] sm:$0xff]
      %v6276 = vld [vmem:[#allocation9 + $0x4f0] sm:$0xff]
      %v6277 = vld [vmem:[#allocation9 + $0x4f8] sm:$0xff]
      %v6278 = vld [vmem:[#allocation9 + $0x500] sm:$0xff]
      %v6279 = vld [vmem:[#allocation9 + $0x508] sm:$0xff]
      %v6280 = vld [vmem:[#allocation9 + $0x510] sm:$0xff]
      %v6281 = vld [vmem:[#allocation9 + $0x518] sm:$0xff]
      %v6282 = vld [vmem:[#allocation9 + $0x520] sm:$0xff]
      %v6283 = vld [vmem:[#allocation9 + $0x528] sm:$0xff]
      %v6284 = vld [vmem:[#allocation9 + $0x530] sm:$0xff]
      %v6285 = vld [vmem:[#allocation9 + $0x538] sm:$0xff]
      %v6286 = vld [vmem:[#allocation9 + $0x540] sm:$0xff]
      %v6287 = vld [vmem:[#allocation9 + $0x548] sm:$0xff]
      %v6288 = vld [vmem:[#allocation9 + $0x550] sm:$0xff]
      %v6289 = vld [vmem:[#allocation9 + $0x558] sm:$0xff]
      %v6290 = vld [vmem:[#allocation9 + $0x560] sm:$0xff]
      %v6291 = vld [vmem:[#allocation9 + $0x568] sm:$0xff]
      %v6292 = vld [vmem:[#allocation9 + $0x570] sm:$0xff]
      %v6293 = vld [vmem:[#allocation9 + $0x578] sm:$0xff]
      %v6294 = vld [vmem:[#allocation9 + $0x580] sm:$0xff]
      %v6295 = vld [vmem:[#allocation9 + $0x588] sm:$0xff]
      %v6296 = vld [vmem:[#allocation9 + $0x590] sm:$0xff]
      %v6297 = vld [vmem:[#allocation9 + $0x598] sm:$0xff]
      %v6298 = vld [vmem:[#allocation9 + $0x5a0] sm:$0xff]
      %v6299 = vld [vmem:[#allocation9 + $0x5a8] sm:$0xff]
      %v6300 = vld [vmem:[#allocation9 + $0x5b0] sm:$0xff]
      %v6301 = vld [vmem:[#allocation9 + $0x5b8] sm:$0xff]
      %v6302 = vld [vmem:[#allocation9 + $0x5c0] sm:$0xff]
      %v6303 = vld [vmem:[#allocation9 + $0x5c8] sm:$0xff]
      %v6304 = vld [vmem:[#allocation9 + $0x5d0] sm:$0xff]
      %v6305 = vld [vmem:[#allocation9 + $0x5d8] sm:$0xff]
      %v6306 = vld [vmem:[#allocation9 + $0x5e0] sm:$0xff]
      %v6307 = vld [vmem:[#allocation9 + $0x5e8] sm:$0xff]
      %v6308 = vld [vmem:[#allocation9 + $0x5f0] sm:$0xff]
      %v6309 = vld [vmem:[#allocation9 + $0x5f8] sm:$0xff]
      %v6310 = vld [vmem:[#allocation9 + $0x600] sm:$0xff]
      %v6311 = vld [vmem:[#allocation9 + $0x608] sm:$0xff]
      %v6312 = vld [vmem:[#allocation9 + $0x610] sm:$0xff]
      %v6313 = vld [vmem:[#allocation9 + $0x618] sm:$0xff]
      %v6314 = vld [vmem:[#allocation9 + $0x620] sm:$0xff]
      %v6315 = vld [vmem:[#allocation9 + $0x628] sm:$0xff]
      %v6316 = vld [vmem:[#allocation9 + $0x630] sm:$0xff]
      %v6317 = vld [vmem:[#allocation9 + $0x638] sm:$0xff]
      %v6318 = vld [vmem:[#allocation9 + $0x640] sm:$0xff]
      %v6319 = vld [vmem:[#allocation9 + $0x648] sm:$0xff]
      %v6320 = vld [vmem:[#allocation9 + $0x650] sm:$0xff]
      %v6321 = vld [vmem:[#allocation9 + $0x658] sm:$0xff]
      %v6322 = vld [vmem:[#allocation9 + $0x660] sm:$0xff]
      %v6323 = vld [vmem:[#allocation9 + $0x668] sm:$0xff]
      %v6324 = vld [vmem:[#allocation9 + $0x670] sm:$0xff]
      %v6325 = vld [vmem:[#allocation9 + $0x678] sm:$0xff]
      %v6326 = vld [vmem:[#allocation9 + $0x680] sm:$0xff]
      %v6327 = vld [vmem:[#allocation9 + $0x688] sm:$0xff]
      %v6328 = vld [vmem:[#allocation9 + $0x690] sm:$0xff]
      %v6329 = vld [vmem:[#allocation9 + $0x698] sm:$0xff]
      %v6330 = vld [vmem:[#allocation9 + $0x6a0] sm:$0xff]
      %v6331 = vld [vmem:[#allocation9 + $0x6a8] sm:$0xff]
      %v6332 = vld [vmem:[#allocation9 + $0x6b0] sm:$0xff]
      %v6333 = vld [vmem:[#allocation9 + $0x6b8] sm:$0xff]
      %v6334 = vld [vmem:[#allocation9 + $0x6c0] sm:$0xff]
      %v6335 = vld [vmem:[#allocation9 + $0x6c8] sm:$0xff]
      %v6336 = vld [vmem:[#allocation9 + $0x6d0] sm:$0xff]
      %v6337 = vld [vmem:[#allocation9 + $0x6d8] sm:$0xff]
      %v6338 = vld [vmem:[#allocation9 + $0x6e0] sm:$0xff]
      %v6339 = vld [vmem:[#allocation9 + $0x6e8] sm:$0xff]
      %v6340 = vld [vmem:[#allocation9 + $0x6f0] sm:$0xff]
      %v6341 = vld [vmem:[#allocation9 + $0x6f8] sm:$0xff]
      %v6342 = vld [vmem:[#allocation9 + $0x700] sm:$0xff]
      %v6343 = vld [vmem:[#allocation9 + $0x708] sm:$0xff]
      %v6344 = vld [vmem:[#allocation9 + $0x710] sm:$0xff]
      %v6345 = vld [vmem:[#allocation9 + $0x718] sm:$0xff]
      %v6346 = vld [vmem:[#allocation9 + $0x720] sm:$0xff]
      %v6347 = vld [vmem:[#allocation9 + $0x728] sm:$0xff]
      %v6348 = vld [vmem:[#allocation9 + $0x730] sm:$0xff]
      %v6349 = vld [vmem:[#allocation9 + $0x738] sm:$0xff]
      %v6350 = vld [vmem:[#allocation9 + $0x740] sm:$0xff]
      %v6351 = vld [vmem:[#allocation9 + $0x748] sm:$0xff]
      %v6352 = vld [vmem:[#allocation9 + $0x750] sm:$0xff]
      %v6353 = vld [vmem:[#allocation9 + $0x758] sm:$0xff]
      %v6354 = vld [vmem:[#allocation9 + $0x760] sm:$0xff]
      %v6355 = vld [vmem:[#allocation9 + $0x768] sm:$0xff]
      %v6356 = vld [vmem:[#allocation9 + $0x770] sm:$0xff]
      %v6357 = vld [vmem:[#allocation9 + $0x778] sm:$0xff]
      %v6358 = vld [vmem:[#allocation9 + $0x780] sm:$0xff]
      %v6359 = vld [vmem:[#allocation9 + $0x788] sm:$0xff]
      %v6360 = vld [vmem:[#allocation9 + $0x790] sm:$0xff]
      %v6361 = vld [vmem:[#allocation9 + $0x798] sm:$0xff]
      %v6362 = vld [vmem:[#allocation9 + $0x7a0] sm:$0xff]
      %v6363 = vld [vmem:[#allocation9 + $0x7a8] sm:$0xff]
      %v6364 = vld [vmem:[#allocation9 + $0x7b0] sm:$0xff]
      %v6365 = vld [vmem:[#allocation9 + $0x7b8] sm:$0xff]
      %v6366 = vld [vmem:[#allocation9 + $0x7c0] sm:$0xff]
      %v6367 = vld [vmem:[#allocation9 + $0x7c8] sm:$0xff]
      %v6368 = vld [vmem:[#allocation9 + $0x7d0] sm:$0xff]
      %v6369 = vld [vmem:[#allocation9 + $0x7d8] sm:$0xff]
      %v6370 = vld [vmem:[#allocation9 + $0x7e0] sm:$0xff]
      %v6371 = vld [vmem:[#allocation9 + $0x7e8] sm:$0xff]
      %v6372 = vld [vmem:[#allocation9 + $0x7f0] sm:$0xff]
      %v6373 = vld [vmem:[#allocation9 + $0x7f8] sm:$0xff]
      %v6374 = vld [vmem:[#allocation9 + $0x800] sm:$0xff]
      %v6375 = vld [vmem:[#allocation9 + $0x808] sm:$0xff]
      %v6376 = vld [vmem:[#allocation9 + $0x810] sm:$0xff]
      %v6377 = vld [vmem:[#allocation9 + $0x818] sm:$0xff]
      %v6378 = vld [vmem:[#allocation9 + $0x820] sm:$0xff]
      %v6379 = vld [vmem:[%s2 + $0x10] sm:$0xff]
      %6381 = vset.pattern.permute.xlu0 0
      %6382 = vperm.xlu0 %6381, %v6379
      %v6383 = vpop.permute.xlu0 %6382
      %v6386 = vsel %vm3783, %v6117, 0
      %6388 = vmatpush.msra.mxu0 0.0
      %6389 = vmatpush.msra.mxu0 0.0
      %6390 = vmatpush.msra.mxu0 0.0
      %6391 = vmatpush.msra.mxu0 0.0
      %6392 = vmatpush.msra.mxu0 0.0
      %6393 = vmatpush.msra.mxu0 0.0
      %6394 = vmatpush.msra.mxu0 0.0
      %6395 = vmatpush.msra.mxu0 %v6350
      %6396 = vmatpush.msra.mxu0 %v6321
      %6397 = vmatpush.msra.mxu0 %v6292
      %6398 = vmatpush.msra.mxu0 %v6263
      %6399 = vmatpush.msra.mxu0 %v6234
      %6400 = vmatpush.msra.mxu0 %v6205
      %6401 = vmatpush.msra.mxu0 %v6176
      %6402 = vmatpush.msra.mxu0 %v6147
      %6403 = vmatpush.msra.mxu0 %v6118
      %6404 = vmatmul.f32.gmra.mxu0 %v6386
      %v6405 = vpop.f32.mrf.mxu0
      %v6406 = vadd.f32 %v6383, %v6405
      %6407 = vdwg.mxu0
      %6408 = vmatpush.msra.mxu0 0.0
      %6409 = vmatpush.msra.mxu0 0.0
      %6410 = vmatpush.msra.mxu0 0.0
      %6411 = vmatpush.msra.mxu0 0.0
      %6412 = vmatpush.msra.mxu0 0.0
      %6413 = vmatpush.msra.mxu0 0.0
      %6414 = vmatpush.msra.mxu0 0.0
      %6415 = vmatpush.msra.mxu0 %v6351
      %6416 = vmatpush.msra.mxu0 %v6322
      %6417 = vmatpush.msra.mxu0 %v6293
      %6418 = vmatpush.msra.mxu0 %v6264
      %6419 = vmatpush.msra.mxu0 %v6235
      %6420 = vmatpush.msra.mxu0 %v6206
      %6421 = vmatpush.msra.mxu0 %v6177
      %6422 = vmatpush.msra.mxu0 %v6148
      %6423 = vmatpush.msra.mxu0 %v6119
      %6424 = vmatmul.f32.gmra.mxu0 %v6386
      %v6425 = vpop.f32.mrf.mxu0
      %v6426 = vadd.f32 %v6383, %v6425
      %6427 = vdwg.mxu0
      %6428 = vmatpush.msra.mxu0 0.0
      %6429 = vmatpush.msra.mxu0 0.0
      %6430 = vmatpush.msra.mxu0 0.0
      %6431 = vmatpush.msra.mxu0 0.0
      %6432 = vmatpush.msra.mxu0 0.0
      %6433 = vmatpush.msra.mxu0 0.0
      %6434 = vmatpush.msra.mxu0 0.0
      %6435 = vmatpush.msra.mxu0 %v6352
      %6436 = vmatpush.msra.mxu0 %v6323
      %6437 = vmatpush.msra.mxu0 %v6294
      %6438 = vmatpush.msra.mxu0 %v6265
      %6439 = vmatpush.msra.mxu0 %v6236
      %6440 = vmatpush.msra.mxu0 %v6207
      %6441 = vmatpush.msra.mxu0 %v6178
      %6442 = vmatpush.msra.mxu0 %v6149
      %6443 = vmatpush.msra.mxu0 %v6120
      %6444 = vmatmul.f32.gmra.mxu0 %v6386
      %v6445 = vpop.f32.mrf.mxu0
      %v6446 = vadd.f32 %v6383, %v6445
      %6447 = vdwg.mxu0
      %6448 = vmatpush.msra.mxu0 0.0
      %6449 = vmatpush.msra.mxu0 0.0
      %6450 = vmatpush.msra.mxu0 0.0
      %6451 = vmatpush.msra.mxu0 0.0
      %6452 = vmatpush.msra.mxu0 0.0
      %6453 = vmatpush.msra.mxu0 0.0
      %6454 = vmatpush.msra.mxu0 0.0
      %6455 = vmatpush.msra.mxu0 %v6353
      %6456 = vmatpush.msra.mxu0 %v6324
      %6457 = vmatpush.msra.mxu0 %v6295
      %6458 = vmatpush.msra.mxu0 %v6266
      %6459 = vmatpush.msra.mxu0 %v6237
      %6460 = vmatpush.msra.mxu0 %v6208
      %6461 = vmatpush.msra.mxu0 %v6179
      %6462 = vmatpush.msra.mxu0 %v6150
      %6463 = vmatpush.msra.mxu0 %v6121
      %6464 = vmatmul.f32.gmra.mxu0 %v6386
      %v6465 = vpop.f32.mrf.mxu0
      %v6466 = vadd.f32 %v6383, %v6465
      %6467 = vdwg.mxu0
      %6468 = vmatpush.msra.mxu0 0.0
      %6469 = vmatpush.msra.mxu0 0.0
      %6470 = vmatpush.msra.mxu0 0.0
      %6471 = vmatpush.msra.mxu0 0.0
      %6472 = vmatpush.msra.mxu0 0.0
      %6473 = vmatpush.msra.mxu0 0.0
      %6474 = vmatpush.msra.mxu0 0.0
      %6475 = vmatpush.msra.mxu0 %v6354
      %6476 = vmatpush.msra.mxu0 %v6325
      %6477 = vmatpush.msra.mxu0 %v6296
      %6478 = vmatpush.msra.mxu0 %v6267
      %6479 = vmatpush.msra.mxu0 %v6238
      %6480 = vmatpush.msra.mxu0 %v6209
      %6481 = vmatpush.msra.mxu0 %v6180
      %6482 = vmatpush.msra.mxu0 %v6151
      %6483 = vmatpush.msra.mxu0 %v6122
      %6484 = vmatmul.f32.gmra.mxu0 %v6386
      %v6485 = vpop.f32.mrf.mxu0
      %v6486 = vadd.f32 %v6383, %v6485
      %6487 = vdwg.mxu0
      %6488 = vmatpush.msra.mxu0 0.0
      %6489 = vmatpush.msra.mxu0 0.0
      %6490 = vmatpush.msra.mxu0 0.0
      %6491 = vmatpush.msra.mxu0 0.0
      %6492 = vmatpush.msra.mxu0 0.0
      %6493 = vmatpush.msra.mxu0 0.0
      %6494 = vmatpush.msra.mxu0 0.0
      %6495 = vmatpush.msra.mxu0 %v6355
      %6496 = vmatpush.msra.mxu0 %v6326
      %6497 = vmatpush.msra.mxu0 %v6297
      %6498 = vmatpush.msra.mxu0 %v6268
      %6499 = vmatpush.msra.mxu0 %v6239
      %6500 = vmatpush.msra.mxu0 %v6210
      %6501 = vmatpush.msra.mxu0 %v6181
      %6502 = vmatpush.msra.mxu0 %v6152
      %6503 = vmatpush.msra.mxu0 %v6123
      %6504 = vmatmul.f32.gmra.mxu0 %v6386
      %v6505 = vpop.f32.mrf.mxu0
      %v6506 = vadd.f32 %v6383, %v6505
      %6507 = vdwg.mxu0
      %6508 = vmatpush.msra.mxu0 0.0
      %6509 = vmatpush.msra.mxu0 0.0
      %6510 = vmatpush.msra.mxu0 0.0
      %6511 = vmatpush.msra.mxu0 0.0
      %6512 = vmatpush.msra.mxu0 0.0
      %6513 = vmatpush.msra.mxu0 0.0
      %6514 = vmatpush.msra.mxu0 0.0
      %6515 = vmatpush.msra.mxu0 %v6356
      %6516 = vmatpush.msra.mxu0 %v6327
      %6517 = vmatpush.msra.mxu0 %v6298
      %6518 = vmatpush.msra.mxu0 %v6269
      %6519 = vmatpush.msra.mxu0 %v6240
      %6520 = vmatpush.msra.mxu0 %v6211
      %6521 = vmatpush.msra.mxu0 %v6182
      %6522 = vmatpush.msra.mxu0 %v6153
      %6523 = vmatpush.msra.mxu0 %v6124
      %6524 = vmatmul.f32.gmra.mxu0 %v6386
      %v6525 = vpop.f32.mrf.mxu0
      %v6526 = vadd.f32 %v6383, %v6525
      %6527 = vdwg.mxu0
      %6528 = vmatpush.msra.mxu0 0.0
      %6529 = vmatpush.msra.mxu0 0.0
      %6530 = vmatpush.msra.mxu0 0.0
      %6531 = vmatpush.msra.mxu0 0.0
      %6532 = vmatpush.msra.mxu0 0.0
      %6533 = vmatpush.msra.mxu0 0.0
      %6534 = vmatpush.msra.mxu0 0.0
      %6535 = vmatpush.msra.mxu0 %v6357
      %6536 = vmatpush.msra.mxu0 %v6328
      %6537 = vmatpush.msra.mxu0 %v6299
      %6538 = vmatpush.msra.mxu0 %v6270
      %6539 = vmatpush.msra.mxu0 %v6241
      %6540 = vmatpush.msra.mxu0 %v6212
      %6541 = vmatpush.msra.mxu0 %v6183
      %6542 = vmatpush.msra.mxu0 %v6154
      %6543 = vmatpush.msra.mxu0 %v6125
      %6544 = vmatmul.f32.gmra.mxu0 %v6386
      %v6545 = vpop.f32.mrf.mxu0
      %v6546 = vadd.f32 %v6383, %v6545
      %6547 = vdwg.mxu0
      %6548 = vmatpush.msra.mxu0 0.0
      %6549 = vmatpush.msra.mxu0 0.0
      %6550 = vmatpush.msra.mxu0 0.0
      %6551 = vmatpush.msra.mxu0 0.0
      %6552 = vmatpush.msra.mxu0 0.0
      %6553 = vmatpush.msra.mxu0 0.0
      %6554 = vmatpush.msra.mxu0 0.0
      %6555 = vmatpush.msra.mxu0 %v6358
      %6556 = vmatpush.msra.mxu0 %v6329
      %6557 = vmatpush.msra.mxu0 %v6300
      %6558 = vmatpush.msra.mxu0 %v6271
      %6559 = vmatpush.msra.mxu0 %v6242
      %6560 = vmatpush.msra.mxu0 %v6213
      %6561 = vmatpush.msra.mxu0 %v6184
      %6562 = vmatpush.msra.mxu0 %v6155
      %6563 = vmatpush.msra.mxu0 %v6126
      %6564 = vmatmul.f32.gmra.mxu0 %v6386
      %v6565 = vpop.f32.mrf.mxu0
      %v6566 = vadd.f32 %v6383, %v6565
      %6567 = vdwg.mxu0
      %6568 = vmatpush.msra.mxu0 0.0
      %6569 = vmatpush.msra.mxu0 0.0
      %6570 = vmatpush.msra.mxu0 0.0
      %6571 = vmatpush.msra.mxu0 0.0
      %6572 = vmatpush.msra.mxu0 0.0
      %6573 = vmatpush.msra.mxu0 0.0
      %6574 = vmatpush.msra.mxu0 0.0
      %6575 = vmatpush.msra.mxu0 %v6359
      %6576 = vmatpush.msra.mxu0 %v6330
      %6577 = vmatpush.msra.mxu0 %v6301
      %6578 = vmatpush.msra.mxu0 %v6272
      %6579 = vmatpush.msra.mxu0 %v6243
      %6580 = vmatpush.msra.mxu0 %v6214
      %6581 = vmatpush.msra.mxu0 %v6185
      %6582 = vmatpush.msra.mxu0 %v6156
      %6583 = vmatpush.msra.mxu0 %v6127
      %6584 = vmatmul.f32.gmra.mxu0 %v6386
      %v6585 = vpop.f32.mrf.mxu0
      %v6586 = vadd.f32 %v6383, %v6585
      %6587 = vdwg.mxu0
      %6588 = vmatpush.msra.mxu0 0.0
      %6589 = vmatpush.msra.mxu0 0.0
      %6590 = vmatpush.msra.mxu0 0.0
      %6591 = vmatpush.msra.mxu0 0.0
      %6592 = vmatpush.msra.mxu0 0.0
      %6593 = vmatpush.msra.mxu0 0.0
      %6594 = vmatpush.msra.mxu0 0.0
      %6595 = vmatpush.msra.mxu0 %v6360
      %6596 = vmatpush.msra.mxu0 %v6331
      %6597 = vmatpush.msra.mxu0 %v6302
      %6598 = vmatpush.msra.mxu0 %v6273
      %6599 = vmatpush.msra.mxu0 %v6244
      %6600 = vmatpush.msra.mxu0 %v6215
      %6601 = vmatpush.msra.mxu0 %v6186
      %6602 = vmatpush.msra.mxu0 %v6157
      %6603 = vmatpush.msra.mxu0 %v6128
      %6604 = vmatmul.f32.gmra.mxu0 %v6386
      %v6605 = vpop.f32.mrf.mxu0
      %v6606 = vadd.f32 %v6383, %v6605
      %6607 = vdwg.mxu0
      %6608 = vmatpush.msra.mxu0 0.0
      %6609 = vmatpush.msra.mxu0 0.0
      %6610 = vmatpush.msra.mxu0 0.0
      %6611 = vmatpush.msra.mxu0 0.0
      %6612 = vmatpush.msra.mxu0 0.0
      %6613 = vmatpush.msra.mxu0 0.0
      %6614 = vmatpush.msra.mxu0 0.0
      %6615 = vmatpush.msra.mxu0 %v6361
      %6616 = vmatpush.msra.mxu0 %v6332
      %6617 = vmatpush.msra.mxu0 %v6303
      %6618 = vmatpush.msra.mxu0 %v6274
      %6619 = vmatpush.msra.mxu0 %v6245
      %6620 = vmatpush.msra.mxu0 %v6216
      %6621 = vmatpush.msra.mxu0 %v6187
      %6622 = vmatpush.msra.mxu0 %v6158
      %6623 = vmatpush.msra.mxu0 %v6129
      %6624 = vmatmul.f32.gmra.mxu0 %v6386
      %v6625 = vpop.f32.mrf.mxu0
      %v6626 = vadd.f32 %v6383, %v6625
      %6627 = vdwg.mxu0
      %6628 = vmatpush.msra.mxu0 0.0
      %6629 = vmatpush.msra.mxu0 0.0
      %6630 = vmatpush.msra.mxu0 0.0
      %6631 = vmatpush.msra.mxu0 0.0
      %6632 = vmatpush.msra.mxu0 0.0
      %6633 = vmatpush.msra.mxu0 0.0
      %6634 = vmatpush.msra.mxu0 0.0
      %6635 = vmatpush.msra.mxu0 %v6362
      %6636 = vmatpush.msra.mxu0 %v6333
      %6637 = vmatpush.msra.mxu0 %v6304
      %6638 = vmatpush.msra.mxu0 %v6275
      %6639 = vmatpush.msra.mxu0 %v6246
      %6640 = vmatpush.msra.mxu0 %v6217
      %6641 = vmatpush.msra.mxu0 %v6188
      %6642 = vmatpush.msra.mxu0 %v6159
      %6643 = vmatpush.msra.mxu0 %v6130
      %6644 = vmatmul.f32.gmra.mxu0 %v6386
      %v6645 = vpop.f32.mrf.mxu0
      %v6646 = vadd.f32 %v6383, %v6645
      %6647 = vdwg.mxu0
      %6648 = vmatpush.msra.mxu0 0.0
      %6649 = vmatpush.msra.mxu0 0.0
      %6650 = vmatpush.msra.mxu0 0.0
      %6651 = vmatpush.msra.mxu0 0.0
      %6652 = vmatpush.msra.mxu0 0.0
      %6653 = vmatpush.msra.mxu0 0.0
      %6654 = vmatpush.msra.mxu0 0.0
      %6655 = vmatpush.msra.mxu0 %v6363
      %6656 = vmatpush.msra.mxu0 %v6334
      %6657 = vmatpush.msra.mxu0 %v6305
      %6658 = vmatpush.msra.mxu0 %v6276
      %6659 = vmatpush.msra.mxu0 %v6247
      %6660 = vmatpush.msra.mxu0 %v6218
      %6661 = vmatpush.msra.mxu0 %v6189
      %6662 = vmatpush.msra.mxu0 %v6160
      %6663 = vmatpush.msra.mxu0 %v6131
      %6664 = vmatmul.f32.gmra.mxu0 %v6386
      %v6665 = vpop.f32.mrf.mxu0
      %v6666 = vadd.f32 %v6383, %v6665
      %6667 = vdwg.mxu0
      %6668 = vmatpush.msra.mxu0 0.0
      %6669 = vmatpush.msra.mxu0 0.0
      %6670 = vmatpush.msra.mxu0 0.0
      %6671 = vmatpush.msra.mxu0 0.0
      %6672 = vmatpush.msra.mxu0 0.0
      %6673 = vmatpush.msra.mxu0 0.0
      %6674 = vmatpush.msra.mxu0 0.0
      %6675 = vmatpush.msra.mxu0 %v6364
      %6676 = vmatpush.msra.mxu0 %v6335
      %6677 = vmatpush.msra.mxu0 %v6306
      %6678 = vmatpush.msra.mxu0 %v6277
      %6679 = vmatpush.msra.mxu0 %v6248
      %6680 = vmatpush.msra.mxu0 %v6219
      %6681 = vmatpush.msra.mxu0 %v6190
      %6682 = vmatpush.msra.mxu0 %v6161
      %6683 = vmatpush.msra.mxu0 %v6132
      %6684 = vmatmul.f32.gmra.mxu0 %v6386
      %v6685 = vpop.f32.mrf.mxu0
      %v6686 = vadd.f32 %v6383, %v6685
      %6687 = vdwg.mxu0
      %6688 = vmatpush.msra.mxu0 0.0
      %6689 = vmatpush.msra.mxu0 0.0
      %6690 = vmatpush.msra.mxu0 0.0
      %6691 = vmatpush.msra.mxu0 0.0
      %6692 = vmatpush.msra.mxu0 0.0
      %6693 = vmatpush.msra.mxu0 0.0
      %6694 = vmatpush.msra.mxu0 0.0
      %6695 = vmatpush.msra.mxu0 %v6365
      %6696 = vmatpush.msra.mxu0 %v6336
      %6697 = vmatpush.msra.mxu0 %v6307
      %6698 = vmatpush.msra.mxu0 %v6278
      %6699 = vmatpush.msra.mxu0 %v6249
      %6700 = vmatpush.msra.mxu0 %v6220
      %6701 = vmatpush.msra.mxu0 %v6191
      %6702 = vmatpush.msra.mxu0 %v6162
      %6703 = vmatpush.msra.mxu0 %v6133
      %6704 = vmatmul.f32.gmra.mxu0 %v6386
      %v6705 = vpop.f32.mrf.mxu0
      %v6706 = vadd.f32 %v6383, %v6705
      %6707 = vdwg.mxu0
      %6708 = vmatpush.msra.mxu0 0.0
      %6709 = vmatpush.msra.mxu0 0.0
      %6710 = vmatpush.msra.mxu0 0.0
      %6711 = vmatpush.msra.mxu0 0.0
      %6712 = vmatpush.msra.mxu0 0.0
      %6713 = vmatpush.msra.mxu0 0.0
      %6714 = vmatpush.msra.mxu0 0.0
      %6715 = vmatpush.msra.mxu0 %v6366
      %6716 = vmatpush.msra.mxu0 %v6337
      %6717 = vmatpush.msra.mxu0 %v6308
      %6718 = vmatpush.msra.mxu0 %v6279
      %6719 = vmatpush.msra.mxu0 %v6250
      %6720 = vmatpush.msra.mxu0 %v6221
      %6721 = vmatpush.msra.mxu0 %v6192
      %6722 = vmatpush.msra.mxu0 %v6163
      %6723 = vmatpush.msra.mxu0 %v6134
      %6724 = vmatmul.f32.gmra.mxu0 %v6386
      %v6725 = vpop.f32.mrf.mxu0
      %v6726 = vadd.f32 %v6383, %v6725
      %6727 = vdwg.mxu0
      %6728 = vmatpush.msra.mxu0 0.0
      %6729 = vmatpush.msra.mxu0 0.0
      %6730 = vmatpush.msra.mxu0 0.0
      %6731 = vmatpush.msra.mxu0 0.0
      %6732 = vmatpush.msra.mxu0 0.0
      %6733 = vmatpush.msra.mxu0 0.0
      %6734 = vmatpush.msra.mxu0 0.0
      %6735 = vmatpush.msra.mxu0 %v6367
      %6736 = vmatpush.msra.mxu0 %v6338
      %6737 = vmatpush.msra.mxu0 %v6309
      %6738 = vmatpush.msra.mxu0 %v6280
      %6739 = vmatpush.msra.mxu0 %v6251
      %6740 = vmatpush.msra.mxu0 %v6222
      %6741 = vmatpush.msra.mxu0 %v6193
      %6742 = vmatpush.msra.mxu0 %v6164
      %6743 = vmatpush.msra.mxu0 %v6135
      %6744 = vmatmul.f32.gmra.mxu0 %v6386
      %v6745 = vpop.f32.mrf.mxu0
      %v6746 = vadd.f32 %v6383, %v6745
      %6747 = vdwg.mxu0
      %6748 = vmatpush.msra.mxu0 0.0
      %6749 = vmatpush.msra.mxu0 0.0
      %6750 = vmatpush.msra.mxu0 0.0
      %6751 = vmatpush.msra.mxu0 0.0
      %6752 = vmatpush.msra.mxu0 0.0
      %6753 = vmatpush.msra.mxu0 0.0
      %6754 = vmatpush.msra.mxu0 0.0
      %6755 = vmatpush.msra.mxu0 %v6368
      %6756 = vmatpush.msra.mxu0 %v6339
      %6757 = vmatpush.msra.mxu0 %v6310
      %6758 = vmatpush.msra.mxu0 %v6281
      %6759 = vmatpush.msra.mxu0 %v6252
      %6760 = vmatpush.msra.mxu0 %v6223
      %6761 = vmatpush.msra.mxu0 %v6194
      %6762 = vmatpush.msra.mxu0 %v6165
      %6763 = vmatpush.msra.mxu0 %v6136
      %6764 = vmatmul.f32.gmra.mxu0 %v6386
      %v6765 = vpop.f32.mrf.mxu0
      %v6766 = vadd.f32 %v6383, %v6765
      %6767 = vdwg.mxu0
      %6768 = vmatpush.msra.mxu0 0.0
      %6769 = vmatpush.msra.mxu0 0.0
      %6770 = vmatpush.msra.mxu0 0.0
      %6771 = vmatpush.msra.mxu0 0.0
      %6772 = vmatpush.msra.mxu0 0.0
      %6773 = vmatpush.msra.mxu0 0.0
      %6774 = vmatpush.msra.mxu0 0.0
      %6775 = vmatpush.msra.mxu0 %v6369
      %6776 = vmatpush.msra.mxu0 %v6340
      %6777 = vmatpush.msra.mxu0 %v6311
      %6778 = vmatpush.msra.mxu0 %v6282
      %6779 = vmatpush.msra.mxu0 %v6253
      %6780 = vmatpush.msra.mxu0 %v6224
      %6781 = vmatpush.msra.mxu0 %v6195
      %6782 = vmatpush.msra.mxu0 %v6166
      %6783 = vmatpush.msra.mxu0 %v6137
      %6784 = vmatmul.f32.gmra.mxu0 %v6386
      %v6785 = vpop.f32.mrf.mxu0
      %v6786 = vadd.f32 %v6383, %v6785
      %6787 = vdwg.mxu0
      %6788 = vmatpush.msra.mxu0 0.0
      %6789 = vmatpush.msra.mxu0 0.0
      %6790 = vmatpush.msra.mxu0 0.0
      %6791 = vmatpush.msra.mxu0 0.0
      %6792 = vmatpush.msra.mxu0 0.0
      %6793 = vmatpush.msra.mxu0 0.0
      %6794 = vmatpush.msra.mxu0 0.0
      %6795 = vmatpush.msra.mxu0 %v6370
      %6796 = vmatpush.msra.mxu0 %v6341
      %6797 = vmatpush.msra.mxu0 %v6312
      %6798 = vmatpush.msra.mxu0 %v6283
      %6799 = vmatpush.msra.mxu0 %v6254
      %6800 = vmatpush.msra.mxu0 %v6225
      %6801 = vmatpush.msra.mxu0 %v6196
      %6802 = vmatpush.msra.mxu0 %v6167
      %6803 = vmatpush.msra.mxu0 %v6138
      %6804 = vmatmul.f32.gmra.mxu0 %v6386
      %v6805 = vpop.f32.mrf.mxu0
      %v6806 = vadd.f32 %v6383, %v6805
      %6807 = vdwg.mxu0
      %6808 = vmatpush.msra.mxu0 0.0
      %6809 = vmatpush.msra.mxu0 0.0
      %6810 = vmatpush.msra.mxu0 0.0
      %6811 = vmatpush.msra.mxu0 0.0
      %6812 = vmatpush.msra.mxu0 0.0
      %6813 = vmatpush.msra.mxu0 0.0
      %6814 = vmatpush.msra.mxu0 0.0
      %6815 = vmatpush.msra.mxu0 %v6371
      %6816 = vmatpush.msra.mxu0 %v6342
      %6817 = vmatpush.msra.mxu0 %v6313
      %6818 = vmatpush.msra.mxu0 %v6284
      %6819 = vmatpush.msra.mxu0 %v6255
      %6820 = vmatpush.msra.mxu0 %v6226
      %6821 = vmatpush.msra.mxu0 %v6197
      %6822 = vmatpush.msra.mxu0 %v6168
      %6823 = vmatpush.msra.mxu0 %v6139
      %6824 = vmatmul.f32.gmra.mxu0 %v6386
      %v6825 = vpop.f32.mrf.mxu0
      %v6826 = vadd.f32 %v6383, %v6825
      %6827 = vdwg.mxu0
      %6828 = vmatpush.msra.mxu0 0.0
      %6829 = vmatpush.msra.mxu0 0.0
      %6830 = vmatpush.msra.mxu0 0.0
      %6831 = vmatpush.msra.mxu0 0.0
      %6832 = vmatpush.msra.mxu0 0.0
      %6833 = vmatpush.msra.mxu0 0.0
      %6834 = vmatpush.msra.mxu0 0.0
      %6835 = vmatpush.msra.mxu0 %v6372
      %6836 = vmatpush.msra.mxu0 %v6343
      %6837 = vmatpush.msra.mxu0 %v6314
      %6838 = vmatpush.msra.mxu0 %v6285
      %6839 = vmatpush.msra.mxu0 %v6256
      %6840 = vmatpush.msra.mxu0 %v6227
      %6841 = vmatpush.msra.mxu0 %v6198
      %6842 = vmatpush.msra.mxu0 %v6169
      %6843 = vmatpush.msra.mxu0 %v6140
      %6844 = vmatmul.f32.gmra.mxu0 %v6386
      %v6845 = vpop.f32.mrf.mxu0
      %v6846 = vadd.f32 %v6383, %v6845
      %6847 = vdwg.mxu0
      %6848 = vmatpush.msra.mxu0 0.0
      %6849 = vmatpush.msra.mxu0 0.0
      %6850 = vmatpush.msra.mxu0 0.0
      %6851 = vmatpush.msra.mxu0 0.0
      %6852 = vmatpush.msra.mxu0 0.0
      %6853 = vmatpush.msra.mxu0 0.0
      %6854 = vmatpush.msra.mxu0 0.0
      %6855 = vmatpush.msra.mxu0 %v6373
      %6856 = vmatpush.msra.mxu0 %v6344
      %6857 = vmatpush.msra.mxu0 %v6315
      %6858 = vmatpush.msra.mxu0 %v6286
      %6859 = vmatpush.msra.mxu0 %v6257
      %6860 = vmatpush.msra.mxu0 %v6228
      %6861 = vmatpush.msra.mxu0 %v6199
      %6862 = vmatpush.msra.mxu0 %v6170
      %6863 = vmatpush.msra.mxu0 %v6141
      %6864 = vmatmul.f32.gmra.mxu0 %v6386
      %v6865 = vpop.f32.mrf.mxu0
      %v6866 = vadd.f32 %v6383, %v6865
      %6867 = vdwg.mxu0
      %6868 = vmatpush.msra.mxu0 0.0
      %6869 = vmatpush.msra.mxu0 0.0
      %6870 = vmatpush.msra.mxu0 0.0
      %6871 = vmatpush.msra.mxu0 0.0
      %6872 = vmatpush.msra.mxu0 0.0
      %6873 = vmatpush.msra.mxu0 0.0
      %6874 = vmatpush.msra.mxu0 0.0
      %6875 = vmatpush.msra.mxu0 %v6374
      %6876 = vmatpush.msra.mxu0 %v6345
      %6877 = vmatpush.msra.mxu0 %v6316
      %6878 = vmatpush.msra.mxu0 %v6287
      %6879 = vmatpush.msra.mxu0 %v6258
      %6880 = vmatpush.msra.mxu0 %v6229
      %6881 = vmatpush.msra.mxu0 %v6200
      %6882 = vmatpush.msra.mxu0 %v6171
      %6883 = vmatpush.msra.mxu0 %v6142
      %6884 = vmatmul.f32.gmra.mxu0 %v6386
      %v6885 = vpop.f32.mrf.mxu0
      %v6886 = vadd.f32 %v6383, %v6885
      %6887 = vdwg.mxu0
      %6888 = vmatpush.msra.mxu0 0.0
      %6889 = vmatpush.msra.mxu0 0.0
      %6890 = vmatpush.msra.mxu0 0.0
      %6891 = vmatpush.msra.mxu0 0.0
      %6892 = vmatpush.msra.mxu0 0.0
      %6893 = vmatpush.msra.mxu0 0.0
      %6894 = vmatpush.msra.mxu0 0.0
      %6895 = vmatpush.msra.mxu0 %v6375
      %6896 = vmatpush.msra.mxu0 %v6346
      %6897 = vmatpush.msra.mxu0 %v6317
      %6898 = vmatpush.msra.mxu0 %v6288
      %6899 = vmatpush.msra.mxu0 %v6259
      %6900 = vmatpush.msra.mxu0 %v6230
      %6901 = vmatpush.msra.mxu0 %v6201
      %6902 = vmatpush.msra.mxu0 %v6172
      %6903 = vmatpush.msra.mxu0 %v6143
      %6904 = vmatmul.f32.gmra.mxu0 %v6386
      %v6905 = vpop.f32.mrf.mxu0
      %v6906 = vadd.f32 %v6383, %v6905
      %6907 = vdwg.mxu0
      %6908 = vmatpush.msra.mxu0 0.0
      %6909 = vmatpush.msra.mxu0 0.0
      %6910 = vmatpush.msra.mxu0 0.0
      %6911 = vmatpush.msra.mxu0 0.0
      %6912 = vmatpush.msra.mxu0 0.0
      %6913 = vmatpush.msra.mxu0 0.0
      %6914 = vmatpush.msra.mxu0 0.0
      %6915 = vmatpush.msra.mxu0 %v6376
      %6916 = vmatpush.msra.mxu0 %v6347
      %6917 = vmatpush.msra.mxu0 %v6318
      %6918 = vmatpush.msra.mxu0 %v6289
      %6919 = vmatpush.msra.mxu0 %v6260
      %6920 = vmatpush.msra.mxu0 %v6231
      %6921 = vmatpush.msra.mxu0 %v6202
      %6922 = vmatpush.msra.mxu0 %v6173
      %6923 = vmatpush.msra.mxu0 %v6144
      %6924 = vmatmul.f32.gmra.mxu0 %v6386
      %v6925 = vpop.f32.mrf.mxu0
      %v6926 = vadd.f32 %v6383, %v6925
      %6927 = vdwg.mxu0
      %6928 = vmatpush.msra.mxu0 0.0
      %6929 = vmatpush.msra.mxu0 0.0
      %6930 = vmatpush.msra.mxu0 0.0
      %6931 = vmatpush.msra.mxu0 0.0
      %6932 = vmatpush.msra.mxu0 0.0
      %6933 = vmatpush.msra.mxu0 0.0
      %6934 = vmatpush.msra.mxu0 0.0
      %6935 = vmatpush.msra.mxu0 %v6377
      %6936 = vmatpush.msra.mxu0 %v6348
      %6937 = vmatpush.msra.mxu0 %v6319
      %6938 = vmatpush.msra.mxu0 %v6290
      %6939 = vmatpush.msra.mxu0 %v6261
      %6940 = vmatpush.msra.mxu0 %v6232
      %6941 = vmatpush.msra.mxu0 %v6203
      %6942 = vmatpush.msra.mxu0 %v6174
      %6943 = vmatpush.msra.mxu0 %v6145
      %6944 = vmatmul.f32.gmra.mxu0 %v6386
      %v6945 = vpop.f32.mrf.mxu0
      %v6946 = vadd.f32 %v6383, %v6945
      %6947 = vdwg.mxu0
      %6948 = vmatpush.msra.mxu0 0.0
      %6949 = vmatpush.msra.mxu0 0.0
      %6950 = vmatpush.msra.mxu0 0.0
      %6951 = vmatpush.msra.mxu0 0.0
      %6952 = vmatpush.msra.mxu0 0.0
      %6953 = vmatpush.msra.mxu0 0.0
      %6954 = vmatpush.msra.mxu0 0.0
      %6955 = vmatpush.msra.mxu0 %v6378
      %6956 = vmatpush.msra.mxu0 %v6349
      %6957 = vmatpush.msra.mxu0 %v6320
      %6958 = vmatpush.msra.mxu0 %v6291
      %6959 = vmatpush.msra.mxu0 %v6262
      %6960 = vmatpush.msra.mxu0 %v6233
      %6961 = vmatpush.msra.mxu0 %v6204
      %6962 = vmatpush.msra.mxu0 %v6175
      %6963 = vmatpush.msra.mxu0 %v6146
      %6964 = vmatmul.f32.gmra.mxu0 %v6386
      %v6965 = vpop.f32.mrf.mxu0
      %v6966 = vadd.f32 %v6383, %v6965
      %6967 = vdwg.mxu0
      %v6968 = vmax.f32 %v6406, 0.0
      %v6969 = vmax.f32 %v6426, 0.0
      %v6970 = vmax.f32 %v6446, 0.0
      %v6971 = vmax.f32 %v6466, 0.0
      %v6972 = vmax.f32 %v6486, 0.0
      %v6973 = vmax.f32 %v6506, 0.0
      %v6974 = vmax.f32 %v6526, 0.0
      %v6975 = vmax.f32 %v6546, 0.0
      %v6976 = vmax.f32 %v6566, 0.0
      %v6977 = vmax.f32 %v6586, 0.0
      %v6978 = vmax.f32 %v6606, 0.0
      %v6979 = vmax.f32 %v6626, 0.0
      %v6980 = vmax.f32 %v6646, 0.0
      %v6981 = vmax.f32 %v6666, 0.0
      %v6982 = vmax.f32 %v6686, 0.0
      %v6983 = vmax.f32 %v6706, 0.0
      %v6984 = vmax.f32 %v6726, 0.0
      %v6985 = vmax.f32 %v6746, 0.0
      %v6986 = vmax.f32 %v6766, 0.0
      %v6987 = vmax.f32 %v6786, 0.0
      %v6988 = vmax.f32 %v6806, 0.0
      %v6989 = vmax.f32 %v6826, 0.0
      %v6990 = vmax.f32 %v6846, 0.0
      %v6991 = vmax.f32 %v6866, 0.0
      %v6992 = vmax.f32 %v6886, 0.0
      %v6993 = vmax.f32 %v6906, 0.0
      %v6994 = vmax.f32 %v6926, 0.0
      %v6995 = vmax.f32 %v6946, 0.0
      %v6996 = vmax.f32 %v6966, 0.0
      %6997 = vst [vmem:[#allocation4] sm:$0xff] %v6968
      %6998 = vst [vmem:[#allocation4 + $0x8] sm:$0xff] %v6969
      %6999 = vst [vmem:[#allocation4 + $0x10] sm:$0xff] %v6970
      %7000 = vst [vmem:[#allocation4 + $0x18] sm:$0xff] %v6971
      %7001 = vst [vmem:[#allocation4 + $0x20] sm:$0xff] %v6972
      %7002 = vst [vmem:[#allocation4 + $0x28] sm:$0xff] %v6973
      %7003 = vst [vmem:[#allocation4 + $0x30] sm:$0xff] %v6974
      %7004 = vst [vmem:[#allocation4 + $0x38] sm:$0xff] %v6975
      %7005 = vst [vmem:[#allocation4 + $0x40] sm:$0xff] %v6976
      %7006 = vst [vmem:[#allocation4 + $0x48] sm:$0xff] %v6977
      %7007 = vst [vmem:[#allocation4 + $0x50] sm:$0xff] %v6978
      %7008 = vst [vmem:[#allocation4 + $0x58] sm:$0xff] %v6979
      %7009 = vst [vmem:[#allocation4 + $0x60] sm:$0xff] %v6980
      %7010 = vst [vmem:[#allocation4 + $0x68] sm:$0xff] %v6981
      %7011 = vst [vmem:[#allocation4 + $0x70] sm:$0xff] %v6982
      %7012 = vst [vmem:[#allocation4 + $0x78] sm:$0xff] %v6983
      %7013 = vst [vmem:[#allocation4 + $0x80] sm:$0xff] %v6984
      %7014 = vst [vmem:[#allocation4 + $0x88] sm:$0xff] %v6985
      %7015 = vst [vmem:[#allocation4 + $0x90] sm:$0xff] %v6986
      %7016 = vst [vmem:[#allocation4 + $0x98] sm:$0xff] %v6987
      %7017 = vst [vmem:[#allocation4 + $0xa0] sm:$0xff] %v6988
      %7018 = vst [vmem:[#allocation4 + $0xa8] sm:$0xff] %v6989
      %7019 = vst [vmem:[#allocation4 + $0xb0] sm:$0xff] %v6990
      %7020 = vst [vmem:[#allocation4 + $0xb8] sm:$0xff] %v6991
      %7021 = vst [vmem:[#allocation4 + $0xc0] sm:$0xff] %v6992
      %7022 = vst [vmem:[#allocation4 + $0xc8] sm:$0xff] %v6993
      %7023 = vst [vmem:[#allocation4 + $0xd0] sm:$0xff] %v6994
      %7024 = vst [vmem:[#allocation4 + $0xd8] sm:$0xff] %v6995
      %7025 = vst.msk [vmem:[#allocation4 + $0xe0] sm:$0xff] %vm1877, %v6996
      %7026 = vst.msk [vmem:[#allocation4 + $0xe0] sm:$0xff] %vm4425, 0.0
      %7027 = vst.msk [vmem:[#allocation4 + $0xe8] sm:$0xff] %vm1818, 0.0
      %v7028 = vld [vmem:[#allocation4] sm:$0xff]
      %v7029 = vld [vmem:[#allocation4 + $0x8] sm:$0xff]
      %v7030 = vld [vmem:[#allocation4 + $0x10] sm:$0xff]
      %v7031 = vld [vmem:[#allocation4 + $0x18] sm:$0xff]
      %v7032 = vld [vmem:[#allocation4 + $0x20] sm:$0xff]
      %v7033 = vld [vmem:[#allocation4 + $0x28] sm:$0xff]
      %v7034 = vld [vmem:[#allocation4 + $0x30] sm:$0xff]
      %v7035 = vld [vmem:[#allocation4 + $0x38] sm:$0xff]
      %v7036 = vld [vmem:[#allocation4 + $0x40] sm:$0xff]
      %v7037 = vld [vmem:[#allocation4 + $0x48] sm:$0xff]
      %v7038 = vld [vmem:[#allocation4 + $0x50] sm:$0xff]
      %v7039 = vld [vmem:[#allocation4 + $0x58] sm:$0xff]
      %v7040 = vld [vmem:[#allocation4 + $0x60] sm:$0xff]
      %v7041 = vld [vmem:[#allocation4 + $0x68] sm:$0xff]
      %v7042 = vld [vmem:[#allocation4 + $0x70] sm:$0xff]
      %v7043 = vld [vmem:[#allocation4 + $0x78] sm:$0xff]
      %v7044 = vld [vmem:[#allocation4 + $0x80] sm:$0xff]
      %v7045 = vld [vmem:[#allocation4 + $0x88] sm:$0xff]
      %v7046 = vld [vmem:[#allocation4 + $0x90] sm:$0xff]
      %v7047 = vld [vmem:[#allocation4 + $0x98] sm:$0xff]
      %v7048 = vld [vmem:[#allocation4 + $0xa0] sm:$0xff]
      %v7049 = vld [vmem:[#allocation4 + $0xa8] sm:$0xff]
      %v7050 = vld [vmem:[#allocation4 + $0xb0] sm:$0xff]
      %v7051 = vld [vmem:[#allocation4 + $0xb8] sm:$0xff]
      %v7052 = vld [vmem:[#allocation4 + $0xc0] sm:$0xff]
      %v7053 = vld [vmem:[#allocation4 + $0xc8] sm:$0xff]
      %v7054 = vld [vmem:[#allocation4 + $0xd0] sm:$0xff]
      %7082 = vrot.lane.b32.xlu0 %v7028, 67
      %v7083 = vpop.permute.xlu0 %7082
      %7084 = vrot.lane.b32.xlu0 %v7029, 67
      %v7085 = vpop.permute.xlu0 %7084
      %7086 = vrot.lane.b32.xlu0 %v7030, 67
      %v7087 = vpop.permute.xlu0 %7086
      %7088 = vrot.lane.b32.xlu0 %v7031, 67
      %v7089 = vpop.permute.xlu0 %7088
      %7090 = vrot.lane.b32.xlu0 %v7032, 67
      %v7091 = vpop.permute.xlu0 %7090
      %7092 = vrot.lane.b32.xlu0 %v7033, 67
      %v7093 = vpop.permute.xlu0 %7092
      %7094 = vrot.lane.b32.xlu0 %v7034, 67
      %v7095 = vpop.permute.xlu0 %7094
      %7096 = vrot.lane.b32.xlu0 %v7035, 67
      %v7097 = vpop.permute.xlu0 %7096
      %7098 = vrot.lane.b32.xlu0 %v7036, 67
      %v7099 = vpop.permute.xlu0 %7098
      %7100 = vrot.lane.b32.xlu0 %v7037, 67
      %v7101 = vpop.permute.xlu0 %7100
      %7102 = vrot.lane.b32.xlu0 %v7038, 67
      %v7103 = vpop.permute.xlu0 %7102
      %7104 = vrot.lane.b32.xlu0 %v7039, 67
      %v7105 = vpop.permute.xlu0 %7104
      %7106 = vrot.lane.b32.xlu0 %v7040, 67
      %v7107 = vpop.permute.xlu0 %7106
      %7108 = vrot.lane.b32.xlu0 %v7041, 67
      %v7109 = vpop.permute.xlu0 %7108
      %7110 = vrot.lane.b32.xlu0 %v7042, 67
      %v7111 = vpop.permute.xlu0 %7110
      %7112 = vrot.lane.b32.xlu0 %v7043, 67
      %v7113 = vpop.permute.xlu0 %7112
      %7114 = vrot.lane.b32.xlu0 %v7044, 67
      %v7115 = vpop.permute.xlu0 %7114
      %7116 = vrot.lane.b32.xlu0 %v7045, 67
      %v7117 = vpop.permute.xlu0 %7116
      %7118 = vrot.lane.b32.xlu0 %v7046, 67
      %v7119 = vpop.permute.xlu0 %7118
      %7120 = vrot.lane.b32.xlu0 %v7047, 67
      %v7121 = vpop.permute.xlu0 %7120
      %7122 = vrot.lane.b32.xlu0 %v7048, 67
      %v7123 = vpop.permute.xlu0 %7122
      %7124 = vrot.lane.b32.xlu0 %v7049, 67
      %v7125 = vpop.permute.xlu0 %7124
      %7126 = vrot.lane.b32.xlu0 %v7050, 67
      %v7127 = vpop.permute.xlu0 %7126
      %7128 = vrot.lane.b32.xlu0 %v7051, 67
      %v7129 = vpop.permute.xlu0 %7128
      %7130 = vrot.lane.b32.xlu0 %v7052, 67
      %v7131 = vpop.permute.xlu0 %7130
      %7132 = vrot.lane.b32.xlu0 %v7053, 67
      %v7133 = vpop.permute.xlu0 %7132
      %7134 = vrot.lane.b32.xlu0 %v7054, 67
      %v7135 = vpop.permute.xlu0 %7134
      %v7136 = vsel %vm755, %v7083, %v7085
      %v7137 = vsel %vm755, %v7085, %v7087
      %v7138 = vsel %vm755, %v7087, %v7089
      %v7139 = vsel %vm755, %v7089, %v7091
      %v7140 = vsel %vm755, %v7091, %v7093
      %v7141 = vsel %vm755, %v7093, %v7095
      %v7142 = vsel %vm755, %v7095, %v7097
      %v7143 = vsel %vm755, %v7097, %v7099
      %v7144 = vsel %vm755, %v7099, %v7101
      %v7145 = vsel %vm755, %v7101, %v7103
      %v7146 = vsel %vm755, %v7103, %v7105
      %v7147 = vsel %vm755, %v7105, %v7107
      %v7148 = vsel %vm755, %v7107, %v7109
      %v7149 = vsel %vm755, %v7109, %v7111
      %v7150 = vsel %vm755, %v7111, %v7113
      %v7151 = vsel %vm755, %v7113, %v7115
      %v7152 = vsel %vm755, %v7115, %v7117
      %v7153 = vsel %vm755, %v7117, %v7119
      %v7154 = vsel %vm755, %v7119, %v7121
      %v7155 = vsel %vm755, %v7121, %v7123
      %v7156 = vsel %vm755, %v7123, %v7125
      %v7157 = vsel %vm755, %v7125, %v7127
      %v7158 = vsel %vm755, %v7127, %v7129
      %v7159 = vsel %vm755, %v7129, %v7131
      %v7160 = vsel %vm755, %v7131, %v7133
      %v7161 = vsel %vm755, %v7133, %v7135
      %v7189 = vmax.f32 %v7028, %v7136
      %v7190 = vmax.f32 %v7029, %v7137
      %v7191 = vmax.f32 %v7030, %v7138
      %v7192 = vmax.f32 %v7031, %v7139
      %v7193 = vmax.f32 %v7032, %v7140
      %v7194 = vmax.f32 %v7033, %v7141
      %v7195 = vmax.f32 %v7034, %v7142
      %v7196 = vmax.f32 %v7035, %v7143
      %v7197 = vmax.f32 %v7036, %v7144
      %v7198 = vmax.f32 %v7037, %v7145
      %v7199 = vmax.f32 %v7038, %v7146
      %v7200 = vmax.f32 %v7039, %v7147
      %v7201 = vmax.f32 %v7040, %v7148
      %v7202 = vmax.f32 %v7041, %v7149
      %v7203 = vmax.f32 %v7042, %v7150
      %v7204 = vmax.f32 %v7043, %v7151
      %v7205 = vmax.f32 %v7044, %v7152
      %v7206 = vmax.f32 %v7045, %v7153
      %v7207 = vmax.f32 %v7046, %v7154
      %v7208 = vmax.f32 %v7047, %v7155
      %v7209 = vmax.f32 %v7048, %v7156
      %v7210 = vmax.f32 %v7049, %v7157
      %v7211 = vmax.f32 %v7050, %v7158
      %v7212 = vmax.f32 %v7051, %v7159
      %v7213 = vmax.f32 %v7052, %v7160
      %v7214 = vmax.f32 %v7053, %v7161
      %v7215 = vmax.f32 %v7054, %v7135
      %7243 = vrot.lane.b32.xlu0 %v7189, 127
      %v7244 = vpop.permute.xlu0 %7243
      %7245 = vrot.lane.b32.xlu0 %v7190, 127
      %v7246 = vpop.permute.xlu0 %7245
      %7247 = vrot.lane.b32.xlu0 %v7191, 127
      %v7248 = vpop.permute.xlu0 %7247
      %7249 = vrot.lane.b32.xlu0 %v7192, 127
      %v7250 = vpop.permute.xlu0 %7249
      %7251 = vrot.lane.b32.xlu0 %v7193, 127
      %v7252 = vpop.permute.xlu0 %7251
      %7253 = vrot.lane.b32.xlu0 %v7194, 127
      %v7254 = vpop.permute.xlu0 %7253
      %7255 = vrot.lane.b32.xlu0 %v7195, 127
      %v7256 = vpop.permute.xlu0 %7255
      %7257 = vrot.lane.b32.xlu0 %v7196, 127
      %v7258 = vpop.permute.xlu0 %7257
      %7259 = vrot.lane.b32.xlu0 %v7197, 127
      %v7260 = vpop.permute.xlu0 %7259
      %7261 = vrot.lane.b32.xlu0 %v7198, 127
      %v7262 = vpop.permute.xlu0 %7261
      %7263 = vrot.lane.b32.xlu0 %v7199, 127
      %v7264 = vpop.permute.xlu0 %7263
      %7265 = vrot.lane.b32.xlu0 %v7200, 127
      %v7266 = vpop.permute.xlu0 %7265
      %7267 = vrot.lane.b32.xlu0 %v7201, 127
      %v7268 = vpop.permute.xlu0 %7267
      %7269 = vrot.lane.b32.xlu0 %v7202, 127
      %v7270 = vpop.permute.xlu0 %7269
      %7271 = vrot.lane.b32.xlu0 %v7203, 127
      %v7272 = vpop.permute.xlu0 %7271
      %7273 = vrot.lane.b32.xlu0 %v7204, 127
      %v7274 = vpop.permute.xlu0 %7273
      %7275 = vrot.lane.b32.xlu0 %v7205, 127
      %v7276 = vpop.permute.xlu0 %7275
      %7277 = vrot.lane.b32.xlu0 %v7206, 127
      %v7278 = vpop.permute.xlu0 %7277
      %7279 = vrot.lane.b32.xlu0 %v7207, 127
      %v7280 = vpop.permute.xlu0 %7279
      %7281 = vrot.lane.b32.xlu0 %v7208, 127
      %v7282 = vpop.permute.xlu0 %7281
      %7283 = vrot.lane.b32.xlu0 %v7209, 127
      %v7284 = vpop.permute.xlu0 %7283
      %7285 = vrot.lane.b32.xlu0 %v7210, 127
      %v7286 = vpop.permute.xlu0 %7285
      %7287 = vrot.lane.b32.xlu0 %v7211, 127
      %v7288 = vpop.permute.xlu0 %7287
      %7289 = vrot.lane.b32.xlu0 %v7212, 127
      %v7290 = vpop.permute.xlu0 %7289
      %7291 = vrot.lane.b32.xlu0 %v7213, 127
      %v7292 = vpop.permute.xlu0 %7291
      %7293 = vrot.lane.b32.xlu0 %v7214, 127
      %v7294 = vpop.permute.xlu0 %7293
      %7295 = vrot.lane.b32.xlu0 %v7215, 127
      %v7296 = vpop.permute.xlu0 %7295
      %v7297 = vsel %vm548, %v7244, %v7246
      %v7298 = vsel %vm548, %v7246, %v7248
      %v7299 = vsel %vm548, %v7248, %v7250
      %v7300 = vsel %vm548, %v7250, %v7252
      %v7301 = vsel %vm548, %v7252, %v7254
      %v7302 = vsel %vm548, %v7254, %v7256
      %v7303 = vsel %vm548, %v7256, %v7258
      %v7304 = vsel %vm548, %v7258, %v7260
      %v7305 = vsel %vm548, %v7260, %v7262
      %v7306 = vsel %vm548, %v7262, %v7264
      %v7307 = vsel %vm548, %v7264, %v7266
      %v7308 = vsel %vm548, %v7266, %v7268
      %v7309 = vsel %vm548, %v7268, %v7270
      %v7310 = vsel %vm548, %v7270, %v7272
      %v7311 = vsel %vm548, %v7272, %v7274
      %v7312 = vsel %vm548, %v7274, %v7276
      %v7313 = vsel %vm548, %v7276, %v7278
      %v7314 = vsel %vm548, %v7278, %v7280
      %v7315 = vsel %vm548, %v7280, %v7282
      %v7316 = vsel %vm548, %v7282, %v7284
      %v7317 = vsel %vm548, %v7284, %v7286
      %v7318 = vsel %vm548, %v7286, %v7288
      %v7319 = vsel %vm548, %v7288, %v7290
      %v7320 = vsel %vm548, %v7290, %v7292
      %v7321 = vsel %vm548, %v7292, %v7294
      %v7322 = vsel %vm548, %v7294, %v7296
      %v7350 = vmax.f32 %v7189, %v7297
      %v7351 = vmax.f32 %v7190, %v7298
      %v7352 = vmax.f32 %v7191, %v7299
      %v7353 = vmax.f32 %v7192, %v7300
      %v7354 = vmax.f32 %v7193, %v7301
      %v7355 = vmax.f32 %v7194, %v7302
      %v7356 = vmax.f32 %v7195, %v7303
      %v7357 = vmax.f32 %v7196, %v7304
      %v7358 = vmax.f32 %v7197, %v7305
      %v7359 = vmax.f32 %v7198, %v7306
      %v7360 = vmax.f32 %v7199, %v7307
      %v7361 = vmax.f32 %v7200, %v7308
      %v7362 = vmax.f32 %v7201, %v7309
      %v7363 = vmax.f32 %v7202, %v7310
      %v7364 = vmax.f32 %v7203, %v7311
      %v7365 = vmax.f32 %v7204, %v7312
      %v7366 = vmax.f32 %v7205, %v7313
      %v7367 = vmax.f32 %v7206, %v7314
      %v7368 = vmax.f32 %v7207, %v7315
      %v7369 = vmax.f32 %v7208, %v7316
      %v7370 = vmax.f32 %v7209, %v7317
      %v7371 = vmax.f32 %v7210, %v7318
      %v7372 = vmax.f32 %v7211, %v7319
      %v7373 = vmax.f32 %v7212, %v7320
      %v7374 = vmax.f32 %v7213, %v7321
      %v7375 = vmax.f32 %v7214, %v7322
      %v7376 = vmax.f32 %v7215, %v7296
      %7377 = vst [vmem:[#allocation3] sm:$0xff] %v7350
      %7378 = vst [vmem:[#allocation3 + $0x8] sm:$0xff] %v7351
      %7379 = vst [vmem:[#allocation3 + $0x10] sm:$0xff] %v7352
      %7380 = vst [vmem:[#allocation3 + $0x18] sm:$0xff] %v7353
      %7381 = vst [vmem:[#allocation3 + $0x20] sm:$0xff] %v7354
      %7382 = vst [vmem:[#allocation3 + $0x28] sm:$0xff] %v7355
      %7383 = vst [vmem:[#allocation3 + $0x30] sm:$0xff] %v7356
      %7384 = vst [vmem:[#allocation3 + $0x38] sm:$0xff] %v7357
      %7385 = vst [vmem:[#allocation3 + $0x40] sm:$0xff] %v7358
      %7386 = vst [vmem:[#allocation3 + $0x48] sm:$0xff] %v7359
      %7387 = vst [vmem:[#allocation3 + $0x50] sm:$0xff] %v7360
      %7388 = vst [vmem:[#allocation3 + $0x58] sm:$0xff] %v7361
      %7389 = vst [vmem:[#allocation3 + $0x60] sm:$0xff] %v7362
      %7390 = vst [vmem:[#allocation3 + $0x68] sm:$0xff] %v7363
      %7391 = vst [vmem:[#allocation3 + $0x70] sm:$0xff] %v7364
      %7392 = vst [vmem:[#allocation3 + $0x78] sm:$0xff] %v7365
      %7393 = vst [vmem:[#allocation3 + $0x80] sm:$0xff] %v7366
      %7394 = vst [vmem:[#allocation3 + $0x88] sm:$0xff] %v7367
      %7395 = vst [vmem:[#allocation3 + $0x90] sm:$0xff] %v7368
      %7396 = vst [vmem:[#allocation3 + $0x98] sm:$0xff] %v7369
      %7397 = vst [vmem:[#allocation3 + $0xa0] sm:$0xff] %v7370
      %7398 = vst [vmem:[#allocation3 + $0xa8] sm:$0xff] %v7371
      %7399 = vst [vmem:[#allocation3 + $0xb0] sm:$0xff] %v7372
      %7400 = vst [vmem:[#allocation3 + $0xb8] sm:$0xff] %v7373
      %7401 = vst [vmem:[#allocation3 + $0xc0] sm:$0xff] %v7374
      %7402 = vst [vmem:[#allocation3 + $0xc8] sm:$0xff] %v7375
      %vm7403 = vcmask 171008
      %7404 = vst.msk [vmem:[#allocation3 + $0xd0] sm:$0xff] %vm7403, %v7376
      %v7405 = vld [vmem:[#allocation3] sm:$0xff]
      %vm7406 = vcmask 449536
      %v7408 = vsel %vm7406, %v7405, 0
      %vm7410 = vcmask 1046528
      %v7412 = vsel %vm7410, %v202, 0
      %7414 = vmatpush.msra.mxu0 0.0
      %7415 = vmatpush.msra.mxu0 0.0
      %7416 = vmatpush.msra.mxu0 0.0
      %7417 = vmatpush.msra.mxu0 0.0
      %7418 = vmatpush.msra.mxu0 0.0
      %7419 = vmatpush.msra.mxu0 0.0
      %7420 = vmatpush.msra.mxu0 0.0
      %7421 = vmatpush.msra.mxu0 0.0
      %7422 = vmatpush.msra.mxu0 0.0
      %7423 = vmatpush.msra.mxu0 %v7412
      %7424 = vmatpush.msra.mxu0 %v201
      %7425 = vmatpush.msra.mxu0 %v200
      %7426 = vmatpush.msra.mxu0 %v199
      %7427 = vmatpush.msra.mxu0 %v198
      %7428 = vmatpush.msra.mxu0 %v197
      %7429 = vmatpush.msra.mxu0 %v196
      %7430 = vmatmul.f32.gmra.mxu0 %v7408
      %v7431 = vpop.f32.mrf.mxu0
      %v7432 = vadd.f32 0.0, %v7431
      %7433 = vdwg.mxu0
      %vm7434 = vcmask 228352
      %7435 = vst.msk [vmem:[#allocation5] sm:$0xff] %vm7434, %v7432
      %v7436 = vld [vmem:[#allocation3] sm:$0xff]
      %v7437 = vld [vmem:[#allocation3 + $0x8] sm:$0xff]
      %7440 = vrot.lane.b32.xlu0 %v7436, 6
      %v7441 = vpop.permute.xlu0 %7440
      %7442 = vrot.lane.b32.xlu0 %v7437, 6
      %v7443 = vpop.permute.xlu0 %7442
      %v7444 = vsel %vm3011, %v7441, %v7443
      %v7445 = vsel %vm7406, %v7444, 0
      %7447 = vmatpush.msra.mxu0 0.0
      %7448 = vmatpush.msra.mxu0 0.0
      %7449 = vmatpush.msra.mxu0 0.0
      %7450 = vmatpush.msra.mxu0 0.0
      %7451 = vmatpush.msra.mxu0 0.0
      %7452 = vmatpush.msra.mxu0 0.0
      %7453 = vmatpush.msra.mxu0 0.0
      %7454 = vmatpush.msra.mxu0 0.0
      %7455 = vmatpush.msra.mxu0 0.0
      %7456 = vmatpush.msra.mxu0 %v7412
      %7457 = vmatpush.msra.mxu0 %v201
      %7458 = vmatpush.msra.mxu0 %v200
      %7459 = vmatpush.msra.mxu0 %v199
      %7460 = vmatpush.msra.mxu0 %v198
      %7461 = vmatpush.msra.mxu0 %v197
      %7462 = vmatpush.msra.mxu0 %v196
      %7463 = vmatmul.f32.gmra.mxu0 %v7445
      %v7464 = vpop.f32.mrf.mxu0
      %v7465 = vadd.f32 0.0, %v7464
      %7466 = vdwg.mxu0
      %7468 = vrot.lane.b32.xlu0 %v7465, 28
      %v7469 = vpop.permute.xlu0 %7468
      %vm7471 = vcmask 457952
      %7472 = vst.msk [vmem:[#allocation5] sm:$0xff] %vm7471, %v7469
      %v7473 = vld [vmem:[#allocation3 + $0x8] sm:$0xff]
      %v7474 = vld [vmem:[#allocation3 + $0x10] sm:$0xff]
      %7477 = vrot.lane.b32.xlu0 %v7473, 12
      %v7478 = vpop.permute.xlu0 %7477
      %7479 = vrot.lane.b32.xlu0 %v7474, 12
      %v7480 = vpop.permute.xlu0 %7479
      %vm7481 = vcmask 97280
      %v7482 = vsel %vm7481, %v7478, %v7480
      %v7483 = vsel %vm7406, %v7482, 0
      %7485 = vmatpush.msra.mxu0 0.0
      %7486 = vmatpush.msra.mxu0 0.0
      %7487 = vmatpush.msra.mxu0 0.0
      %7488 = vmatpush.msra.mxu0 0.0
      %7489 = vmatpush.msra.mxu0 0.0
      %7490 = vmatpush.msra.mxu0 0.0
      %7491 = vmatpush.msra.mxu0 0.0
      %7492 = vmatpush.msra.mxu0 0.0
      %7493 = vmatpush.msra.mxu0 0.0
      %7494 = vmatpush.msra.mxu0 %v7412
      %7495 = vmatpush.msra.mxu0 %v201
      %7496 = vmatpush.msra.mxu0 %v200
      %7497 = vmatpush.msra.mxu0 %v199
      %7498 = vmatpush.msra.mxu0 %v198
      %7499 = vmatpush.msra.mxu0 %v197
      %7500 = vmatpush.msra.mxu0 %v196
      %7501 = vmatmul.f32.gmra.mxu0 %v7483
      %v7502 = vpop.f32.mrf.mxu0
      %v7503 = vadd.f32 0.0, %v7502
      %7504 = vdwg.mxu0
      %7506 = vrot.lane.b32.xlu0 %v7503, 56
      %v7507 = vpop.permute.xlu0 %7506
      %vm7509 = vcmask 687552
      %7510 = vst.msk [vmem:[#allocation5] sm:$0xff] %vm7509, %v7507
      %v7511 = vld [vmem:[#allocation3 + $0x10] sm:$0xff]
      %v7512 = vld [vmem:[#allocation3 + $0x18] sm:$0xff]
      %7515 = vrot.lane.b32.xlu0 %v7511, 18
      %v7516 = vpop.permute.xlu0 %7515
      %7517 = vrot.lane.b32.xlu0 %v7512, 18
      %v7518 = vpop.permute.xlu0 %7517
      %vm7519 = vcmask 146432
      %v7520 = vsel %vm7519, %v7516, %v7518
      %v7521 = vsel %vm7406, %v7520, 0
      %7523 = vmatpush.msra.mxu0 0.0
      %7524 = vmatpush.msra.mxu0 0.0
      %7525 = vmatpush.msra.mxu0 0.0
      %7526 = vmatpush.msra.mxu0 0.0
      %7527 = vmatpush.msra.mxu0 0.0
      %7528 = vmatpush.msra.mxu0 0.0
      %7529 = vmatpush.msra.mxu0 0.0
      %7530 = vmatpush.msra.mxu0 0.0
      %7531 = vmatpush.msra.mxu0 0.0
      %7532 = vmatpush.msra.mxu0 %v7412
      %7533 = vmatpush.msra.mxu0 %v201
      %7534 = vmatpush.msra.mxu0 %v200
      %7535 = vmatpush.msra.mxu0 %v199
      %7536 = vmatpush.msra.mxu0 %v198
      %7537 = vmatpush.msra.mxu0 %v197
      %7538 = vmatpush.msra.mxu0 %v196
      %7539 = vmatmul.f32.gmra.mxu0 %v7521
      %v7540 = vpop.f32.mrf.mxu0
      %v7541 = vadd.f32 0.0, %v7540
      %7542 = vdwg.mxu0
      %7544 = vrot.lane.b32.xlu0 %v7541, 84
      %v7545 = vpop.permute.xlu0 %7544
      %vm7547 = vcmask 917152
      %7548 = vst.msk [vmem:[#allocation5] sm:$0xff] %vm7547, %v7545
      %v7549 = vld [vmem:[#allocation3 + $0x18] sm:$0xff]
      %v7550 = vld [vmem:[#allocation3 + $0x20] sm:$0xff]
      %7553 = vrot.lane.b32.xlu0 %v7549, 24
      %v7554 = vpop.permute.xlu0 %7553
      %7555 = vrot.lane.b32.xlu0 %v7550, 24
      %v7556 = vpop.permute.xlu0 %7555
      %vm7557 = vcmask 195584
      %v7558 = vsel %vm7557, %v7554, %v7556
      %v7559 = vsel %vm7406, %v7558, 0
      %7561 = vmatpush.msra.mxu0 0.0
      %7562 = vmatpush.msra.mxu0 0.0
      %7563 = vmatpush.msra.mxu0 0.0
      %7564 = vmatpush.msra.mxu0 0.0
      %7565 = vmatpush.msra.mxu0 0.0
      %7566 = vmatpush.msra.mxu0 0.0
      %7567 = vmatpush.msra.mxu0 0.0
      %7568 = vmatpush.msra.mxu0 0.0
      %7569 = vmatpush.msra.mxu0 0.0
      %7570 = vmatpush.msra.mxu0 %v7412
      %7571 = vmatpush.msra.mxu0 %v201
      %7572 = vmatpush.msra.mxu0 %v200
      %7573 = vmatpush.msra.mxu0 %v199
      %7574 = vmatpush.msra.mxu0 %v198
      %7575 = vmatpush.msra.mxu0 %v197
      %7576 = vmatpush.msra.mxu0 %v196
      %7577 = vmatmul.f32.gmra.mxu0 %v7559
      %v7578 = vpop.f32.mrf.mxu0
      %v7579 = vadd.f32 0.0, %v7578
      %7580 = vdwg.mxu0
      %7582 = vrot.lane.b32.xlu0 %v7579, 112
      %v7583 = vpop.permute.xlu0 %7582
      %vm7585 = vcmask 1048448
      %7586 = vst.msk [vmem:[#allocation5] sm:$0xff] %vm7585, %v7583
      %7587 = vst.msk [vmem:[#allocation5 + $0x8] sm:$0xff] %vm7481, %v7583
      %v7588 = vld [vmem:[#allocation3 + $0x20] sm:$0xff]
      %v7589 = vld [vmem:[#allocation3 + $0x28] sm:$0xff]
      %7592 = vrot.lane.b32.xlu0 %v7588, 30
      %v7593 = vpop.permute.xlu0 %7592
      %7594 = vrot.lane.b32.xlu0 %v7589, 30
      %v7595 = vpop.permute.xlu0 %7594
      %vm7596 = vcmask 244736
      %v7597 = vsel %vm7596, %v7593, %v7595
      %v7598 = vsel %vm7406, %v7597, 0
      %7600 = vmatpush.msra.mxu0 0.0
      %7601 = vmatpush.msra.mxu0 0.0
      %7602 = vmatpush.msra.mxu0 0.0
      %7603 = vmatpush.msra.mxu0 0.0
      %7604 = vmatpush.msra.mxu0 0.0
      %7605 = vmatpush.msra.mxu0 0.0
      %7606 = vmatpush.msra.mxu0 0.0
      %7607 = vmatpush.msra.mxu0 0.0
      %7608 = vmatpush.msra.mxu0 0.0
      %7609 = vmatpush.msra.mxu0 %v7412
      %7610 = vmatpush.msra.mxu0 %v201
      %7611 = vmatpush.msra.mxu0 %v200
      %7612 = vmatpush.msra.mxu0 %v199
      %7613 = vmatpush.msra.mxu0 %v198
      %7614 = vmatpush.msra.mxu0 %v197
      %7615 = vmatpush.msra.mxu0 %v196
      %7616 = vmatmul.f32.gmra.mxu0 %v7598
      %v7617 = vpop.f32.mrf.mxu0
      %v7618 = vadd.f32 0.0, %v7617
      %7619 = vdwg.mxu0
      %7621 = vrot.lane.b32.xlu0 %v7618, 12
      %v7622 = vpop.permute.xlu0 %7621
      %vm7624 = vcmask 326752
      %7625 = vst.msk [vmem:[#allocation5 + $0x8] sm:$0xff] %vm7624, %v7622
      %v7626 = vld [vmem:[#allocation3 + $0x28] sm:$0xff]
      %v7627 = vld [vmem:[#allocation3 + $0x30] sm:$0xff]
      %7630 = vrot.lane.b32.xlu0 %v7626, 36
      %v7631 = vpop.permute.xlu0 %7630
      %7632 = vrot.lane.b32.xlu0 %v7627, 36
      %v7633 = vpop.permute.xlu0 %7632
      %vm7634 = vcmask 293888
      %v7635 = vsel %vm7634, %v7631, %v7633
      %v7636 = vsel %vm7406, %v7635, 0
      %7638 = vmatpush.msra.mxu0 0.0
      %7639 = vmatpush.msra.mxu0 0.0
      %7640 = vmatpush.msra.mxu0 0.0
      %7641 = vmatpush.msra.mxu0 0.0
      %7642 = vmatpush.msra.mxu0 0.0
      %7643 = vmatpush.msra.mxu0 0.0
      %7644 = vmatpush.msra.mxu0 0.0
      %7645 = vmatpush.msra.mxu0 0.0
      %7646 = vmatpush.msra.mxu0 0.0
      %7647 = vmatpush.msra.mxu0 %v7412
      %7648 = vmatpush.msra.mxu0 %v201
      %7649 = vmatpush.msra.mxu0 %v200
      %7650 = vmatpush.msra.mxu0 %v199
      %7651 = vmatpush.msra.mxu0 %v198
      %7652 = vmatpush.msra.mxu0 %v197
      %7653 = vmatpush.msra.mxu0 %v196
      %7654 = vmatmul.f32.gmra.mxu0 %v7636
      %v7655 = vpop.f32.mrf.mxu0
      %v7656 = vadd.f32 0.0, %v7655
      %7657 = vdwg.mxu0
      %7659 = vrot.lane.b32.xlu0 %v7656, 40
      %v7660 = vpop.permute.xlu0 %7659
      %vm7662 = vcmask 556352
      %7663 = vst.msk [vmem:[#allocation5 + $0x8] sm:$0xff] %vm7662, %v7660
      %v7664 = vld [vmem:[#allocation3 + $0x30] sm:$0xff]
      %v7665 = vld [vmem:[#allocation3 + $0x38] sm:$0xff]
      %7668 = vrot.lane.b32.xlu0 %v7664, 42
      %v7669 = vpop.permute.xlu0 %7668
      %7670 = vrot.lane.b32.xlu0 %v7665, 42
      %v7671 = vpop.permute.xlu0 %7670
      %vm7672 = vcmask 343040
      %v7673 = vsel %vm7672, %v7669, %v7671
      %v7674 = vsel %vm7406, %v7673, 0
      %7676 = vmatpush.msra.mxu0 0.0
      %7677 = vmatpush.msra.mxu0 0.0
      %7678 = vmatpush.msra.mxu0 0.0
      %7679 = vmatpush.msra.mxu0 0.0
      %7680 = vmatpush.msra.mxu0 0.0
      %7681 = vmatpush.msra.mxu0 0.0
      %7682 = vmatpush.msra.mxu0 0.0
      %7683 = vmatpush.msra.mxu0 0.0
      %7684 = vmatpush.msra.mxu0 0.0
      %7685 = vmatpush.msra.mxu0 %v7412
      %7686 = vmatpush.msra.mxu0 %v201
      %7687 = vmatpush.msra.mxu0 %v200
      %7688 = vmatpush.msra.mxu0 %v199
      %7689 = vmatpush.msra.mxu0 %v198
      %7690 = vmatpush.msra.mxu0 %v197
      %7691 = vmatpush.msra.mxu0 %v196
      %7692 = vmatmul.f32.gmra.mxu0 %v7674
      %v7693 = vpop.f32.mrf.mxu0
      %v7694 = vadd.f32 0.0, %v7693
      %7695 = vdwg.mxu0
      %7697 = vrot.lane.b32.xlu0 %v7694, 68
      %v7698 = vpop.permute.xlu0 %7697
      %vm7700 = vcmask 785952
      %7701 = vst.msk [vmem:[#allocation5 + $0x8] sm:$0xff] %vm7700, %v7698
      %v7702 = vld [vmem:[#allocation3 + $0x38] sm:$0xff]
      %v7703 = vld [vmem:[#allocation3 + $0x40] sm:$0xff]
      %7706 = vrot.lane.b32.xlu0 %v7702, 48
      %v7707 = vpop.permute.xlu0 %7706
      %7708 = vrot.lane.b32.xlu0 %v7703, 48
      %v7709 = vpop.permute.xlu0 %7708
      %vm7710 = vcmask 392192
      %v7711 = vsel %vm7710, %v7707, %v7709
      %v7712 = vsel %vm7406, %v7711, 0
      %7714 = vmatpush.msra.mxu0 0.0
      %7715 = vmatpush.msra.mxu0 0.0
      %7716 = vmatpush.msra.mxu0 0.0
      %7717 = vmatpush.msra.mxu0 0.0
      %7718 = vmatpush.msra.mxu0 0.0
      %7719 = vmatpush.msra.mxu0 0.0
      %7720 = vmatpush.msra.mxu0 0.0
      %7721 = vmatpush.msra.mxu0 0.0
      %7722 = vmatpush.msra.mxu0 0.0
      %7723 = vmatpush.msra.mxu0 %v7412
      %7724 = vmatpush.msra.mxu0 %v201
      %7725 = vmatpush.msra.mxu0 %v200
      %7726 = vmatpush.msra.mxu0 %v199
      %7727 = vmatpush.msra.mxu0 %v198
      %7728 = vmatpush.msra.mxu0 %v197
      %7729 = vmatpush.msra.mxu0 %v196
      %7730 = vmatmul.f32.gmra.mxu0 %v7712
      %v7731 = vpop.f32.mrf.mxu0
      %v7732 = vadd.f32 0.0, %v7731
      %7733 = vdwg.mxu0
      %7735 = vrot.lane.b32.xlu0 %v7732, 96
      %v7736 = vpop.permute.xlu0 %7735
      %vm7738 = vcmask 1015552
      %7739 = vst.msk [vmem:[#allocation5 + $0x8] sm:$0xff] %vm7738, %v7736
      %v7740 = vld [vmem:[#allocation3 + $0x40] sm:$0xff]
      %v7741 = vld [vmem:[#allocation3 + $0x48] sm:$0xff]
      %7744 = vrot.lane.b32.xlu0 %v7740, 54
      %v7745 = vpop.permute.xlu0 %7744
      %7746 = vrot.lane.b32.xlu0 %v7741, 54
      %v7747 = vpop.permute.xlu0 %7746
      %vm7748 = vcmask 441344
      %v7749 = vsel %vm7748, %v7745, %v7747
      %v7750 = vsel %vm7406, %v7749, 0
      %7752 = vmatpush.msra.mxu0 0.0
      %7753 = vmatpush.msra.mxu0 0.0
      %7754 = vmatpush.msra.mxu0 0.0
      %7755 = vmatpush.msra.mxu0 0.0
      %7756 = vmatpush.msra.mxu0 0.0
      %7757 = vmatpush.msra.mxu0 0.0
      %7758 = vmatpush.msra.mxu0 0.0
      %7759 = vmatpush.msra.mxu0 0.0
      %7760 = vmatpush.msra.mxu0 0.0
      %7761 = vmatpush.msra.mxu0 %v7412
      %7762 = vmatpush.msra.mxu0 %v201
      %7763 = vmatpush.msra.mxu0 %v200
      %7764 = vmatpush.msra.mxu0 %v199
      %7765 = vmatpush.msra.mxu0 %v198
      %7766 = vmatpush.msra.mxu0 %v197
      %7767 = vmatpush.msra.mxu0 %v196
      %7768 = vmatmul.f32.gmra.mxu0 %v7750
      %v7769 = vpop.f32.mrf.mxu0
      %v7770 = vadd.f32 0.0, %v7769
      %7771 = vdwg.mxu0
      %7773 = vrot.lane.b32.xlu0 %v7770, 124
      %v7774 = vpop.permute.xlu0 %7773
      %vm7776 = vcmask 1048544
      %7777 = vst.msk [vmem:[#allocation5 + $0x8] sm:$0xff] %vm7776, %v7774
      %7778 = vst.msk [vmem:[#allocation5 + $0x10] sm:$0xff] %vm7557, %v7774
      %v7779 = vld [vmem:[#allocation3 + $0x48] sm:$0xff]
      %7781 = vrot.lane.b32.xlu0 %v7779, 60
      %v7782 = vpop.permute.xlu0 %7781
      %v7783 = vsel %vm7406, %v7782, 0
      %7785 = vmatpush.msra.mxu0 0.0
      %7786 = vmatpush.msra.mxu0 0.0
      %7787 = vmatpush.msra.mxu0 0.0
      %7788 = vmatpush.msra.mxu0 0.0
      %7789 = vmatpush.msra.mxu0 0.0
      %7790 = vmatpush.msra.mxu0 0.0
      %7791 = vmatpush.msra.mxu0 0.0
      %7792 = vmatpush.msra.mxu0 0.0
      %7793 = vmatpush.msra.mxu0 0.0
      %7794 = vmatpush.msra.mxu0 %v7412
      %7795 = vmatpush.msra.mxu0 %v201
      %7796 = vmatpush.msra.mxu0 %v200
      %7797 = vmatpush.msra.mxu0 %v199
      %7798 = vmatpush.msra.mxu0 %v198
      %7799 = vmatpush.msra.mxu0 %v197
      %7800 = vmatpush.msra.mxu0 %v196
      %7801 = vmatmul.f32.gmra.mxu0 %v7783
      %v7802 = vpop.f32.mrf.mxu0
      %v7803 = vadd.f32 0.0, %v7802
      %7804 = vdwg.mxu0
      %7806 = vrot.lane.b32.xlu0 %v7803, 24
      %v7807 = vpop.permute.xlu0 %7806
      %vm7809 = vcmask 425152
      %7810 = vst.msk [vmem:[#allocation5 + $0x10] sm:$0xff] %vm7809, %v7807
      %v7811 = vld [vmem:[#allocation3 + $0x50] sm:$0xff]
      %7813 = vrot.lane.b32.xlu0 %v7811, 66
      %v7814 = vpop.permute.xlu0 %7813
      %v7815 = vsel %vm7406, %v7814, 0
      %7817 = vmatpush.msra.mxu0 0.0
      %7818 = vmatpush.msra.mxu0 0.0
      %7819 = vmatpush.msra.mxu0 0.0
      %7820 = vmatpush.msra.mxu0 0.0
      %7821 = vmatpush.msra.mxu0 0.0
      %7822 = vmatpush.msra.mxu0 0.0
      %7823 = vmatpush.msra.mxu0 0.0
      %7824 = vmatpush.msra.mxu0 0.0
      %7825 = vmatpush.msra.mxu0 0.0
      %7826 = vmatpush.msra.mxu0 %v7412
      %7827 = vmatpush.msra.mxu0 %v201
      %7828 = vmatpush.msra.mxu0 %v200
      %7829 = vmatpush.msra.mxu0 %v199
      %7830 = vmatpush.msra.mxu0 %v198
      %7831 = vmatpush.msra.mxu0 %v197
      %7832 = vmatpush.msra.mxu0 %v196
      %7833 = vmatmul.f32.gmra.mxu0 %v7815
      %v7834 = vpop.f32.mrf.mxu0
      %v7835 = vadd.f32 0.0, %v7834
      %7836 = vdwg.mxu0
      %7838 = vrot.lane.b32.xlu0 %v7835, 52
      %v7839 = vpop.permute.xlu0 %7838
      %vm7841 = vcmask 654752
      %7842 = vst.msk [vmem:[#allocation5 + $0x10] sm:$0xff] %vm7841, %v7839
      %v7843 = vld [vmem:[#allocation3 + $0x58] sm:$0xff]
      %7845 = vrot.lane.b32.xlu0 %v7843, 72
      %v7846 = vpop.permute.xlu0 %7845
      %v7847 = vsel %vm7406, %v7846, 0
      %7849 = vmatpush.msra.mxu0 0.0
      %7850 = vmatpush.msra.mxu0 0.0
      %7851 = vmatpush.msra.mxu0 0.0
      %7852 = vmatpush.msra.mxu0 0.0
      %7853 = vmatpush.msra.mxu0 0.0
      %7854 = vmatpush.msra.mxu0 0.0
      %7855 = vmatpush.msra.mxu0 0.0
      %7856 = vmatpush.msra.mxu0 0.0
      %7857 = vmatpush.msra.mxu0 0.0
      %7858 = vmatpush.msra.mxu0 %v7412
      %7859 = vmatpush.msra.mxu0 %v201
      %7860 = vmatpush.msra.mxu0 %v200
      %7861 = vmatpush.msra.mxu0 %v199
      %7862 = vmatpush.msra.mxu0 %v198
      %7863 = vmatpush.msra.mxu0 %v197
      %7864 = vmatpush.msra.mxu0 %v196
      %7865 = vmatmul.f32.gmra.mxu0 %v7847
      %v7866 = vpop.f32.mrf.mxu0
      %v7867 = vadd.f32 0.0, %v7866
      %7868 = vdwg.mxu0
      %7870 = vrot.lane.b32.xlu0 %v7867, 80
      %v7871 = vpop.permute.xlu0 %7870
      %vm7873 = vcmask 884352
      %7874 = vst.msk [vmem:[#allocation5 + $0x10] sm:$0xff] %vm7873, %v7871
      %v7875 = vld [vmem:[#allocation3 + $0x60] sm:$0xff]
      %7877 = vrot.lane.b32.xlu0 %v7875, 78
      %v7878 = vpop.permute.xlu0 %7877
      %v7879 = vsel %vm7406, %v7878, 0
      %7881 = vmatpush.msra.mxu0 0.0
      %7882 = vmatpush.msra.mxu0 0.0
      %7883 = vmatpush.msra.mxu0 0.0
      %7884 = vmatpush.msra.mxu0 0.0
      %7885 = vmatpush.msra.mxu0 0.0
      %7886 = vmatpush.msra.mxu0 0.0
      %7887 = vmatpush.msra.mxu0 0.0
      %7888 = vmatpush.msra.mxu0 0.0
      %7889 = vmatpush.msra.mxu0 0.0
      %7890 = vmatpush.msra.mxu0 %v7412
      %7891 = vmatpush.msra.mxu0 %v201
      %7892 = vmatpush.msra.mxu0 %v200
      %7893 = vmatpush.msra.mxu0 %v199
      %7894 = vmatpush.msra.mxu0 %v198
      %7895 = vmatpush.msra.mxu0 %v197
      %7896 = vmatpush.msra.mxu0 %v196
      %7897 = vmatmul.f32.gmra.mxu0 %v7879
      %v7898 = vpop.f32.mrf.mxu0
      %v7899 = vadd.f32 0.0, %v7898
      %7900 = vdwg.mxu0
      %7902 = vrot.lane.b32.xlu0 %v7899, 108
      %v7903 = vpop.permute.xlu0 %7902
      %vm7905 = vcmask 1048416
      %7906 = vst.msk [vmem:[#allocation5 + $0x10] sm:$0xff] %vm7905, %v7903
      %vm7907 = vcmask 64512
      %7908 = vst.msk [vmem:[#allocation5 + $0x18] sm:$0xff] %vm7907, %v7903
      %v7909 = vld [vmem:[#allocation3 + $0x68] sm:$0xff]
      %7911 = vrot.lane.b32.xlu0 %v7909, 84
      %v7912 = vpop.permute.xlu0 %7911
      %v7913 = vsel %vm7406, %v7912, 0
      %7915 = vmatpush.msra.mxu0 0.0
      %7916 = vmatpush.msra.mxu0 0.0
      %7917 = vmatpush.msra.mxu0 0.0
      %7918 = vmatpush.msra.mxu0 0.0
      %7919 = vmatpush.msra.mxu0 0.0
      %7920 = vmatpush.msra.mxu0 0.0
      %7921 = vmatpush.msra.mxu0 0.0
      %7922 = vmatpush.msra.mxu0 0.0
      %7923 = vmatpush.msra.mxu0 0.0
      %7924 = vmatpush.msra.mxu0 %v7412
      %7925 = vmatpush.msra.mxu0 %v201
      %7926 = vmatpush.msra.mxu0 %v200
      %7927 = vmatpush.msra.mxu0 %v199
      %7928 = vmatpush.msra.mxu0 %v198
      %7929 = vmatpush.msra.mxu0 %v197
      %7930 = vmatpush.msra.mxu0 %v196
      %7931 = vmatmul.f32.gmra.mxu0 %v7913
      %v7932 = vpop.f32.mrf.mxu0
      %v7933 = vadd.f32 0.0, %v7932
      %7934 = vdwg.mxu0
      %7936 = vrot.lane.b32.xlu0 %v7933, 8
      %v7937 = vpop.permute.xlu0 %7936
      %vm7939 = vcmask 293952
      %7940 = vst.msk [vmem:[#allocation5 + $0x18] sm:$0xff] %vm7939, %v7937
      %v7941 = vld [vmem:[#allocation3 + $0x70] sm:$0xff]
      %7943 = vrot.lane.b32.xlu0 %v7941, 90
      %v7944 = vpop.permute.xlu0 %7943
      %v7945 = vsel %vm7406, %v7944, 0
      %7947 = vmatpush.msra.mxu0 0.0
      %7948 = vmatpush.msra.mxu0 0.0
      %7949 = vmatpush.msra.mxu0 0.0
      %7950 = vmatpush.msra.mxu0 0.0
      %7951 = vmatpush.msra.mxu0 0.0
      %7952 = vmatpush.msra.mxu0 0.0
      %7953 = vmatpush.msra.mxu0 0.0
      %7954 = vmatpush.msra.mxu0 0.0
      %7955 = vmatpush.msra.mxu0 0.0
      %7956 = vmatpush.msra.mxu0 %v7412
      %7957 = vmatpush.msra.mxu0 %v201
      %7958 = vmatpush.msra.mxu0 %v200
      %7959 = vmatpush.msra.mxu0 %v199
      %7960 = vmatpush.msra.mxu0 %v198
      %7961 = vmatpush.msra.mxu0 %v197
      %7962 = vmatpush.msra.mxu0 %v196
      %7963 = vmatmul.f32.gmra.mxu0 %v7945
      %v7964 = vpop.f32.mrf.mxu0
      %v7965 = vadd.f32 0.0, %v7964
      %7966 = vdwg.mxu0
      %7968 = vrot.lane.b32.xlu0 %v7965, 36
      %v7969 = vpop.permute.xlu0 %7968
      %vm7971 = vcmask 523552
      %7972 = vst.msk [vmem:[#allocation5 + $0x18] sm:$0xff] %vm7971, %v7969
      %v7973 = vld [vmem:[#allocation3 + $0x78] sm:$0xff]
      %7975 = vrot.lane.b32.xlu0 %v7973, 96
      %v7976 = vpop.permute.xlu0 %7975
      %v7977 = vsel %vm7406, %v7976, 0
      %7979 = vmatpush.msra.mxu0 0.0
      %7980 = vmatpush.msra.mxu0 0.0
      %7981 = vmatpush.msra.mxu0 0.0
      %7982 = vmatpush.msra.mxu0 0.0
      %7983 = vmatpush.msra.mxu0 0.0
      %7984 = vmatpush.msra.mxu0 0.0
      %7985 = vmatpush.msra.mxu0 0.0
      %7986 = vmatpush.msra.mxu0 0.0
      %7987 = vmatpush.msra.mxu0 0.0
      %7988 = vmatpush.msra.mxu0 %v7412
      %7989 = vmatpush.msra.mxu0 %v201
      %7990 = vmatpush.msra.mxu0 %v200
      %7991 = vmatpush.msra.mxu0 %v199
      %7992 = vmatpush.msra.mxu0 %v198
      %7993 = vmatpush.msra.mxu0 %v197
      %7994 = vmatpush.msra.mxu0 %v196
      %7995 = vmatmul.f32.gmra.mxu0 %v7977
      %v7996 = vpop.f32.mrf.mxu0
      %v7997 = vadd.f32 0.0, %v7996
      %7998 = vdwg.mxu0
      %8000 = vrot.lane.b32.xlu0 %v7997, 64
      %v8001 = vpop.permute.xlu0 %8000
      %vm8003 = vcmask 753152
      %8004 = vst.msk [vmem:[#allocation5 + $0x18] sm:$0xff] %vm8003, %v8001
      %v8005 = vld [vmem:[#allocation3 + $0x80] sm:$0xff]
      %8007 = vrot.lane.b32.xlu0 %v8005, 102
      %v8008 = vpop.permute.xlu0 %8007
      %v8009 = vsel %vm7406, %v8008, 0
      %8011 = vmatpush.msra.mxu0 0.0
      %8012 = vmatpush.msra.mxu0 0.0
      %8013 = vmatpush.msra.mxu0 0.0
      %8014 = vmatpush.msra.mxu0 0.0
      %8015 = vmatpush.msra.mxu0 0.0
      %8016 = vmatpush.msra.mxu0 0.0
      %8017 = vmatpush.msra.mxu0 0.0
      %8018 = vmatpush.msra.mxu0 0.0
      %8019 = vmatpush.msra.mxu0 0.0
      %8020 = vmatpush.msra.mxu0 %v7412
      %8021 = vmatpush.msra.mxu0 %v201
      %8022 = vmatpush.msra.mxu0 %v200
      %8023 = vmatpush.msra.mxu0 %v199
      %8024 = vmatpush.msra.mxu0 %v198
      %8025 = vmatpush.msra.mxu0 %v197
      %8026 = vmatpush.msra.mxu0 %v196
      %8027 = vmatmul.f32.gmra.mxu0 %v8009
      %v8028 = vpop.f32.mrf.mxu0
      %v8029 = vadd.f32 0.0, %v8028
      %8030 = vdwg.mxu0
      %8032 = vrot.lane.b32.xlu0 %v8029, 92
      %v8033 = vpop.permute.xlu0 %8032
      %vm8035 = vcmask 982752
      %8036 = vst.msk [vmem:[#allocation5 + $0x18] sm:$0xff] %vm8035, %v8033
      %v8037 = vld [vmem:[#allocation3 + $0x88] sm:$0xff]
      %8039 = vrot.lane.b32.xlu0 %v8037, 108
      %v8040 = vpop.permute.xlu0 %8039
      %v8041 = vsel %vm7406, %v8040, 0
      %8043 = vmatpush.msra.mxu0 0.0
      %8044 = vmatpush.msra.mxu0 0.0
      %8045 = vmatpush.msra.mxu0 0.0
      %8046 = vmatpush.msra.mxu0 0.0
      %8047 = vmatpush.msra.mxu0 0.0
      %8048 = vmatpush.msra.mxu0 0.0
      %8049 = vmatpush.msra.mxu0 0.0
      %8050 = vmatpush.msra.mxu0 0.0
      %8051 = vmatpush.msra.mxu0 0.0
      %8052 = vmatpush.msra.mxu0 %v7412
      %8053 = vmatpush.msra.mxu0 %v201
      %8054 = vmatpush.msra.mxu0 %v200
      %8055 = vmatpush.msra.mxu0 %v199
      %8056 = vmatpush.msra.mxu0 %v198
      %8057 = vmatpush.msra.mxu0 %v197
      %8058 = vmatpush.msra.mxu0 %v196
      %8059 = vmatmul.f32.gmra.mxu0 %v8041
      %v8060 = vpop.f32.mrf.mxu0
      %v8061 = vadd.f32 0.0, %v8060
      %8062 = vdwg.mxu0
      %8064 = vrot.lane.b32.xlu0 %v8061, 120
      %v8065 = vpop.permute.xlu0 %8064
      %vm8067 = vcmask 1048512
      %8068 = vst.msk [vmem:[#allocation5 + $0x18] sm:$0xff] %vm8067, %v8065
      %vm8069 = vcmask 162816
      %8070 = vst.msk [vmem:[#allocation5 + $0x20] sm:$0xff] %vm8069, %v8065
      %v8071 = vld [vmem:[#allocation3 + $0x90] sm:$0xff]
      %8073 = vrot.lane.b32.xlu0 %v8071, 114
      %v8074 = vpop.permute.xlu0 %8073
      %v8075 = vsel %vm7406, %v8074, 0
      %8077 = vmatpush.msra.mxu0 0.0
      %8078 = vmatpush.msra.mxu0 0.0
      %8079 = vmatpush.msra.mxu0 0.0
      %8080 = vmatpush.msra.mxu0 0.0
      %8081 = vmatpush.msra.mxu0 0.0
      %8082 = vmatpush.msra.mxu0 0.0
      %8083 = vmatpush.msra.mxu0 0.0
      %8084 = vmatpush.msra.mxu0 0.0
      %8085 = vmatpush.msra.mxu0 0.0
      %8086 = vmatpush.msra.mxu0 %v7412
      %8087 = vmatpush.msra.mxu0 %v201
      %8088 = vmatpush.msra.mxu0 %v200
      %8089 = vmatpush.msra.mxu0 %v199
      %8090 = vmatpush.msra.mxu0 %v198
      %8091 = vmatpush.msra.mxu0 %v197
      %8092 = vmatpush.msra.mxu0 %v196
      %8093 = vmatmul.f32.gmra.mxu0 %v8075
      %v8094 = vpop.f32.mrf.mxu0
      %v8095 = vadd.f32 0.0, %v8094
      %8096 = vdwg.mxu0
      %8098 = vrot.lane.b32.xlu0 %v8095, 20
      %v8099 = vpop.permute.xlu0 %8098
      %vm8101 = vcmask 392352
      %8102 = vst.msk [vmem:[#allocation5 + $0x20] sm:$0xff] %vm8101, %v8099
      %v8103 = vld [vmem:[#allocation3 + $0x98] sm:$0xff]
      %8105 = vrot.lane.b32.xlu0 %v8103, 120
      %v8106 = vpop.permute.xlu0 %8105
      %v8107 = vsel %vm7406, %v8106, 0
      %8109 = vmatpush.msra.mxu0 0.0
      %8110 = vmatpush.msra.mxu0 0.0
      %8111 = vmatpush.msra.mxu0 0.0
      %8112 = vmatpush.msra.mxu0 0.0
      %8113 = vmatpush.msra.mxu0 0.0
      %8114 = vmatpush.msra.mxu0 0.0
      %8115 = vmatpush.msra.mxu0 0.0
      %8116 = vmatpush.msra.mxu0 0.0
      %8117 = vmatpush.msra.mxu0 0.0
      %8118 = vmatpush.msra.mxu0 %v7412
      %8119 = vmatpush.msra.mxu0 %v201
      %8120 = vmatpush.msra.mxu0 %v200
      %8121 = vmatpush.msra.mxu0 %v199
      %8122 = vmatpush.msra.mxu0 %v198
      %8123 = vmatpush.msra.mxu0 %v197
      %8124 = vmatpush.msra.mxu0 %v196
      %8125 = vmatmul.f32.gmra.mxu0 %v8107
      %v8126 = vpop.f32.mrf.mxu0
      %v8127 = vadd.f32 0.0, %v8126
      %8128 = vdwg.mxu0
      %8130 = vrot.lane.b32.xlu0 %v8127, 48
      %v8131 = vpop.permute.xlu0 %8130
      %vm8133 = vcmask 621952
      %8134 = vst.msk [vmem:[#allocation5 + $0x20] sm:$0xff] %vm8133, %v8131
      %v8135 = vld [vmem:[#allocation3 + $0xa0] sm:$0xff]
      %8137 = vrot.lane.b32.xlu0 %v8135, 126
      %v8138 = vpop.permute.xlu0 %8137
      %v8139 = vsel %vm7406, %v8138, 0
      %8141 = vmatpush.msra.mxu0 0.0
      %8142 = vmatpush.msra.mxu0 0.0
      %8143 = vmatpush.msra.mxu0 0.0
      %8144 = vmatpush.msra.mxu0 0.0
      %8145 = vmatpush.msra.mxu0 0.0
      %8146 = vmatpush.msra.mxu0 0.0
      %8147 = vmatpush.msra.mxu0 0.0
      %8148 = vmatpush.msra.mxu0 0.0
      %8149 = vmatpush.msra.mxu0 0.0
      %8150 = vmatpush.msra.mxu0 %v7412
      %8151 = vmatpush.msra.mxu0 %v201
      %8152 = vmatpush.msra.mxu0 %v200
      %8153 = vmatpush.msra.mxu0 %v199
      %8154 = vmatpush.msra.mxu0 %v198
      %8155 = vmatpush.msra.mxu0 %v197
      %8156 = vmatpush.msra.mxu0 %v196
      %8157 = vmatmul.f32.gmra.mxu0 %v8139
      %v8158 = vpop.f32.mrf.mxu0
      %v8159 = vadd.f32 0.0, %v8158
      %8160 = vdwg.mxu0
      %8162 = vrot.lane.b32.xlu0 %v8159, 76
      %v8163 = vpop.permute.xlu0 %8162
      %vm8165 = vcmask 851552
      %8166 = vst.msk [vmem:[#allocation5 + $0x20] sm:$0xff] %vm8165, %v8163
      %v8167 = vld [vmem:[#allocation3 + $0xa0] sm:$0xff]
      %v8168 = vld [vmem:[#allocation3 + $0xa8] sm:$0xff]
      %8171 = vrot.lane.b32.xlu0 %v8167, 4
      %v8172 = vpop.permute.xlu0 %8171
      %8173 = vrot.lane.b32.xlu0 %v8168, 4
      %v8174 = vpop.permute.xlu0 %8173
      %v8175 = vsel %vm3427, %v8172, %v8174
      %v8176 = vsel %vm7406, %v8175, 0
      %8178 = vmatpush.msra.mxu0 0.0
      %8179 = vmatpush.msra.mxu0 0.0
      %8180 = vmatpush.msra.mxu0 0.0
      %8181 = vmatpush.msra.mxu0 0.0
      %8182 = vmatpush.msra.mxu0 0.0
      %8183 = vmatpush.msra.mxu0 0.0
      %8184 = vmatpush.msra.mxu0 0.0
      %8185 = vmatpush.msra.mxu0 0.0
      %8186 = vmatpush.msra.mxu0 0.0
      %8187 = vmatpush.msra.mxu0 %v7412
      %8188 = vmatpush.msra.mxu0 %v201
      %8189 = vmatpush.msra.mxu0 %v200
      %8190 = vmatpush.msra.mxu0 %v199
      %8191 = vmatpush.msra.mxu0 %v198
      %8192 = vmatpush.msra.mxu0 %v197
      %8193 = vmatpush.msra.mxu0 %v196
      %8194 = vmatmul.f32.gmra.mxu0 %v8176
      %v8195 = vpop.f32.mrf.mxu0
      %v8196 = vadd.f32 0.0, %v8195
      %8197 = vdwg.mxu0
      %8199 = vrot.lane.b32.xlu0 %v8196, 104
      %v8200 = vpop.permute.xlu0 %8199
      %vm8202 = vcmask 1048384
      %8203 = vst.msk [vmem:[#allocation5 + $0x20] sm:$0xff] %vm8202, %v8200
      %8204 = vst.msk [vmem:[#allocation5 + $0x28] sm:$0xff] %vm3427, %v8200
      %v8205 = vld [vmem:[#allocation3 + $0xa8] sm:$0xff]
      %v8206 = vld [vmem:[#allocation3 + $0xb0] sm:$0xff]
      %8209 = vrot.lane.b32.xlu0 %v8205, 10
      %v8210 = vpop.permute.xlu0 %8209
      %8211 = vrot.lane.b32.xlu0 %v8206, 10
      %v8212 = vpop.permute.xlu0 %8211
      %vm8213 = vcmask 80896
      %v8214 = vsel %vm8213, %v8210, %v8212
      %v8215 = vsel %vm7406, %v8214, 0
      %8217 = vmatpush.msra.mxu0 0.0
      %8218 = vmatpush.msra.mxu0 0.0
      %8219 = vmatpush.msra.mxu0 0.0
      %8220 = vmatpush.msra.mxu0 0.0
      %8221 = vmatpush.msra.mxu0 0.0
      %8222 = vmatpush.msra.mxu0 0.0
      %8223 = vmatpush.msra.mxu0 0.0
      %8224 = vmatpush.msra.mxu0 0.0
      %8225 = vmatpush.msra.mxu0 0.0
      %8226 = vmatpush.msra.mxu0 %v7412
      %8227 = vmatpush.msra.mxu0 %v201
      %8228 = vmatpush.msra.mxu0 %v200
      %8229 = vmatpush.msra.mxu0 %v199
      %8230 = vmatpush.msra.mxu0 %v198
      %8231 = vmatpush.msra.mxu0 %v197
      %8232 = vmatpush.msra.mxu0 %v196
      %8233 = vmatmul.f32.gmra.mxu0 %v8215
      %v8234 = vpop.f32.mrf.mxu0
      %v8235 = vadd.f32 0.0, %v8234
      %8236 = vdwg.mxu0
      %8238 = vrot.lane.b32.xlu0 %v8235, 4
      %v8239 = vpop.permute.xlu0 %8238
      %vm8241 = vcmask 261152
      %8242 = vst.msk [vmem:[#allocation5 + $0x28] sm:$0xff] %vm8241, %v8239
      %v8243 = vld [vmem:[#allocation3 + $0xb0] sm:$0xff]
      %v8244 = vld [vmem:[#allocation3 + $0xb8] sm:$0xff]
      %8247 = vrot.lane.b32.xlu0 %v8243, 16
      %v8248 = vpop.permute.xlu0 %8247
      %8249 = vrot.lane.b32.xlu0 %v8244, 16
      %v8250 = vpop.permute.xlu0 %8249
      %vm8251 = vcmask 130048
      %v8252 = vsel %vm8251, %v8248, %v8250
      %v8253 = vsel %vm7406, %v8252, 0
      %8255 = vmatpush.msra.mxu0 0.0
      %8256 = vmatpush.msra.mxu0 0.0
      %8257 = vmatpush.msra.mxu0 0.0
      %8258 = vmatpush.msra.mxu0 0.0
      %8259 = vmatpush.msra.mxu0 0.0
      %8260 = vmatpush.msra.mxu0 0.0
      %8261 = vmatpush.msra.mxu0 0.0
      %8262 = vmatpush.msra.mxu0 0.0
      %8263 = vmatpush.msra.mxu0 0.0
      %8264 = vmatpush.msra.mxu0 %v7412
      %8265 = vmatpush.msra.mxu0 %v201
      %8266 = vmatpush.msra.mxu0 %v200
      %8267 = vmatpush.msra.mxu0 %v199
      %8268 = vmatpush.msra.mxu0 %v198
      %8269 = vmatpush.msra.mxu0 %v197
      %8270 = vmatpush.msra.mxu0 %v196
      %8271 = vmatmul.f32.gmra.mxu0 %v8253
      %v8272 = vpop.f32.mrf.mxu0
      %v8273 = vadd.f32 0.0, %v8272
      %8274 = vdwg.mxu0
      %8276 = vrot.lane.b32.xlu0 %v8273, 32
      %v8277 = vpop.permute.xlu0 %8276
      %vm8279 = vcmask 490752
      %8280 = vst.msk [vmem:[#allocation5 + $0x28] sm:$0xff] %vm8279, %v8277
      %v8281 = vld [vmem:[#allocation3 + $0xb8] sm:$0xff]
      %v8282 = vld [vmem:[#allocation3 + $0xc0] sm:$0xff]
      %8285 = vrot.lane.b32.xlu0 %v8281, 22
      %v8286 = vpop.permute.xlu0 %8285
      %8287 = vrot.lane.b32.xlu0 %v8282, 22
      %v8288 = vpop.permute.xlu0 %8287
      %vm8289 = vcmask 179200
      %v8290 = vsel %vm8289, %v8286, %v8288
      %v8291 = vsel %vm7406, %v8290, 0
      %8293 = vmatpush.msra.mxu0 0.0
      %8294 = vmatpush.msra.mxu0 0.0
      %8295 = vmatpush.msra.mxu0 0.0
      %8296 = vmatpush.msra.mxu0 0.0
      %8297 = vmatpush.msra.mxu0 0.0
      %8298 = vmatpush.msra.mxu0 0.0
      %8299 = vmatpush.msra.mxu0 0.0
      %8300 = vmatpush.msra.mxu0 0.0
      %8301 = vmatpush.msra.mxu0 0.0
      %8302 = vmatpush.msra.mxu0 %v7412
      %8303 = vmatpush.msra.mxu0 %v201
      %8304 = vmatpush.msra.mxu0 %v200
      %8305 = vmatpush.msra.mxu0 %v199
      %8306 = vmatpush.msra.mxu0 %v198
      %8307 = vmatpush.msra.mxu0 %v197
      %8308 = vmatpush.msra.mxu0 %v196
      %8309 = vmatmul.f32.gmra.mxu0 %v8291
      %v8310 = vpop.f32.mrf.mxu0
      %v8311 = vadd.f32 0.0, %v8310
      %8312 = vdwg.mxu0
      %8314 = vrot.lane.b32.xlu0 %v8311, 60
      %v8315 = vpop.permute.xlu0 %8314
      %vm8317 = vcmask 720352
      %8318 = vst.msk [vmem:[#allocation5 + $0x28] sm:$0xff] %vm8317, %v8315
      %v8319 = vld [vmem:[#allocation3 + $0xc0] sm:$0xff]
      %v8320 = vld [vmem:[#allocation3 + $0xc8] sm:$0xff]
      %8323 = vrot.lane.b32.xlu0 %v8319, 28
      %v8324 = vpop.permute.xlu0 %8323
      %8325 = vrot.lane.b32.xlu0 %v8320, 28
      %v8326 = vpop.permute.xlu0 %8325
      %v8327 = vsel %vm7434, %v8324, %v8326
      %v8328 = vsel %vm7406, %v8327, 0
      %8330 = vmatpush.msra.mxu0 0.0
      %8331 = vmatpush.msra.mxu0 0.0
      %8332 = vmatpush.msra.mxu0 0.0
      %8333 = vmatpush.msra.mxu0 0.0
      %8334 = vmatpush.msra.mxu0 0.0
      %8335 = vmatpush.msra.mxu0 0.0
      %8336 = vmatpush.msra.mxu0 0.0
      %8337 = vmatpush.msra.mxu0 0.0
      %8338 = vmatpush.msra.mxu0 0.0
      %8339 = vmatpush.msra.mxu0 %v7412
      %8340 = vmatpush.msra.mxu0 %v201
      %8341 = vmatpush.msra.mxu0 %v200
      %8342 = vmatpush.msra.mxu0 %v199
      %8343 = vmatpush.msra.mxu0 %v198
      %8344 = vmatpush.msra.mxu0 %v197
      %8345 = vmatpush.msra.mxu0 %v196
      %8346 = vmatmul.f32.gmra.mxu0 %v8328
      %v8347 = vpop.f32.mrf.mxu0
      %v8348 = vadd.f32 0.0, %v8347
      %8349 = vdwg.mxu0
      %8351 = vrot.lane.b32.xlu0 %v8348, 88
      %v8352 = vpop.permute.xlu0 %8351
      %vm8354 = vcmask 949952
      %8355 = vst.msk [vmem:[#allocation5 + $0x28] sm:$0xff] %vm8354, %v8352
      %v8356 = vld [vmem:[#allocation3 + $0xc8] sm:$0xff]
      %v8357 = vld [vmem:[#allocation3 + $0xd0] sm:$0xff]
      %8360 = vrot.lane.b32.xlu0 %v8356, 34
      %v8361 = vpop.permute.xlu0 %8360
      %8362 = vrot.lane.b32.xlu0 %v8357, 34
      %v8363 = vpop.permute.xlu0 %8362
      %vm8364 = vcmask 277504
      %v8365 = vsel %vm8364, %v8361, %v8363
      %v8366 = vsel %vm7406, %v8365, 0
      %8368 = vmatpush.msra.mxu0 0.0
      %8369 = vmatpush.msra.mxu0 0.0
      %8370 = vmatpush.msra.mxu0 0.0
      %8371 = vmatpush.msra.mxu0 0.0
      %8372 = vmatpush.msra.mxu0 0.0
      %8373 = vmatpush.msra.mxu0 0.0
      %8374 = vmatpush.msra.mxu0 0.0
      %8375 = vmatpush.msra.mxu0 0.0
      %8376 = vmatpush.msra.mxu0 0.0
      %8377 = vmatpush.msra.mxu0 %v7412
      %8378 = vmatpush.msra.mxu0 %v201
      %8379 = vmatpush.msra.mxu0 %v200
      %8380 = vmatpush.msra.mxu0 %v199
      %8381 = vmatpush.msra.mxu0 %v198
      %8382 = vmatpush.msra.mxu0 %v197
      %8383 = vmatpush.msra.mxu0 %v196
      %8384 = vmatmul.f32.gmra.mxu0 %v8366
      %v8385 = vpop.f32.mrf.mxu0
      %v8386 = vadd.f32 0.0, %v8385
      %8387 = vdwg.mxu0
      %8389 = vrot.lane.b32.xlu0 %v8386, 116
      %v8390 = vpop.permute.xlu0 %8389
      %vm8392 = vcmask 1048480
      %8393 = vst.msk [vmem:[#allocation5 + $0x28] sm:$0xff] %vm8392, %v8390
      %8394 = vst.msk [vmem:[#allocation5 + $0x30] sm:$0xff] %vm8251, %v8390
      %v8395 = vld [vmem:[#allocation5] sm:$0xff]
      %v8396 = vld [vmem:[#allocation5 + $0x8] sm:$0xff]
      %v8397 = vld [vmem:[#allocation5 + $0x10] sm:$0xff]
      %v8398 = vld [vmem:[#allocation5 + $0x18] sm:$0xff]
      %v8399 = vld [vmem:[#allocation5 + $0x20] sm:$0xff]
      %v8400 = vld [vmem:[#allocation5 + $0x28] sm:$0xff]
      %8401 = vst [vmem:[#allocation9] sm:$0xff] %v8395
      %8402 = vst [vmem:[#allocation9 + $0x8] sm:$0xff] %v8396
      %8403 = vst [vmem:[#allocation9 + $0x10] sm:$0xff] %v8397
      %8404 = vst [vmem:[#allocation9 + $0x18] sm:$0xff] %v8398
      %8405 = vst [vmem:[#allocation9 + $0x20] sm:$0xff] %v8399
      %vm8406 = vcmask 703488
      %8407 = vst.msk [vmem:[#allocation9 + $0x28] sm:$0xff] %vm8406, %v8400
      %v8408 = vld [vmem:[#allocation5] sm:$0xff]
      %v8409 = vld [vmem:[#allocation5 + $0x8] sm:$0xff]
      %v8410 = vld [vmem:[#allocation5 + $0x10] sm:$0xff]
      %v8411 = vld [vmem:[#allocation5 + $0x18] sm:$0xff]
      %v8412 = vld [vmem:[#allocation5 + $0x20] sm:$0xff]
      %v8413 = vld [vmem:[#allocation5 + $0x28] sm:$0xff]
      %8420 = vrot.lane.b32.xlu0 %v8408, 127
      %v8421 = vpop.permute.xlu0 %8420
      %8422 = vrot.lane.b32.xlu0 %v8409, 127
      %v8423 = vpop.permute.xlu0 %8422
      %8424 = vrot.lane.b32.xlu0 %v8410, 127
      %v8425 = vpop.permute.xlu0 %8424
      %8426 = vrot.lane.b32.xlu0 %v8411, 127
      %v8427 = vpop.permute.xlu0 %8426
      %8428 = vrot.lane.b32.xlu0 %v8412, 127
      %v8429 = vpop.permute.xlu0 %8428
      %8430 = vrot.lane.b32.xlu0 %v8413, 127
      %v8431 = vpop.permute.xlu0 %8430
      %v8432 = vsel %vm548, %v8421, %v8423
      %v8433 = vsel %vm548, %v8423, %v8425
      %v8434 = vsel %vm548, %v8425, %v8427
      %v8435 = vsel %vm548, %v8427, %v8429
      %v8436 = vsel %vm548, %v8429, %v8431
      %8443 = vst [vmem:[#allocation9 + $0xe8] sm:$0xff] %v8432
      %8444 = vst [vmem:[#allocation9 + $0xf0] sm:$0xff] %v8433
      %8445 = vst [vmem:[#allocation9 + $0xf8] sm:$0xff] %v8434
      %8446 = vst [vmem:[#allocation9 + $0x100] sm:$0xff] %v8435
      %8447 = vst [vmem:[#allocation9 + $0x108] sm:$0xff] %v8436
      %8448 = vst.msk [vmem:[#allocation9 + $0x110] sm:$0xff] %vm8406, %v8431
      %v8449 = vld [vmem:[#allocation5] sm:$0xff]
      %v8450 = vld [vmem:[#allocation5 + $0x8] sm:$0xff]
      %v8451 = vld [vmem:[#allocation5 + $0x10] sm:$0xff]
      %v8452 = vld [vmem:[#allocation5 + $0x18] sm:$0xff]
      %v8453 = vld [vmem:[#allocation5 + $0x20] sm:$0xff]
      %v8454 = vld [vmem:[#allocation5 + $0x28] sm:$0xff]
      %8461 = vrot.lane.b32.xlu0 %v8449, 126
      %v8462 = vpop.permute.xlu0 %8461
      %8463 = vrot.lane.b32.xlu0 %v8450, 126
      %v8464 = vpop.permute.xlu0 %8463
      %8465 = vrot.lane.b32.xlu0 %v8451, 126
      %v8466 = vpop.permute.xlu0 %8465
      %8467 = vrot.lane.b32.xlu0 %v8452, 126
      %v8468 = vpop.permute.xlu0 %8467
      %8469 = vrot.lane.b32.xlu0 %v8453, 126
      %v8470 = vpop.permute.xlu0 %8469
      %8471 = vrot.lane.b32.xlu0 %v8454, 126
      %v8472 = vpop.permute.xlu0 %8471
      %v8473 = vsel %vm2197, %v8462, %v8464
      %v8474 = vsel %vm2197, %v8464, %v8466
      %v8475 = vsel %vm2197, %v8466, %v8468
      %v8476 = vsel %vm2197, %v8468, %v8470
      %v8477 = vsel %vm2197, %v8470, %v8472
      %8484 = vst [vmem:[#allocation9 + $0x1d0] sm:$0xff] %v8473
      %8485 = vst [vmem:[#allocation9 + $0x1d8] sm:$0xff] %v8474
      %8486 = vst [vmem:[#allocation9 + $0x1e0] sm:$0xff] %v8475
      %8487 = vst [vmem:[#allocation9 + $0x1e8] sm:$0xff] %v8476
      %8488 = vst [vmem:[#allocation9 + $0x1f0] sm:$0xff] %v8477
      %8489 = vst.msk [vmem:[#allocation9 + $0x1f8] sm:$0xff] %vm8406, %v8472
      %v8490 = vld [vmem:[#allocation5] sm:$0xff]
      %v8491 = vld [vmem:[#allocation5 + $0x8] sm:$0xff]
      %v8492 = vld [vmem:[#allocation5 + $0x10] sm:$0xff]
      %v8493 = vld [vmem:[#allocation5 + $0x18] sm:$0xff]
      %v8494 = vld [vmem:[#allocation5 + $0x20] sm:$0xff]
      %v8495 = vld [vmem:[#allocation5 + $0x28] sm:$0xff]
      %8502 = vrot.lane.b32.xlu0 %v8490, 100
      %v8503 = vpop.permute.xlu0 %8502
      %8504 = vrot.lane.b32.xlu0 %v8491, 100
      %v8505 = vpop.permute.xlu0 %8504
      %8506 = vrot.lane.b32.xlu0 %v8492, 100
      %v8507 = vpop.permute.xlu0 %8506
      %8508 = vrot.lane.b32.xlu0 %v8493, 100
      %v8509 = vpop.permute.xlu0 %8508
      %8510 = vrot.lane.b32.xlu0 %v8494, 100
      %v8511 = vpop.permute.xlu0 %8510
      %8512 = vrot.lane.b32.xlu0 %v8495, 100
      %v8513 = vpop.permute.xlu0 %8512
      %vm8514 = vcmask 818176
      %v8515 = vsel %vm8514, %v8503, %v8505
      %v8516 = vsel %vm8514, %v8505, %v8507
      %v8517 = vsel %vm8514, %v8507, %v8509
      %v8518 = vsel %vm8514, %v8509, %v8511
      %v8519 = vsel %vm8514, %v8511, %v8513
      %8526 = vst [vmem:[#allocation9 + $0x2b8] sm:$0xff] %v8515
      %8527 = vst [vmem:[#allocation9 + $0x2c0] sm:$0xff] %v8516
      %8528 = vst [vmem:[#allocation9 + $0x2c8] sm:$0xff] %v8517
      %8529 = vst [vmem:[#allocation9 + $0x2d0] sm:$0xff] %v8518
      %8530 = vst [vmem:[#allocation9 + $0x2d8] sm:$0xff] %v8519
      %8531 = vst.msk [vmem:[#allocation9 + $0x2e0] sm:$0xff] %vm8406, %v8513
      %v8532 = vld [vmem:[#allocation5] sm:$0xff]
      %v8533 = vld [vmem:[#allocation5 + $0x8] sm:$0xff]
      %v8534 = vld [vmem:[#allocation5 + $0x10] sm:$0xff]
      %v8535 = vld [vmem:[#allocation5 + $0x18] sm:$0xff]
      %v8536 = vld [vmem:[#allocation5 + $0x20] sm:$0xff]
      %v8537 = vld [vmem:[#allocation5 + $0x28] sm:$0xff]
      %8544 = vrot.lane.b32.xlu0 %v8532, 99
      %v8545 = vpop.permute.xlu0 %8544
      %8546 = vrot.lane.b32.xlu0 %v8533, 99
      %v8547 = vpop.permute.xlu0 %8546
      %8548 = vrot.lane.b32.xlu0 %v8534, 99
      %v8549 = vpop.permute.xlu0 %8548
      %8550 = vrot.lane.b32.xlu0 %v8535, 99
      %v8551 = vpop.permute.xlu0 %8550
      %8552 = vrot.lane.b32.xlu0 %v8536, 99
      %v8553 = vpop.permute.xlu0 %8552
      %8554 = vrot.lane.b32.xlu0 %v8537, 99
      %v8555 = vpop.permute.xlu0 %8554
      %vm8556 = vcmask 809984
      %v8557 = vsel %vm8556, %v8545, %v8547
      %v8558 = vsel %vm8556, %v8547, %v8549
      %v8559 = vsel %vm8556, %v8549, %v8551
      %v8560 = vsel %vm8556, %v8551, %v8553
      %v8561 = vsel %vm8556, %v8553, %v8555
      %8568 = vst [vmem:[#allocation9 + $0x3a0] sm:$0xff] %v8557
      %8569 = vst [vmem:[#allocation9 + $0x3a8] sm:$0xff] %v8558
      %8570 = vst [vmem:[#allocation9 + $0x3b0] sm:$0xff] %v8559
      %8571 = vst [vmem:[#allocation9 + $0x3b8] sm:$0xff] %v8560
      %8572 = vst [vmem:[#allocation9 + $0x3c0] sm:$0xff] %v8561
      %8573 = vst.msk [vmem:[#allocation9 + $0x3c8] sm:$0xff] %vm8406, %v8555
      %v8574 = vld [vmem:[#allocation5] sm:$0xff]
      %v8575 = vld [vmem:[#allocation5 + $0x8] sm:$0xff]
      %v8576 = vld [vmem:[#allocation5 + $0x10] sm:$0xff]
      %v8577 = vld [vmem:[#allocation5 + $0x18] sm:$0xff]
      %v8578 = vld [vmem:[#allocation5 + $0x20] sm:$0xff]
      %v8579 = vld [vmem:[#allocation5 + $0x28] sm:$0xff]
      %8586 = vrot.lane.b32.xlu0 %v8574, 98
      %v8587 = vpop.permute.xlu0 %8586
      %8588 = vrot.lane.b32.xlu0 %v8575, 98
      %v8589 = vpop.permute.xlu0 %8588
      %8590 = vrot.lane.b32.xlu0 %v8576, 98
      %v8591 = vpop.permute.xlu0 %8590
      %8592 = vrot.lane.b32.xlu0 %v8577, 98
      %v8593 = vpop.permute.xlu0 %8592
      %8594 = vrot.lane.b32.xlu0 %v8578, 98
      %v8595 = vpop.permute.xlu0 %8594
      %8596 = vrot.lane.b32.xlu0 %v8579, 98
      %v8597 = vpop.permute.xlu0 %8596
      %vm8598 = vcmask 801792
      %v8599 = vsel %vm8598, %v8587, %v8589
      %v8600 = vsel %vm8598, %v8589, %v8591
      %v8601 = vsel %vm8598, %v8591, %v8593
      %v8602 = vsel %vm8598, %v8593, %v8595
      %v8603 = vsel %vm8598, %v8595, %v8597
      %8610 = vst [vmem:[#allocation9 + $0x488] sm:$0xff] %v8599
      %8611 = vst [vmem:[#allocation9 + $0x490] sm:$0xff] %v8600
      %8612 = vst [vmem:[#allocation9 + $0x498] sm:$0xff] %v8601
      %8613 = vst [vmem:[#allocation9 + $0x4a0] sm:$0xff] %v8602
      %8614 = vst [vmem:[#allocation9 + $0x4a8] sm:$0xff] %v8603
      %8615 = vst.msk [vmem:[#allocation9 + $0x4b0] sm:$0xff] %vm8406, %v8597
      %v8616 = vld [vmem:[#allocation5] sm:$0xff]
      %v8617 = vld [vmem:[#allocation5 + $0x8] sm:$0xff]
      %v8618 = vld [vmem:[#allocation5 + $0x10] sm:$0xff]
      %v8619 = vld [vmem:[#allocation5 + $0x18] sm:$0xff]
      %v8620 = vld [vmem:[#allocation5 + $0x20] sm:$0xff]
      %v8621 = vld [vmem:[#allocation5 + $0x28] sm:$0xff]
      %v8622 = vld [vmem:[#allocation5 + $0x30] sm:$0xff]
      %8630 = vrot.lane.b32.xlu0 %v8616, 72
      %v8631 = vpop.permute.xlu0 %8630
      %8632 = vrot.lane.b32.xlu0 %v8617, 72
      %v8633 = vpop.permute.xlu0 %8632
      %8634 = vrot.lane.b32.xlu0 %v8618, 72
      %v8635 = vpop.permute.xlu0 %8634
      %8636 = vrot.lane.b32.xlu0 %v8619, 72
      %v8637 = vpop.permute.xlu0 %8636
      %8638 = vrot.lane.b32.xlu0 %v8620, 72
      %v8639 = vpop.permute.xlu0 %8638
      %8640 = vrot.lane.b32.xlu0 %v8621, 72
      %v8641 = vpop.permute.xlu0 %8640
      %8642 = vrot.lane.b32.xlu0 %v8622, 72
      %v8643 = vpop.permute.xlu0 %8642
      %v8644 = vsel %vm3783, %v8631, %v8633
      %v8645 = vsel %vm3783, %v8633, %v8635
      %v8646 = vsel %vm3783, %v8635, %v8637
      %v8647 = vsel %vm3783, %v8637, %v8639
      %v8648 = vsel %vm3783, %v8639, %v8641
      %v8649 = vsel %vm3783, %v8641, %v8643
      %8656 = vst [vmem:[#allocation9 + $0x570] sm:$0xff] %v8644
      %8657 = vst [vmem:[#allocation9 + $0x578] sm:$0xff] %v8645
      %8658 = vst [vmem:[#allocation9 + $0x580] sm:$0xff] %v8646
      %8659 = vst [vmem:[#allocation9 + $0x588] sm:$0xff] %v8647
      %8660 = vst [vmem:[#allocation9 + $0x590] sm:$0xff] %v8648
      %8661 = vst.msk [vmem:[#allocation9 + $0x598] sm:$0xff] %vm8406, %v8649
      %v8662 = vld [vmem:[#allocation5] sm:$0xff]
      %v8663 = vld [vmem:[#allocation5 + $0x8] sm:$0xff]
      %v8664 = vld [vmem:[#allocation5 + $0x10] sm:$0xff]
      %v8665 = vld [vmem:[#allocation5 + $0x18] sm:$0xff]
      %v8666 = vld [vmem:[#allocation5 + $0x20] sm:$0xff]
      %v8667 = vld [vmem:[#allocation5 + $0x28] sm:$0xff]
      %v8668 = vld [vmem:[#allocation5 + $0x30] sm:$0xff]
      %8676 = vrot.lane.b32.xlu0 %v8662, 71
      %v8677 = vpop.permute.xlu0 %8676
      %8678 = vrot.lane.b32.xlu0 %v8663, 71
      %v8679 = vpop.permute.xlu0 %8678
      %8680 = vrot.lane.b32.xlu0 %v8664, 71
      %v8681 = vpop.permute.xlu0 %8680
      %8682 = vrot.lane.b32.xlu0 %v8665, 71
      %v8683 = vpop.permute.xlu0 %8682
      %8684 = vrot.lane.b32.xlu0 %v8666, 71
      %v8685 = vpop.permute.xlu0 %8684
      %8686 = vrot.lane.b32.xlu0 %v8667, 71
      %v8687 = vpop.permute.xlu0 %8686
      %8688 = vrot.lane.b32.xlu0 %v8668, 71
      %v8689 = vpop.permute.xlu0 %8688
      %vm8690 = vcmask 580608
      %v8691 = vsel %vm8690, %v8677, %v8679
      %v8692 = vsel %vm8690, %v8679, %v8681
      %v8693 = vsel %vm8690, %v8681, %v8683
      %v8694 = vsel %vm8690, %v8683, %v8685
      %v8695 = vsel %vm8690, %v8685, %v8687
      %v8696 = vsel %vm8690, %v8687, %v8689
      %8703 = vst [vmem:[#allocation9 + $0x658] sm:$0xff] %v8691
      %8704 = vst [vmem:[#allocation9 + $0x660] sm:$0xff] %v8692
      %8705 = vst [vmem:[#allocation9 + $0x668] sm:$0xff] %v8693
      %8706 = vst [vmem:[#allocation9 + $0x670] sm:$0xff] %v8694
      %8707 = vst [vmem:[#allocation9 + $0x678] sm:$0xff] %v8695
      %8708 = vst.msk [vmem:[#allocation9 + $0x680] sm:$0xff] %vm8406, %v8696
      %v8709 = vld [vmem:[#allocation5] sm:$0xff]
      %v8710 = vld [vmem:[#allocation5 + $0x8] sm:$0xff]
      %v8711 = vld [vmem:[#allocation5 + $0x10] sm:$0xff]
      %v8712 = vld [vmem:[#allocation5 + $0x18] sm:$0xff]
      %v8713 = vld [vmem:[#allocation5 + $0x20] sm:$0xff]
      %v8714 = vld [vmem:[#allocation5 + $0x28] sm:$0xff]
      %v8715 = vld [vmem:[#allocation5 + $0x30] sm:$0xff]
      %8723 = vrot.lane.b32.xlu0 %v8709, 70
      %v8724 = vpop.permute.xlu0 %8723
      %8725 = vrot.lane.b32.xlu0 %v8710, 70
      %v8726 = vpop.permute.xlu0 %8725
      %8727 = vrot.lane.b32.xlu0 %v8711, 70
      %v8728 = vpop.permute.xlu0 %8727
      %8729 = vrot.lane.b32.xlu0 %v8712, 70
      %v8730 = vpop.permute.xlu0 %8729
      %8731 = vrot.lane.b32.xlu0 %v8713, 70
      %v8732 = vpop.permute.xlu0 %8731
      %8733 = vrot.lane.b32.xlu0 %v8714, 70
      %v8734 = vpop.permute.xlu0 %8733
      %8735 = vrot.lane.b32.xlu0 %v8715, 70
      %v8736 = vpop.permute.xlu0 %8735
      %vm8737 = vcmask 572416
      %v8738 = vsel %vm8737, %v8724, %v8726
      %v8739 = vsel %vm8737, %v8726, %v8728
      %v8740 = vsel %vm8737, %v8728, %v8730
      %v8741 = vsel %vm8737, %v8730, %v8732
      %v8742 = vsel %vm8737, %v8732, %v8734
      %v8743 = vsel %vm8737, %v8734, %v8736
      %8750 = vst [vmem:[#allocation9 + $0x740] sm:$0xff] %v8738
      %8751 = vst [vmem:[#allocation9 + $0x748] sm:$0xff] %v8739
      %8752 = vst [vmem:[#allocation9 + $0x750] sm:$0xff] %v8740
      %8753 = vst [vmem:[#allocation9 + $0x758] sm:$0xff] %v8741
      %8754 = vst [vmem:[#allocation9 + $0x760] sm:$0xff] %v8742
      %8755 = vst.msk [vmem:[#allocation9 + $0x768] sm:$0xff] %vm8406, %v8743
      %v8756 = vld [vmem:[%s1 + $0x18] sm:$0xff]
      %v8757 = vld [vmem:[#allocation9] sm:$0xff]
      %v8758 = vld [vmem:[#allocation9 + $0x8] sm:$0xff]
      %v8759 = vld [vmem:[#allocation9 + $0x10] sm:$0xff]
      %v8760 = vld [vmem:[#allocation9 + $0x18] sm:$0xff]
      %v8761 = vld [vmem:[#allocation9 + $0x20] sm:$0xff]
      %v8762 = vld [vmem:[#allocation9 + $0x28] sm:$0xff]
      %v8763 = vld [vmem:[#allocation9 + $0xe8] sm:$0xff]
      %v8764 = vld [vmem:[#allocation9 + $0xf0] sm:$0xff]
      %v8765 = vld [vmem:[#allocation9 + $0xf8] sm:$0xff]
      %v8766 = vld [vmem:[#allocation9 + $0x100] sm:$0xff]
      %v8767 = vld [vmem:[#allocation9 + $0x108] sm:$0xff]
      %v8768 = vld [vmem:[#allocation9 + $0x110] sm:$0xff]
      %v8769 = vld [vmem:[#allocation9 + $0x1d0] sm:$0xff]
      %v8770 = vld [vmem:[#allocation9 + $0x1d8] sm:$0xff]
      %v8771 = vld [vmem:[#allocation9 + $0x1e0] sm:$0xff]
      %v8772 = vld [vmem:[#allocation9 + $0x1e8] sm:$0xff]
      %v8773 = vld [vmem:[#allocation9 + $0x1f0] sm:$0xff]
      %v8774 = vld [vmem:[#allocation9 + $0x1f8] sm:$0xff]
      %v8775 = vld [vmem:[#allocation9 + $0x2b8] sm:$0xff]
      %v8776 = vld [vmem:[#allocation9 + $0x2c0] sm:$0xff]
      %v8777 = vld [vmem:[#allocation9 + $0x2c8] sm:$0xff]
      %v8778 = vld [vmem:[#allocation9 + $0x2d0] sm:$0xff]
      %v8779 = vld [vmem:[#allocation9 + $0x2d8] sm:$0xff]
      %v8780 = vld [vmem:[#allocation9 + $0x2e0] sm:$0xff]
      %v8781 = vld [vmem:[#allocation9 + $0x3a0] sm:$0xff]
      %v8782 = vld [vmem:[#allocation9 + $0x3a8] sm:$0xff]
      %v8783 = vld [vmem:[#allocation9 + $0x3b0] sm:$0xff]
      %v8784 = vld [vmem:[#allocation9 + $0x3b8] sm:$0xff]
      %v8785 = vld [vmem:[#allocation9 + $0x3c0] sm:$0xff]
      %v8786 = vld [vmem:[#allocation9 + $0x3c8] sm:$0xff]
      %v8787 = vld [vmem:[#allocation9 + $0x488] sm:$0xff]
      %v8788 = vld [vmem:[#allocation9 + $0x490] sm:$0xff]
      %v8789 = vld [vmem:[#allocation9 + $0x498] sm:$0xff]
      %v8790 = vld [vmem:[#allocation9 + $0x4a0] sm:$0xff]
      %v8791 = vld [vmem:[#allocation9 + $0x4a8] sm:$0xff]
      %v8792 = vld [vmem:[#allocation9 + $0x4b0] sm:$0xff]
      %v8793 = vld [vmem:[#allocation9 + $0x570] sm:$0xff]
      %v8794 = vld [vmem:[#allocation9 + $0x578] sm:$0xff]
      %v8795 = vld [vmem:[#allocation9 + $0x580] sm:$0xff]
      %v8796 = vld [vmem:[#allocation9 + $0x588] sm:$0xff]
      %v8797 = vld [vmem:[#allocation9 + $0x590] sm:$0xff]
      %v8798 = vld [vmem:[#allocation9 + $0x598] sm:$0xff]
      %v8799 = vld [vmem:[#allocation9 + $0x658] sm:$0xff]
      %v8800 = vld [vmem:[#allocation9 + $0x660] sm:$0xff]
      %v8801 = vld [vmem:[#allocation9 + $0x668] sm:$0xff]
      %v8802 = vld [vmem:[#allocation9 + $0x670] sm:$0xff]
      %v8803 = vld [vmem:[#allocation9 + $0x678] sm:$0xff]
      %v8804 = vld [vmem:[#allocation9 + $0x680] sm:$0xff]
      %v8805 = vld [vmem:[#allocation9 + $0x740] sm:$0xff]
      %v8806 = vld [vmem:[#allocation9 + $0x748] sm:$0xff]
      %v8807 = vld [vmem:[#allocation9 + $0x750] sm:$0xff]
      %v8808 = vld [vmem:[#allocation9 + $0x758] sm:$0xff]
      %v8809 = vld [vmem:[#allocation9 + $0x760] sm:$0xff]
      %v8810 = vld [vmem:[#allocation9 + $0x768] sm:$0xff]
      %v8811 = vld [vmem:[%s2 + $0x18] sm:$0xff]
      %8813 = vset.pattern.permute.xlu0 0
      %8814 = vperm.xlu0 %8813, %v8811
      %v8815 = vpop.permute.xlu0 %8814
      %v8818 = vsel %vm3783, %v8756, 0
      %8820 = vmatpush.msra.mxu0 0.0
      %8821 = vmatpush.msra.mxu0 0.0
      %8822 = vmatpush.msra.mxu0 0.0
      %8823 = vmatpush.msra.mxu0 0.0
      %8824 = vmatpush.msra.mxu0 0.0
      %8825 = vmatpush.msra.mxu0 0.0
      %8826 = vmatpush.msra.mxu0 0.0
      %8827 = vmatpush.msra.mxu0 %v8805
      %8828 = vmatpush.msra.mxu0 %v8799
      %8829 = vmatpush.msra.mxu0 %v8793
      %8830 = vmatpush.msra.mxu0 %v8787
      %8831 = vmatpush.msra.mxu0 %v8781
      %8832 = vmatpush.msra.mxu0 %v8775
      %8833 = vmatpush.msra.mxu0 %v8769
      %8834 = vmatpush.msra.mxu0 %v8763
      %8835 = vmatpush.msra.mxu0 %v8757
      %8836 = vmatmul.f32.gmra.mxu0 %v8818
      %v8837 = vpop.f32.mrf.mxu0
      %v8838 = vadd.f32 %v8815, %v8837
      %8839 = vdwg.mxu0
      %8840 = vmatpush.msra.mxu0 0.0
      %8841 = vmatpush.msra.mxu0 0.0
      %8842 = vmatpush.msra.mxu0 0.0
      %8843 = vmatpush.msra.mxu0 0.0
      %8844 = vmatpush.msra.mxu0 0.0
      %8845 = vmatpush.msra.mxu0 0.0
      %8846 = vmatpush.msra.mxu0 0.0
      %8847 = vmatpush.msra.mxu0 %v8806
      %8848 = vmatpush.msra.mxu0 %v8800
      %8849 = vmatpush.msra.mxu0 %v8794
      %8850 = vmatpush.msra.mxu0 %v8788
      %8851 = vmatpush.msra.mxu0 %v8782
      %8852 = vmatpush.msra.mxu0 %v8776
      %8853 = vmatpush.msra.mxu0 %v8770
      %8854 = vmatpush.msra.mxu0 %v8764
      %8855 = vmatpush.msra.mxu0 %v8758
      %8856 = vmatmul.f32.gmra.mxu0 %v8818
      %v8857 = vpop.f32.mrf.mxu0
      %v8858 = vadd.f32 %v8815, %v8857
      %8859 = vdwg.mxu0
      %8860 = vmatpush.msra.mxu0 0.0
      %8861 = vmatpush.msra.mxu0 0.0
      %8862 = vmatpush.msra.mxu0 0.0
      %8863 = vmatpush.msra.mxu0 0.0
      %8864 = vmatpush.msra.mxu0 0.0
      %8865 = vmatpush.msra.mxu0 0.0
      %8866 = vmatpush.msra.mxu0 0.0
      %8867 = vmatpush.msra.mxu0 %v8807
      %8868 = vmatpush.msra.mxu0 %v8801
      %8869 = vmatpush.msra.mxu0 %v8795
      %8870 = vmatpush.msra.mxu0 %v8789
      %8871 = vmatpush.msra.mxu0 %v8783
      %8872 = vmatpush.msra.mxu0 %v8777
      %8873 = vmatpush.msra.mxu0 %v8771
      %8874 = vmatpush.msra.mxu0 %v8765
      %8875 = vmatpush.msra.mxu0 %v8759
      %8876 = vmatmul.f32.gmra.mxu0 %v8818
      %v8877 = vpop.f32.mrf.mxu0
      %v8878 = vadd.f32 %v8815, %v8877
      %8879 = vdwg.mxu0
      %8880 = vmatpush.msra.mxu0 0.0
      %8881 = vmatpush.msra.mxu0 0.0
      %8882 = vmatpush.msra.mxu0 0.0
      %8883 = vmatpush.msra.mxu0 0.0
      %8884 = vmatpush.msra.mxu0 0.0
      %8885 = vmatpush.msra.mxu0 0.0
      %8886 = vmatpush.msra.mxu0 0.0
      %8887 = vmatpush.msra.mxu0 %v8808
      %8888 = vmatpush.msra.mxu0 %v8802
      %8889 = vmatpush.msra.mxu0 %v8796
      %8890 = vmatpush.msra.mxu0 %v8790
      %8891 = vmatpush.msra.mxu0 %v8784
      %8892 = vmatpush.msra.mxu0 %v8778
      %8893 = vmatpush.msra.mxu0 %v8772
      %8894 = vmatpush.msra.mxu0 %v8766
      %8895 = vmatpush.msra.mxu0 %v8760
      %8896 = vmatmul.f32.gmra.mxu0 %v8818
      %v8897 = vpop.f32.mrf.mxu0
      %v8898 = vadd.f32 %v8815, %v8897
      %8899 = vdwg.mxu0
      %8900 = vmatpush.msra.mxu0 0.0
      %8901 = vmatpush.msra.mxu0 0.0
      %8902 = vmatpush.msra.mxu0 0.0
      %8903 = vmatpush.msra.mxu0 0.0
      %8904 = vmatpush.msra.mxu0 0.0
      %8905 = vmatpush.msra.mxu0 0.0
      %8906 = vmatpush.msra.mxu0 0.0
      %8907 = vmatpush.msra.mxu0 %v8809
      %8908 = vmatpush.msra.mxu0 %v8803
      %8909 = vmatpush.msra.mxu0 %v8797
      %8910 = vmatpush.msra.mxu0 %v8791
      %8911 = vmatpush.msra.mxu0 %v8785
      %8912 = vmatpush.msra.mxu0 %v8779
      %8913 = vmatpush.msra.mxu0 %v8773
      %8914 = vmatpush.msra.mxu0 %v8767
      %8915 = vmatpush.msra.mxu0 %v8761
      %8916 = vmatmul.f32.gmra.mxu0 %v8818
      %v8917 = vpop.f32.mrf.mxu0
      %v8918 = vadd.f32 %v8815, %v8917
      %8919 = vdwg.mxu0
      %8920 = vmatpush.msra.mxu0 0.0
      %8921 = vmatpush.msra.mxu0 0.0
      %8922 = vmatpush.msra.mxu0 0.0
      %8923 = vmatpush.msra.mxu0 0.0
      %8924 = vmatpush.msra.mxu0 0.0
      %8925 = vmatpush.msra.mxu0 0.0
      %8926 = vmatpush.msra.mxu0 0.0
      %8927 = vmatpush.msra.mxu0 %v8810
      %8928 = vmatpush.msra.mxu0 %v8804
      %8929 = vmatpush.msra.mxu0 %v8798
      %8930 = vmatpush.msra.mxu0 %v8792
      %8931 = vmatpush.msra.mxu0 %v8786
      %8932 = vmatpush.msra.mxu0 %v8780
      %8933 = vmatpush.msra.mxu0 %v8774
      %8934 = vmatpush.msra.mxu0 %v8768
      %8935 = vmatpush.msra.mxu0 %v8762
      %8936 = vmatmul.f32.gmra.mxu0 %v8818
      %v8937 = vpop.f32.mrf.mxu0
      %v8938 = vadd.f32 %v8815, %v8937
      %8939 = vdwg.mxu0
      %v8940 = vmax.f32 %v8838, 0.0
      %v8941 = vmax.f32 %v8858, 0.0
      %v8942 = vmax.f32 %v8878, 0.0
      %v8943 = vmax.f32 %v8898, 0.0
      %v8944 = vmax.f32 %v8918, 0.0
      %v8945 = vmax.f32 %v8938, 0.0
      %8946 = vst [vmem:[#allocation6] sm:$0xff] %v8940
      %8947 = vst [vmem:[#allocation6 + $0x8] sm:$0xff] %v8941
      %8948 = vst [vmem:[#allocation6 + $0x10] sm:$0xff] %v8942
      %8949 = vst [vmem:[#allocation6 + $0x18] sm:$0xff] %v8943
      %8950 = vst [vmem:[#allocation6 + $0x20] sm:$0xff] %v8944
      %8951 = vst.msk [vmem:[#allocation6 + $0x28] sm:$0xff] %vm8406, %v8945
      %vm8952 = vcmask 1048240
      %8953 = vst.msk [vmem:[#allocation6 + $0x28] sm:$0xff] %vm8952, 0.0
      %8954 = vst.msk [vmem:[#allocation6 + $0x30] sm:$0xff] %vm8251, 0.0
      %v8955 = vld [vmem:[#allocation6] sm:$0xff]
      %v8956 = vld [vmem:[#allocation6 + $0x8] sm:$0xff]
      %v8957 = vld [vmem:[#allocation6 + $0x10] sm:$0xff]
      %v8958 = vld [vmem:[#allocation6 + $0x18] sm:$0xff]
      %v8959 = vld [vmem:[#allocation6 + $0x20] sm:$0xff]
      %v8960 = vld [vmem:[#allocation6 + $0x28] sm:$0xff]
      %8961 = vst [vmem:[#allocation9] sm:$0xff] %v8955
      %8962 = vst [vmem:[#allocation9 + $0x8] sm:$0xff] %v8956
      %8963 = vst [vmem:[#allocation9 + $0x10] sm:$0xff] %v8957
      %8964 = vst [vmem:[#allocation9 + $0x18] sm:$0xff] %v8958
      %8965 = vst [vmem:[#allocation9 + $0x20] sm:$0xff] %v8959
      %8966 = vst.msk [vmem:[#allocation9 + $0x28] sm:$0xff] %vm8406, %v8960
      %v8967 = vld [vmem:[#allocation6] sm:$0xff]
      %v8968 = vld [vmem:[#allocation6 + $0x8] sm:$0xff]
      %v8969 = vld [vmem:[#allocation6 + $0x10] sm:$0xff]
      %v8970 = vld [vmem:[#allocation6 + $0x18] sm:$0xff]
      %v8971 = vld [vmem:[#allocation6 + $0x20] sm:$0xff]
      %v8972 = vld [vmem:[#allocation6 + $0x28] sm:$0xff]
      %8979 = vrot.lane.b32.xlu0 %v8967, 127
      %v8980 = vpop.permute.xlu0 %8979
      %8981 = vrot.lane.b32.xlu0 %v8968, 127
      %v8982 = vpop.permute.xlu0 %8981
      %8983 = vrot.lane.b32.xlu0 %v8969, 127
      %v8984 = vpop.permute.xlu0 %8983
      %8985 = vrot.lane.b32.xlu0 %v8970, 127
      %v8986 = vpop.permute.xlu0 %8985
      %8987 = vrot.lane.b32.xlu0 %v8971, 127
      %v8988 = vpop.permute.xlu0 %8987
      %8989 = vrot.lane.b32.xlu0 %v8972, 127
      %v8990 = vpop.permute.xlu0 %8989
      %v8991 = vsel %vm548, %v8980, %v8982
      %v8992 = vsel %vm548, %v8982, %v8984
      %v8993 = vsel %vm548, %v8984, %v8986
      %v8994 = vsel %vm548, %v8986, %v8988
      %v8995 = vsel %vm548, %v8988, %v8990
      %9002 = vst [vmem:[#allocation9 + $0xe8] sm:$0xff] %v8991
      %9003 = vst [vmem:[#allocation9 + $0xf0] sm:$0xff] %v8992
      %9004 = vst [vmem:[#allocation9 + $0xf8] sm:$0xff] %v8993
      %9005 = vst [vmem:[#allocation9 + $0x100] sm:$0xff] %v8994
      %9006 = vst [vmem:[#allocation9 + $0x108] sm:$0xff] %v8995
      %9007 = vst.msk [vmem:[#allocation9 + $0x110] sm:$0xff] %vm8406, %v8990
      %v9008 = vld [vmem:[#allocation6] sm:$0xff]
      %v9009 = vld [vmem:[#allocation6 + $0x8] sm:$0xff]
      %v9010 = vld [vmem:[#allocation6 + $0x10] sm:$0xff]
      %v9011 = vld [vmem:[#allocation6 + $0x18] sm:$0xff]
      %v9012 = vld [vmem:[#allocation6 + $0x20] sm:$0xff]
      %v9013 = vld [vmem:[#allocation6 + $0x28] sm:$0xff]
      %9020 = vrot.lane.b32.xlu0 %v9008, 126
      %v9021 = vpop.permute.xlu0 %9020
      %9022 = vrot.lane.b32.xlu0 %v9009, 126
      %v9023 = vpop.permute.xlu0 %9022
      %9024 = vrot.lane.b32.xlu0 %v9010, 126
      %v9025 = vpop.permute.xlu0 %9024
      %9026 = vrot.lane.b32.xlu0 %v9011, 126
      %v9027 = vpop.permute.xlu0 %9026
      %9028 = vrot.lane.b32.xlu0 %v9012, 126
      %v9029 = vpop.permute.xlu0 %9028
      %9030 = vrot.lane.b32.xlu0 %v9013, 126
      %v9031 = vpop.permute.xlu0 %9030
      %v9032 = vsel %vm2197, %v9021, %v9023
      %v9033 = vsel %vm2197, %v9023, %v9025
      %v9034 = vsel %vm2197, %v9025, %v9027
      %v9035 = vsel %vm2197, %v9027, %v9029
      %v9036 = vsel %vm2197, %v9029, %v9031
      %9043 = vst [vmem:[#allocation9 + $0x1d0] sm:$0xff] %v9032
      %9044 = vst [vmem:[#allocation9 + $0x1d8] sm:$0xff] %v9033
      %9045 = vst [vmem:[#allocation9 + $0x1e0] sm:$0xff] %v9034
      %9046 = vst [vmem:[#allocation9 + $0x1e8] sm:$0xff] %v9035
      %9047 = vst [vmem:[#allocation9 + $0x1f0] sm:$0xff] %v9036
      %9048 = vst.msk [vmem:[#allocation9 + $0x1f8] sm:$0xff] %vm8406, %v9031
      %v9049 = vld [vmem:[#allocation6] sm:$0xff]
      %v9050 = vld [vmem:[#allocation6 + $0x8] sm:$0xff]
      %v9051 = vld [vmem:[#allocation6 + $0x10] sm:$0xff]
      %v9052 = vld [vmem:[#allocation6 + $0x18] sm:$0xff]
      %v9053 = vld [vmem:[#allocation6 + $0x20] sm:$0xff]
      %v9054 = vld [vmem:[#allocation6 + $0x28] sm:$0xff]
      %9061 = vrot.lane.b32.xlu0 %v9049, 100
      %v9062 = vpop.permute.xlu0 %9061
      %9063 = vrot.lane.b32.xlu0 %v9050, 100
      %v9064 = vpop.permute.xlu0 %9063
      %9065 = vrot.lane.b32.xlu0 %v9051, 100
      %v9066 = vpop.permute.xlu0 %9065
      %9067 = vrot.lane.b32.xlu0 %v9052, 100
      %v9068 = vpop.permute.xlu0 %9067
      %9069 = vrot.lane.b32.xlu0 %v9053, 100
      %v9070 = vpop.permute.xlu0 %9069
      %9071 = vrot.lane.b32.xlu0 %v9054, 100
      %v9072 = vpop.permute.xlu0 %9071
      %v9073 = vsel %vm8514, %v9062, %v9064
      %v9074 = vsel %vm8514, %v9064, %v9066
      %v9075 = vsel %vm8514, %v9066, %v9068
      %v9076 = vsel %vm8514, %v9068, %v9070
      %v9077 = vsel %vm8514, %v9070, %v9072
      %9084 = vst [vmem:[#allocation9 + $0x2b8] sm:$0xff] %v9073
      %9085 = vst [vmem:[#allocation9 + $0x2c0] sm:$0xff] %v9074
      %9086 = vst [vmem:[#allocation9 + $0x2c8] sm:$0xff] %v9075
      %9087 = vst [vmem:[#allocation9 + $0x2d0] sm:$0xff] %v9076
      %9088 = vst [vmem:[#allocation9 + $0x2d8] sm:$0xff] %v9077
      %9089 = vst.msk [vmem:[#allocation9 + $0x2e0] sm:$0xff] %vm8406, %v9072
      %v9090 = vld [vmem:[#allocation6] sm:$0xff]
      %v9091 = vld [vmem:[#allocation6 + $0x8] sm:$0xff]
      %v9092 = vld [vmem:[#allocation6 + $0x10] sm:$0xff]
      %v9093 = vld [vmem:[#allocation6 + $0x18] sm:$0xff]
      %v9094 = vld [vmem:[#allocation6 + $0x20] sm:$0xff]
      %v9095 = vld [vmem:[#allocation6 + $0x28] sm:$0xff]
      %9102 = vrot.lane.b32.xlu0 %v9090, 99
      %v9103 = vpop.permute.xlu0 %9102
      %9104 = vrot.lane.b32.xlu0 %v9091, 99
      %v9105 = vpop.permute.xlu0 %9104
      %9106 = vrot.lane.b32.xlu0 %v9092, 99
      %v9107 = vpop.permute.xlu0 %9106
      %9108 = vrot.lane.b32.xlu0 %v9093, 99
      %v9109 = vpop.permute.xlu0 %9108
      %9110 = vrot.lane.b32.xlu0 %v9094, 99
      %v9111 = vpop.permute.xlu0 %9110
      %9112 = vrot.lane.b32.xlu0 %v9095, 99
      %v9113 = vpop.permute.xlu0 %9112
      %v9114 = vsel %vm8556, %v9103, %v9105
      %v9115 = vsel %vm8556, %v9105, %v9107
      %v9116 = vsel %vm8556, %v9107, %v9109
      %v9117 = vsel %vm8556, %v9109, %v9111
      %v9118 = vsel %vm8556, %v9111, %v9113
      %9125 = vst [vmem:[#allocation9 + $0x3a0] sm:$0xff] %v9114
      %9126 = vst [vmem:[#allocation9 + $0x3a8] sm:$0xff] %v9115
      %9127 = vst [vmem:[#allocation9 + $0x3b0] sm:$0xff] %v9116
      %9128 = vst [vmem:[#allocation9 + $0x3b8] sm:$0xff] %v9117
      %9129 = vst [vmem:[#allocation9 + $0x3c0] sm:$0xff] %v9118
      %9130 = vst.msk [vmem:[#allocation9 + $0x3c8] sm:$0xff] %vm8406, %v9113
      %v9131 = vld [vmem:[#allocation6] sm:$0xff]
      %v9132 = vld [vmem:[#allocation6 + $0x8] sm:$0xff]
      %v9133 = vld [vmem:[#allocation6 + $0x10] sm:$0xff]
      %v9134 = vld [vmem:[#allocation6 + $0x18] sm:$0xff]
      %v9135 = vld [vmem:[#allocation6 + $0x20] sm:$0xff]
      %v9136 = vld [vmem:[#allocation6 + $0x28] sm:$0xff]
      %9143 = vrot.lane.b32.xlu0 %v9131, 98
      %v9144 = vpop.permute.xlu0 %9143
      %9145 = vrot.lane.b32.xlu0 %v9132, 98
      %v9146 = vpop.permute.xlu0 %9145
      %9147 = vrot.lane.b32.xlu0 %v9133, 98
      %v9148 = vpop.permute.xlu0 %9147
      %9149 = vrot.lane.b32.xlu0 %v9134, 98
      %v9150 = vpop.permute.xlu0 %9149
      %9151 = vrot.lane.b32.xlu0 %v9135, 98
      %v9152 = vpop.permute.xlu0 %9151
      %9153 = vrot.lane.b32.xlu0 %v9136, 98
      %v9154 = vpop.permute.xlu0 %9153
      %v9155 = vsel %vm8598, %v9144, %v9146
      %v9156 = vsel %vm8598, %v9146, %v9148
      %v9157 = vsel %vm8598, %v9148, %v9150
      %v9158 = vsel %vm8598, %v9150, %v9152
      %v9159 = vsel %vm8598, %v9152, %v9154
      %9166 = vst [vmem:[#allocation9 + $0x488] sm:$0xff] %v9155
      %9167 = vst [vmem:[#allocation9 + $0x490] sm:$0xff] %v9156
      %9168 = vst [vmem:[#allocation9 + $0x498] sm:$0xff] %v9157
      %9169 = vst [vmem:[#allocation9 + $0x4a0] sm:$0xff] %v9158
      %9170 = vst [vmem:[#allocation9 + $0x4a8] sm:$0xff] %v9159
      %9171 = vst.msk [vmem:[#allocation9 + $0x4b0] sm:$0xff] %vm8406, %v9154
      %v9172 = vld [vmem:[#allocation6] sm:$0xff]
      %v9173 = vld [vmem:[#allocation6 + $0x8] sm:$0xff]
      %v9174 = vld [vmem:[#allocation6 + $0x10] sm:$0xff]
      %v9175 = vld [vmem:[#allocation6 + $0x18] sm:$0xff]
      %v9176 = vld [vmem:[#allocation6 + $0x20] sm:$0xff]
      %v9177 = vld [vmem:[#allocation6 + $0x28] sm:$0xff]
      %v9178 = vld [vmem:[#allocation6 + $0x30] sm:$0xff]
      %9186 = vrot.lane.b32.xlu0 %v9172, 72
      %v9187 = vpop.permute.xlu0 %9186
      %9188 = vrot.lane.b32.xlu0 %v9173, 72
      %v9189 = vpop.permute.xlu0 %9188
      %9190 = vrot.lane.b32.xlu0 %v9174, 72
      %v9191 = vpop.permute.xlu0 %9190
      %9192 = vrot.lane.b32.xlu0 %v9175, 72
      %v9193 = vpop.permute.xlu0 %9192
      %9194 = vrot.lane.b32.xlu0 %v9176, 72
      %v9195 = vpop.permute.xlu0 %9194
      %9196 = vrot.lane.b32.xlu0 %v9177, 72
      %v9197 = vpop.permute.xlu0 %9196
      %9198 = vrot.lane.b32.xlu0 %v9178, 72
      %v9199 = vpop.permute.xlu0 %9198
      %v9200 = vsel %vm3783, %v9187, %v9189
      %v9201 = vsel %vm3783, %v9189, %v9191
      %v9202 = vsel %vm3783, %v9191, %v9193
      %v9203 = vsel %vm3783, %v9193, %v9195
      %v9204 = vsel %vm3783, %v9195, %v9197
      %v9205 = vsel %vm3783, %v9197, %v9199
      %9212 = vst [vmem:[#allocation9 + $0x570] sm:$0xff] %v9200
      %9213 = vst [vmem:[#allocation9 + $0x578] sm:$0xff] %v9201
      %9214 = vst [vmem:[#allocation9 + $0x580] sm:$0xff] %v9202
      %9215 = vst [vmem:[#allocation9 + $0x588] sm:$0xff] %v9203
      %9216 = vst [vmem:[#allocation9 + $0x590] sm:$0xff] %v9204
      %9217 = vst.msk [vmem:[#allocation9 + $0x598] sm:$0xff] %vm8406, %v9205
      %v9218 = vld [vmem:[#allocation6] sm:$0xff]
      %v9219 = vld [vmem:[#allocation6 + $0x8] sm:$0xff]
      %v9220 = vld [vmem:[#allocation6 + $0x10] sm:$0xff]
      %v9221 = vld [vmem:[#allocation6 + $0x18] sm:$0xff]
      %v9222 = vld [vmem:[#allocation6 + $0x20] sm:$0xff]
      %v9223 = vld [vmem:[#allocation6 + $0x28] sm:$0xff]
      %v9224 = vld [vmem:[#allocation6 + $0x30] sm:$0xff]
      %9232 = vrot.lane.b32.xlu0 %v9218, 71
      %v9233 = vpop.permute.xlu0 %9232
      %9234 = vrot.lane.b32.xlu0 %v9219, 71
      %v9235 = vpop.permute.xlu0 %9234
      %9236 = vrot.lane.b32.xlu0 %v9220, 71
      %v9237 = vpop.permute.xlu0 %9236
      %9238 = vrot.lane.b32.xlu0 %v9221, 71
      %v9239 = vpop.permute.xlu0 %9238
      %9240 = vrot.lane.b32.xlu0 %v9222, 71
      %v9241 = vpop.permute.xlu0 %9240
      %9242 = vrot.lane.b32.xlu0 %v9223, 71
      %v9243 = vpop.permute.xlu0 %9242
      %9244 = vrot.lane.b32.xlu0 %v9224, 71
      %v9245 = vpop.permute.xlu0 %9244
      %v9246 = vsel %vm8690, %v9233, %v9235
      %v9247 = vsel %vm8690, %v9235, %v9237
      %v9248 = vsel %vm8690, %v9237, %v9239
      %v9249 = vsel %vm8690, %v9239, %v9241
      %v9250 = vsel %vm8690, %v9241, %v9243
      %v9251 = vsel %vm8690, %v9243, %v9245
      %9258 = vst [vmem:[#allocation9 + $0x658] sm:$0xff] %v9246
      %9259 = vst [vmem:[#allocation9 + $0x660] sm:$0xff] %v9247
      %9260 = vst [vmem:[#allocation9 + $0x668] sm:$0xff] %v9248
      %9261 = vst [vmem:[#allocation9 + $0x670] sm:$0xff] %v9249
      %9262 = vst [vmem:[#allocation9 + $0x678] sm:$0xff] %v9250
      %9263 = vst.msk [vmem:[#allocation9 + $0x680] sm:$0xff] %vm8406, %v9251
      %v9264 = vld [vmem:[#allocation6] sm:$0xff]
      %v9265 = vld [vmem:[#allocation6 + $0x8] sm:$0xff]
      %v9266 = vld [vmem:[#allocation6 + $0x10] sm:$0xff]
      %v9267 = vld [vmem:[#allocation6 + $0x18] sm:$0xff]
      %v9268 = vld [vmem:[#allocation6 + $0x20] sm:$0xff]
      %v9269 = vld [vmem:[#allocation6 + $0x28] sm:$0xff]
      %v9270 = vld [vmem:[#allocation6 + $0x30] sm:$0xff]
      %9278 = vrot.lane.b32.xlu0 %v9264, 70
      %v9279 = vpop.permute.xlu0 %9278
      %9280 = vrot.lane.b32.xlu0 %v9265, 70
      %v9281 = vpop.permute.xlu0 %9280
      %9282 = vrot.lane.b32.xlu0 %v9266, 70
      %v9283 = vpop.permute.xlu0 %9282
      %9284 = vrot.lane.b32.xlu0 %v9267, 70
      %v9285 = vpop.permute.xlu0 %9284
      %9286 = vrot.lane.b32.xlu0 %v9268, 70
      %v9287 = vpop.permute.xlu0 %9286
      %9288 = vrot.lane.b32.xlu0 %v9269, 70
      %v9289 = vpop.permute.xlu0 %9288
      %9290 = vrot.lane.b32.xlu0 %v9270, 70
      %v9291 = vpop.permute.xlu0 %9290
      %v9292 = vsel %vm8737, %v9279, %v9281
      %v9293 = vsel %vm8737, %v9281, %v9283
      %v9294 = vsel %vm8737, %v9283, %v9285
      %v9295 = vsel %vm8737, %v9285, %v9287
      %v9296 = vsel %vm8737, %v9287, %v9289
      %v9297 = vsel %vm8737, %v9289, %v9291
      %9304 = vst [vmem:[#allocation9 + $0x740] sm:$0xff] %v9292
      %9305 = vst [vmem:[#allocation9 + $0x748] sm:$0xff] %v9293
      %9306 = vst [vmem:[#allocation9 + $0x750] sm:$0xff] %v9294
      %9307 = vst [vmem:[#allocation9 + $0x758] sm:$0xff] %v9295
      %9308 = vst [vmem:[#allocation9 + $0x760] sm:$0xff] %v9296
      %9309 = vst.msk [vmem:[#allocation9 + $0x768] sm:$0xff] %vm8406, %v9297
      %v9310 = vld [vmem:[%s1 + $0x20] sm:$0xff]
      %v9311 = vld [vmem:[#allocation9] sm:$0xff]
      %v9312 = vld [vmem:[#allocation9 + $0x8] sm:$0xff]
      %v9313 = vld [vmem:[#allocation9 + $0x10] sm:$0xff]
      %v9314 = vld [vmem:[#allocation9 + $0x18] sm:$0xff]
      %v9315 = vld [vmem:[#allocation9 + $0x20] sm:$0xff]
      %v9316 = vld [vmem:[#allocation9 + $0x28] sm:$0xff]
      %v9317 = vld [vmem:[#allocation9 + $0xe8] sm:$0xff]
      %v9318 = vld [vmem:[#allocation9 + $0xf0] sm:$0xff]
      %v9319 = vld [vmem:[#allocation9 + $0xf8] sm:$0xff]
      %v9320 = vld [vmem:[#allocation9 + $0x100] sm:$0xff]
      %v9321 = vld [vmem:[#allocation9 + $0x108] sm:$0xff]
      %v9322 = vld [vmem:[#allocation9 + $0x110] sm:$0xff]
      %v9323 = vld [vmem:[#allocation9 + $0x1d0] sm:$0xff]
      %v9324 = vld [vmem:[#allocation9 + $0x1d8] sm:$0xff]
      %v9325 = vld [vmem:[#allocation9 + $0x1e0] sm:$0xff]
      %v9326 = vld [vmem:[#allocation9 + $0x1e8] sm:$0xff]
      %v9327 = vld [vmem:[#allocation9 + $0x1f0] sm:$0xff]
      %v9328 = vld [vmem:[#allocation9 + $0x1f8] sm:$0xff]
      %v9329 = vld [vmem:[#allocation9 + $0x2b8] sm:$0xff]
      %v9330 = vld [vmem:[#allocation9 + $0x2c0] sm:$0xff]
      %v9331 = vld [vmem:[#allocation9 + $0x2c8] sm:$0xff]
      %v9332 = vld [vmem:[#allocation9 + $0x2d0] sm:$0xff]
      %v9333 = vld [vmem:[#allocation9 + $0x2d8] sm:$0xff]
      %v9334 = vld [vmem:[#allocation9 + $0x2e0] sm:$0xff]
      %v9335 = vld [vmem:[#allocation9 + $0x3a0] sm:$0xff]
      %v9336 = vld [vmem:[#allocation9 + $0x3a8] sm:$0xff]
      %v9337 = vld [vmem:[#allocation9 + $0x3b0] sm:$0xff]
      %v9338 = vld [vmem:[#allocation9 + $0x3b8] sm:$0xff]
      %v9339 = vld [vmem:[#allocation9 + $0x3c0] sm:$0xff]
      %v9340 = vld [vmem:[#allocation9 + $0x3c8] sm:$0xff]
      %v9341 = vld [vmem:[#allocation9 + $0x488] sm:$0xff]
      %v9342 = vld [vmem:[#allocation9 + $0x490] sm:$0xff]
      %v9343 = vld [vmem:[#allocation9 + $0x498] sm:$0xff]
      %v9344 = vld [vmem:[#allocation9 + $0x4a0] sm:$0xff]
      %v9345 = vld [vmem:[#allocation9 + $0x4a8] sm:$0xff]
      %v9346 = vld [vmem:[#allocation9 + $0x4b0] sm:$0xff]
      %v9347 = vld [vmem:[#allocation9 + $0x570] sm:$0xff]
      %v9348 = vld [vmem:[#allocation9 + $0x578] sm:$0xff]
      %v9349 = vld [vmem:[#allocation9 + $0x580] sm:$0xff]
      %v9350 = vld [vmem:[#allocation9 + $0x588] sm:$0xff]
      %v9351 = vld [vmem:[#allocation9 + $0x590] sm:$0xff]
      %v9352 = vld [vmem:[#allocation9 + $0x598] sm:$0xff]
      %v9353 = vld [vmem:[#allocation9 + $0x658] sm:$0xff]
      %v9354 = vld [vmem:[#allocation9 + $0x660] sm:$0xff]
      %v9355 = vld [vmem:[#allocation9 + $0x668] sm:$0xff]
      %v9356 = vld [vmem:[#allocation9 + $0x670] sm:$0xff]
      %v9357 = vld [vmem:[#allocation9 + $0x678] sm:$0xff]
      %v9358 = vld [vmem:[#allocation9 + $0x680] sm:$0xff]
      %v9359 = vld [vmem:[#allocation9 + $0x740] sm:$0xff]
      %v9360 = vld [vmem:[#allocation9 + $0x748] sm:$0xff]
      %v9361 = vld [vmem:[#allocation9 + $0x750] sm:$0xff]
      %v9362 = vld [vmem:[#allocation9 + $0x758] sm:$0xff]
      %v9363 = vld [vmem:[#allocation9 + $0x760] sm:$0xff]
      %v9364 = vld [vmem:[#allocation9 + $0x768] sm:$0xff]
      %v9365 = vld [vmem:[%s2 + $0x20] sm:$0xff]
      %9367 = vset.pattern.permute.xlu0 0
      %9368 = vperm.xlu0 %9367, %v9365
      %v9369 = vpop.permute.xlu0 %9368
      %v9372 = vsel %vm3783, %v9310, 0
      %9374 = vmatpush.msra.mxu0 0.0
      %9375 = vmatpush.msra.mxu0 0.0
      %9376 = vmatpush.msra.mxu0 0.0
      %9377 = vmatpush.msra.mxu0 0.0
      %9378 = vmatpush.msra.mxu0 0.0
      %9379 = vmatpush.msra.mxu0 0.0
      %9380 = vmatpush.msra.mxu0 0.0
      %9381 = vmatpush.msra.mxu0 %v9359
      %9382 = vmatpush.msra.mxu0 %v9353
      %9383 = vmatpush.msra.mxu0 %v9347
      %9384 = vmatpush.msra.mxu0 %v9341
      %9385 = vmatpush.msra.mxu0 %v9335
      %9386 = vmatpush.msra.mxu0 %v9329
      %9387 = vmatpush.msra.mxu0 %v9323
      %9388 = vmatpush.msra.mxu0 %v9317
      %9389 = vmatpush.msra.mxu0 %v9311
      %9390 = vmatmul.f32.gmra.mxu0 %v9372
      %v9391 = vpop.f32.mrf.mxu0
      %v9392 = vadd.f32 %v9369, %v9391
      %9393 = vdwg.mxu0
      %9394 = vmatpush.msra.mxu0 0.0
      %9395 = vmatpush.msra.mxu0 0.0
      %9396 = vmatpush.msra.mxu0 0.0
      %9397 = vmatpush.msra.mxu0 0.0
      %9398 = vmatpush.msra.mxu0 0.0
      %9399 = vmatpush.msra.mxu0 0.0
      %9400 = vmatpush.msra.mxu0 0.0
      %9401 = vmatpush.msra.mxu0 %v9360
      %9402 = vmatpush.msra.mxu0 %v9354
      %9403 = vmatpush.msra.mxu0 %v9348
      %9404 = vmatpush.msra.mxu0 %v9342
      %9405 = vmatpush.msra.mxu0 %v9336
      %9406 = vmatpush.msra.mxu0 %v9330
      %9407 = vmatpush.msra.mxu0 %v9324
      %9408 = vmatpush.msra.mxu0 %v9318
      %9409 = vmatpush.msra.mxu0 %v9312
      %9410 = vmatmul.f32.gmra.mxu0 %v9372
      %v9411 = vpop.f32.mrf.mxu0
      %v9412 = vadd.f32 %v9369, %v9411
      %9413 = vdwg.mxu0
      %9414 = vmatpush.msra.mxu0 0.0
      %9415 = vmatpush.msra.mxu0 0.0
      %9416 = vmatpush.msra.mxu0 0.0
      %9417 = vmatpush.msra.mxu0 0.0
      %9418 = vmatpush.msra.mxu0 0.0
      %9419 = vmatpush.msra.mxu0 0.0
      %9420 = vmatpush.msra.mxu0 0.0
      %9421 = vmatpush.msra.mxu0 %v9361
      %9422 = vmatpush.msra.mxu0 %v9355
      %9423 = vmatpush.msra.mxu0 %v9349
      %9424 = vmatpush.msra.mxu0 %v9343
      %9425 = vmatpush.msra.mxu0 %v9337
      %9426 = vmatpush.msra.mxu0 %v9331
      %9427 = vmatpush.msra.mxu0 %v9325
      %9428 = vmatpush.msra.mxu0 %v9319
      %9429 = vmatpush.msra.mxu0 %v9313
      %9430 = vmatmul.f32.gmra.mxu0 %v9372
      %v9431 = vpop.f32.mrf.mxu0
      %v9432 = vadd.f32 %v9369, %v9431
      %9433 = vdwg.mxu0
      %9434 = vmatpush.msra.mxu0 0.0
      %9435 = vmatpush.msra.mxu0 0.0
      %9436 = vmatpush.msra.mxu0 0.0
      %9437 = vmatpush.msra.mxu0 0.0
      %9438 = vmatpush.msra.mxu0 0.0
      %9439 = vmatpush.msra.mxu0 0.0
      %9440 = vmatpush.msra.mxu0 0.0
      %9441 = vmatpush.msra.mxu0 %v9362
      %9442 = vmatpush.msra.mxu0 %v9356
      %9443 = vmatpush.msra.mxu0 %v9350
      %9444 = vmatpush.msra.mxu0 %v9344
      %9445 = vmatpush.msra.mxu0 %v9338
      %9446 = vmatpush.msra.mxu0 %v9332
      %9447 = vmatpush.msra.mxu0 %v9326
      %9448 = vmatpush.msra.mxu0 %v9320
      %9449 = vmatpush.msra.mxu0 %v9314
      %9450 = vmatmul.f32.gmra.mxu0 %v9372
      %v9451 = vpop.f32.mrf.mxu0
      %v9452 = vadd.f32 %v9369, %v9451
      %9453 = vdwg.mxu0
      %9454 = vmatpush.msra.mxu0 0.0
      %9455 = vmatpush.msra.mxu0 0.0
      %9456 = vmatpush.msra.mxu0 0.0
      %9457 = vmatpush.msra.mxu0 0.0
      %9458 = vmatpush.msra.mxu0 0.0
      %9459 = vmatpush.msra.mxu0 0.0
      %9460 = vmatpush.msra.mxu0 0.0
      %9461 = vmatpush.msra.mxu0 %v9363
      %9462 = vmatpush.msra.mxu0 %v9357
      %9463 = vmatpush.msra.mxu0 %v9351
      %9464 = vmatpush.msra.mxu0 %v9345
      %9465 = vmatpush.msra.mxu0 %v9339
      %9466 = vmatpush.msra.mxu0 %v9333
      %9467 = vmatpush.msra.mxu0 %v9327
      %9468 = vmatpush.msra.mxu0 %v9321
      %9469 = vmatpush.msra.mxu0 %v9315
      %9470 = vmatmul.f32.gmra.mxu0 %v9372
      %v9471 = vpop.f32.mrf.mxu0
      %v9472 = vadd.f32 %v9369, %v9471
      %9473 = vdwg.mxu0
      %9474 = vmatpush.msra.mxu0 0.0
      %9475 = vmatpush.msra.mxu0 0.0
      %9476 = vmatpush.msra.mxu0 0.0
      %9477 = vmatpush.msra.mxu0 0.0
      %9478 = vmatpush.msra.mxu0 0.0
      %9479 = vmatpush.msra.mxu0 0.0
      %9480 = vmatpush.msra.mxu0 0.0
      %9481 = vmatpush.msra.mxu0 %v9364
      %9482 = vmatpush.msra.mxu0 %v9358
      %9483 = vmatpush.msra.mxu0 %v9352
      %9484 = vmatpush.msra.mxu0 %v9346
      %9485 = vmatpush.msra.mxu0 %v9340
      %9486 = vmatpush.msra.mxu0 %v9334
      %9487 = vmatpush.msra.mxu0 %v9328
      %9488 = vmatpush.msra.mxu0 %v9322
      %9489 = vmatpush.msra.mxu0 %v9316
      %9490 = vmatmul.f32.gmra.mxu0 %v9372
      %v9491 = vpop.f32.mrf.mxu0
      %v9492 = vadd.f32 %v9369, %v9491
      %9493 = vdwg.mxu0
      %v9494 = vmax.f32 %v9392, 0.0
      %v9495 = vmax.f32 %v9412, 0.0
      %v9496 = vmax.f32 %v9432, 0.0
      %v9497 = vmax.f32 %v9452, 0.0
      %v9498 = vmax.f32 %v9472, 0.0
      %v9499 = vmax.f32 %v9492, 0.0
      %9500 = vst [vmem:[#allocation7] sm:$0xff] %v9494
      %9501 = vst [vmem:[#allocation7 + $0x8] sm:$0xff] %v9495
      %9502 = vst [vmem:[#allocation7 + $0x10] sm:$0xff] %v9496
      %9503 = vst [vmem:[#allocation7 + $0x18] sm:$0xff] %v9497
      %9504 = vst [vmem:[#allocation7 + $0x20] sm:$0xff] %v9498
      %9505 = vst.msk [vmem:[#allocation7 + $0x28] sm:$0xff] %vm8406, %v9499
      %9506 = vst.msk [vmem:[#allocation7 + $0x28] sm:$0xff] %vm8952, 0.0
      %9507 = vst.msk [vmem:[#allocation7 + $0x30] sm:$0xff] %vm8251, 0.0
      %v9508 = vld [vmem:[#allocation7] sm:$0xff]
      %v9509 = vld [vmem:[#allocation7 + $0x8] sm:$0xff]
      %v9510 = vld [vmem:[#allocation7 + $0x10] sm:$0xff]
      %v9511 = vld [vmem:[#allocation7 + $0x18] sm:$0xff]
      %v9512 = vld [vmem:[#allocation7 + $0x20] sm:$0xff]
      %v9513 = vld [vmem:[#allocation7 + $0x28] sm:$0xff]
      %9520 = vrot.lane.b32.xlu0 %v9508, 100
      %v9521 = vpop.permute.xlu0 %9520
      %9522 = vrot.lane.b32.xlu0 %v9509, 100
      %v9523 = vpop.permute.xlu0 %9522
      %9524 = vrot.lane.b32.xlu0 %v9510, 100
      %v9525 = vpop.permute.xlu0 %9524
      %9526 = vrot.lane.b32.xlu0 %v9511, 100
      %v9527 = vpop.permute.xlu0 %9526
      %9528 = vrot.lane.b32.xlu0 %v9512, 100
      %v9529 = vpop.permute.xlu0 %9528
      %9530 = vrot.lane.b32.xlu0 %v9513, 100
      %v9531 = vpop.permute.xlu0 %9530
      %v9532 = vsel %vm8514, %v9521, %v9523
      %v9533 = vsel %vm8514, %v9523, %v9525
      %v9534 = vsel %vm8514, %v9525, %v9527
      %v9535 = vsel %vm8514, %v9527, %v9529
      %v9536 = vsel %vm8514, %v9529, %v9531
      %v9542 = vmax.f32 %v9508, %v9532
      %v9543 = vmax.f32 %v9509, %v9533
      %v9544 = vmax.f32 %v9510, %v9534
      %v9545 = vmax.f32 %v9511, %v9535
      %v9546 = vmax.f32 %v9512, %v9536
      %9552 = vrot.lane.b32.xlu0 %v9542, 127
      %v9553 = vpop.permute.xlu0 %9552
      %9554 = vrot.lane.b32.xlu0 %v9543, 127
      %v9555 = vpop.permute.xlu0 %9554
      %9556 = vrot.lane.b32.xlu0 %v9544, 127
      %v9557 = vpop.permute.xlu0 %9556
      %9558 = vrot.lane.b32.xlu0 %v9545, 127
      %v9559 = vpop.permute.xlu0 %9558
      %9560 = vrot.lane.b32.xlu0 %v9546, 127
      %v9561 = vpop.permute.xlu0 %9560
      %v9562 = vsel %vm548, %v9553, %v9555
      %v9563 = vsel %vm548, %v9555, %v9557
      %v9564 = vsel %vm548, %v9557, %v9559
      %v9565 = vsel %vm548, %v9559, %v9561
      %v9571 = vmax.f32 %v9542, %v9562
      %v9572 = vmax.f32 %v9543, %v9563
      %v9573 = vmax.f32 %v9544, %v9564
      %v9574 = vmax.f32 %v9545, %v9565
      %v9575 = vmax.f32 %v9546, %v9561
      %9576 = vst [vmem:[#allocation6] sm:$0xff] %v9571
      %9577 = vst [vmem:[#allocation6 + $0x8] sm:$0xff] %v9572
      %9578 = vst [vmem:[#allocation6 + $0x10] sm:$0xff] %v9573
      %9579 = vst [vmem:[#allocation6 + $0x18] sm:$0xff] %v9574
      %9580 = vst.msk [vmem:[#allocation6 + $0x20] sm:$0xff] %vm548, %v9575
      %v9581 = vld [vmem:[#allocation6] sm:$0xff]
      %vm9582 = vcmask 187392
      %v9584 = vsel %vm9582, %v9581, 0
      %v9587 = vsel %vm7410, %v198, 0
      %9589 = vmatpush.msra.mxu0 0.0
      %9590 = vmatpush.msra.mxu0 0.0
      %9591 = vmatpush.msra.mxu0 0.0
      %9592 = vmatpush.msra.mxu0 0.0
      %9593 = vmatpush.msra.mxu0 0.0
      %9594 = vmatpush.msra.mxu0 0.0
      %9595 = vmatpush.msra.mxu0 0.0
      %9596 = vmatpush.msra.mxu0 0.0
      %9597 = vmatpush.msra.mxu0 0.0
      %9598 = vmatpush.msra.mxu0 0.0
      %9599 = vmatpush.msra.mxu0 0.0
      %9600 = vmatpush.msra.mxu0 0.0
      %9601 = vmatpush.msra.mxu0 0.0
      %9602 = vmatpush.msra.mxu0 %v9587
      %9603 = vmatpush.msra.mxu0 %v197
      %9604 = vmatpush.msra.mxu0 %v196
      %9605 = vmatmul.f32.gmra.mxu0 %v9584
      %v9606 = vpop.f32.mrf.mxu0
      %v9607 = vadd.f32 0.0, %v9606
      %9608 = vdwg.mxu0
      %9609 = vst.msk [vmem:[#allocation8] sm:$0xff] %vm7481, %v9607
      %v9610 = vld [vmem:[#allocation6] sm:$0xff]
      %9612 = vrot.lane.b32.xlu0 %v9610, 72
      %v9613 = vpop.permute.xlu0 %9612
      %v9614 = vsel %vm9582, %v9613, 0
      %9616 = vmatpush.msra.mxu0 0.0
      %9617 = vmatpush.msra.mxu0 0.0
      %9618 = vmatpush.msra.mxu0 0.0
      %9619 = vmatpush.msra.mxu0 0.0
      %9620 = vmatpush.msra.mxu0 0.0
      %9621 = vmatpush.msra.mxu0 0.0
      %9622 = vmatpush.msra.mxu0 0.0
      %9623 = vmatpush.msra.mxu0 0.0
      %9624 = vmatpush.msra.mxu0 0.0
      %9625 = vmatpush.msra.mxu0 0.0
      %9626 = vmatpush.msra.mxu0 0.0
      %9627 = vmatpush.msra.mxu0 0.0
      %9628 = vmatpush.msra.mxu0 0.0
      %9629 = vmatpush.msra.mxu0 %v9587
      %9630 = vmatpush.msra.mxu0 %v197
      %9631 = vmatpush.msra.mxu0 %v196
      %9632 = vmatmul.f32.gmra.mxu0 %v9614
      %v9633 = vpop.f32.mrf.mxu0
      %v9634 = vadd.f32 0.0, %v9633
      %9635 = vdwg.mxu0
      %9637 = vrot.lane.b32.xlu0 %v9634, 12
      %v9638 = vpop.permute.xlu0 %9637
      %vm9640 = vcmask 195680
      %9641 = vst.msk [vmem:[#allocation8] sm:$0xff] %vm9640, %v9638
      %v9642 = vld [vmem:[#allocation6] sm:$0xff]
      %v9643 = vld [vmem:[#allocation6 + $0x8] sm:$0xff]
      %9646 = vrot.lane.b32.xlu0 %v9642, 16
      %v9647 = vpop.permute.xlu0 %9646
      %9648 = vrot.lane.b32.xlu0 %v9643, 16
      %v9649 = vpop.permute.xlu0 %9648
      %v9650 = vsel %vm8251, %v9647, %v9649
      %v9651 = vsel %vm9582, %v9650, 0
      %9653 = vmatpush.msra.mxu0 0.0
      %9654 = vmatpush.msra.mxu0 0.0
      %9655 = vmatpush.msra.mxu0 0.0
      %9656 = vmatpush.msra.mxu0 0.0
      %9657 = vmatpush.msra.mxu0 0.0
      %9658 = vmatpush.msra.mxu0 0.0
      %9659 = vmatpush.msra.mxu0 0.0
      %9660 = vmatpush.msra.mxu0 0.0
      %9661 = vmatpush.msra.mxu0 0.0
      %9662 = vmatpush.msra.mxu0 0.0
      %9663 = vmatpush.msra.mxu0 0.0
      %9664 = vmatpush.msra.mxu0 0.0
      %9665 = vmatpush.msra.mxu0 0.0
      %9666 = vmatpush.msra.mxu0 %v9587
      %9667 = vmatpush.msra.mxu0 %v197
      %9668 = vmatpush.msra.mxu0 %v196
      %9669 = vmatmul.f32.gmra.mxu0 %v9651
      %v9670 = vpop.f32.mrf.mxu0
      %v9671 = vadd.f32 0.0, %v9670
      %9672 = vdwg.mxu0
      %9674 = vrot.lane.b32.xlu0 %v9671, 24
      %v9675 = vpop.permute.xlu0 %9674
      %vm9677 = vcmask 294080
      %9678 = vst.msk [vmem:[#allocation8] sm:$0xff] %vm9677, %v9675
      %v9679 = vld [vmem:[#allocation6 + $0x8] sm:$0xff]
      %9681 = vrot.lane.b32.xlu0 %v9679, 88
      %v9682 = vpop.permute.xlu0 %9681
      %v9683 = vsel %vm9582, %v9682, 0
      %9685 = vmatpush.msra.mxu0 0.0
      %9686 = vmatpush.msra.mxu0 0.0
      %9687 = vmatpush.msra.mxu0 0.0
      %9688 = vmatpush.msra.mxu0 0.0
      %9689 = vmatpush.msra.mxu0 0.0
      %9690 = vmatpush.msra.mxu0 0.0
      %9691 = vmatpush.msra.mxu0 0.0
      %9692 = vmatpush.msra.mxu0 0.0
      %9693 = vmatpush.msra.mxu0 0.0
      %9694 = vmatpush.msra.mxu0 0.0
      %9695 = vmatpush.msra.mxu0 0.0
      %9696 = vmatpush.msra.mxu0 0.0
      %9697 = vmatpush.msra.mxu0 0.0
      %9698 = vmatpush.msra.mxu0 %v9587
      %9699 = vmatpush.msra.mxu0 %v197
      %9700 = vmatpush.msra.mxu0 %v196
      %9701 = vmatmul.f32.gmra.mxu0 %v9683
      %v9702 = vpop.f32.mrf.mxu0
      %v9703 = vadd.f32 0.0, %v9702
      %9704 = vdwg.mxu0
      %9706 = vrot.lane.b32.xlu0 %v9703, 36
      %v9707 = vpop.permute.xlu0 %9706
      %vm9709 = vcmask 392480
      %9710 = vst.msk [vmem:[#allocation8] sm:$0xff] %vm9709, %v9707
      %v9711 = vld [vmem:[#allocation6 + $0x8] sm:$0xff]
      %9713 = vrot.lane.b32.xlu0 %v9711, 32
      %v9714 = vpop.permute.xlu0 %9713
      %v9715 = vsel %vm9582, %v9714, 0
      %9717 = vmatpush.msra.mxu0 0.0
      %9718 = vmatpush.msra.mxu0 0.0
      %9719 = vmatpush.msra.mxu0 0.0
      %9720 = vmatpush.msra.mxu0 0.0
      %9721 = vmatpush.msra.mxu0 0.0
      %9722 = vmatpush.msra.mxu0 0.0
      %9723 = vmatpush.msra.mxu0 0.0
      %9724 = vmatpush.msra.mxu0 0.0
      %9725 = vmatpush.msra.mxu0 0.0
      %9726 = vmatpush.msra.mxu0 0.0
      %9727 = vmatpush.msra.mxu0 0.0
      %9728 = vmatpush.msra.mxu0 0.0
      %9729 = vmatpush.msra.mxu0 0.0
      %9730 = vmatpush.msra.mxu0 %v9587
      %9731 = vmatpush.msra.mxu0 %v197
      %9732 = vmatpush.msra.mxu0 %v196
      %9733 = vmatmul.f32.gmra.mxu0 %v9715
      %v9734 = vpop.f32.mrf.mxu0
      %v9735 = vadd.f32 0.0, %v9734
      %9736 = vdwg.mxu0
      %9738 = vrot.lane.b32.xlu0 %v9735, 48
      %v9739 = vpop.permute.xlu0 %9738
      %vm9741 = vcmask 490880
      %9742 = vst.msk [vmem:[#allocation8] sm:$0xff] %vm9741, %v9739
      %v9743 = vld [vmem:[#allocation6 + $0x10] sm:$0xff]
      %9745 = vrot.lane.b32.xlu0 %v9743, 104
      %v9746 = vpop.permute.xlu0 %9745
      %v9747 = vsel %vm9582, %v9746, 0
      %9749 = vmatpush.msra.mxu0 0.0
      %9750 = vmatpush.msra.mxu0 0.0
      %9751 = vmatpush.msra.mxu0 0.0
      %9752 = vmatpush.msra.mxu0 0.0
      %9753 = vmatpush.msra.mxu0 0.0
      %9754 = vmatpush.msra.mxu0 0.0
      %9755 = vmatpush.msra.mxu0 0.0
      %9756 = vmatpush.msra.mxu0 0.0
      %9757 = vmatpush.msra.mxu0 0.0
      %9758 = vmatpush.msra.mxu0 0.0
      %9759 = vmatpush.msra.mxu0 0.0
      %9760 = vmatpush.msra.mxu0 0.0
      %9761 = vmatpush.msra.mxu0 0.0
      %9762 = vmatpush.msra.mxu0 %v9587
      %9763 = vmatpush.msra.mxu0 %v197
      %9764 = vmatpush.msra.mxu0 %v196
      %9765 = vmatmul.f32.gmra.mxu0 %v9747
      %v9766 = vpop.f32.mrf.mxu0
      %v9767 = vadd.f32 0.0, %v9766
      %9768 = vdwg.mxu0
      %9770 = vrot.lane.b32.xlu0 %v9767, 60
      %v9771 = vpop.permute.xlu0 %9770
      %vm9773 = vcmask 589280
      %9774 = vst.msk [vmem:[#allocation8] sm:$0xff] %vm9773, %v9771
      %v9775 = vld [vmem:[#allocation6 + $0x10] sm:$0xff]
      %9777 = vrot.lane.b32.xlu0 %v9775, 48
      %v9778 = vpop.permute.xlu0 %9777
      %v9779 = vsel %vm9582, %v9778, 0
      %9781 = vmatpush.msra.mxu0 0.0
      %9782 = vmatpush.msra.mxu0 0.0
      %9783 = vmatpush.msra.mxu0 0.0
      %9784 = vmatpush.msra.mxu0 0.0
      %9785 = vmatpush.msra.mxu0 0.0
      %9786 = vmatpush.msra.mxu0 0.0
      %9787 = vmatpush.msra.mxu0 0.0
      %9788 = vmatpush.msra.mxu0 0.0
      %9789 = vmatpush.msra.mxu0 0.0
      %9790 = vmatpush.msra.mxu0 0.0
      %9791 = vmatpush.msra.mxu0 0.0
      %9792 = vmatpush.msra.mxu0 0.0
      %9793 = vmatpush.msra.mxu0 0.0
      %9794 = vmatpush.msra.mxu0 %v9587
      %9795 = vmatpush.msra.mxu0 %v197
      %9796 = vmatpush.msra.mxu0 %v196
      %9797 = vmatmul.f32.gmra.mxu0 %v9779
      %v9798 = vpop.f32.mrf.mxu0
      %v9799 = vadd.f32 0.0, %v9798
      %9800 = vdwg.mxu0
      %9802 = vrot.lane.b32.xlu0 %v9799, 72
      %v9803 = vpop.permute.xlu0 %9802
      %vm9805 = vcmask 687680
      %9806 = vst.msk [vmem:[#allocation8] sm:$0xff] %vm9805, %v9803
      %v9807 = vld [vmem:[#allocation6 + $0x18] sm:$0xff]
      %9809 = vrot.lane.b32.xlu0 %v9807, 120
      %v9810 = vpop.permute.xlu0 %9809
      %v9811 = vsel %vm9582, %v9810, 0
      %9813 = vmatpush.msra.mxu0 0.0
      %9814 = vmatpush.msra.mxu0 0.0
      %9815 = vmatpush.msra.mxu0 0.0
      %9816 = vmatpush.msra.mxu0 0.0
      %9817 = vmatpush.msra.mxu0 0.0
      %9818 = vmatpush.msra.mxu0 0.0
      %9819 = vmatpush.msra.mxu0 0.0
      %9820 = vmatpush.msra.mxu0 0.0
      %9821 = vmatpush.msra.mxu0 0.0
      %9822 = vmatpush.msra.mxu0 0.0
      %9823 = vmatpush.msra.mxu0 0.0
      %9824 = vmatpush.msra.mxu0 0.0
      %9825 = vmatpush.msra.mxu0 0.0
      %9826 = vmatpush.msra.mxu0 %v9587
      %9827 = vmatpush.msra.mxu0 %v197
      %9828 = vmatpush.msra.mxu0 %v196
      %9829 = vmatmul.f32.gmra.mxu0 %v9811
      %v9830 = vpop.f32.mrf.mxu0
      %v9831 = vadd.f32 0.0, %v9830
      %9832 = vdwg.mxu0
      %9834 = vrot.lane.b32.xlu0 %v9831, 84
      %v9835 = vpop.permute.xlu0 %9834
      %vm9837 = vcmask 786080
      %9838 = vst.msk [vmem:[#allocation8] sm:$0xff] %vm9837, %v9835
      %v9839 = vld [vmem:[#allocation6 + $0x18] sm:$0xff]
      %9841 = vrot.lane.b32.xlu0 %v9839, 64
      %v9842 = vpop.permute.xlu0 %9841
      %v9843 = vsel %vm9582, %v9842, 0
      %9845 = vmatpush.msra.mxu0 0.0
      %9846 = vmatpush.msra.mxu0 0.0
      %9847 = vmatpush.msra.mxu0 0.0
      %9848 = vmatpush.msra.mxu0 0.0
      %9849 = vmatpush.msra.mxu0 0.0
      %9850 = vmatpush.msra.mxu0 0.0
      %9851 = vmatpush.msra.mxu0 0.0
      %9852 = vmatpush.msra.mxu0 0.0
      %9853 = vmatpush.msra.mxu0 0.0
      %9854 = vmatpush.msra.mxu0 0.0
      %9855 = vmatpush.msra.mxu0 0.0
      %9856 = vmatpush.msra.mxu0 0.0
      %9857 = vmatpush.msra.mxu0 0.0
      %9858 = vmatpush.msra.mxu0 %v9587
      %9859 = vmatpush.msra.mxu0 %v197
      %9860 = vmatpush.msra.mxu0 %v196
      %9861 = vmatmul.f32.gmra.mxu0 %v9843
      %v9862 = vpop.f32.mrf.mxu0
      %v9863 = vadd.f32 0.0, %v9862
      %9864 = vdwg.mxu0
      %9866 = vrot.lane.b32.xlu0 %v9863, 96
      %v9867 = vpop.permute.xlu0 %9866
      %vm9869 = vcmask 884480
      %9870 = vst.msk [vmem:[#allocation8] sm:$0xff] %vm9869, %v9867
      %v9871 = vld [vmem:[#allocation6 + $0x18] sm:$0xff]
      %v9872 = vld [vmem:[#allocation6 + $0x20] sm:$0xff]
      %9875 = vrot.lane.b32.xlu0 %v9871, 8
      %v9876 = vpop.permute.xlu0 %9875
      %9877 = vrot.lane.b32.xlu0 %v9872, 8
      %v9878 = vpop.permute.xlu0 %9877
      %v9879 = vsel %vm7907, %v9876, %v9878
      %v9880 = vsel %vm9582, %v9879, 0
      %9882 = vmatpush.msra.mxu0 0.0
      %9883 = vmatpush.msra.mxu0 0.0
      %9884 = vmatpush.msra.mxu0 0.0
      %9885 = vmatpush.msra.mxu0 0.0
      %9886 = vmatpush.msra.mxu0 0.0
      %9887 = vmatpush.msra.mxu0 0.0
      %9888 = vmatpush.msra.mxu0 0.0
      %9889 = vmatpush.msra.mxu0 0.0
      %9890 = vmatpush.msra.mxu0 0.0
      %9891 = vmatpush.msra.mxu0 0.0
      %9892 = vmatpush.msra.mxu0 0.0
      %9893 = vmatpush.msra.mxu0 0.0
      %9894 = vmatpush.msra.mxu0 0.0
      %9895 = vmatpush.msra.mxu0 %v9587
      %9896 = vmatpush.msra.mxu0 %v197
      %9897 = vmatpush.msra.mxu0 %v196
      %9898 = vmatmul.f32.gmra.mxu0 %v9880
      %v9899 = vpop.f32.mrf.mxu0
      %v9900 = vadd.f32 0.0, %v9899
      %9901 = vdwg.mxu0
      %9903 = vrot.lane.b32.xlu0 %v9900, 108
      %v9904 = vpop.permute.xlu0 %9903
      %vm9906 = vcmask 982880
      %9907 = vst.msk [vmem:[#allocation8] sm:$0xff] %vm9906, %v9904
      %v9908 = vld [vmem:[#allocation6 + $0x20] sm:$0xff]
      %9910 = vrot.lane.b32.xlu0 %v9908, 80
      %v9911 = vpop.permute.xlu0 %9910
      %v9912 = vsel %vm9582, %v9911, 0
      %9914 = vmatpush.msra.mxu0 0.0
      %9915 = vmatpush.msra.mxu0 0.0
      %9916 = vmatpush.msra.mxu0 0.0
      %9917 = vmatpush.msra.mxu0 0.0
      %9918 = vmatpush.msra.mxu0 0.0
      %9919 = vmatpush.msra.mxu0 0.0
      %9920 = vmatpush.msra.mxu0 0.0
      %9921 = vmatpush.msra.mxu0 0.0
      %9922 = vmatpush.msra.mxu0 0.0
      %9923 = vmatpush.msra.mxu0 0.0
      %9924 = vmatpush.msra.mxu0 0.0
      %9925 = vmatpush.msra.mxu0 0.0
      %9926 = vmatpush.msra.mxu0 0.0
      %9927 = vmatpush.msra.mxu0 %v9587
      %9928 = vmatpush.msra.mxu0 %v197
      %9929 = vmatpush.msra.mxu0 %v196
      %9930 = vmatmul.f32.gmra.mxu0 %v9912
      %v9931 = vpop.f32.mrf.mxu0
      %v9932 = vadd.f32 0.0, %v9931
      %9933 = vdwg.mxu0
      %9935 = vrot.lane.b32.xlu0 %v9932, 120
      %v9936 = vpop.permute.xlu0 %9935
      %9938 = vst.msk [vmem:[#allocation8] sm:$0xff] %vm8067, %v9936
      %9939 = vst.msk [vmem:[#allocation8 + $0x8] sm:$0xff] %vm3427, %v9936
      %v9940 = vld [vmem:[#allocation6 + $0x20] sm:$0xff]
      %9942 = vrot.lane.b32.xlu0 %v9940, 24
      %v9943 = vpop.permute.xlu0 %9942
      %v9944 = vsel %vm9582, %v9943, 0
      %9946 = vmatpush.msra.mxu0 0.0
      %9947 = vmatpush.msra.mxu0 0.0
      %9948 = vmatpush.msra.mxu0 0.0
      %9949 = vmatpush.msra.mxu0 0.0
      %9950 = vmatpush.msra.mxu0 0.0
      %9951 = vmatpush.msra.mxu0 0.0
      %9952 = vmatpush.msra.mxu0 0.0
      %9953 = vmatpush.msra.mxu0 0.0
      %9954 = vmatpush.msra.mxu0 0.0
      %9955 = vmatpush.msra.mxu0 0.0
      %9956 = vmatpush.msra.mxu0 0.0
      %9957 = vmatpush.msra.mxu0 0.0
      %9958 = vmatpush.msra.mxu0 0.0
      %9959 = vmatpush.msra.mxu0 %v9587
      %9960 = vmatpush.msra.mxu0 %v197
      %9961 = vmatpush.msra.mxu0 %v196
      %9962 = vmatmul.f32.gmra.mxu0 %v9944
      %v9963 = vpop.f32.mrf.mxu0
      %v9964 = vadd.f32 0.0, %v9963
      %9965 = vdwg.mxu0
      %9967 = vrot.lane.b32.xlu0 %v9964, 4
      %v9968 = vpop.permute.xlu0 %9967
      %vm9970 = vcmask 130080
      %9971 = vst.msk [vmem:[#allocation8 + $0x8] sm:$0xff] %vm9970, %v9968
      %v9972 = vld [vmem:[#allocation8] sm:$0xff]
      %vm9973 = vcmask 965632
      %9974 = vst.msk [vmem:[#allocation9] sm:$0xff] %vm9973, %v9972
      %v9975 = vld [vmem:[#allocation8] sm:$0xff]
      %9977 = vrot.lane.b32.xlu0 %v9975, 127
      %v9978 = vpop.permute.xlu0 %9977
      %9980 = vst.msk [vmem:[#allocation9 + $0xe8] sm:$0xff] %vm9973, %v9978
      %v9981 = vld [vmem:[#allocation8] sm:$0xff]
      %9983 = vrot.lane.b32.xlu0 %v9981, 126
      %v9984 = vpop.permute.xlu0 %9983
      %9986 = vst.msk [vmem:[#allocation9 + $0x1d0] sm:$0xff] %vm9973, %v9984
      %v9987 = vld [vmem:[#allocation8] sm:$0xff]
      %v9988 = vld [vmem:[#allocation8 + $0x8] sm:$0xff]
      %9991 = vrot.lane.b32.xlu0 %v9987, 116
      %v9992 = vpop.permute.xlu0 %9991
      %9993 = vrot.lane.b32.xlu0 %v9988, 116
      %v9994 = vpop.permute.xlu0 %9993
      %vm9995 = vcmask 949248
      %v9996 = vsel %vm9995, %v9992, %v9994
      %9998 = vst.msk [vmem:[#allocation9 + $0x2b8] sm:$0xff] %vm9973, %v9996
      %v9999 = vld [vmem:[#allocation8] sm:$0xff]
      %v10000 = vld [vmem:[#allocation8 + $0x8] sm:$0xff]
      %10003 = vrot.lane.b32.xlu0 %v9999, 115
      %v10004 = vpop.permute.xlu0 %10003
      %10005 = vrot.lane.b32.xlu0 %v10000, 115
      %v10006 = vpop.permute.xlu0 %10005
      %vm10007 = vcmask 941056
      %v10008 = vsel %vm10007, %v10004, %v10006
      %10010 = vst.msk [vmem:[#allocation9 + $0x3a0] sm:$0xff] %vm9973, %v10008
      %v10011 = vld [vmem:[#allocation8] sm:$0xff]
      %v10012 = vld [vmem:[#allocation8 + $0x8] sm:$0xff]
      %10015 = vrot.lane.b32.xlu0 %v10011, 114
      %v10016 = vpop.permute.xlu0 %10015
      %10017 = vrot.lane.b32.xlu0 %v10012, 114
      %v10018 = vpop.permute.xlu0 %10017
      %vm10019 = vcmask 932864
      %v10020 = vsel %vm10019, %v10016, %v10018
      %10022 = vst.msk [vmem:[#allocation9 + $0x488] sm:$0xff] %vm9973, %v10020
      %v10023 = vld [vmem:[#allocation8] sm:$0xff]
      %v10024 = vld [vmem:[#allocation8 + $0x8] sm:$0xff]
      %10027 = vrot.lane.b32.xlu0 %v10023, 104
      %v10028 = vpop.permute.xlu0 %10027
      %10029 = vrot.lane.b32.xlu0 %v10024, 104
      %v10030 = vpop.permute.xlu0 %10029
      %vm10031 = vcmask 850944
      %v10032 = vsel %vm10031, %v10028, %v10030
      %10034 = vst.msk [vmem:[#allocation9 + $0x570] sm:$0xff] %vm9973, %v10032
      %v10035 = vld [vmem:[#allocation8] sm:$0xff]
      %v10036 = vld [vmem:[#allocation8 + $0x8] sm:$0xff]
      %10039 = vrot.lane.b32.xlu0 %v10035, 103
      %v10040 = vpop.permute.xlu0 %10039
      %10041 = vrot.lane.b32.xlu0 %v10036, 103
      %v10042 = vpop.permute.xlu0 %10041
      %vm10043 = vcmask 842752
      %v10044 = vsel %vm10043, %v10040, %v10042
      %10046 = vst.msk [vmem:[#allocation9 + $0x658] sm:$0xff] %vm9973, %v10044
      %v10047 = vld [vmem:[#allocation8] sm:$0xff]
      %v10048 = vld [vmem:[#allocation8 + $0x8] sm:$0xff]
      %10051 = vrot.lane.b32.xlu0 %v10047, 102
      %v10052 = vpop.permute.xlu0 %10051
      %10053 = vrot.lane.b32.xlu0 %v10048, 102
      %v10054 = vpop.permute.xlu0 %10053
      %vm10055 = vcmask 834560
      %v10056 = vsel %vm10055, %v10052, %v10054
      %10058 = vst.msk [vmem:[#allocation9 + $0x740] sm:$0xff] %vm9973, %v10056
      %v10059 = vld [vmem:[%s1 + $0x28] sm:$0xff]
      %v10060 = vld [vmem:[%s1 + $0x30] sm:$0xff]
      %v10061 = vld [vmem:[#allocation9] sm:$0xff]
      %v10062 = vld [vmem:[#allocation9 + $0xe8] sm:$0xff]
      %v10063 = vld [vmem:[#allocation9 + $0x1d0] sm:$0xff]
      %v10064 = vld [vmem:[#allocation9 + $0x2b8] sm:$0xff]
      %v10065 = vld [vmem:[#allocation9 + $0x3a0] sm:$0xff]
      %v10066 = vld [vmem:[#allocation9 + $0x488] sm:$0xff]
      %v10067 = vld [vmem:[#allocation9 + $0x570] sm:$0xff]
      %v10068 = vld [vmem:[#allocation9 + $0x658] sm:$0xff]
      %v10069 = vld [vmem:[#allocation9 + $0x740] sm:$0xff]
      %v10070 = vld [vmem:[%s2 + $0x28] sm:$0xff]
      %v10071 = vld [vmem:[%s2 + $0x30] sm:$0xff]
      %10073 = vset.pattern.permute.xlu0 0
      %10074 = vperm.xlu0 %10073, %v10070
      %v10075 = vpop.permute.xlu0 %10074
      %10078 = vset.pattern.permute.xlu0 0
      %10079 = vperm.xlu0 %10078, %v10071
      %v10080 = vpop.permute.xlu0 %10079
      %v10083 = vsel %vm3783, %v10059, 0
      %v10086 = vsel %vm3783, %v10060, 0
      %10088 = vmatpush.msra.mxu0 0.0
      %10089 = vmatpush.msra.mxu0 0.0
      %10090 = vmatpush.msra.mxu0 0.0
      %10091 = vmatpush.msra.mxu0 0.0
      %10092 = vmatpush.msra.mxu0 0.0
      %10093 = vmatpush.msra.mxu0 0.0
      %10094 = vmatpush.msra.mxu0 0.0
      %10095 = vmatpush.msra.mxu0 %v10069
      %10096 = vmatpush.msra.mxu0 %v10068
      %10097 = vmatpush.msra.mxu0 %v10067
      %10098 = vmatpush.msra.mxu0 %v10066
      %10099 = vmatpush.msra.mxu0 %v10065
      %10100 = vmatpush.msra.mxu0 %v10064
      %10101 = vmatpush.msra.mxu0 %v10063
      %10102 = vmatpush.msra.mxu0 %v10062
      %10103 = vmatpush.msra.mxu0 %v10061
      %10104 = vmatmul.f32.gmra.mxu0 %v10083
      %v10105 = vpop.f32.mrf.mxu0
      %v10106 = vadd.f32 %v10075, %v10105
      %10107 = vmatmul.f32.gmra.mxu0 %v10086
      %v10108 = vpop.f32.mrf.mxu0
      %v10109 = vadd.f32 %v10080, %v10108
      %10110 = vdwg.mxu0
      %v10111 = vmax.f32 %v10106, 0.0
      %v10112 = vmax.f32 %v10109, 0.0
      %10115 = vrot.lane.b32.xlu0 %v10111, 116
      %v10116 = vpop.permute.xlu0 %10115
      %10117 = vrot.lane.b32.xlu0 %v10112, 116
      %v10118 = vpop.permute.xlu0 %10117
      %v10121 = vadd.f32 %v10111, %v10116
      %v10122 = vadd.f32 %v10112, %v10118
      %10123 = vrot.lane.b32.xlu0 %v10111, 104
      %v10124 = vpop.permute.xlu0 %10123
      %10125 = vrot.lane.b32.xlu0 %v10112, 104
      %v10126 = vpop.permute.xlu0 %10125
      %v10129 = vadd.f32 %v10121, %v10124
      %v10130 = vadd.f32 %v10122, %v10126
      %10131 = vrot.lane.b32.xlu0 %v10111, 92
      %v10132 = vpop.permute.xlu0 %10131
      %10133 = vrot.lane.b32.xlu0 %v10112, 92
      %v10134 = vpop.permute.xlu0 %10133
      %v10137 = vadd.f32 %v10129, %v10132
      %v10138 = vadd.f32 %v10130, %v10134
      %10139 = vrot.lane.b32.xlu0 %v10111, 80
      %v10140 = vpop.permute.xlu0 %10139
      %10141 = vrot.lane.b32.xlu0 %v10112, 80
      %v10142 = vpop.permute.xlu0 %10141
      %v10145 = vadd.f32 %v10137, %v10140
      %v10146 = vadd.f32 %v10138, %v10142
      %10147 = vrot.lane.b32.xlu0 %v10111, 68
      %v10148 = vpop.permute.xlu0 %10147
      %10149 = vrot.lane.b32.xlu0 %v10112, 68
      %v10150 = vpop.permute.xlu0 %10149
      %v10153 = vadd.f32 %v10145, %v10148
      %v10154 = vadd.f32 %v10146, %v10150
      %10155 = vrot.lane.b32.xlu0 %v10111, 56
      %v10156 = vpop.permute.xlu0 %10155
      %10157 = vrot.lane.b32.xlu0 %v10112, 56
      %v10158 = vpop.permute.xlu0 %10157
      %v10161 = vadd.f32 %v10153, %v10156
      %v10162 = vadd.f32 %v10154, %v10158
      %10163 = vrot.lane.b32.xlu0 %v10111, 44
      %v10164 = vpop.permute.xlu0 %10163
      %10165 = vrot.lane.b32.xlu0 %v10112, 44
      %v10166 = vpop.permute.xlu0 %10165
      %v10169 = vadd.f32 %v10161, %v10164
      %v10170 = vadd.f32 %v10162, %v10166
      %10171 = vrot.lane.b32.xlu0 %v10111, 32
      %v10172 = vpop.permute.xlu0 %10171
      %10173 = vrot.lane.b32.xlu0 %v10112, 32
      %v10174 = vpop.permute.xlu0 %10173
      %v10177 = vadd.f32 %v10169, %v10172
      %v10178 = vadd.f32 %v10170, %v10174
      %10179 = vrot.lane.b32.xlu0 %v10111, 20
      %v10180 = vpop.permute.xlu0 %10179
      %10181 = vrot.lane.b32.xlu0 %v10112, 20
      %v10182 = vpop.permute.xlu0 %10181
      %v10185 = vadd.f32 %v10177, %v10180
      %v10186 = vadd.f32 %v10178, %v10182
      %v10187 = vsel %vm8213, %v10185, 0.0
      %10188 = vadd.xlane.f32.xlu0 %v10187
      %v10189 = vpop.xlane.xlu0 %10188
      %v10190 = vsel %vm8213, %v10186, 0.0
      %10191 = vadd.xlane.f32.xlu0 %v10190
      %v10192 = vpop.xlane.xlu0 %10191
      %v10193 = vmul.f32 %v10189, 0.01
      %v10194 = vmul.f32 %v10192, 0.01
      %vm10195 = vcmask 7168
      %10196 = vst.msk [vmem:[%s170] sm:$0xff] %vm10195, %v10193
      %10197 = vst.msk [vmem:[%s170 + $0x8] sm:$0xff] %vm10195, %v10194
      %p10198 = scmp.lt.s32.totalorder %s14, 1
      %s10199 = scalar_select %p10198, %s14, 1
      %s10200 = smul.addr %s10199, 2
      %s10201 = smul.addr %s10200, 8
      %s10202 = scalar_lea.vmem %s3, %s10201
      // Predicated region
      $region33: #{_lambda_.1} parent=31 // pred_check
        %p10203 = pneg %p100
      $region34: #{_lambda_.1} parent=31 // pred_check_branch
        %10205 = sbr.rel (%p10203) target = $region36
      $region35: #{_lambda_.1} parent=31 // pred_region
        _
      $region36: #{_lambda_.1} parent=31 // pred_fallthru
        _
    $region32: #{_lambda_.1} parent=5 // pred_fallthru
      _
    %p10206 = scmp.le.s32.totalorder 2, %s9
    // Predicated region
    $region37: #{_lambda_.1} parent=5 // pred_check
      %p10207 = pneg %p10206
    $region38: #{_lambda_.1} parent=5 // pred_check_branch
      %10209 = sbr.rel (%p10207) target = $region40
    $region39: #{_lambda_.1} parent=5 // pred_region
      %s10210 = ssub.s32 %s9, 2
      // Predicated region
      $region41: #{_lambda_.1} parent=39 // pred_check
        %p10211 = pneg %p106
      $region42: #{_lambda_.1} parent=39 // pred_check_branch
        %10213 = sbr.rel (%p10211) target = $region44
      $region43: #{_lambda_.1} parent=39 // pred_region
        %p10214 = scmp.lt.s32.totalorder %s15, 1
        %s10215 = scalar_select %p10214, %s15, 1
        %s10216 = smul.addr %s10215, 2
        %s10217 = smul.addr %s10216, 8
        %s10218 = scalar_lea.vmem %s3, %s10217
      $region44: #{_lambda_.1} parent=39 // pred_fallthru
        _
    $region40: #{_lambda_.1} parent=5 // pred_fallthru
      _
  $region6: #{_lambda_.1} parent=0 // loop_footer
    %s13 = sadd.s32 1, %s9
  $region7: #{_lambda_.1} parent=0 // loop_footer_branch
    %8 = sbr.rel target = $region3
  $region8: #{_lambda_.1} parent=0 // loop_exit
    _

</llo_original>
